<compile_context>
chip_gen: v5e
topology: v5e:2x2
jax: 0.10.0
libtpu: 0.0.40
codegen_flags: <defaults>
</compile_context>

<pallas_src>
import jax
import jax.numpy as jnp
from jax.experimental import pallas as pl
from jax.experimental.pallas import tpu as pltpu

EPS = 1e-5                 # nn.InstanceNorm2d default eps (affine=False)
NEG_MASK = -1e30           # additive mask value (softmax-equivalent to masked_fill)
MXU_DTYPE = jnp.bfloat16   # matmul operand dtype; accumulation / stats stay f32


# ----------------------------- Pallas kernels -----------------------------

def _instance_norm(y):
    # single-pass biased variance: var = E[y^2] - E[y]^2, all in f32
    m = jnp.mean(y, axis=0, keepdims=True)
    m2 = jnp.mean(y * y, axis=0, keepdims=True)
    return (y - m) * jax.lax.rsqrt(m2 - m * m + EPS)


def _mm_in_relu_kernel(x_ref, w_ref, o_ref):
    # x_ref: (1, M, K)  w_ref: (K, C)  o_ref: (1, M, C)
    y = jnp.dot(x_ref[0].astype(MXU_DTYPE), w_ref[...].astype(MXU_DTYPE),
                preferred_element_type=jnp.float32)
    o_ref[0] = jnp.maximum(_instance_norm(y), 0.0)


def _mm_in_res_relu_kernel(x_ref, w_ref, res_ref, o_ref):
    # conv-as-matmul + InstanceNorm + residual add + ReLU
    y = jnp.dot(x_ref[0].astype(MXU_DTYPE), w_ref[...].astype(MXU_DTYPE),
                preferred_element_type=jnp.float32)
    o_ref[0] = jnp.maximum(_instance_norm(y) + res_ref[0], 0.0)


def _fusion_final_kernel(x_ref, wf_ref, wl_ref, bl_ref, o_ref):
    # fusion conv3x3 (im2col matmul) + IN + ReLU, fused with final 1x1 conv (+bias)
    y = jnp.dot(x_ref[0].astype(MXU_DTYPE), wf_ref[...].astype(MXU_DTYPE),
                preferred_element_type=jnp.float32)
    y = jnp.maximum(_instance_norm(y), 0.0)
    o_ref[0] = jnp.dot(y.astype(MXU_DTYPE), wl_ref[...].astype(MXU_DTYPE),
                       preferred_element_type=jnp.float32) + bl_ref[...]


def _matmul_kernel(x_ref, w_ref, o_ref):
    o_ref[...] = jnp.dot(x_ref[...].astype(MXU_DTYPE), w_ref[...].astype(MXU_DTYPE),
                         preferred_element_type=jnp.float32)


def _halo_attn_kernel(q_ref, k_ref, v_ref, qa_ref, rkt_ref, amask_ref,
                      wo_ref, bo_ref, o_ref):
    # One (batch, image-block) per grid step; all heads handled inside.
    # q_ref: (1, H, Nq, d)   k_ref/v_ref: (1, H, Nk, d)
    # qa_ref: (1, H, Nq, Z)  rkt_ref: (Z, Nk)   amask_ref: (1, 1, Nk)
    # wo_ref: (H, d, C)      bo_ref: (1, C)     o_ref: (1, Nq, C)
    heads = q_ref.shape[1]
    Nq = q_ref.shape[2]
    Nk = k_ref.shape[2]
    C = wo_ref.shape[-1]
    Z = rkt_ref.shape[0]

    # relative positional bias for all heads in one dense matmul
    qa = qa_ref[0].reshape(heads * Nq, Z).astype(MXU_DTYPE)
    bias = jnp.dot(qa, rkt_ref[...].astype(MXU_DTYPE),
                   preferred_element_type=jnp.float32).reshape(heads, Nq, Nk)
    amask = amask_ref[0]                                    # (1, Nk) additive mask

    acc = jnp.zeros((Nq, C), jnp.float32)
    for h in range(heads):                                  # static unroll (heads small)
        qh = q_ref[0, h].astype(MXU_DTYPE)                  # (Nq, d) (pre-scaled)
        kh = k_ref[0, h].astype(MXU_DTYPE)                  # (Nk, d)
        vh = v_ref[0, h].astype(MXU_DTYPE)                  # (Nk, d)
        sim = jax.lax.dot_general(qh, kh, (((1,), (1,)), ((), ())),
                                  preferred_element_type=jnp.float32)
        sim = sim + bias[h] + amask
        m = jnp.max(sim, axis=-1, keepdims=True)            # softmax in f32
        e = jnp.exp(sim - m)
        attn = (e / jnp.sum(e, axis=-1, keepdims=True)).astype(MXU_DTYPE)
        oh = jnp.dot(attn, vh, preferred_element_type=jnp.float32)   # (Nq, d)
        # fold the output projection (per-head slice of wo) into the kernel
        acc = acc + jnp.dot(oh.astype(MXU_DTYPE), wo_ref[h].astype(MXU_DTYPE),
                            preferred_element_type=jnp.float32)
    o_ref[0] = acc + bo_ref[...]


# ----------------------------- wrappers -----------------------------

def im2col3x3(x):
    """(B, H, W, C) -> (B, H*W, 9*C) patch matrix for a 3x3 / pad=1 conv."""
    B, H, W, C = x.shape
    xp = jnp.pad(x, ((0, 0), (1, 1), (1, 1), (0, 0)))
    cols = [xp[:, kh:kh + H, kw:kw + W, :] for kh in range(3) for kw in range(3)]
    return jnp.concatenate(cols, axis=-1).reshape(B, H * W, 9 * C)


def _conv_call(kernel, rows, w, res=None):
    B, M, K = rows.shape
    Cout = w.shape[-1]
    in_specs = [pl.BlockSpec((1, M, K), lambda n: (n, 0, 0)),
                pl.BlockSpec((K, Cout), lambda n: (0, 0))]
    args = (rows, w)
    if res is not None:
        in_specs.append(pl.BlockSpec((1, M, Cout), lambda n: (n, 0, 0)))
        args = (rows, w, res)
    return pl.pallas_call(
        kernel,
        out_shape=jax.ShapeDtypeStruct((B, M, Cout), jnp.float32),
        grid=(B,),
        in_specs=in_specs,
        out_specs=pl.BlockSpec((1, M, Cout), lambda n: (n, 0, 0)),
        compiler_params=pltpu.CompilerParams(dimension_semantics=("parallel",)),
    )(*args)


def conv1x1_in_relu(x, w):
    B, H, W, Cin = x.shape
    Cout = w.shape[-1]
    out = _conv_call(_mm_in_relu_kernel, x.reshape(B, H * W, Cin), w)
    return out.reshape(B, H, W, Cout)


def conv3x3_in_relu(x, w9, residual=None):
    B, H, W, _ = x.shape
    Cout = w9.shape[-1]
    rows = im2col3x3(x)
    if residual is None:
        out = _conv_call(_mm_in_relu_kernel, rows, w9)
    else:
        out = _conv_call(_mm_in_res_relu_kernel, rows, w9,
                         res=residual.reshape(B, H * W, Cout))
    return out.reshape(B, H, W, Cout)


def fusion_final_conv(x, wf9, wl, bl):
    B, H, W, _ = x.shape
    rows = im2col3x3(x)
    M, K = H * W, rows.shape[-1]
    Chid, Cout = wf9.shape[-1], wl.shape[-1]
    out = pl.pallas_call(
        _fusion_final_kernel,
        out_shape=jax.ShapeDtypeStruct((B, M, Cout), jnp.float32),
        grid=(B,),
        in_specs=[pl.BlockSpec((1, M, K), lambda n: (n, 0, 0)),
                  pl.BlockSpec((K, Chid), lambda n: (0, 0)),
                  pl.BlockSpec((Chid, Cout), lambda n: (0, 0)),
                  pl.BlockSpec((1, Cout), lambda n: (0, 0))],
        out_specs=pl.BlockSpec((1, M, Cout), lambda n: (n, 0, 0)),
        compiler_params=pltpu.CompilerParams(dimension_semantics=("parallel",)),
    )(rows, wf9, wl, bl.reshape(1, Cout))
    return out.reshape(B, H, W, Cout)


def matmul(x, w, tm=128):
    M, K = x.shape
    N = w.shape[-1]
    if M % tm != 0:
        tm = M
    return pl.pallas_call(
        _matmul_kernel,
        out_shape=jax.ShapeDtypeStruct((M, N), jnp.float32),
        grid=(M // tm,),
        in_specs=[pl.BlockSpec((tm, K), lambda i: (i, 0)),
                  pl.BlockSpec((K, N), lambda i: (0, 0))],
        out_specs=pl.BlockSpec((tm, N), lambda i: (i, 0)),
        compiler_params=pltpu.CompilerParams(dimension_semantics=("parallel",)),
    )(x, w)


def halo_attn_core(q, k, v, qa, rkt, amask, wo, bo):
    G, heads, Nq, dh = q.shape
    Nk = k.shape[2]
    Z = rkt.shape[0]
    C = wo.shape[-1]
    return pl.pallas_call(
        _halo_attn_kernel,
        out_shape=jax.ShapeDtypeStruct((G, Nq, C), jnp.float32),
        grid=(G,),
        in_specs=[pl.BlockSpec((1, heads, Nq, dh), lambda g: (g, 0, 0, 0)),
                  pl.BlockSpec((1, heads, Nk, dh), lambda g: (g, 0, 0, 0)),
                  pl.BlockSpec((1, heads, Nk, dh), lambda g: (g, 0, 0, 0)),
                  pl.BlockSpec((1, heads, Nq, Z), lambda g: (g, 0, 0, 0)),
                  pl.BlockSpec((Z, Nk), lambda g: (0, 0)),
                  pl.BlockSpec((1, 1, Nk), lambda g: (g, 0, 0)),
                  pl.BlockSpec((heads, dh, C), lambda g: (0, 0, 0)),
                  pl.BlockSpec((1, C), lambda g: (0, 0))],
        out_specs=pl.BlockSpec((1, Nq, C), lambda g: (g, 0, 0)),
        compiler_params=pltpu.CompilerParams(dimension_semantics=("parallel",)),
    )(q, k, v, qa, rkt, amask, wo, bo)


# ----------------------------- halo attention (lucidrains semantics) -----------------------------

def halo_attention(x, p, *, block, halo, heads, dim_head):
    B, H, W, C = x.shape
    nbh, nbw = H // block, W // block
    nb = nbh * nbw
    G = B * nb
    R = block + 2 * halo
    Nq, Nk = block * block, R * R
    inner = heads * dim_head
    Z = 2 * block * dim_head
    scale = dim_head ** -0.5
    Hp, Wp = H + 2 * halo, W + 2 * halo

    # fused q/k/v projection on the zero-padded map (projections are bias-free, so
    # the interior of the projected padded map equals the projection of x itself).
    # dim_head**-0.5 is folded into wq.
    w_all = jnp.concatenate([p['wq'] * scale, p['wkv']], axis=1)        # (C, 3*inner)
    xp = jnp.pad(x, ((0, 0), (halo, halo), (halo, halo), (0, 0)))
    proj = matmul(xp.reshape(B * Hp * Wp, C), w_all).reshape(B, Hp, Wp, 3 * inner)

    qmap = proj[:, halo:halo + H, halo:halo + W, :inner]                # (B, H, W, inner)
    kmap = proj[..., inner:2 * inner]                                   # (B, Hp, Wp, inner)
    vmap = proj[..., 2 * inner:]

    # block-local queries: (G, heads, Nq, dh)
    q = (qmap.reshape(B, nbh, block, nbw, block, heads, dim_head)
             .transpose(0, 1, 3, 5, 2, 4, 6)
             .reshape(G, heads, Nq, dim_head))

    # halo'ed key/value windows extracted AFTER projection (no duplicated matmul rows)
    def unfold(t):
        wins = [t[:, bi * block:bi * block + R, bj * block:bj * block + R, :]
                for bi in range(nbh) for bj in range(nbw)]
        t = jnp.stack(wins, axis=1)                                     # (B, nb, R, R, inner)
        return (t.reshape(B, nb, Nk, heads, dim_head)
                 .transpose(0, 1, 3, 2, 4)
                 .reshape(G, heads, Nk, dim_head))
    k = unfold(kmap)
    v = unfold(vmap)

    # scattered-q / rel-key reformulation of the relative positional bias:
    #   bias[h, i, j] = sum_z qa[h, i, z] * RK[j, z]   (one dense matmul in-kernel)
    q4 = q.reshape(G, heads, block, block, dim_head)
    eye = jnp.eye(block, dtype=jnp.float32)
    qa_h = jnp.einsum('ghxyd,xz->ghxyzd', q4, eye).reshape(G, heads, Nq, block * dim_head)
    qa_w = jnp.einsum('ghxyd,yz->ghxyzd', q4, eye).reshape(G, heads, Nq, block * dim_head)
    qa = jnp.concatenate([qa_h, qa_w], axis=-1)                         # (G, heads, Nq, Z)

    idx = jnp.arange(R)[None, :] - jnp.arange(block)[:, None] + R - 1   # (block, R)
    rh = p['rel_h'][idx]                                                # (block, R, d) [qx, kr, d]
    rw = p['rel_w'][idx]                                                # (block, R, d) [qy, kc, d]
    bd = block * dim_head
    rkh = jnp.broadcast_to(rh.transpose(1, 0, 2).reshape(R, 1, bd),
                           (R, R, bd)).reshape(Nk, bd)                  # [kr*R+kc, qx*d+d']
    rkw = jnp.broadcast_to(rw.transpose(1, 0, 2).reshape(1, R, bd),
                           (R, R, bd)).reshape(Nk, bd)                  # [kr*R+kc, qy*d+d']
    rkt = jnp.concatenate([rkh, rkw], axis=-1).T                        # (Z, Nk), shared

    # additive padding mask (0 inside the image, NEG_MASK in the halo padding)
    ones = jnp.pad(jnp.ones((H, W), jnp.float32), ((halo, halo), (halo, halo)))
    mwins = [ones[bi * block:bi * block + R, bj * block:bj * block + R].reshape(Nk)
             for bi in range(nbh) for bj in range(nbw)]
    amask = jnp.where(jnp.stack(mwins) > 0.5,
                      jnp.float32(0.0), jnp.float32(NEG_MASK))          # (nb, Nk)
    amask = jnp.broadcast_to(amask[None, :, None, :], (B, nb, 1, Nk)).reshape(G, 1, Nk)

    wo = p['wo'].reshape(heads, dim_head, C)
    bo = p['bo'].reshape(1, C)

    out = halo_attn_core(q, k, v, qa, rkt, amask, wo, bo)               # (G, Nq, C)

    # merge image blocks back to the feature map
    out = (out.reshape(B, nbh, nbw, block, block, C)
              .transpose(0, 1, 3, 2, 4, 5)
              .reshape(B, H, W, C))
    return out


# ----------------------------- full model forward -----------------------------

def halo_res_pre_forward(x_nchw, params, cfg):
    x = jnp.transpose(x_nchw, (0, 2, 3, 1)).astype(jnp.float32)         # NCHW -> NHWC
    hid = cfg['hidden_channel']

    # stem: Conv2d 1x1 (no bias) + InstanceNorm2d + ReLU
    x = conv1x1_in_relu(x, params['stem_w'])

    # residual tower of BasicBlocks
    # TODO(synk): BasicBlock class is not in the provided source; standard ResPRE
    #             block assumed; nn.Dropout treated as identity (inference mode).
    y1 = x
    for blk in params['blocks']:
        h1 = conv3x3_in_relu(y1, blk['w1'].reshape(9 * hid, hid))
        y1 = conv3x3_in_relu(h1, blk['w2'].reshape(9 * hid, hid), residual=y1)

    # halo attention branch (operates on the stem output)
    y2 = halo_attention(x, params['attn'], block=cfg['block_size'],
                        halo=cfg['halo_size'], heads=cfg['heads'],
                        dim_head=cfg['dim_head'])

    # fusion conv3x3 + IN + ReLU fused with final 1x1 conv (+bias)
    y = jnp.concatenate([y1, y2], axis=-1)
    out = fusion_final_conv(y, params['fusion_w'].reshape(9 * 2 * hid, hid),
                            params['final_w'], params['final_b'])
    return jnp.transpose(out, (0, 3, 1, 2))                             # back to NCHW


# ----------------------------- deterministic synthetic params -----------------------------

def init_params(key, cfg):
    # TODO(synk): real PyTorch weights are OIHW / (out,in) and would need transposing
    #             to these HWIO / (in,out) layouts; synthetic params are generated
    #             directly in kernel-friendly layouts.
    cin, hid, cout = cfg['input_channel'], cfg['hidden_channel'], cfg['out_channel']
    heads, dh = cfg['heads'], cfg['dim_head']
    inner = heads * dh
    R = cfg['block_size'] + 2 * cfg['halo_size']
    keys = iter(jax.random.split(key, 16 + 2 * cfg['blocks']))

    def n(k, shape, scale=0.05):
        return scale * jax.random.normal(k, shape, jnp.float32)

    return {
        'stem_w': n(next(keys), (cin, hid)),
        'blocks': [{'w1': n(next(keys), (3, 3, hid, hid)),
                    'w2': n(next(keys), (3, 3, hid, hid))}
                   for _ in range(cfg['blocks'])],
        'attn': {'wq': n(next(keys), (hid, inner)),
                 'wkv': n(next(keys), (hid, 2 * inner)),
                 'wo': n(next(keys), (inner, hid)),
                 'bo': n(next(keys), (hid,)),
                 'rel_h': n(next(keys), (2 * R - 1, dh), dh ** -0.5),
                 'rel_w': n(next(keys), (2 * R - 1, dh), dh ** -0.5)},
        'fusion_w': n(next(keys), (3, 3, 2 * hid, hid)),
        'final_w': n(next(keys), (hid, cout)),
        'final_b': n(next(keys), (cout,)),
    }


# ----------------------------- main -----------------------------

if __name__ == "__main__":
    cfg = dict(input_channel=8, out_channel=4, hidden_channel=32, blocks=2,
               block_size=8, halo_size=4, dim_head=16, heads=4)
    key = jax.random.PRNGKey(0)
    kx, kp = jax.random.split(key)

    x = jax.random.normal(kx, (2, cfg['input_channel'], 16, 16), jnp.float32)
    params = init_params(kp, cfg)

    fwd = jax.jit(lambda xx, pp: halo_res_pre_forward(xx, pp, cfg))
    y = fwd(x, params)
    jax.block_until_ready(y)

    assert y.shape == (2, cfg['out_channel'], 16, 16), y.shape
    assert bool(jnp.all(jnp.isfinite(y)))
    print("KERNEL_OK")
</pallas_src>

<mosaic_0001>
module attributes {stable_mosaic.version = 11 : i64} {
  func.func @_mm_in_relu_kernel(%arg0: i32, %arg1: memref<1x256x8xf32, #tpu.memory_space<vmem>>, %arg2: memref<8x32xf32, #tpu.memory_space<vmem>>, %arg3: memref<1x256x32xf32, #tpu.memory_space<vmem>>) attributes {dimension_semantics = [#tpu.dimension_semantics<parallel>], iteration_bounds = array<i64: 2>, scalar_prefetch = 0 : i64, scratch_operands = 0 : i64, tpu.core_type = #tpu.core_type<tc>, window_params = [{transform_indices = @transform_0, window_bounds = array<i64: 1, 256, 8>}, {pipeline_mode = #tpu.pipeline_mode<synchronous>, transform_indices = @transform_1, window_bounds = array<i64: 8, 32>}, {transform_indices = @transform_2, window_bounds = array<i64: 1, 256, 32>}]} {
    %c0 = arith.constant 0 : index
    %c0_0 = arith.constant 0 : index
    %c0_1 = arith.constant 0 : index
    %0 = vector.load %arg1[%c0, %c0_0, %c0_1] : memref<1x256x8xf32, #tpu.memory_space<vmem>>, vector<1x256x8xf32>
    %1 = vector.shape_cast %0 : vector<1x256x8xf32> to vector<256x8xf32>
    %2 = arith.truncf %1 : vector<256x8xf32> to vector<256x8xbf16>
    %c0_2 = arith.constant 0 : index
    %c0_3 = arith.constant 0 : index
    %3 = vector.load %arg2[%c0_2, %c0_3] : memref<8x32xf32, #tpu.memory_space<vmem>>, vector<8x32xf32>
    %4 = arith.truncf %3 : vector<8x32xf32> to vector<8x32xbf16>
    %cst = arith.constant dense<0.000000e+00> : vector<256x32xf32>
    %5 = tpu.matmul %2, %4, %cst {dimension_numbers = #tpu.dot_dimension_numbers<[1], [0], [0], [1], [0, 0, 1, 1], [], []>} : vector<256x8xbf16>, vector<8x32xbf16>, vector<256x32xf32> -> vector<256x32xf32>
    %cst_4 = arith.constant dense<0.000000e+00> : vector<32xf32>
    %6 = vector.multi_reduction <add>, %5, %cst_4 [0] : vector<256x32xf32> to vector<32xf32>
    %7 = vector.shape_cast %6 : vector<32xf32> to vector<1x32xf32>
    %cst_5 = arith.constant 2.560000e+02 : f32
    %8 = vector.broadcast %cst_5 : f32 to vector<1x32xf32>
    %9 = arith.divf %7, %8 : vector<1x32xf32>
    %10 = arith.mulf %5, %5 : vector<256x32xf32>
    %cst_6 = arith.constant dense<0.000000e+00> : vector<32xf32>
    %11 = vector.multi_reduction <add>, %10, %cst_6 [0] : vector<256x32xf32> to vector<32xf32>
    %12 = vector.shape_cast %11 : vector<32xf32> to vector<1x32xf32>
    %cst_7 = arith.constant 2.560000e+02 : f32
    %13 = vector.broadcast %cst_7 : f32 to vector<1x32xf32>
    %14 = arith.divf %12, %13 : vector<1x32xf32>
    %15 = vector.broadcast %9 : vector<1x32xf32> to vector<256x32xf32>
    %16 = arith.subf %5, %15 : vector<256x32xf32>
    %17 = arith.mulf %9, %9 : vector<1x32xf32>
    %18 = arith.subf %14, %17 : vector<1x32xf32>
    %cst_8 = arith.constant 9.99999974E-6 : f32
    %19 = vector.broadcast %cst_8 : f32 to vector<1x32xf32>
    %20 = arith.addf %18, %19 : vector<1x32xf32>
    %21 = math.rsqrt %20 : vector<1x32xf32>
    %22 = vector.broadcast %21 : vector<1x32xf32> to vector<256x32xf32>
    %23 = arith.mulf %16, %22 : vector<256x32xf32>
    %cst_9 = arith.constant 0.000000e+00 : f32
    %24 = vector.broadcast %cst_9 : f32 to vector<256x32xf32>
    %25 = arith.maximumf %23, %24 : vector<256x32xf32>
    %c0_10 = arith.constant 0 : index
    %c0_11 = arith.constant 0 : index
    %c0_12 = arith.constant 0 : index
    %26 = vector.load %arg3[%c0_10, %c0_11, %c0_12] : memref<1x256x32xf32, #tpu.memory_space<vmem>>, vector<1x256x32xf32>
    %27 = vector.shape_cast %26 : vector<1x256x32xf32> to vector<256x32xf32>
    %28 = vector.shape_cast %25 : vector<256x32xf32> to vector<1x256x32xf32>
    tpu.vector_store %arg3[%c0_10, %c0_11, %c0_12], %28 {strides = array<i32>} : memref<1x256x32xf32, #tpu.memory_space<vmem>>, vector<1x256x32xf32>,
    return
  }
  func.func @transform_0(%arg0: i32) -> (i32, i32, i32) {
    %c0_i32 = arith.constant 0 : i32
    %c0_i32_0 = arith.constant 0 : i32
    %c0_i32_1 = arith.constant 0 : i32
    return %arg0, %c0_i32, %c0_i32_0 : i32, i32, i32
  }
  func.func @transform_1(%arg0: i32) -> (i32, i32) {
    %c0_i32 = arith.constant 0 : i32
    %c0_i32_0 = arith.constant 0 : i32
    %c0_i32_1 = arith.constant 0 : i32
    return %c0_i32, %c0_i32_0 : i32, i32
  }
  func.func @transform_2(%arg0: i32) -> (i32, i32, i32) {
    %c0_i32 = arith.constant 0 : i32
    %c0_i32_0 = arith.constant 0 : i32
    %c0_i32_1 = arith.constant 0 : i32
    return %arg0, %c0_i32, %c0_i32_0 : i32, i32, i32
  }
}

module attributes {stable_mosaic.version = 11 : i64} {
  func.func @_matmul_kernel(%arg0: i32, %arg1: memref<128x32xf32, #tpu.memory_space<vmem>>, %arg2: memref<32x192xf32, #tpu.memory_space<vmem>>, %arg3: memref<128x192xf32, #tpu.memory_space<vmem>>) attributes {dimension_semantics = [#tpu.dimension_semantics<parallel>], iteration_bounds = array<i64: 9>, scalar_prefetch = 0 : i64, scratch_operands = 0 : i64, tpu.core_type = #tpu.core_type<tc>, window_params = [{transform_indices = @transform_0, window_bounds = array<i64: 128, 32>}, {pipeline_mode = #tpu.pipeline_mode<synchronous>, transform_indices = @transform_1, window_bounds = array<i64: 32, 192>}, {transform_indices = @transform_2, window_bounds = array<i64: 128, 192>}]} {
    %c0 = arith.constant 0 : index
    %c0_0 = arith.constant 0 : index
    %0 = vector.load %arg1[%c0, %c0_0] : memref<128x32xf32, #tpu.memory_space<vmem>>, vector<128x32xf32>
    %1 = arith.truncf %0 : vector<128x32xf32> to vector<128x32xbf16>
    %c0_1 = arith.constant 0 : index
    %c0_2 = arith.constant 0 : index
    %2 = vector.load %arg2[%c0_1, %c0_2] : memref<32x192xf32, #tpu.memory_space<vmem>>, vector<32x192xf32>
    %3 = arith.truncf %2 : vector<32x192xf32> to vector<32x192xbf16>
    %cst = arith.constant dense<0.000000e+00> : vector<128x192xf32>
    %4 = tpu.matmul %1, %3, %cst {dimension_numbers = #tpu.dot_dimension_numbers<[1], [0], [0], [1], [0, 0, 1, 1], [], []>} : vector<128x32xbf16>, vector<32x192xbf16>, vector<128x192xf32> -> vector<128x192xf32>
    %c0_3 = arith.constant 0 : index
    %c0_4 = arith.constant 0 : index
    %5 = vector.load %arg3[%c0_3, %c0_4] : memref<128x192xf32, #tpu.memory_space<vmem>>, vector<128x192xf32>
    tpu.vector_store %arg3[%c0_3, %c0_4], %4 {strides = array<i32>} : memref<128x192xf32, #tpu.memory_space<vmem>>, vector<128x192xf32>,
    return
  }
  func.func @transform_0(%arg0: i32) -> (i32, i32) {
    %c0_i32 = arith.constant 0 : i32
    %c0_i32_0 = arith.constant 0 : i32
    return %arg0, %c0_i32 : i32, i32
  }
  func.func @transform_1(%arg0: i32) -> (i32, i32) {
    %c0_i32 = arith.constant 0 : i32
    %c0_i32_0 = arith.constant 0 : i32
    %c0_i32_1 = arith.constant 0 : i32
    return %c0_i32, %c0_i32_0 : i32, i32
  }
  func.func @transform_2(%arg0: i32) -> (i32, i32) {
    %c0_i32 = arith.constant 0 : i32
    %c0_i32_0 = arith.constant 0 : i32
    return %arg0, %c0_i32 : i32, i32
  }
}

module attributes {stable_mosaic.version = 11 : i64} {
  func.func @_halo_attn_kernel(%arg0: i32, %arg1: memref<1x4x64x16xf32, #tpu.memory_space<vmem>>, %arg2: memref<1x4x256x16xf32, #tpu.memory_space<vmem>>, %arg3: memref<1x4x256x16xf32, #tpu.memory_space<vmem>>, %arg4: memref<1x4x64x256xf32, #tpu.memory_space<vmem>>, %arg5: memref<256x256xf32, #tpu.memory_space<vmem>>, %arg6: memref<1x1x256xf32, #tpu.memory_space<vmem>>, %arg7: memref<4x16x32xf32, #tpu.memory_space<vmem>>, %arg8: memref<1x32xf32, #tpu.memory_space<vmem>>, %arg9: memref<1x64x32xf32, #tpu.memory_space<vmem>>) attributes {dimension_semantics = [#tpu.dimension_semantics<parallel>], iteration_bounds = array<i64: 8>, scalar_prefetch = 0 : i64, scratch_operands = 0 : i64, tpu.core_type = #tpu.core_type<tc>, window_params = [{transform_indices = @transform_0, window_bounds = array<i64: 1, 4, 64, 16>}, {transform_indices = @transform_1, window_bounds = array<i64: 1, 4, 256, 16>}, {transform_indices = @transform_2, window_bounds = array<i64: 1, 4, 256, 16>}, {transform_indices = @transform_3, window_bounds = array<i64: 1, 4, 64, 256>}, {pipeline_mode = #tpu.pipeline_mode<synchronous>, transform_indices = @transform_4, window_bounds = array<i64: 256, 256>}, {transform_indices = @transform_5, window_bounds = array<i64: 1, 1, 256>}, {pipeline_mode = #tpu.pipeline_mode<synchronous>, transform_indices = @transform_6, window_bounds = array<i64: 4, 16, 32>}, {pipeline_mode = #tpu.pipeline_mode<synchronous>, transform_indices = @transform_7, window_bounds = array<i64: 1, 32>}, {transform_indices = @transform_8, window_bounds = array<i64: 1, 64, 32>}]} {
    %c0 = arith.constant 0 : index
    %c0_0 = arith.constant 0 : index
    %c0_1 = arith.constant 0 : index
    %c0_2 = arith.constant 0 : index
    %0 = vector.load %arg4[%c0, %c0_0, %c0_1, %c0_2] : memref<1x4x64x256xf32, #tpu.memory_space<vmem>>, vector<1x4x64x256xf32>
    %1 = vector.shape_cast %0 : vector<1x4x64x256xf32> to vector<4x64x256xf32>
    %2 = vector.shape_cast %1 : vector<4x64x256xf32> to vector<256x256xf32>
    %3 = arith.truncf %2 : vector<256x256xf32> to vector<256x256xbf16>
    %c0_3 = arith.constant 0 : index
    %c0_4 = arith.constant 0 : index
    %4 = vector.load %arg5[%c0_3, %c0_4] : memref<256x256xf32, #tpu.memory_space<vmem>>, vector<256x256xf32>
    %5 = arith.truncf %4 : vector<256x256xf32> to vector<256x256xbf16>
    %cst = arith.constant dense<0.000000e+00> : vector<256x256xf32>
    %6 = tpu.matmul %3, %5, %cst {dimension_numbers = #tpu.dot_dimension_numbers<[1], [0], [0], [1], [0, 0, 1, 1], [], []>} : vector<256x256xbf16>, vector<256x256xbf16>, vector<256x256xf32> -> vector<256x256xf32>
    %7 = vector.shape_cast %6 : vector<256x256xf32> to vector<4x64x256xf32>
    %c0_5 = arith.constant 0 : index
    %c0_6 = arith.constant 0 : index
    %c0_7 = arith.constant 0 : index
    %8 = vector.load %arg6[%c0_5, %c0_6, %c0_7] : memref<1x1x256xf32, #tpu.memory_space<vmem>>, vector<1x1x256xf32>
    %9 = vector.shape_cast %8 : vector<1x1x256xf32> to vector<1x256xf32>
    %cst_8 = arith.constant 0.000000e+00 : f32
    %10 = vector.broadcast %cst_8 : f32 to vector<64x32xf32>
    %c0_9 = arith.constant 0 : index
    %c0_10 = arith.constant 0 : index
    %c0_11 = arith.constant 0 : index
    %c0_12 = arith.constant 0 : index
    %11 = vector.load %arg1[%c0_9, %c0_10, %c0_11, %c0_12] : memref<1x4x64x16xf32, #tpu.memory_space<vmem>>, vector<1x1x64x16xf32>
    %12 = vector.shape_cast %11 : vector<1x1x64x16xf32> to vector<64x16xf32>
    %13 = arith.truncf %12 : vector<64x16xf32> to vector<64x16xbf16>
    %c0_13 = arith.constant 0 : index
    %c0_14 = arith.constant 0 : index
    %c0_15 = arith.constant 0 : index
    %c0_16 = arith.constant 0 : index
    %14 = vector.load %arg2[%c0_13, %c0_14, %c0_15, %c0_16] : memref<1x4x256x16xf32, #tpu.memory_space<vmem>>, vector<1x1x256x16xf32>
    %15 = vector.shape_cast %14 : vector<1x1x256x16xf32> to vector<256x16xf32>
    %16 = arith.truncf %15 : vector<256x16xf32> to vector<256x16xbf16>
    %c0_17 = arith.constant 0 : index
    %c0_18 = arith.constant 0 : index
    %c0_19 = arith.constant 0 : index
    %c0_20 = arith.constant 0 : index
    %17 = vector.load %arg3[%c0_17, %c0_18, %c0_19, %c0_20] : memref<1x4x256x16xf32, #tpu.memory_space<vmem>>, vector<1x1x256x16xf32>
    %18 = vector.shape_cast %17 : vector<1x1x256x16xf32> to vector<256x16xf32>
    %19 = arith.truncf %18 : vector<256x16xf32> to vector<256x16xbf16>
    %cst_21 = arith.constant dense<0.000000e+00> : vector<64x256xf32>
    %20 = tpu.matmul %13, %16, %cst_21 {dimension_numbers = #tpu.dot_dimension_numbers<[1], [1], [0], [0], [0, 0, 1, 0], [], []>} : vector<64x16xbf16>, vector<256x16xbf16>, vector<64x256xf32> -> vector<64x256xf32>
    %21 = vector.extract_strided_slice %7 {offsets = [0, 0, 0], sizes = [1, 64, 256], strides = [1, 1, 1]} : vector<4x64x256xf32> to vector<1x64x256xf32>
    %22 = vector.shape_cast %21 : vector<1x64x256xf32> to vector<64x256xf32>
    %23 = arith.addf %20, %22 : vector<64x256xf32>
    %24 = vector.broadcast %9 : vector<1x256xf32> to vector<64x256xf32>
    %25 = arith.addf %23, %24 : vector<64x256xf32>
    %cst_22 = arith.constant dense<0xFF800000> : vector<64xf32>
    %26 = vector.multi_reduction <maximumf>, %25, %cst_22 [1] : vector<64x256xf32> to vector<64xf32>
    %27 = vector.shape_cast %26 : vector<64xf32> to vector<64x1xf32>
    %28 = vector.broadcast %27 : vector<64x1xf32> to vector<64x256xf32>
    %29 = arith.subf %25, %28 : vector<64x256xf32>
    %30 = math.exp %29 : vector<64x256xf32>
    %cst_23 = arith.constant dense<0.000000e+00> : vector<64xf32>
    %31 = vector.multi_reduction <add>, %30, %cst_23 [1] : vector<64x256xf32> to vector<64xf32>
    %32 = vector.shape_cast %31 : vector<64xf32> to vector<64x1xf32>
    %33 = vector.broadcast %32 : vector<64x1xf32> to vector<64x256xf32>
    %34 = arith.divf %30, %33 : vector<64x256xf32>
    %35 = arith.truncf %34 : vector<64x256xf32> to vector<64x256xbf16>
    %cst_24 = arith.constant dense<0.000000e+00> : vector<64x16xf32>
    %36 = tpu.matmul %35, %19, %cst_24 {dimension_numbers = #tpu.dot_dimension_numbers<[1], [0], [0], [1], [0, 0, 1, 1], [], []>} : vector<64x256xbf16>, vector<256x16xbf16>, vector<64x16xf32> -> vector<64x16xf32>
    %37 = arith.truncf %36 : vector<64x16xf32> to vector<64x16xbf16>
    %c0_25 = arith.constant 0 : index
    %c0_26 = arith.constant 0 : index
    %c0_27 = arith.constant 0 : index
    %38 = vector.load %arg7[%c0_25, %c0_26, %c0_27] : memref<4x16x32xf32, #tpu.memory_space<vmem>>, vector<1x16x32xf32>
    %39 = vector.shape_cast %38 : vector<1x16x32xf32> to vector<16x32xf32>
    %40 = arith.truncf %39 : vector<16x32xf32> to vector<16x32xbf16>
    %cst_28 = arith.constant dense<0.000000e+00> : vector<64x32xf32>
    %41 = tpu.matmul %37, %40, %cst_28 {dimension_numbers = #tpu.dot_dimension_numbers<[1], [0], [0], [1], [0, 0, 1, 1], [], []>} : vector<64x16xbf16>, vector<16x32xbf16>, vector<64x32xf32> -> vector<64x32xf32>
    %42 = arith.addf %10, %41 : vector<64x32xf32>
    %c0_29 = arith.constant 0 : index
    %c1 = arith.constant 1 : index
    %c0_30 = arith.constant 0 : index
    %c0_31 = arith.constant 0 : index
    %43 = vector.load %arg1[%c0_29, %c1, %c0_30, %c0_31] : memref<1x4x64x16xf32, #tpu.memory_space<vmem>>, vector<1x1x64x16xf32>
    %44 = vector.shape_cast %43 : vector<1x1x64x16xf32> to vector<64x16xf32>
    %45 = arith.truncf %44 : vector<64x16xf32> to vector<64x16xbf16>
    %c0_32 = arith.constant 0 : index
    %c1_33 = arith.constant 1 : index
    %c0_34 = arith.constant 0 : index
    %c0_35 = arith.constant 0 : index
    %46 = vector.load %arg2[%c0_32, %c1_33, %c0_34, %c0_35] : memref<1x4x256x16xf32, #tpu.memory_space<vmem>>, vector<1x1x256x16xf32>
    %47 = vector.shape_cast %46 : vector<1x1x256x16xf32> to vector<256x16xf32>
    %48 = arith.truncf %47 : vector<256x16xf32> to vector<256x16xbf16>
    %c0_36 = arith.constant 0 : index
    %c1_37 = arith.constant 1 : index
    %c0_38 = arith.constant 0 : index
    %c0_39 = arith.constant 0 : index
    %49 = vector.load %arg3[%c0_36, %c1_37, %c0_38, %c0_39] : memref<1x4x256x16xf32, #tpu.memory_space<vmem>>, vector<1x1x256x16xf32>
    %50 = vector.shape_cast %49 : vector<1x1x256x16xf32> to vector<256x16xf32>
    %51 = arith.truncf %50 : vector<256x16xf32> to vector<256x16xbf16>
    %cst_40 = arith.constant dense<0.000000e+00> : vector<64x256xf32>
    %52 = tpu.matmul %45, %48, %cst_40 {dimension_numbers = #tpu.dot_dimension_numbers<[1], [1], [0], [0], [0, 0, 1, 0], [], []>} : vector<64x16xbf16>, vector<256x16xbf16>, vector<64x256xf32> -> vector<64x256xf32>
    %53 = vector.extract_strided_slice %7 {offsets = [1, 0, 0], sizes = [1, 64, 256], strides = [1, 1, 1]} : vector<4x64x256xf32> to vector<1x64x256xf32>
    %54 = vector.shape_cast %53 : vector<1x64x256xf32> to vector<64x256xf32>
    %55 = arith.addf %52, %54 : vector<64x256xf32>
    %56 = vector.broadcast %9 : vector<1x256xf32> to vector<64x256xf32>
    %57 = arith.addf %55, %56 : vector<64x256xf32>
    %cst_41 = arith.constant dense<0xFF800000> : vector<64xf32>
    %58 = vector.multi_reduction <maximumf>, %57, %cst_41 [1] : vector<64x256xf32> to vector<64xf32>
    %59 = vector.shape_cast %58 : vector<64xf32> to vector<64x1xf32>
    %60 = vector.broadcast %59 : vector<64x1xf32> to vector<64x256xf32>
    %61 = arith.subf %57, %60 : vector<64x256xf32>
    %62 = math.exp %61 : vector<64x256xf32>
    %cst_42 = arith.constant dense<0.000000e+00> : vector<64xf32>
    %63 = vector.multi_reduction <add>, %62, %cst_42 [1] : vector<64x256xf32> to vector<64xf32>
    %64 = vector.shape_cast %63 : vector<64xf32> to vector<64x1xf32>
    %65 = vector.broadcast %64 : vector<64x1xf32> to vector<64x256xf32>
    %66 = arith.divf %62, %65 : vector<64x256xf32>
    %67 = arith.truncf %66 : vector<64x256xf32> to vector<64x256xbf16>
    %cst_43 = arith.constant dense<0.000000e+00> : vector<64x16xf32>
    %68 = tpu.matmul %67, %51, %cst_43 {dimension_numbers = #tpu.dot_dimension_numbers<[1], [0], [0], [1], [0, 0, 1, 1], [], []>} : vector<64x256xbf16>, vector<256x16xbf16>, vector<64x16xf32> -> vector<64x16xf32>
    %69 = arith.truncf %68 : vector<64x16xf32> to vector<64x16xbf16>
    %c1_44 = arith.constant 1 : index
    %c0_45 = arith.constant 0 : index
    %c0_46 = arith.constant 0 : index
    %70 = vector.load %arg7[%c1_44, %c0_45, %c0_46] : memref<4x16x32xf32, #tpu.memory_space<vmem>>, vector<1x16x32xf32>
    %71 = vector.shape_cast %70 : vector<1x16x32xf32> to vector<16x32xf32>
    %72 = arith.truncf %71 : vector<16x32xf32> to vector<16x32xbf16>
    %cst_47 = arith.constant dense<0.000000e+00> : vector<64x32xf32>
    %73 = tpu.matmul %69, %72, %cst_47 {dimension_numbers = #tpu.dot_dimension_numbers<[1], [0], [0], [1], [0, 0, 1, 1], [], []>} : vector<64x16xbf16>, vector<16x32xbf16>, vector<64x32xf32> -> vector<64x32xf32>
    %74 = arith.addf %42, %73 : vector<64x32xf32>
    %c0_48 = arith.constant 0 : index
    %c2 = arith.constant 2 : index
    %c0_49 = arith.constant 0 : index
    %c0_50 = arith.constant 0 : index
    %75 = vector.load %arg1[%c0_48, %c2, %c0_49, %c0_50] : memref<1x4x64x16xf32, #tpu.memory_space<vmem>>, vector<1x1x64x16xf32>
    %76 = vector.shape_cast %75 : vector<1x1x64x16xf32> to vector<64x16xf32>
    %77 = arith.truncf %76 : vector<64x16xf32> to vector<64x16xbf16>
    %c0_51 = arith.constant 0 : index
    %c2_52 = arith.constant 2 : index
    %c0_53 = arith.constant 0 : index
    %c0_54 = arith.constant 0 : index
    %78 = vector.load %arg2[%c0_51, %c2_52, %c0_53, %c0_54] : memref<1x4x256x16xf32, #tpu.memory_space<vmem>>, vector<1x1x256x16xf32>
    %79 = vector.shape_cast %78 : vector<1x1x256x16xf32> to vector<256x16xf32>
    %80 = arith.truncf %79 : vector<256x16xf32> to vector<256x16xbf16>
    %c0_55 = arith.constant 0 : index
    %c2_56 = arith.constant 2 : index
    %c0_57 = arith.constant 0 : index
    %c0_58 = arith.constant 0 : index
    %81 = vector.load %arg3[%c0_55, %c2_56, %c0_57, %c0_58] : memref<1x4x256x16xf32, #tpu.memory_space<vmem>>, vector<1x1x256x16xf32>
    %82 = vector.shape_cast %81 : vector<1x1x256x16xf32> to vector<256x16xf32>
    %83 = arith.truncf %82 : vector<256x16xf32> to vector<256x16xbf16>
    %cst_59 = arith.constant dense<0.000000e+00> : vector<64x256xf32>
    %84 = tpu.matmul %77, %80, %cst_59 {dimension_numbers = #tpu.dot_dimension_numbers<[1], [1], [0], [0], [0, 0, 1, 0], [], []>} : vector<64x16xbf16>, vector<256x16xbf16>, vector<64x256xf32> -> vector<64x256xf32>
    %85 = vector.extract_strided_slice %7 {offsets = [2, 0, 0], sizes = [1, 64, 256], strides = [1, 1, 1]} : vector<4x64x256xf32> to vector<1x64x256xf32>
    %86 = vector.shape_cast %85 : vector<1x64x256xf32> to vector<64x256xf32>
    %87 = arith.addf %84, %86 : vector<64x256xf32>
    %88 = vector.broadcast %9 : vector<1x256xf32> to vector<64x256xf32>
    %89 = arith.addf %87, %88 : vector<64x256xf32>
    %cst_60 = arith.constant dense<0xFF800000> : vector<64xf32>
    %90 = vector.multi_reduction <maximumf>, %89, %cst_60 [1] : vector<64x256xf32> to vector<64xf32>
    %91 = vector.shape_cast %90 : vector<64xf32> to vector<64x1xf32>
    %92 = vector.broadcast %91 : vector<64x1xf32> to vector<64x256xf32>
    %93 = arith.subf %89, %92 : vector<64x256xf32>
    %94 = math.exp %93 : vector<64x256xf32>
    %cst_61 = arith.constant dense<0.000000e+00> : vector<64xf32>
    %95 = vector.multi_reduction <add>, %94, %cst_61 [1] : vector<64x256xf32> to vector<64xf32>
    %96 = vector.shape_cast %95 : vector<64xf32> to vector<64x1xf32>
    %97 = vector.broadcast %96 : vector<64x1xf32> to vector<64x256xf32>
    %98 = arith.divf %94, %97 : vector<64x256xf32>
    %99 = arith.truncf %98 : vector<64x256xf32> to vector<64x256xbf16>
    %cst_62 = arith.constant dense<0.000000e+00> : vector<64x16xf32>
    %100 = tpu.matmul %99, %83, %cst_62 {dimension_numbers = #tpu.dot_dimension_numbers<[1], [0], [0], [1], [0, 0, 1, 1], [], []>} : vector<64x256xbf16>, vector<256x16xbf16>, vector<64x16xf32> -> vector<64x16xf32>
    %101 = arith.truncf %100 : vector<64x16xf32> to vector<64x16xbf16>
    %c2_63 = arith.constant 2 : index
    %c0_64 = arith.constant 0 : index
    %c0_65 = arith.constant 0 : index
    %102 = vector.load %arg7[%c2_63, %c0_64, %c0_65] : memref<4x16x32xf32, #tpu.memory_space<vmem>>, vector<1x16x32xf32>
    %103 = vector.shape_cast %102 : vector<1x16x32xf32> to vector<16x32xf32>
    %104 = arith.truncf %103 : vector<16x32xf32> to vector<16x32xbf16>
    %cst_66 = arith.constant dense<0.000000e+00> : vector<64x32xf32>
    %105 = tpu.matmul %101, %104, %cst_66 {dimension_numbers = #tpu.dot_dimension_numbers<[1], [0], [0], [1], [0, 0, 1, 1], [], []>} : vector<64x16xbf16>, vector<16x32xbf16>, vector<64x32xf32> -> vector<64x32xf32>
    %106 = arith.addf %74, %105 : vector<64x32xf32>
    %c0_67 = arith.constant 0 : index
    %c3 = arith.constant 3 : index
    %c0_68 = arith.constant 0 : index
    %c0_69 = arith.constant 0 : index
    %107 = vector.load %arg1[%c0_67, %c3, %c0_68, %c0_69] : memref<1x4x64x16xf32, #tpu.memory_space<vmem>>, vector<1x1x64x16xf32>
    %108 = vector.shape_cast %107 : vector<1x1x64x16xf32> to vector<64x16xf32>
    %109 = arith.truncf %108 : vector<64x16xf32> to vector<64x16xbf16>
    %c0_70 = arith.constant 0 : index
    %c3_71 = arith.constant 3 : index
    %c0_72 = arith.constant 0 : index
    %c0_73 = arith.constant 0 : index
    %110 = vector.load %arg2[%c0_70, %c3_71, %c0_72, %c0_73] : memref<1x4x256x16xf32, #tpu.memory_space<vmem>>, vector<1x1x256x16xf32>
    %111 = vector.shape_cast %110 : vector<1x1x256x16xf32> to vector<256x16xf32>
    %112 = arith.truncf %111 : vector<256x16xf32> to vector<256x16xbf16>
    %c0_74 = arith.constant 0 : index
    %c3_75 = arith.constant 3 : index
    %c0_76 = arith.constant 0 : index
    %c0_77 = arith.constant 0 : index
    %113 = vector.load %arg3[%c0_74, %c3_75, %c0_76, %c0_77] : memref<1x4x256x16xf32, #tpu.memory_space<vmem>>, vector<1x1x256x16xf32>
    %114 = vector.shape_cast %113 : vector<1x1x256x16xf32> to vector<256x16xf32>
    %115 = arith.truncf %114 : vector<256x16xf32> to vector<256x16xbf16>
    %cst_78 = arith.constant dense<0.000000e+00> : vector<64x256xf32>
    %116 = tpu.matmul %109, %112, %cst_78 {dimension_numbers = #tpu.dot_dimension_numbers<[1], [1], [0], [0], [0, 0, 1, 0], [], []>} : vector<64x16xbf16>, vector<256x16xbf16>, vector<64x256xf32> -> vector<64x256xf32>
    %117 = vector.extract_strided_slice %7 {offsets = [3, 0, 0], sizes = [1, 64, 256], strides = [1, 1, 1]} : vector<4x64x256xf32> to vector<1x64x256xf32>
    %118 = vector.shape_cast %117 : vector<1x64x256xf32> to vector<64x256xf32>
    %119 = arith.addf %116, %118 : vector<64x256xf32>
    %120 = vector.broadcast %9 : vector<1x256xf32> to vector<64x256xf32>
    %121 = arith.addf %119, %120 : vector<64x256xf32>
    %cst_79 = arith.constant dense<0xFF800000> : vector<64xf32>
    %122 = vector.multi_reduction <maximumf>, %121, %cst_79 [1] : vector<64x256xf32> to vector<64xf32>
    %123 = vector.shape_cast %122 : vector<64xf32> to vector<64x1xf32>
    %124 = vector.broadcast %123 : vector<64x1xf32> to vector<64x256xf32>
    %125 = arith.subf %121, %124 : vector<64x256xf32>
    %126 = math.exp %125 : vector<64x256xf32>
    %cst_80 = arith.constant dense<0.000000e+00> : vector<64xf32>
    %127 = vector.multi_reduction <add>, %126, %cst_80 [1] : vector<64x256xf32> to vector<64xf32>
    %128 = vector.shape_cast %127 : vector<64xf32> to vector<64x1xf32>
    %129 = vector.broadcast %128 : vector<64x1xf32> to vector<64x256xf32>
    %130 = arith.divf %126, %129 : vector<64x256xf32>
    %131 = arith.truncf %130 : vector<64x256xf32> to vector<64x256xbf16>
    %cst_81 = arith.constant dense<0.000000e+00> : vector<64x16xf32>
    %132 = tpu.matmul %131, %115, %cst_81 {dimension_numbers = #tpu.dot_dimension_numbers<[1], [0], [0], [1], [0, 0, 1, 1], [], []>} : vector<64x256xbf16>, vector<256x16xbf16>, vector<64x16xf32> -> vector<64x16xf32>
    %133 = arith.truncf %132 : vector<64x16xf32> to vector<64x16xbf16>
    %c3_82 = arith.constant 3 : index
    %c0_83 = arith.constant 0 : index
    %c0_84 = arith.constant 0 : index
    %134 = vector.load %arg7[%c3_82, %c0_83, %c0_84] : memref<4x16x32xf32, #tpu.memory_space<vmem>>, vector<1x16x32xf32>
    %135 = vector.shape_cast %134 : vector<1x16x32xf32> to vector<16x32xf32>
    %136 = arith.truncf %135 : vector<16x32xf32> to vector<16x32xbf16>
    %cst_85 = arith.constant dense<0.000000e+00> : vector<64x32xf32>
    %137 = tpu.matmul %133, %136, %cst_85 {dimension_numbers = #tpu.dot_dimension_numbers<[1], [0], [0], [1], [0, 0, 1, 1], [], []>} : vector<64x16xbf16>, vector<16x32xbf16>, vector<64x32xf32> -> vector<64x32xf32>
    %138 = arith.addf %106, %137 : vector<64x32xf32>
    %c0_86 = arith.constant 0 : index
    %c0_87 = arith.constant 0 : index
    %139 = vector.load %arg8[%c0_86, %c0_87] : memref<1x32xf32, #tpu.memory_space<vmem>>, vector<1x32xf32>
    %140 = vector.broadcast %139 : vector<1x32xf32> to vector<64x32xf32>
    %141 = arith.addf %138, %140 : vector<64x32xf32>
    %c0_88 = arith.constant 0 : index
    %c0_89 = arith.constant 0 : index
    %c0_90 = arith.constant 0 : index
    %142 = vector.load %arg9[%c0_88, %c0_89, %c0_90] : memref<1x64x32xf32, #tpu.memory_space<vmem>>, vector<1x64x32xf32>
    %143 = vector.shape_cast %142 : vector<1x64x32xf32> to vector<64x32xf32>
    %144 = vector.shape_cast %141 : vector<64x32xf32> to vector<1x64x32xf32>
    tpu.vector_store %arg9[%c0_88, %c0_89, %c0_90], %144 {strides = array<i32>} : memref<1x64x32xf32, #tpu.memory_space<vmem>>, vector<1x64x32xf32>,
    return
  }
  func.func @transform_0(%arg0: i32) -> (i32, i32, i32, i32) {
    %c0_i32 = arith.constant 0 : i32
    %c0_i32_0 = arith.constant 0 : i32
    %c0_i32_1 = arith.constant 0 : i32
    %c0_i32_2 = arith.constant 0 : i32
    return %arg0, %c0_i32, %c0_i32_0, %c0_i32_1 : i32, i32, i32, i32
  }
  func.func @transform_1(%arg0: i32) -> (i32, i32, i32, i32) {
    %c0_i32 = arith.constant 0 : i32
    %c0_i32_0 = arith.constant 0 : i32
    %c0_i32_1 = arith.constant 0 : i32
    %c0_i32_2 = arith.constant 0 : i32
    return %arg0, %c0_i32, %c0_i32_0, %c0_i32_1 : i32, i32, i32, i32
  }
  func.func @transform_2(%arg0: i32) -> (i32, i32, i32, i32) {
    %c0_i32 = arith.constant 0 : i32
    %c0_i32_0 = arith.constant 0 : i32
    %c0_i32_1 = arith.constant 0 : i32
    %c0_i32_2 = arith.constant 0 : i32
    return %arg0, %c0_i32, %c0_i32_0, %c0_i32_1 : i32, i32, i32, i32
  }
  func.func @transform_3(%arg0: i32) -> (i32, i32, i32, i32) {
    %c0_i32 = arith.constant 0 : i32
    %c0_i32_0 = arith.constant 0 : i32
    %c0_i32_1 = arith.constant 0 : i32
    %c0_i32_2 = arith.constant 0 : i32
    return %arg0, %c0_i32, %c0_i32_0, %c0_i32_1 : i32, i32, i32, i32
  }
  func.func @transform_4(%arg0: i32) -> (i32, i32) {
    %c0_i32 = arith.constant 0 : i32
    %c0_i32_0 = arith.constant 0 : i32
    %c0_i32_1 = arith.constant 0 : i32
    return %c0_i32, %c0_i32_0 : i32, i32
  }
  func.func @transform_5(%arg0: i32) -> (i32, i32, i32) {
    %c0_i32 = arith.constant 0 : i32
    %c0_i32_0 = arith.constant 0 : i32
    %c0_i32_1 = arith.constant 0 : i32
    return %arg0, %c0_i32, %c0_i32_0 : i32, i32, i32
  }
  func.func @transform_6(%arg0: i32) -> (i32, i32, i32) {
    %c0_i32 = arith.constant 0 : i32
    %c0_i32_0 = arith.constant 0 : i32
    %c0_i32_1 = arith.constant 0 : i32
    %c0_i32_2 = arith.constant 0 : i32
    return %c0_i32, %c0_i32_0, %c0_i32_1 : i32, i32, i32
  }
  func.func @transform_7(%arg0: i32) -> (i32, i32) {
    %c0_i32 = arith.constant 0 : i32
    %c0_i32_0 = arith.constant 0 : i32
    %c0_i32_1 = arith.constant 0 : i32
    return %c0_i32, %c0_i32_0 : i32, i32
  }
  func.func @transform_8(%arg0: i32) -> (i32, i32, i32) {
    %c0_i32 = arith.constant 0 : i32
    %c0_i32_0 = arith.constant 0 : i32
    %c0_i32_1 = arith.constant 0 : i32
    return %arg0, %c0_i32, %c0_i32_0 : i32, i32, i32
  }
}

module attributes {stable_mosaic.version = 11 : i64} {
  func.func @_mm_in_relu_kernel(%arg0: i32, %arg1: memref<1x256x288xf32, #tpu.memory_space<vmem>>, %arg2: memref<288x32xf32, #tpu.memory_space<vmem>>, %arg3: memref<1x256x32xf32, #tpu.memory_space<vmem>>) attributes {dimension_semantics = [#tpu.dimension_semantics<parallel>], iteration_bounds = array<i64: 2>, scalar_prefetch = 0 : i64, scratch_operands = 0 : i64, tpu.core_type = #tpu.core_type<tc>, window_params = [{transform_indices = @transform_0, window_bounds = array<i64: 1, 256, 288>}, {pipeline_mode = #tpu.pipeline_mode<synchronous>, transform_indices = @transform_1, window_bounds = array<i64: 288, 32>}, {transform_indices = @transform_2, window_bounds = array<i64: 1, 256, 32>}]} {
    %c0 = arith.constant 0 : index
    %c0_0 = arith.constant 0 : index
    %c0_1 = arith.constant 0 : index
    %0 = vector.load %arg1[%c0, %c0_0, %c0_1] : memref<1x256x288xf32, #tpu.memory_space<vmem>>, vector<1x256x288xf32>
    %1 = vector.shape_cast %0 : vector<1x256x288xf32> to vector<256x288xf32>
    %2 = arith.truncf %1 : vector<256x288xf32> to vector<256x288xbf16>
    %c0_2 = arith.constant 0 : index
    %c0_3 = arith.constant 0 : index
    %3 = vector.load %arg2[%c0_2, %c0_3] : memref<288x32xf32, #tpu.memory_space<vmem>>, vector<288x32xf32>
    %4 = arith.truncf %3 : vector<288x32xf32> to vector<288x32xbf16>
    %cst = arith.constant dense<0.000000e+00> : vector<256x32xf32>
    %5 = tpu.matmul %2, %4, %cst {dimension_numbers = #tpu.dot_dimension_numbers<[1], [0], [0], [1], [0, 0, 1, 1], [], []>} : vector<256x288xbf16>, vector<288x32xbf16>, vector<256x32xf32> -> vector<256x32xf32>
    %cst_4 = arith.constant dense<0.000000e+00> : vector<32xf32>
    %6 = vector.multi_reduction <add>, %5, %cst_4 [0] : vector<256x32xf32> to vector<32xf32>
    %7 = vector.shape_cast %6 : vector<32xf32> to vector<1x32xf32>
    %cst_5 = arith.constant 2.560000e+02 : f32
    %8 = vector.broadcast %cst_5 : f32 to vector<1x32xf32>
    %9 = arith.divf %7, %8 : vector<1x32xf32>
    %10 = arith.mulf %5, %5 : vector<256x32xf32>
    %cst_6 = arith.constant dense<0.000000e+00> : vector<32xf32>
    %11 = vector.multi_reduction <add>, %10, %cst_6 [0] : vector<256x32xf32> to vector<32xf32>
    %12 = vector.shape_cast %11 : vector<32xf32> to vector<1x32xf32>
    %cst_7 = arith.constant 2.560000e+02 : f32
    %13 = vector.broadcast %cst_7 : f32 to vector<1x32xf32>
    %14 = arith.divf %12, %13 : vector<1x32xf32>
    %15 = vector.broadcast %9 : vector<1x32xf32> to vector<256x32xf32>
    %16 = arith.subf %5, %15 : vector<256x32xf32>
    %17 = arith.mulf %9, %9 : vector<1x32xf32>
    %18 = arith.subf %14, %17 : vector<1x32xf32>
    %cst_8 = arith.constant 9.99999974E-6 : f32
    %19 = vector.broadcast %cst_8 : f32 to vector<1x32xf32>
    %20 = arith.addf %18, %19 : vector<1x32xf32>
    %21 = math.rsqrt %20 : vector<1x32xf32>
    %22 = vector.broadcast %21 : vector<1x32xf32> to vector<256x32xf32>
    %23 = arith.mulf %16, %22 : vector<256x32xf32>
    %cst_9 = arith.constant 0.000000e+00 : f32
    %24 = vector.broadcast %cst_9 : f32 to vector<256x32xf32>
    %25 = arith.maximumf %23, %24 : vector<256x32xf32>
    %c0_10 = arith.constant 0 : index
    %c0_11 = arith.constant 0 : index
    %c0_12 = arith.constant 0 : index
    %26 = vector.load %arg3[%c0_10, %c0_11, %c0_12] : memref<1x256x32xf32, #tpu.memory_space<vmem>>, vector<1x256x32xf32>
    %27 = vector.shape_cast %26 : vector<1x256x32xf32> to vector<256x32xf32>
    %28 = vector.shape_cast %25 : vector<256x32xf32> to vector<1x256x32xf32>
    tpu.vector_store %arg3[%c0_10, %c0_11, %c0_12], %28 {strides = array<i32>} : memref<1x256x32xf32, #tpu.memory_space<vmem>>, vector<1x256x32xf32>,
    return
  }
  func.func @transform_0(%arg0: i32) -> (i32, i32, i32) {
    %c0_i32 = arith.constant 0 : i32
    %c0_i32_0 = arith.constant 0 : i32
    %c0_i32_1 = arith.constant 0 : i32
    return %arg0, %c0_i32, %c0_i32_0 : i32, i32, i32
  }
  func.func @transform_1(%arg0: i32) -> (i32, i32) {
    %c0_i32 = arith.constant 0 : i32
    %c0_i32_0 = arith.constant 0 : i32
    %c0_i32_1 = arith.constant 0 : i32
    return %c0_i32, %c0_i32_0 : i32, i32
  }
  func.func @transform_2(%arg0: i32) -> (i32, i32, i32) {
    %c0_i32 = arith.constant 0 : i32
    %c0_i32_0 = arith.constant 0 : i32
    %c0_i32_1 = arith.constant 0 : i32
    return %arg0, %c0_i32, %c0_i32_0 : i32, i32, i32
  }
}

module attributes {stable_mosaic.version = 11 : i64} {
  func.func @_mm_in_res_relu_kernel(%arg0: i32, %arg1: memref<1x256x288xf32, #tpu.memory_space<vmem>>, %arg2: memref<288x32xf32, #tpu.memory_space<vmem>>, %arg3: memref<1x256x32xf32, #tpu.memory_space<vmem>>, %arg4: memref<1x256x32xf32, #tpu.memory_space<vmem>>) attributes {dimension_semantics = [#tpu.dimension_semantics<parallel>], iteration_bounds = array<i64: 2>, scalar_prefetch = 0 : i64, scratch_operands = 0 : i64, tpu.core_type = #tpu.core_type<tc>, window_params = [{transform_indices = @transform_0, window_bounds = array<i64: 1, 256, 288>}, {pipeline_mode = #tpu.pipeline_mode<synchronous>, transform_indices = @transform_1, window_bounds = array<i64: 288, 32>}, {transform_indices = @transform_2, window_bounds = array<i64: 1, 256, 32>}, {transform_indices = @transform_3, window_bounds = array<i64: 1, 256, 32>}]} {
    %c0 = arith.constant 0 : index
    %c0_0 = arith.constant 0 : index
    %c0_1 = arith.constant 0 : index
    %0 = vector.load %arg1[%c0, %c0_0, %c0_1] : memref<1x256x288xf32, #tpu.memory_space<vmem>>, vector<1x256x288xf32>
    %1 = vector.shape_cast %0 : vector<1x256x288xf32> to vector<256x288xf32>
    %2 = arith.truncf %1 : vector<256x288xf32> to vector<256x288xbf16>
    %c0_2 = arith.constant 0 : index
    %c0_3 = arith.constant 0 : index
    %3 = vector.load %arg2[%c0_2, %c0_3] : memref<288x32xf32, #tpu.memory_space<vmem>>, vector<288x32xf32>
    %4 = arith.truncf %3 : vector<288x32xf32> to vector<288x32xbf16>
    %cst = arith.constant dense<0.000000e+00> : vector<256x32xf32>
    %5 = tpu.matmul %2, %4, %cst {dimension_numbers = #tpu.dot_dimension_numbers<[1], [0], [0], [1], [0, 0, 1, 1], [], []>} : vector<256x288xbf16>, vector<288x32xbf16>, vector<256x32xf32> -> vector<256x32xf32>
    %cst_4 = arith.constant dense<0.000000e+00> : vector<32xf32>
    %6 = vector.multi_reduction <add>, %5, %cst_4 [0] : vector<256x32xf32> to vector<32xf32>
    %7 = vector.shape_cast %6 : vector<32xf32> to vector<1x32xf32>
    %cst_5 = arith.constant 2.560000e+02 : f32
    %8 = vector.broadcast %cst_5 : f32 to vector<1x32xf32>
    %9 = arith.divf %7, %8 : vector<1x32xf32>
    %10 = arith.mulf %5, %5 : vector<256x32xf32>
    %cst_6 = arith.constant dense<0.000000e+00> : vector<32xf32>
    %11 = vector.multi_reduction <add>, %10, %cst_6 [0] : vector<256x32xf32> to vector<32xf32>
    %12 = vector.shape_cast %11 : vector<32xf32> to vector<1x32xf32>
    %cst_7 = arith.constant 2.560000e+02 : f32
    %13 = vector.broadcast %cst_7 : f32 to vector<1x32xf32>
    %14 = arith.divf %12, %13 : vector<1x32xf32>
    %15 = vector.broadcast %9 : vector<1x32xf32> to vector<256x32xf32>
    %16 = arith.subf %5, %15 : vector<256x32xf32>
    %17 = arith.mulf %9, %9 : vector<1x32xf32>
    %18 = arith.subf %14, %17 : vector<1x32xf32>
    %cst_8 = arith.constant 9.99999974E-6 : f32
    %19 = vector.broadcast %cst_8 : f32 to vector<1x32xf32>
    %20 = arith.addf %18, %19 : vector<1x32xf32>
    %21 = math.rsqrt %20 : vector<1x32xf32>
    %22 = vector.broadcast %21 : vector<1x32xf32> to vector<256x32xf32>
    %23 = arith.mulf %16, %22 : vector<256x32xf32>
    %c0_9 = arith.constant 0 : index
    %c0_10 = arith.constant 0 : index
    %c0_11 = arith.constant 0 : index
    %24 = vector.load %arg3[%c0_9, %c0_10, %c0_11] : memref<1x256x32xf32, #tpu.memory_space<vmem>>, vector<1x256x32xf32>
    %25 = vector.shape_cast %24 : vector<1x256x32xf32> to vector<256x32xf32>
    %26 = arith.addf %23, %25 : vector<256x32xf32>
    %cst_12 = arith.constant 0.000000e+00 : f32
    %27 = vector.broadcast %cst_12 : f32 to vector<256x32xf32>
    %28 = arith.maximumf %26, %27 : vector<256x32xf32>
    %c0_13 = arith.constant 0 : index
    %c0_14 = arith.constant 0 : index
    %c0_15 = arith.constant 0 : index
    %29 = vector.load %arg4[%c0_13, %c0_14, %c0_15] : memref<1x256x32xf32, #tpu.memory_space<vmem>>, vector<1x256x32xf32>
    %30 = vector.shape_cast %29 : vector<1x256x32xf32> to vector<256x32xf32>
    %31 = vector.shape_cast %28 : vector<256x32xf32> to vector<1x256x32xf32>
    tpu.vector_store %arg4[%c0_13, %c0_14, %c0_15], %31 {strides = array<i32>} : memref<1x256x32xf32, #tpu.memory_space<vmem>>, vector<1x256x32xf32>,
    return
  }
  func.func @transform_0(%arg0: i32) -> (i32, i32, i32) {
    %c0_i32 = arith.constant 0 : i32
    %c0_i32_0 = arith.constant 0 : i32
    %c0_i32_1 = arith.constant 0 : i32
    return %arg0, %c0_i32, %c0_i32_0 : i32, i32, i32
  }
  func.func @transform_1(%arg0: i32) -> (i32, i32) {
    %c0_i32 = arith.constant 0 : i32
    %c0_i32_0 = arith.constant 0 : i32
    %c0_i32_1 = arith.constant 0 : i32
    return %c0_i32, %c0_i32_0 : i32, i32
  }
  func.func @transform_2(%arg0: i32) -> (i32, i32, i32) {
    %c0_i32 = arith.constant 0 : i32
    %c0_i32_0 = arith.constant 0 : i32
    %c0_i32_1 = arith.constant 0 : i32
    return %arg0, %c0_i32, %c0_i32_0 : i32, i32, i32
  }
  func.func @transform_3(%arg0: i32) -> (i32, i32, i32) {
    %c0_i32 = arith.constant 0 : i32
    %c0_i32_0 = arith.constant 0 : i32
    %c0_i32_1 = arith.constant 0 : i32
    return %arg0, %c0_i32, %c0_i32_0 : i32, i32, i32
  }
}

module attributes {stable_mosaic.version = 11 : i64} {
  func.func @_fusion_final_kernel(%arg0: i32, %arg1: memref<1x256x576xf32, #tpu.memory_space<vmem>>, %arg2: memref<576x32xf32, #tpu.memory_space<vmem>>, %arg3: memref<32x4xf32, #tpu.memory_space<vmem>>, %arg4: memref<1x4xf32, #tpu.memory_space<vmem>>, %arg5: memref<1x256x4xf32, #tpu.memory_space<vmem>>) attributes {dimension_semantics = [#tpu.dimension_semantics<parallel>], iteration_bounds = array<i64: 2>, scalar_prefetch = 0 : i64, scratch_operands = 0 : i64, tpu.core_type = #tpu.core_type<tc>, window_params = [{transform_indices = @transform_0, window_bounds = array<i64: 1, 256, 576>}, {pipeline_mode = #tpu.pipeline_mode<synchronous>, transform_indices = @transform_1, window_bounds = array<i64: 576, 32>}, {pipeline_mode = #tpu.pipeline_mode<synchronous>, transform_indices = @transform_2, window_bounds = array<i64: 32, 4>}, {pipeline_mode = #tpu.pipeline_mode<synchronous>, transform_indices = @transform_3, window_bounds = array<i64: 1, 4>}, {transform_indices = @transform_4, window_bounds = array<i64: 1, 256, 4>}]} {
    %c0 = arith.constant 0 : index
    %c0_0 = arith.constant 0 : index
    %c0_1 = arith.constant 0 : index
    %0 = vector.load %arg1[%c0, %c0_0, %c0_1] : memref<1x256x576xf32, #tpu.memory_space<vmem>>, vector<1x256x576xf32>
    %1 = vector.shape_cast %0 : vector<1x256x576xf32> to vector<256x576xf32>
    %2 = arith.truncf %1 : vector<256x576xf32> to vector<256x576xbf16>
    %c0_2 = arith.constant 0 : index
    %c0_3 = arith.constant 0 : index
    %3 = vector.load %arg2[%c0_2, %c0_3] : memref<576x32xf32, #tpu.memory_space<vmem>>, vector<576x32xf32>
    %4 = arith.truncf %3 : vector<576x32xf32> to vector<576x32xbf16>
    %cst = arith.constant dense<0.000000e+00> : vector<256x32xf32>
    %5 = tpu.matmul %2, %4, %cst {dimension_numbers = #tpu.dot_dimension_numbers<[1], [0], [0], [1], [0, 0, 1, 1], [], []>} : vector<256x576xbf16>, vector<576x32xbf16>, vector<256x32xf32> -> vector<256x32xf32>
    %cst_4 = arith.constant dense<0.000000e+00> : vector<32xf32>
    %6 = vector.multi_reduction <add>, %5, %cst_4 [0] : vector<256x32xf32> to vector<32xf32>
    %7 = vector.shape_cast %6 : vector<32xf32> to vector<1x32xf32>
    %cst_5 = arith.constant 2.560000e+02 : f32
    %8 = vector.broadcast %cst_5 : f32 to vector<1x32xf32>
    %9 = arith.divf %7, %8 : vector<1x32xf32>
    %10 = arith.mulf %5, %5 : vector<256x32xf32>
    %cst_6 = arith.constant dense<0.000000e+00> : vector<32xf32>
    %11 = vector.multi_reduction <add>, %10, %cst_6 [0] : vector<256x32xf32> to vector<32xf32>
    %12 = vector.shape_cast %11 : vector<32xf32> to vector<1x32xf32>
    %cst_7 = arith.constant 2.560000e+02 : f32
    %13 = vector.broadcast %cst_7 : f32 to vector<1x32xf32>
    %14 = arith.divf %12, %13 : vector<1x32xf32>
    %15 = vector.broadcast %9 : vector<1x32xf32> to vector<256x32xf32>
    %16 = arith.subf %5, %15 : vector<256x32xf32>
    %17 = arith.mulf %9, %9 : vector<1x32xf32>
    %18 = arith.subf %14, %17 : vector<1x32xf32>
    %cst_8 = arith.constant 9.99999974E-6 : f32
    %19 = vector.broadcast %cst_8 : f32 to vector<1x32xf32>
    %20 = arith.addf %18, %19 : vector<1x32xf32>
    %21 = math.rsqrt %20 : vector<1x32xf32>
    %22 = vector.broadcast %21 : vector<1x32xf32> to vector<256x32xf32>
    %23 = arith.mulf %16, %22 : vector<256x32xf32>
    %cst_9 = arith.constant 0.000000e+00 : f32
    %24 = vector.broadcast %cst_9 : f32 to vector<256x32xf32>
    %25 = arith.maximumf %23, %24 : vector<256x32xf32>
    %26 = arith.truncf %25 : vector<256x32xf32> to vector<256x32xbf16>
    %c0_10 = arith.constant 0 : index
    %c0_11 = arith.constant 0 : index
    %27 = vector.load %arg3[%c0_10, %c0_11] : memref<32x4xf32, #tpu.memory_space<vmem>>, vector<32x4xf32>
    %28 = arith.truncf %27 : vector<32x4xf32> to vector<32x4xbf16>
    %cst_12 = arith.constant dense<0.000000e+00> : vector<256x4xf32>
    %29 = tpu.matmul %26, %28, %cst_12 {dimension_numbers = #tpu.dot_dimension_numbers<[1], [0], [0], [1], [0, 0, 1, 1], [], []>} : vector<256x32xbf16>, vector<32x4xbf16>, vector<256x4xf32> -> vector<256x4xf32>
    %c0_13 = arith.constant 0 : index
    %c0_14 = arith.constant 0 : index
    %30 = vector.load %arg4[%c0_13, %c0_14] : memref<1x4xf32, #tpu.memory_space<vmem>>, vector<1x4xf32>
    %31 = vector.broadcast %30 : vector<1x4xf32> to vector<256x4xf32>
    %32 = arith.addf %29, %31 : vector<256x4xf32>
    %c0_15 = arith.constant 0 : index
    %c0_16 = arith.constant 0 : index
    %c0_17 = arith.constant 0 : index
    %33 = vector.load %arg5[%c0_15, %c0_16, %c0_17] : memref<1x256x4xf32, #tpu.memory_space<vmem>>, vector<1x256x4xf32>
    %34 = vector.shape_cast %33 : vector<1x256x4xf32> to vector<256x4xf32>
    %35 = vector.shape_cast %32 : vector<256x4xf32> to vector<1x256x4xf32>
    tpu.vector_store %arg5[%c0_15, %c0_16, %c0_17], %35 {strides = array<i32>} : memref<1x256x4xf32, #tpu.memory_space<vmem>>, vector<1x256x4xf32>,
    return
  }
  func.func @transform_0(%arg0: i32) -> (i32, i32, i32) {
    %c0_i32 = arith.constant 0 : i32
    %c0_i32_0 = arith.constant 0 : i32
    %c0_i32_1 = arith.constant 0 : i32
    return %arg0, %c0_i32, %c0_i32_0 : i32, i32, i32
  }
  func.func @transform_1(%arg0: i32) -> (i32, i32) {
    %c0_i32 = arith.constant 0 : i32
    %c0_i32_0 = arith.constant 0 : i32
    %c0_i32_1 = arith.constant 0 : i32
    return %c0_i32, %c0_i32_0 : i32, i32
  }
  func.func @transform_2(%arg0: i32) -> (i32, i32) {
    %c0_i32 = arith.constant 0 : i32
    %c0_i32_0 = arith.constant 0 : i32
    %c0_i32_1 = arith.constant 0 : i32
    return %c0_i32, %c0_i32_0 : i32, i32
  }
  func.func @transform_3(%arg0: i32) -> (i32, i32) {
    %c0_i32 = arith.constant 0 : i32
    %c0_i32_0 = arith.constant 0 : i32
    %c0_i32_1 = arith.constant 0 : i32
    return %c0_i32, %c0_i32_0 : i32, i32
  }
  func.func @transform_4(%arg0: i32) -> (i32, i32, i32) {
    %c0_i32 = arith.constant 0 : i32
    %c0_i32_0 = arith.constant 0 : i32
    %c0_i32_1 = arith.constant 0 : i32
    return %arg0, %c0_i32, %c0_i32_0 : i32, i32, i32
  }
}

</mosaic_0001>

<llo_original>
// kernel: _lambda_.8
$region0: #{_lambda_.8}
  #allocation0 [shape = 'u32[]', space=smem, size = 0x4, offset = 0x4, fixed_abs, tag = 'smem constant byte address 0x4 - core index']
  #allocation1 [shape = 'u32[72,128]{1,0:T(1,128)}', space=vmem, size = 0x9000, scoped, tag = 'internal scratch']
  %s0 = inlined_call_operand.vmem [shape: f32[2,256,8], index: 0, kind: input, shape index: {}]
  %s1 = inlined_call_operand.hbm [shape: f32[8,32], index: 1, kind: input, shape index: {}]
  %s2 = inlined_call_operand.vmem [shape: f32[2,256,32], index: 2, kind: output, shape index: {}]
  %s3 = sld [smem:[#allocation0]]
  $region45: #{_lambda_.8} parent=0
    _
  %s5 = ssub.s32 1, %s3
  %s6 = scalar_select 0, %s5, %s3
  $region1: #{_lambda_.8} parent=0
    #allocation2 [shape = 'u8[4096]{0}', space=vmem, size = 0x1000, scoped, tag = 'input window, operand 1, single buffered']
    #allocation3 [shape = 's32[2]{0}', space=sflag, size = 0x8, scoped, tag = 'scoped memory for _lambda_.8']
    %7 = vsyncpa [#allocation3], 0
    loop: start=0, step=1, limit=4
    $region2: #{_lambda_.8} parent=1 // loop_pre_header
      _
    $region3: #{_lambda_.8} parent=1 // loop_header
      %s9 = sphi 0, %s13
      %p10 = scmp.ge.s32.totalorder %s9, 4
      %s19 = sphi 0, %s21
      %s22 = sphi 0, %s19
      %s23 = sphi 0, %s22
      %s39 = sphi 0, %s23
      %s43 = sphi 0, %s43
      %s45 = sphi 0, %s43
      %s46 = sphi 0, %s45
      %s60 = sphi 0, %s46
      %s66 = sphi 0, %s68
      %s69 = sphi 0, %s66
      %s70 = sphi 0, %s69
      %s86 = sphi 0, %s70
    $region4: #{_lambda_.8} parent=1 // loop_header_branch
      %12 = sbr.rel (%p10) target = $region8
    $region5: #{_lambda_.8} parent=1 // loop_body
      %s14 = ssub.s32 %s9, 1
      %s15 = ssub.s32 %s9, 2
      %s16 = sadd.s32 %s9, 1
      %s17 = ssub.s32 %s9, %s16
      %p18 = scmp.eq.s32.totalorder %s17, 0
      %s20 = sadd.s32 %s19, 1
      %s21 = scalar_select %p18, %s19, %s20
      %p24 = pneg %p18
      %p25 = scmp.eq.s32.totalorder %s9, 1
      %p26 = por %p24, %p25
      %p27 = scmp.ne.s32.totalorder %s19, %s22
      %p28 = scmp.eq.s32.totalorder %s9, 0
      %p29 = por %p27, %p28
      %p30 = scmp.ne.s32.totalorder %s19, %s22
      %p31 = scmp.eq.s32.totalorder %s14, 1
      %p32 = por %p30, %p31
      %p33 = scmp.ne.s32.totalorder %s22, %s23
      %p34 = scmp.eq.s32.totalorder %s14, 0
      %p35 = por %p33, %p34
      %p36 = scmp.ne.s32.totalorder %s22, %s23
      %p37 = scmp.eq.s32.totalorder %s15, 1
      %p38 = por %p36, %p37
      %p40 = scmp.ne.s32.totalorder %s23, %s39
      %p41 = scmp.eq.s32.totalorder %s15, 0
      %p42 = por %p40, %p41
      %s44 = sadd.s32 %s43, 1
      %p47 = scmp.eq.s32.totalorder %s9, 1
      %p48 = scmp.ne.s32.totalorder %s43, %s45
      %p49 = scmp.eq.s32.totalorder %s9, 0
      %p50 = por %p48, %p49
      %p51 = scmp.ne.s32.totalorder %s43, %s45
      %p52 = scmp.eq.s32.totalorder %s14, 1
      %p53 = por %p51, %p52
      %p54 = scmp.ne.s32.totalorder %s45, %s46
      %p55 = scmp.eq.s32.totalorder %s14, 0
      %p56 = por %p54, %p55
      %p57 = scmp.ne.s32.totalorder %s45, %s46
      %p58 = scmp.eq.s32.totalorder %s15, 1
      %p59 = por %p57, %p58
      %p61 = scmp.ne.s32.totalorder %s46, %s60
      %p62 = scmp.eq.s32.totalorder %s15, 0
      %p63 = por %p61, %p62
      %s64 = ssub.s32 %s9, %s16
      %p65 = scmp.eq.s32.totalorder %s64, 0
      %s67 = sadd.s32 %s66, 1
      %s68 = scalar_select %p65, %s66, %s67
      %p71 = pneg %p65
      %p72 = scmp.eq.s32.totalorder %s9, 1
      %p73 = por %p71, %p72
      %p74 = scmp.ne.s32.totalorder %s66, %s69
      %p75 = scmp.eq.s32.totalorder %s9, 0
      %p76 = por %p74, %p75
      %p77 = scmp.ne.s32.totalorder %s66, %s69
      %p78 = scmp.eq.s32.totalorder %s14, 1
      %p79 = por %p77, %p78
      %p80 = scmp.ne.s32.totalorder %s69, %s70
      %p81 = scmp.eq.s32.totalorder %s14, 0
      %p82 = por %p80, %p81
      %p83 = scmp.ne.s32.totalorder %s69, %s70
      %p84 = scmp.eq.s32.totalorder %s15, 1
      %p85 = por %p83, %p84
      %p87 = scmp.ne.s32.totalorder %s70, %s86
      %p88 = scmp.eq.s32.totalorder %s15, 0
      %p89 = por %p87, %p88
      %p90 = scmp.le.s32.totalorder 1, %s9
      %p91 = scmp.lt.s32.totalorder %s9, 3
      %p92 = pnand %p90, %p91
      %p93 = pneg %p92
      // Predicated region
      $region9: #{_lambda_.8} parent=5 // pred_check
        _
      $region10: #{_lambda_.8} parent=5 // pred_check_branch
        %95 = sbr.rel (%p92) target = $region12
      $region11: #{_lambda_.8} parent=5 // pred_region
        %s96 = ssub.s32 %s9, 1
        // Predicated region
        $region13: #{_lambda_.8} parent=11 // pred_check
          %p97 = pneg %p56
        $region14: #{_lambda_.8} parent=11 // pred_check_branch
          %99 = sbr.rel (%p97) target = $region16
        $region15: #{_lambda_.8} parent=11 // pred_region
          %101 = vsyncadd [#allocation3], 0
          %s103 = sshll.u32 %s1, 4
          %s104 = int_to_ptr.hbm [resolvable:$true] %s103
          %s105 = sshll.u32 [#allocation2], 4
          %s106 = int_to_ptr.vmem [resolvable:$true] %s105
          %108 = dma.hbm_to_vmem [thread:$0]  %s104, 128, %s106, [#allocation3]
        $region16: #{_lambda_.8} parent=11 // pred_fallthru
          _
      $region12: #{_lambda_.8} parent=5 // pred_fallthru
        _
      %p109 = scmp.lt.s32.totalorder %s9, 2
      // Predicated region
      $region17: #{_lambda_.8} parent=5 // pred_check
        %p110 = pneg %p109
      $region18: #{_lambda_.8} parent=5 // pred_check_branch
        %112 = sbr.rel (%p110) target = $region20
      $region19: #{_lambda_.8} parent=5 // pred_region
        // Predicated region
        $region21: #{_lambda_.8} parent=19 // pred_check
          %p113 = pneg %p29
        $region22: #{_lambda_.8} parent=19 // pred_check_branch
          %115 = sbr.rel (%p113) target = $region24
        $region23: #{_lambda_.8} parent=19 // pred_region
          %p116 = scmp.lt.s32.totalorder %s9, 1
          %s117 = scalar_select %p116, %s9, 1
          %s118 = smul.addr %s117, 32
          %s119 = smul.addr %s118, 8
          %s120 = scalar_lea.vmem %s0, %s119
        $region24: #{_lambda_.8} parent=19 // pred_fallthru
          _
      $region20: #{_lambda_.8} parent=5 // pred_fallthru
        _
      %p121 = scmp.le.s32.totalorder 1, %s9
      %p122 = scmp.lt.s32.totalorder %s9, 3
      %p123 = pnand %p121, %p122
      %p124 = pneg %p123
      // Predicated region
      $region25: #{_lambda_.8} parent=5 // pred_check
        _
      $region26: #{_lambda_.8} parent=5 // pred_check_branch
        %126 = sbr.rel (%p123) target = $region28
      $region27: #{_lambda_.8} parent=5 // pred_region
        %s127 = ssub.s32 %s9, 1
        // Predicated region
        $region29: #{_lambda_.8} parent=27 // pred_check
          %p128 = pneg %p56
        $region30: #{_lambda_.8} parent=27 // pred_check_branch
          %130 = sbr.rel (%p128) target = $region32
        $region31: #{_lambda_.8} parent=27 // pred_region
          %132 = dma.done [#allocation3], 128
        $region32: #{_lambda_.8} parent=27 // pred_fallthru
          _
        %p133 = scmp.lt.s32.totalorder %s14, 1
        %s134 = scalar_select %p133, %s14, 1
        %s135 = smul.addr %s134, 32
        %s136 = smul.addr %s135, 8
        %s137 = scalar_lea.vmem %s0, %s136
        %p138 = pneg %p35
        %p139 = pneg %p32
        %p140 = pneg %p56
        %p141 = pneg %p53
        %p142 = pneg %p82
        %p143 = pneg %p79
        %p144 = scmp.lt.s32.totalorder %s14, 1
        %s145 = scalar_select %p144, %s14, 1
        %s146 = smul.addr %s145, 32
        %s147 = smul.addr %s146, 8
        %s148 = scalar_lea.vmem %s2, %s147
        %p149 = scmp.lt.s32.totalorder %s14, 1
        %s150 = scalar_select %p149, %s14, 1
        %s151 = smul.addr %s150, 32
        %s152 = smul.addr %s151, 8
        %s153 = scalar_lea.vmem %s0, %s152
        %p154 = scmp.lt.s32.totalorder %s14, 1
        %s155 = scalar_select %p154, %s14, 1
        %s156 = smul.addr %s155, 32
        %s157 = smul.addr %s156, 8
        %s158 = scalar_lea.vmem %s2, %s157
        %v160 = vld [vmem:[%s153] sm:$0xff]
        %v161 = vld [vmem:[%s153 + $0x8] sm:$0xff]
        %v162 = vld [vmem:[%s153 + $0x10] sm:$0xff]
        %v163 = vld [vmem:[%s153 + $0x18] sm:$0xff]
        %v164 = vld [vmem:[%s153 + $0x20] sm:$0xff]
        %v165 = vld [vmem:[%s153 + $0x28] sm:$0xff]
        %v166 = vld [vmem:[%s153 + $0x30] sm:$0xff]
        %v167 = vld [vmem:[%s153 + $0x38] sm:$0xff]
        %v168 = vld [vmem:[%s153 + $0x40] sm:$0xff]
        %v169 = vld [vmem:[%s153 + $0x48] sm:$0xff]
        %v170 = vld [vmem:[%s153 + $0x50] sm:$0xff]
        %v171 = vld [vmem:[%s153 + $0x58] sm:$0xff]
        %v172 = vld [vmem:[%s153 + $0x60] sm:$0xff]
        %v173 = vld [vmem:[%s153 + $0x68] sm:$0xff]
        %v174 = vld [vmem:[%s153 + $0x70] sm:$0xff]
        %v175 = vld [vmem:[%s153 + $0x78] sm:$0xff]
        %v176 = vld [vmem:[%s153 + $0x80] sm:$0xff]
        %v177 = vld [vmem:[%s153 + $0x88] sm:$0xff]
        %v178 = vld [vmem:[%s153 + $0x90] sm:$0xff]
        %v179 = vld [vmem:[%s153 + $0x98] sm:$0xff]
        %v180 = vld [vmem:[%s153 + $0xa0] sm:$0xff]
        %v181 = vld [vmem:[%s153 + $0xa8] sm:$0xff]
        %v182 = vld [vmem:[%s153 + $0xb0] sm:$0xff]
        %v183 = vld [vmem:[%s153 + $0xb8] sm:$0xff]
        %v184 = vld [vmem:[%s153 + $0xc0] sm:$0xff]
        %v185 = vld [vmem:[%s153 + $0xc8] sm:$0xff]
        %v186 = vld [vmem:[%s153 + $0xd0] sm:$0xff]
        %v187 = vld [vmem:[%s153 + $0xd8] sm:$0xff]
        %v188 = vld [vmem:[%s153 + $0xe0] sm:$0xff]
        %v189 = vld [vmem:[%s153 + $0xe8] sm:$0xff]
        %v190 = vld [vmem:[%s153 + $0xf0] sm:$0xff]
        %v191 = vld [vmem:[%s153 + $0xf8] sm:$0xff]
        %v192 = vpack.c.bf16 %v161, %v160
        %v193 = vpack.c.bf16 %v163, %v162
        %v194 = vpack.c.bf16 %v165, %v164
        %v195 = vpack.c.bf16 %v167, %v166
        %v196 = vpack.c.bf16 %v169, %v168
        %v197 = vpack.c.bf16 %v171, %v170
        %v198 = vpack.c.bf16 %v173, %v172
        %v199 = vpack.c.bf16 %v175, %v174
        %v200 = vpack.c.bf16 %v177, %v176
        %v201 = vpack.c.bf16 %v179, %v178
        %v202 = vpack.c.bf16 %v181, %v180
        %v203 = vpack.c.bf16 %v183, %v182
        %v204 = vpack.c.bf16 %v185, %v184
        %v205 = vpack.c.bf16 %v187, %v186
        %v206 = vpack.c.bf16 %v189, %v188
        %v207 = vpack.c.bf16 %v191, %v190
        %v208 = vld [vmem:[#allocation2] sm:$0xff]
        %v209 = vpack.c.bf16 %v208, %v208
        %vm210 = vcmask 64512
        %v212 = vsel %vm210, %v192, 0
        %v215 = vsel %vm210, %v193, 0
        %v218 = vsel %vm210, %v194, 0
        %v221 = vsel %vm210, %v195, 0
        %v224 = vsel %vm210, %v196, 0
        %v227 = vsel %vm210, %v197, 0
        %v230 = vsel %vm210, %v198, 0
        %v233 = vsel %vm210, %v199, 0
        %v236 = vsel %vm210, %v200, 0
        %v239 = vsel %vm210, %v201, 0
        %v242 = vsel %vm210, %v202, 0
        %v245 = vsel %vm210, %v203, 0
        %v248 = vsel %vm210, %v204, 0
        %v251 = vsel %vm210, %v205, 0
        %v254 = vsel %vm210, %v206, 0
        %v257 = vsel %vm210, %v207, 0
        %vm259 = vcmask 1043456
        %v261 = vsel %vm259, %v209, 0
        %263 = vmatpush.bf16.msra.mxu0 0
        %264 = vmatpush.bf16.msra.mxu0 0
        %265 = vmatpush.bf16.msra.mxu0 0
        %266 = vmatpush.bf16.msra.mxu0 0
        %267 = vmatpush.bf16.msra.mxu0 0
        %268 = vmatpush.bf16.msra.mxu0 0
        %269 = vmatpush.bf16.msra.mxu0 0
        %270 = vmatpush.bf16.msra.mxu0 %v261
        %271 = vmatmul.bf16.gmra.mxu0 %v212
        %v272 = vpop.f32.mrf.mxu0
        %v273 = vadd.f32 0.0, %v272
        %v274 = vpop.f32.mrf.mxu0
        %v275 = vadd.f32 0.0, %v274
        %276 = vmatmul.bf16.gmra.mxu0 %v215
        %v277 = vpop.f32.mrf.mxu0
        %v278 = vadd.f32 0.0, %v277
        %v279 = vpop.f32.mrf.mxu0
        %v280 = vadd.f32 0.0, %v279
        %281 = vmatmul.bf16.gmra.mxu0 %v218
        %v282 = vpop.f32.mrf.mxu0
        %v283 = vadd.f32 0.0, %v282
        %v284 = vpop.f32.mrf.mxu0
        %v285 = vadd.f32 0.0, %v284
        %286 = vmatmul.bf16.gmra.mxu0 %v221
        %v287 = vpop.f32.mrf.mxu0
        %v288 = vadd.f32 0.0, %v287
        %v289 = vpop.f32.mrf.mxu0
        %v290 = vadd.f32 0.0, %v289
        %291 = vmatmul.bf16.gmra.mxu0 %v224
        %v292 = vpop.f32.mrf.mxu0
        %v293 = vadd.f32 0.0, %v292
        %v294 = vpop.f32.mrf.mxu0
        %v295 = vadd.f32 0.0, %v294
        %296 = vmatmul.bf16.gmra.mxu0 %v227
        %v297 = vpop.f32.mrf.mxu0
        %v298 = vadd.f32 0.0, %v297
        %v299 = vpop.f32.mrf.mxu0
        %v300 = vadd.f32 0.0, %v299
        %301 = vmatmul.bf16.gmra.mxu0 %v230
        %v302 = vpop.f32.mrf.mxu0
        %v303 = vadd.f32 0.0, %v302
        %v304 = vpop.f32.mrf.mxu0
        %v305 = vadd.f32 0.0, %v304
        %306 = vmatmul.bf16.gmra.mxu0 %v233
        %v307 = vpop.f32.mrf.mxu0
        %v308 = vadd.f32 0.0, %v307
        %v309 = vpop.f32.mrf.mxu0
        %v310 = vadd.f32 0.0, %v309
        %311 = vmatmul.bf16.gmra.mxu0 %v236
        %v312 = vpop.f32.mrf.mxu0
        %v313 = vadd.f32 0.0, %v312
        %v314 = vpop.f32.mrf.mxu0
        %v315 = vadd.f32 0.0, %v314
        %316 = vmatmul.bf16.gmra.mxu0 %v239
        %v317 = vpop.f32.mrf.mxu0
        %v318 = vadd.f32 0.0, %v317
        %v319 = vpop.f32.mrf.mxu0
        %v320 = vadd.f32 0.0, %v319
        %321 = vmatmul.bf16.gmra.mxu0 %v242
        %v322 = vpop.f32.mrf.mxu0
        %v323 = vadd.f32 0.0, %v322
        %v324 = vpop.f32.mrf.mxu0
        %v325 = vadd.f32 0.0, %v324
        %326 = vmatmul.bf16.gmra.mxu0 %v245
        %v327 = vpop.f32.mrf.mxu0
        %v328 = vadd.f32 0.0, %v327
        %v329 = vpop.f32.mrf.mxu0
        %v330 = vadd.f32 0.0, %v329
        %331 = vmatmul.bf16.gmra.mxu0 %v248
        %v332 = vpop.f32.mrf.mxu0
        %v333 = vadd.f32 0.0, %v332
        %v334 = vpop.f32.mrf.mxu0
        %v335 = vadd.f32 0.0, %v334
        %336 = vmatmul.bf16.gmra.mxu0 %v251
        %v337 = vpop.f32.mrf.mxu0
        %v338 = vadd.f32 0.0, %v337
        %v339 = vpop.f32.mrf.mxu0
        %v340 = vadd.f32 0.0, %v339
        %341 = vmatmul.bf16.gmra.mxu0 %v254
        %v342 = vpop.f32.mrf.mxu0
        %v343 = vadd.f32 0.0, %v342
        %v344 = vpop.f32.mrf.mxu0
        %v345 = vadd.f32 0.0, %v344
        %346 = vmatmul.bf16.gmra.mxu0 %v257
        %v347 = vpop.f32.mrf.mxu0
        %v348 = vadd.f32 0.0, %v347
        %v349 = vpop.f32.mrf.mxu0
        %v350 = vadd.f32 0.0, %v349
        %351 = vdwg.mxu0
        %vm352 = vcmask 261120
        %v353 = vsel %vm352, %v273, 0.0
        %v354 = vsel %vm352, %v275, 0.0
        %v355 = vadd.f32 %v353, %v354
        %v356 = vsel %vm352, %v278, 0.0
        %v357 = vadd.f32 %v355, %v356
        %v358 = vsel %vm352, %v280, 0.0
        %v359 = vadd.f32 %v357, %v358
        %v360 = vsel %vm352, %v283, 0.0
        %v361 = vadd.f32 %v359, %v360
        %v362 = vsel %vm352, %v285, 0.0
        %v363 = vadd.f32 %v361, %v362
        %v364 = vsel %vm352, %v288, 0.0
        %v365 = vadd.f32 %v363, %v364
        %v366 = vsel %vm352, %v290, 0.0
        %v367 = vadd.f32 %v365, %v366
        %v368 = vsel %vm352, %v293, 0.0
        %v369 = vadd.f32 %v367, %v368
        %v370 = vsel %vm352, %v295, 0.0
        %v371 = vadd.f32 %v369, %v370
        %v372 = vsel %vm352, %v298, 0.0
        %v373 = vadd.f32 %v371, %v372
        %v374 = vsel %vm352, %v300, 0.0
        %v375 = vadd.f32 %v373, %v374
        %v376 = vsel %vm352, %v303, 0.0
        %v377 = vadd.f32 %v375, %v376
        %v378 = vsel %vm352, %v305, 0.0
        %v379 = vadd.f32 %v377, %v378
        %v380 = vsel %vm352, %v308, 0.0
        %v381 = vadd.f32 %v379, %v380
        %v382 = vsel %vm352, %v310, 0.0
        %v383 = vadd.f32 %v381, %v382
        %v384 = vsel %vm352, %v313, 0.0
        %v385 = vadd.f32 %v383, %v384
        %v386 = vsel %vm352, %v315, 0.0
        %v387 = vadd.f32 %v385, %v386
        %v388 = vsel %vm352, %v318, 0.0
        %v389 = vadd.f32 %v387, %v388
        %v390 = vsel %vm352, %v320, 0.0
        %v391 = vadd.f32 %v389, %v390
        %v392 = vsel %vm352, %v323, 0.0
        %v393 = vadd.f32 %v391, %v392
        %v394 = vsel %vm352, %v325, 0.0
        %v395 = vadd.f32 %v393, %v394
        %v396 = vsel %vm352, %v328, 0.0
        %v397 = vadd.f32 %v395, %v396
        %v398 = vsel %vm352, %v330, 0.0
        %v399 = vadd.f32 %v397, %v398
        %v400 = vsel %vm352, %v333, 0.0
        %v401 = vadd.f32 %v399, %v400
        %v402 = vsel %vm352, %v335, 0.0
        %v403 = vadd.f32 %v401, %v402
        %v404 = vsel %vm352, %v338, 0.0
        %v405 = vadd.f32 %v403, %v404
        %v406 = vsel %vm352, %v340, 0.0
        %v407 = vadd.f32 %v405, %v406
        %v408 = vsel %vm352, %v343, 0.0
        %v409 = vadd.f32 %v407, %v408
        %v410 = vsel %vm352, %v345, 0.0
        %v411 = vadd.f32 %v409, %v410
        %v412 = vsel %vm352, %v348, 0.0
        %v413 = vadd.f32 %v411, %v412
        %v414 = vsel %vm352, %v350, 0.0
        %v415 = vadd.f32 %v413, %v414
        %v416 = vrot.slane %v415, 4
        %v417 = vadd.f32 %v415, %v416
        %v418 = vrot.slane %v417, 2
        %v419 = vadd.f32 %v417, %v418
        %v420 = vrot.slane %v419, 1
        %v421 = vadd.f32 %v419, %v420
        %v422 = vrcp.pop 256.0
        %v423 = vmul.f32 256.0, %v422
        %v424 = vsub.f32 1.0, %v423
        %v425 = vmul.f32 %v422, %v424
        %v426 = vadd.f32 %v422, %v425
        %vm427 = vweird.f32 %v422
        %v428 = vsel %vm427, %v422, %v426
        %v429 = vmul.f32 %v421, %v428
        %v430 = vmul.f32 %v273, %v273
        %v431 = vmul.f32 %v275, %v275
        %v432 = vmul.f32 %v278, %v278
        %v433 = vmul.f32 %v280, %v280
        %v434 = vmul.f32 %v283, %v283
        %v435 = vmul.f32 %v285, %v285
        %v436 = vmul.f32 %v288, %v288
        %v437 = vmul.f32 %v290, %v290
        %v438 = vmul.f32 %v293, %v293
        %v439 = vmul.f32 %v295, %v295
        %v440 = vmul.f32 %v298, %v298
        %v441 = vmul.f32 %v300, %v300
        %v442 = vmul.f32 %v303, %v303
        %v443 = vmul.f32 %v305, %v305
        %v444 = vmul.f32 %v308, %v308
        %v445 = vmul.f32 %v310, %v310
        %v446 = vmul.f32 %v313, %v313
        %v447 = vmul.f32 %v315, %v315
        %v448 = vmul.f32 %v318, %v318
        %v449 = vmul.f32 %v320, %v320
        %v450 = vmul.f32 %v323, %v323
        %v451 = vmul.f32 %v325, %v325
        %v452 = vmul.f32 %v328, %v328
        %v453 = vmul.f32 %v330, %v330
        %v454 = vmul.f32 %v333, %v333
        %v455 = vmul.f32 %v335, %v335
        %v456 = vmul.f32 %v338, %v338
        %v457 = vmul.f32 %v340, %v340
        %v458 = vmul.f32 %v343, %v343
        %v459 = vmul.f32 %v345, %v345
        %v460 = vmul.f32 %v348, %v348
        %v461 = vmul.f32 %v350, %v350
        %v462 = vsel %vm352, %v430, 0.0
        %v463 = vsel %vm352, %v431, 0.0
        %v464 = vadd.f32 %v462, %v463
        %v465 = vsel %vm352, %v432, 0.0
        %v466 = vadd.f32 %v464, %v465
        %v467 = vsel %vm352, %v433, 0.0
        %v468 = vadd.f32 %v466, %v467
        %v469 = vsel %vm352, %v434, 0.0
        %v470 = vadd.f32 %v468, %v469
        %v471 = vsel %vm352, %v435, 0.0
        %v472 = vadd.f32 %v470, %v471
        %v473 = vsel %vm352, %v436, 0.0
        %v474 = vadd.f32 %v472, %v473
        %v475 = vsel %vm352, %v437, 0.0
        %v476 = vadd.f32 %v474, %v475
        %v477 = vsel %vm352, %v438, 0.0
        %v478 = vadd.f32 %v476, %v477
        %v479 = vsel %vm352, %v439, 0.0
        %v480 = vadd.f32 %v478, %v479
        %v481 = vsel %vm352, %v440, 0.0
        %v482 = vadd.f32 %v480, %v481
        %v483 = vsel %vm352, %v441, 0.0
        %v484 = vadd.f32 %v482, %v483
        %v485 = vsel %vm352, %v442, 0.0
        %v486 = vadd.f32 %v484, %v485
        %v487 = vsel %vm352, %v443, 0.0
        %v488 = vadd.f32 %v486, %v487
        %v489 = vsel %vm352, %v444, 0.0
        %v490 = vadd.f32 %v488, %v489
        %v491 = vsel %vm352, %v445, 0.0
        %v492 = vadd.f32 %v490, %v491
        %v493 = vsel %vm352, %v446, 0.0
        %v494 = vadd.f32 %v492, %v493
        %v495 = vsel %vm352, %v447, 0.0
        %v496 = vadd.f32 %v494, %v495
        %v497 = vsel %vm352, %v448, 0.0
        %v498 = vadd.f32 %v496, %v497
        %v499 = vsel %vm352, %v449, 0.0
        %v500 = vadd.f32 %v498, %v499
        %v501 = vsel %vm352, %v450, 0.0
        %v502 = vadd.f32 %v500, %v501
        %v503 = vsel %vm352, %v451, 0.0
        %v504 = vadd.f32 %v502, %v503
        %v505 = vsel %vm352, %v452, 0.0
        %v506 = vadd.f32 %v504, %v505
        %v507 = vsel %vm352, %v453, 0.0
        %v508 = vadd.f32 %v506, %v507
        %v509 = vsel %vm352, %v454, 0.0
        %v510 = vadd.f32 %v508, %v509
        %v511 = vsel %vm352, %v455, 0.0
        %v512 = vadd.f32 %v510, %v511
        %v513 = vsel %vm352, %v456, 0.0
        %v514 = vadd.f32 %v512, %v513
        %v515 = vsel %vm352, %v457, 0.0
        %v516 = vadd.f32 %v514, %v515
        %v517 = vsel %vm352, %v458, 0.0
        %v518 = vadd.f32 %v516, %v517
        %v519 = vsel %vm352, %v459, 0.0
        %v520 = vadd.f32 %v518, %v519
        %v521 = vsel %vm352, %v460, 0.0
        %v522 = vadd.f32 %v520, %v521
        %v523 = vsel %vm352, %v461, 0.0
        %v524 = vadd.f32 %v522, %v523
        %v525 = vrot.slane %v524, 4
        %v526 = vadd.f32 %v524, %v525
        %v527 = vrot.slane %v526, 2
        %v528 = vadd.f32 %v526, %v527
        %v529 = vrot.slane %v528, 1
        %v530 = vadd.f32 %v528, %v529
        %v531 = vmul.f32 %v530, %v428
        %v532 = vsub.f32 %v273, %v429
        %v533 = vsub.f32 %v275, %v429
        %v534 = vsub.f32 %v278, %v429
        %v535 = vsub.f32 %v280, %v429
        %v536 = vsub.f32 %v283, %v429
        %v537 = vsub.f32 %v285, %v429
        %v538 = vsub.f32 %v288, %v429
        %v539 = vsub.f32 %v290, %v429
        %v540 = vsub.f32 %v293, %v429
        %v541 = vsub.f32 %v295, %v429
        %v542 = vsub.f32 %v298, %v429
        %v543 = vsub.f32 %v300, %v429
        %v544 = vsub.f32 %v303, %v429
        %v545 = vsub.f32 %v305, %v429
        %v546 = vsub.f32 %v308, %v429
        %v547 = vsub.f32 %v310, %v429
        %v548 = vsub.f32 %v313, %v429
        %v549 = vsub.f32 %v315, %v429
        %v550 = vsub.f32 %v318, %v429
        %v551 = vsub.f32 %v320, %v429
        %v552 = vsub.f32 %v323, %v429
        %v553 = vsub.f32 %v325, %v429
        %v554 = vsub.f32 %v328, %v429
        %v555 = vsub.f32 %v330, %v429
        %v556 = vsub.f32 %v333, %v429
        %v557 = vsub.f32 %v335, %v429
        %v558 = vsub.f32 %v338, %v429
        %v559 = vsub.f32 %v340, %v429
        %v560 = vsub.f32 %v343, %v429
        %v561 = vsub.f32 %v345, %v429
        %v562 = vsub.f32 %v348, %v429
        %v563 = vsub.f32 %v350, %v429
        %v564 = vmul.f32 %v429, %v429
        %v565 = vsub.f32 %v531, %v564
        %v566 = vadd.f32 %v565, 1e-05
        %v567 = vrsqrt.pop %v566
        %v568 = vmul.f32 %v567, %v566
        %v569 = vmul.f32 %v568, %v567
        %v570 = vmul.f32 0.5, %v569
        %v571 = vsub.f32 1.5, %v570
        %v572 = vmul.f32 %v567, %v571
        %vm573 = vweird.f32 %v566
        %vm574 = vweird.f32 %v567
        %vm575 = vmor %vm573, %vm574
        %v576 = vsel %vm575, %v567, %v572
        %v577 = vmul.f32 %v532, %v576
        %v578 = vmul.f32 %v533, %v576
        %v579 = vmul.f32 %v534, %v576
        %v580 = vmul.f32 %v535, %v576
        %v581 = vmul.f32 %v536, %v576
        %v582 = vmul.f32 %v537, %v576
        %v583 = vmul.f32 %v538, %v576
        %v584 = vmul.f32 %v539, %v576
        %v585 = vmul.f32 %v540, %v576
        %v586 = vmul.f32 %v541, %v576
        %v587 = vmul.f32 %v542, %v576
        %v588 = vmul.f32 %v543, %v576
        %v589 = vmul.f32 %v544, %v576
        %v590 = vmul.f32 %v545, %v576
        %v591 = vmul.f32 %v546, %v576
        %v592 = vmul.f32 %v547, %v576
        %v593 = vmul.f32 %v548, %v576
        %v594 = vmul.f32 %v549, %v576
        %v595 = vmul.f32 %v550, %v576
        %v596 = vmul.f32 %v551, %v576
        %v597 = vmul.f32 %v552, %v576
        %v598 = vmul.f32 %v553, %v576
        %v599 = vmul.f32 %v554, %v576
        %v600 = vmul.f32 %v555, %v576
        %v601 = vmul.f32 %v556, %v576
        %v602 = vmul.f32 %v557, %v576
        %v603 = vmul.f32 %v558, %v576
        %v604 = vmul.f32 %v559, %v576
        %v605 = vmul.f32 %v560, %v576
        %v606 = vmul.f32 %v561, %v576
        %v607 = vmul.f32 %v562, %v576
        %v608 = vmul.f32 %v563, %v576
        %v609 = vmax.f32 %v577, 0.0
        %v610 = vmax.f32 %v578, 0.0
        %v611 = vmax.f32 %v579, 0.0
        %v612 = vmax.f32 %v580, 0.0
        %v613 = vmax.f32 %v581, 0.0
        %v614 = vmax.f32 %v582, 0.0
        %v615 = vmax.f32 %v583, 0.0
        %v616 = vmax.f32 %v584, 0.0
        %v617 = vmax.f32 %v585, 0.0
        %v618 = vmax.f32 %v586, 0.0
        %v619 = vmax.f32 %v587, 0.0
        %v620 = vmax.f32 %v588, 0.0
        %v621 = vmax.f32 %v589, 0.0
        %v622 = vmax.f32 %v590, 0.0
        %v623 = vmax.f32 %v591, 0.0
        %v624 = vmax.f32 %v592, 0.0
        %v625 = vmax.f32 %v593, 0.0
        %v626 = vmax.f32 %v594, 0.0
        %v627 = vmax.f32 %v595, 0.0
        %v628 = vmax.f32 %v596, 0.0
        %v629 = vmax.f32 %v597, 0.0
        %v630 = vmax.f32 %v598, 0.0
        %v631 = vmax.f32 %v599, 0.0
        %v632 = vmax.f32 %v600, 0.0
        %v633 = vmax.f32 %v601, 0.0
        %v634 = vmax.f32 %v602, 0.0
        %v635 = vmax.f32 %v603, 0.0
        %v636 = vmax.f32 %v604, 0.0
        %v637 = vmax.f32 %v605, 0.0
        %v638 = vmax.f32 %v606, 0.0
        %v639 = vmax.f32 %v607, 0.0
        %v640 = vmax.f32 %v608, 0.0
        %641 = vst.msk [vmem:[%s158] sm:$0xff] %vm352, %v609
        %642 = vst.msk [vmem:[%s158 + $0x8] sm:$0xff] %vm352, %v610
        %643 = vst.msk [vmem:[%s158 + $0x10] sm:$0xff] %vm352, %v611
        %644 = vst.msk [vmem:[%s158 + $0x18] sm:$0xff] %vm352, %v612
        %645 = vst.msk [vmem:[%s158 + $0x20] sm:$0xff] %vm352, %v613
        %646 = vst.msk [vmem:[%s158 + $0x28] sm:$0xff] %vm352, %v614
        %647 = vst.msk [vmem:[%s158 + $0x30] sm:$0xff] %vm352, %v615
        %648 = vst.msk [vmem:[%s158 + $0x38] sm:$0xff] %vm352, %v616
        %649 = vst.msk [vmem:[%s158 + $0x40] sm:$0xff] %vm352, %v617
        %650 = vst.msk [vmem:[%s158 + $0x48] sm:$0xff] %vm352, %v618
        %651 = vst.msk [vmem:[%s158 + $0x50] sm:$0xff] %vm352, %v619
        %652 = vst.msk [vmem:[%s158 + $0x58] sm:$0xff] %vm352, %v620
        %653 = vst.msk [vmem:[%s158 + $0x60] sm:$0xff] %vm352, %v621
        %654 = vst.msk [vmem:[%s158 + $0x68] sm:$0xff] %vm352, %v622
        %655 = vst.msk [vmem:[%s158 + $0x70] sm:$0xff] %vm352, %v623
        %656 = vst.msk [vmem:[%s158 + $0x78] sm:$0xff] %vm352, %v624
        %657 = vst.msk [vmem:[%s158 + $0x80] sm:$0xff] %vm352, %v625
        %658 = vst.msk [vmem:[%s158 + $0x88] sm:$0xff] %vm352, %v626
        %659 = vst.msk [vmem:[%s158 + $0x90] sm:$0xff] %vm352, %v627
        %660 = vst.msk [vmem:[%s158 + $0x98] sm:$0xff] %vm352, %v628
        %661 = vst.msk [vmem:[%s158 + $0xa0] sm:$0xff] %vm352, %v629
        %662 = vst.msk [vmem:[%s158 + $0xa8] sm:$0xff] %vm352, %v630
        %663 = vst.msk [vmem:[%s158 + $0xb0] sm:$0xff] %vm352, %v631
        %664 = vst.msk [vmem:[%s158 + $0xb8] sm:$0xff] %vm352, %v632
        %665 = vst.msk [vmem:[%s158 + $0xc0] sm:$0xff] %vm352, %v633
        %666 = vst.msk [vmem:[%s158 + $0xc8] sm:$0xff] %vm352, %v634
        %667 = vst.msk [vmem:[%s158 + $0xd0] sm:$0xff] %vm352, %v635
        %668 = vst.msk [vmem:[%s158 + $0xd8] sm:$0xff] %vm352, %v636
        %669 = vst.msk [vmem:[%s158 + $0xe0] sm:$0xff] %vm352, %v637
        %670 = vst.msk [vmem:[%s158 + $0xe8] sm:$0xff] %vm352, %v638
        %671 = vst.msk [vmem:[%s158 + $0xf0] sm:$0xff] %vm352, %v639
        %672 = vst.msk [vmem:[%s158 + $0xf8] sm:$0xff] %vm352, %v640
        %p673 = scmp.lt.s32.totalorder %s14, 1
        %s674 = scalar_select %p673, %s14, 1
        %s675 = smul.addr %s674, 32
        %s676 = smul.addr %s675, 8
        %s677 = scalar_lea.vmem %s2, %s676
        // Predicated region
        $region33: #{_lambda_.8} parent=27 // pred_check
          %p678 = pneg %p79
        $region34: #{_lambda_.8} parent=27 // pred_check_branch
          %680 = sbr.rel (%p678) target = $region36
        $region35: #{_lambda_.8} parent=27 // pred_region
          _
        $region36: #{_lambda_.8} parent=27 // pred_fallthru
          _
      $region28: #{_lambda_.8} parent=5 // pred_fallthru
        _
      %p681 = scmp.le.s32.totalorder 2, %s9
      // Predicated region
      $region37: #{_lambda_.8} parent=5 // pred_check
        %p682 = pneg %p681
      $region38: #{_lambda_.8} parent=5 // pred_check_branch
        %684 = sbr.rel (%p682) target = $region40
      $region39: #{_lambda_.8} parent=5 // pred_region
        %s685 = ssub.s32 %s9, 2
        // Predicated region
        $region41: #{_lambda_.8} parent=39 // pred_check
          %p686 = pneg %p85
        $region42: #{_lambda_.8} parent=39 // pred_check_branch
          %688 = sbr.rel (%p686) target = $region44
        $region43: #{_lambda_.8} parent=39 // pred_region
          %p689 = scmp.lt.s32.totalorder %s15, 1
          %s690 = scalar_select %p689, %s15, 1
          %s691 = smul.addr %s690, 32
          %s692 = smul.addr %s691, 8
          %s693 = scalar_lea.vmem %s2, %s692
        $region44: #{_lambda_.8} parent=39 // pred_fallthru
          _
      $region40: #{_lambda_.8} parent=5 // pred_fallthru
        _
    $region6: #{_lambda_.8} parent=1 // loop_footer
      %s13 = sadd.s32 1, %s9
    $region7: #{_lambda_.8} parent=1 // loop_footer_branch
      %8 = sbr.rel target = $region3
    $region8: #{_lambda_.8} parent=1 // loop_exit
      _
    %694 = vsyncpa [#allocation3], 1
    %s695 = scalar_lea.sflag [#allocation3], 1
    %696 = vsyncpa %s695, 1

// kernel: _lambda_.13
$region0: #{_lambda_.13}
  #allocation0 [shape = 'u32[]', space=smem, size = 0x4, offset = 0x4, fixed_abs, tag = 'smem constant byte address 0x4 - core index']
  #allocation1 [shape = 'u32[72,128]{1,0:T(1,128)}', space=vmem, size = 0x9000, scoped, tag = 'internal scratch']
  %s0 = inlined_call_operand.vmem [shape: f32[1152,32], index: 0, kind: input, shape index: {}]
  %s1 = inlined_call_operand.vmem [shape: f32[32,192], index: 1, kind: input, shape index: {}]
  %s2 = inlined_call_operand.vmem [shape: f32[1152,192], index: 2, kind: output, shape index: {}]
  %s3 = sld [smem:[#allocation0]]
  $region41: #{_lambda_.13} parent=0
    _
  %s5 = ssub.s32 1, %s3
  %s6 = scalar_select 0, %s5, %s3
  loop: start=0, step=1, limit=11
  $region2: #{_lambda_.13} parent=0 // loop_pre_header
    _
  $region3: #{_lambda_.13} parent=0 // loop_header
    %s8 = sphi 0, %s12
    %p9 = scmp.ge.s32.totalorder %s8, 11
    %s18 = sphi 0, %s20
    %s21 = sphi 0, %s18
    %s22 = sphi 0, %s21
    %s38 = sphi 0, %s22
    %s42 = sphi 0, %s42
    %s44 = sphi 0, %s42
    %s45 = sphi 0, %s44
    %s59 = sphi 0, %s45
    %s65 = sphi 0, %s67
    %s68 = sphi 0, %s65
    %s69 = sphi 0, %s68
    %s85 = sphi 0, %s69
  $region4: #{_lambda_.13} parent=0 // loop_header_branch
    %11 = sbr.rel (%p9) target = $region8
  $region5: #{_lambda_.13} parent=0 // loop_body
    %s13 = ssub.s32 %s8, 1
    %s14 = ssub.s32 %s8, 2
    %s15 = sadd.s32 %s8, 1
    %s16 = ssub.s32 %s8, %s15
    %p17 = scmp.eq.s32.totalorder %s16, 0
    %s19 = sadd.s32 %s18, 1
    %s20 = scalar_select %p17, %s18, %s19
    %p23 = pneg %p17
    %p24 = scmp.eq.s32.totalorder %s8, 8
    %p25 = por %p23, %p24
    %p26 = scmp.ne.s32.totalorder %s18, %s21
    %p27 = scmp.eq.s32.totalorder %s8, 0
    %p28 = por %p26, %p27
    %p29 = scmp.ne.s32.totalorder %s18, %s21
    %p30 = scmp.eq.s32.totalorder %s13, 8
    %p31 = por %p29, %p30
    %p32 = scmp.ne.s32.totalorder %s21, %s22
    %p33 = scmp.eq.s32.totalorder %s13, 0
    %p34 = por %p32, %p33
    %p35 = scmp.ne.s32.totalorder %s21, %s22
    %p36 = scmp.eq.s32.totalorder %s14, 8
    %p37 = por %p35, %p36
    %p39 = scmp.ne.s32.totalorder %s22, %s38
    %p40 = scmp.eq.s32.totalorder %s14, 0
    %p41 = por %p39, %p40
    %s43 = sadd.s32 %s42, 1
    %p46 = scmp.eq.s32.totalorder %s8, 8
    %p47 = scmp.ne.s32.totalorder %s42, %s44
    %p48 = scmp.eq.s32.totalorder %s8, 0
    %p49 = por %p47, %p48
    %p50 = scmp.ne.s32.totalorder %s42, %s44
    %p51 = scmp.eq.s32.totalorder %s13, 8
    %p52 = por %p50, %p51
    %p53 = scmp.ne.s32.totalorder %s44, %s45
    %p54 = scmp.eq.s32.totalorder %s13, 0
    %p55 = por %p53, %p54
    %p56 = scmp.ne.s32.totalorder %s44, %s45
    %p57 = scmp.eq.s32.totalorder %s14, 8
    %p58 = por %p56, %p57
    %p60 = scmp.ne.s32.totalorder %s45, %s59
    %p61 = scmp.eq.s32.totalorder %s14, 0
    %p62 = por %p60, %p61
    %s63 = ssub.s32 %s8, %s15
    %p64 = scmp.eq.s32.totalorder %s63, 0
    %s66 = sadd.s32 %s65, 1
    %s67 = scalar_select %p64, %s65, %s66
    %p70 = pneg %p64
    %p71 = scmp.eq.s32.totalorder %s8, 8
    %p72 = por %p70, %p71
    %p73 = scmp.ne.s32.totalorder %s65, %s68
    %p74 = scmp.eq.s32.totalorder %s8, 0
    %p75 = por %p73, %p74
    %p76 = scmp.ne.s32.totalorder %s65, %s68
    %p77 = scmp.eq.s32.totalorder %s13, 8
    %p78 = por %p76, %p77
    %p79 = scmp.ne.s32.totalorder %s68, %s69
    %p80 = scmp.eq.s32.totalorder %s13, 0
    %p81 = por %p79, %p80
    %p82 = scmp.ne.s32.totalorder %s68, %s69
    %p83 = scmp.eq.s32.totalorder %s14, 8
    %p84 = por %p82, %p83
    %p86 = scmp.ne.s32.totalorder %s69, %s85
    %p87 = scmp.eq.s32.totalorder %s14, 0
    %p88 = por %p86, %p87
    %p89 = scmp.le.s32.totalorder 1, %s8
    %p90 = scmp.lt.s32.totalorder %s8, 10
    %p91 = pnand %p89, %p90
    %p92 = pneg %p91
    // Predicated region
    $region9: #{_lambda_.13} parent=5 // pred_check
      _
    $region10: #{_lambda_.13} parent=5 // pred_check_branch
      %94 = sbr.rel (%p91) target = $region12
    $region11: #{_lambda_.13} parent=5 // pred_region
      %s95 = ssub.s32 %s8, 1
      // Predicated region
      $region13: #{_lambda_.13} parent=11 // pred_check
        %p96 = pneg %p55
      $region14: #{_lambda_.13} parent=11 // pred_check_branch
        %98 = sbr.rel (%p96) target = $region16
      $region15: #{_lambda_.13} parent=11 // pred_region
        _
      $region16: #{_lambda_.13} parent=11 // pred_fallthru
        _
    $region12: #{_lambda_.13} parent=5 // pred_fallthru
      _
    %p99 = scmp.lt.s32.totalorder %s8, 9
    // Predicated region
    $region17: #{_lambda_.13} parent=5 // pred_check
      %p100 = pneg %p99
    $region18: #{_lambda_.13} parent=5 // pred_check_branch
      %102 = sbr.rel (%p100) target = $region20
    $region19: #{_lambda_.13} parent=5 // pred_region
      // Predicated region
      $region21: #{_lambda_.13} parent=19 // pred_check
        %p103 = pneg %p28
      $region22: #{_lambda_.13} parent=19 // pred_check_branch
        %105 = sbr.rel (%p103) target = $region24
      $region23: #{_lambda_.13} parent=19 // pred_region
        %s106 = smul.u32 16, %s8
        %p107 = scmp.lt.s32.totalorder %s106, 143
        %s108 = scalar_select %p107, %s106, 143
        %s109 = smul.addr %s108, 8
        %s110 = scalar_lea.vmem %s0, %s109
        %s111 = smul.u32 16, %s8
      $region24: #{_lambda_.13} parent=19 // pred_fallthru
        _
    $region20: #{_lambda_.13} parent=5 // pred_fallthru
      _
    %p112 = scmp.le.s32.totalorder 1, %s8
    %p113 = scmp.lt.s32.totalorder %s8, 10
    %p114 = pnand %p112, %p113
    %p115 = pneg %p114
    // Predicated region
    $region25: #{_lambda_.13} parent=5 // pred_check
      _
    $region26: #{_lambda_.13} parent=5 // pred_check_branch
      %117 = sbr.rel (%p114) target = $region28
    $region27: #{_lambda_.13} parent=5 // pred_region
      %s118 = ssub.s32 %s8, 1
      %s119 = smul.u32 16, %s13
      %p120 = scmp.lt.s32.totalorder %s119, 143
      %s121 = scalar_select %p120, %s119, 143
      %s122 = smul.addr %s121, 8
      %s123 = scalar_lea.vmem %s0, %s122
      %p124 = pneg %p34
      %p125 = pneg %p31
      %p126 = pneg %p55
      %p127 = pneg %p52
      %p128 = pneg %p81
      %p129 = pneg %p78
      %s130 = smul.u32 16, %s13
      %p131 = scmp.lt.s32.totalorder %s130, 143
      %s132 = scalar_select %p131, %s130, 143
      %s133 = smul.addr %s132, 2
      %s134 = smul.addr %s133, 8
      %s135 = scalar_lea.vmem %s2, %s134
      %s136 = smul.u32 16, %s13
      %p137 = scmp.lt.s32.totalorder %s136, 143
      %s138 = scalar_select %p137, %s136, 143
      %s139 = smul.addr %s138, 8
      %s140 = scalar_lea.vmem %s0, %s139
      %s141 = smul.u32 16, %s13
      %s142 = smul.u32 16, %s13
      %p143 = scmp.lt.s32.totalorder %s142, 143
      %s144 = scalar_select %p143, %s142, 143
      %s145 = smul.addr %s144, 2
      %s146 = smul.addr %s145, 8
      %s147 = scalar_lea.vmem %s2, %s146
      %s148 = smul.u32 16, %s13
      %v150 = vld [vmem:[%s140] sm:$0xff]
      %v151 = vld [vmem:[%s140 + $0x8] sm:$0xff]
      %v152 = vld [vmem:[%s140 + $0x10] sm:$0xff]
      %v153 = vld [vmem:[%s140 + $0x18] sm:$0xff]
      %v154 = vld [vmem:[%s140 + $0x20] sm:$0xff]
      %v155 = vld [vmem:[%s140 + $0x28] sm:$0xff]
      %v156 = vld [vmem:[%s140 + $0x30] sm:$0xff]
      %v157 = vld [vmem:[%s140 + $0x38] sm:$0xff]
      %v158 = vld [vmem:[%s140 + $0x40] sm:$0xff]
      %v159 = vld [vmem:[%s140 + $0x48] sm:$0xff]
      %v160 = vld [vmem:[%s140 + $0x50] sm:$0xff]
      %v161 = vld [vmem:[%s140 + $0x58] sm:$0xff]
      %v162 = vld [vmem:[%s140 + $0x60] sm:$0xff]
      %v163 = vld [vmem:[%s140 + $0x68] sm:$0xff]
      %v164 = vld [vmem:[%s140 + $0x70] sm:$0xff]
      %v165 = vld [vmem:[%s140 + $0x78] sm:$0xff]
      %v166 = vpack.c.bf16 %v151, %v150
      %v167 = vpack.c.bf16 %v153, %v152
      %v168 = vpack.c.bf16 %v155, %v154
      %v169 = vpack.c.bf16 %v157, %v156
      %v170 = vpack.c.bf16 %v159, %v158
      %v171 = vpack.c.bf16 %v161, %v160
      %v172 = vpack.c.bf16 %v163, %v162
      %v173 = vpack.c.bf16 %v165, %v164
      %v174 = vld [vmem:[%s1] sm:$0xff]
      %v175 = vld [vmem:[%s1 + $0x8] sm:$0xff]
      %v176 = vld [vmem:[%s1 + $0x10] sm:$0xff]
      %v177 = vld [vmem:[%s1 + $0x18] sm:$0xff]
      %v178 = vld [vmem:[%s1 + $0x20] sm:$0xff]
      %v179 = vld [vmem:[%s1 + $0x28] sm:$0xff]
      %v180 = vld [vmem:[%s1 + $0x30] sm:$0xff]
      %v181 = vld [vmem:[%s1 + $0x38] sm:$0xff]
      %v182 = vpack.c.bf16 %v176, %v174
      %v183 = vpack.c.bf16 %v177, %v175
      %v184 = vpack.c.bf16 %v180, %v178
      %v185 = vpack.c.bf16 %v181, %v179
      %vm186 = vcmask 261120
      %v188 = vsel %vm186, %v166, 0
      %v191 = vsel %vm186, %v167, 0
      %v194 = vsel %vm186, %v168, 0
      %v197 = vsel %vm186, %v169, 0
      %v200 = vsel %vm186, %v170, 0
      %v203 = vsel %vm186, %v171, 0
      %v206 = vsel %vm186, %v172, 0
      %v209 = vsel %vm186, %v173, 0
      %211 = vmatpush.bf16.msra.mxu0 0
      %212 = vmatpush.bf16.msra.mxu0 0
      %213 = vmatpush.bf16.msra.mxu0 0
      %214 = vmatpush.bf16.msra.mxu0 0
      %215 = vmatpush.bf16.msra.mxu0 0
      %216 = vmatpush.bf16.msra.mxu0 0
      %217 = vmatpush.bf16.msra.mxu0 %v184
      %218 = vmatpush.bf16.msra.mxu0 %v182
      %219 = vmatmul.bf16.gmra.mxu0 %v188
      %v220 = vpop.f32.mrf.mxu0
      %v221 = vadd.f32 0.0, %v220
      %v222 = vpop.f32.mrf.mxu0
      %v223 = vadd.f32 0.0, %v222
      %224 = vmatmul.bf16.gmra.mxu0 %v191
      %v225 = vpop.f32.mrf.mxu0
      %v226 = vadd.f32 0.0, %v225
      %v227 = vpop.f32.mrf.mxu0
      %v228 = vadd.f32 0.0, %v227
      %229 = vmatmul.bf16.gmra.mxu0 %v194
      %v230 = vpop.f32.mrf.mxu0
      %v231 = vadd.f32 0.0, %v230
      %v232 = vpop.f32.mrf.mxu0
      %v233 = vadd.f32 0.0, %v232
      %234 = vmatmul.bf16.gmra.mxu0 %v197
      %v235 = vpop.f32.mrf.mxu0
      %v236 = vadd.f32 0.0, %v235
      %v237 = vpop.f32.mrf.mxu0
      %v238 = vadd.f32 0.0, %v237
      %239 = vmatmul.bf16.gmra.mxu0 %v200
      %v240 = vpop.f32.mrf.mxu0
      %v241 = vadd.f32 0.0, %v240
      %v242 = vpop.f32.mrf.mxu0
      %v243 = vadd.f32 0.0, %v242
      %244 = vmatmul.bf16.gmra.mxu0 %v203
      %v245 = vpop.f32.mrf.mxu0
      %v246 = vadd.f32 0.0, %v245
      %v247 = vpop.f32.mrf.mxu0
      %v248 = vadd.f32 0.0, %v247
      %249 = vmatmul.bf16.gmra.mxu0 %v206
      %v250 = vpop.f32.mrf.mxu0
      %v251 = vadd.f32 0.0, %v250
      %v252 = vpop.f32.mrf.mxu0
      %v253 = vadd.f32 0.0, %v252
      %254 = vmatmul.bf16.gmra.mxu0 %v209
      %v255 = vpop.f32.mrf.mxu0
      %v256 = vadd.f32 0.0, %v255
      %v257 = vpop.f32.mrf.mxu0
      %v258 = vadd.f32 0.0, %v257
      %259 = vdwg.mxu0
      %260 = vmatpush.bf16.msra.mxu0 0
      %261 = vmatpush.bf16.msra.mxu0 0
      %262 = vmatpush.bf16.msra.mxu0 0
      %263 = vmatpush.bf16.msra.mxu0 0
      %264 = vmatpush.bf16.msra.mxu0 0
      %265 = vmatpush.bf16.msra.mxu0 0
      %266 = vmatpush.bf16.msra.mxu0 %v185
      %267 = vmatpush.bf16.msra.mxu0 %v183
      %268 = vmatmul.bf16.gmra.mxu0 %v188
      %v269 = vpop.f32.mrf.mxu0
      %v270 = vadd.f32 0.0, %v269
      %v271 = vpop.f32.mrf.mxu0
      %v272 = vadd.f32 0.0, %v271
      %273 = vmatmul.bf16.gmra.mxu0 %v191
      %v274 = vpop.f32.mrf.mxu0
      %v275 = vadd.f32 0.0, %v274
      %v276 = vpop.f32.mrf.mxu0
      %v277 = vadd.f32 0.0, %v276
      %278 = vmatmul.bf16.gmra.mxu0 %v194
      %v279 = vpop.f32.mrf.mxu0
      %v280 = vadd.f32 0.0, %v279
      %v281 = vpop.f32.mrf.mxu0
      %v282 = vadd.f32 0.0, %v281
      %283 = vmatmul.bf16.gmra.mxu0 %v197
      %v284 = vpop.f32.mrf.mxu0
      %v285 = vadd.f32 0.0, %v284
      %v286 = vpop.f32.mrf.mxu0
      %v287 = vadd.f32 0.0, %v286
      %288 = vmatmul.bf16.gmra.mxu0 %v200
      %v289 = vpop.f32.mrf.mxu0
      %v290 = vadd.f32 0.0, %v289
      %v291 = vpop.f32.mrf.mxu0
      %v292 = vadd.f32 0.0, %v291
      %293 = vmatmul.bf16.gmra.mxu0 %v203
      %v294 = vpop.f32.mrf.mxu0
      %v295 = vadd.f32 0.0, %v294
      %v296 = vpop.f32.mrf.mxu0
      %v297 = vadd.f32 0.0, %v296
      %298 = vmatmul.bf16.gmra.mxu0 %v206
      %v299 = vpop.f32.mrf.mxu0
      %v300 = vadd.f32 0.0, %v299
      %v301 = vpop.f32.mrf.mxu0
      %v302 = vadd.f32 0.0, %v301
      %303 = vmatmul.bf16.gmra.mxu0 %v209
      %v304 = vpop.f32.mrf.mxu0
      %v305 = vadd.f32 0.0, %v304
      %v306 = vpop.f32.mrf.mxu0
      %v307 = vadd.f32 0.0, %v306
      %308 = vdwg.mxu0
      %309 = vst [vmem:[%s147] sm:$0xff] %v221
      %vm310 = vcmask 523264
      %311 = vst.msk [vmem:[%s147 + $0x8] sm:$0xff] %vm310, %v270
      %312 = vst [vmem:[%s147 + $0x10] sm:$0xff] %v223
      %313 = vst.msk [vmem:[%s147 + $0x18] sm:$0xff] %vm310, %v272
      %314 = vst [vmem:[%s147 + $0x20] sm:$0xff] %v226
      %315 = vst.msk [vmem:[%s147 + $0x28] sm:$0xff] %vm310, %v275
      %316 = vst [vmem:[%s147 + $0x30] sm:$0xff] %v228
      %317 = vst.msk [vmem:[%s147 + $0x38] sm:$0xff] %vm310, %v277
      %318 = vst [vmem:[%s147 + $0x40] sm:$0xff] %v231
      %319 = vst.msk [vmem:[%s147 + $0x48] sm:$0xff] %vm310, %v280
      %320 = vst [vmem:[%s147 + $0x50] sm:$0xff] %v233
      %321 = vst.msk [vmem:[%s147 + $0x58] sm:$0xff] %vm310, %v282
      %322 = vst [vmem:[%s147 + $0x60] sm:$0xff] %v236
      %323 = vst.msk [vmem:[%s147 + $0x68] sm:$0xff] %vm310, %v285
      %324 = vst [vmem:[%s147 + $0x70] sm:$0xff] %v238
      %325 = vst.msk [vmem:[%s147 + $0x78] sm:$0xff] %vm310, %v287
      %326 = vst [vmem:[%s147 + $0x80] sm:$0xff] %v241
      %327 = vst.msk [vmem:[%s147 + $0x88] sm:$0xff] %vm310, %v290
      %328 = vst [vmem:[%s147 + $0x90] sm:$0xff] %v243
      %329 = vst.msk [vmem:[%s147 + $0x98] sm:$0xff] %vm310, %v292
      %330 = vst [vmem:[%s147 + $0xa0] sm:$0xff] %v246
      %331 = vst.msk [vmem:[%s147 + $0xa8] sm:$0xff] %vm310, %v295
      %332 = vst [vmem:[%s147 + $0xb0] sm:$0xff] %v248
      %333 = vst.msk [vmem:[%s147 + $0xb8] sm:$0xff] %vm310, %v297
      %334 = vst [vmem:[%s147 + $0xc0] sm:$0xff] %v251
      %335 = vst.msk [vmem:[%s147 + $0xc8] sm:$0xff] %vm310, %v300
      %336 = vst [vmem:[%s147 + $0xd0] sm:$0xff] %v253
      %337 = vst.msk [vmem:[%s147 + $0xd8] sm:$0xff] %vm310, %v302
      %338 = vst [vmem:[%s147 + $0xe0] sm:$0xff] %v256
      %339 = vst.msk [vmem:[%s147 + $0xe8] sm:$0xff] %vm310, %v305
      %340 = vst [vmem:[%s147 + $0xf0] sm:$0xff] %v258
      %341 = vst.msk [vmem:[%s147 + $0xf8] sm:$0xff] %vm310, %v307
      %s342 = smul.u32 16, %s13
      %p343 = scmp.lt.s32.totalorder %s342, 143
      %s344 = scalar_select %p343, %s342, 143
      %s345 = smul.addr %s344, 2
      %s346 = smul.addr %s345, 8
      %s347 = scalar_lea.vmem %s2, %s346
      // Predicated region
      $region29: #{_lambda_.13} parent=27 // pred_check
        %p348 = pneg %p78
      $region30: #{_lambda_.13} parent=27 // pred_check_branch
        %350 = sbr.rel (%p348) target = $region32
      $region31: #{_lambda_.13} parent=27 // pred_region
        %s351 = smul.u32 16, %s13
      $region32: #{_lambda_.13} parent=27 // pred_fallthru
        _
    $region28: #{_lambda_.13} parent=5 // pred_fallthru
      _
    %p352 = scmp.le.s32.totalorder 2, %s8
    // Predicated region
    $region33: #{_lambda_.13} parent=5 // pred_check
      %p353 = pneg %p352
    $region34: #{_lambda_.13} parent=5 // pred_check_branch
      %355 = sbr.rel (%p353) target = $region36
    $region35: #{_lambda_.13} parent=5 // pred_region
      %s356 = ssub.s32 %s8, 2
      // Predicated region
      $region37: #{_lambda_.13} parent=35 // pred_check
        %p357 = pneg %p84
      $region38: #{_lambda_.13} parent=35 // pred_check_branch
        %359 = sbr.rel (%p357) target = $region40
      $region39: #{_lambda_.13} parent=35 // pred_region
        %s360 = smul.u32 16, %s14
        %p361 = scmp.lt.s32.totalorder %s360, 143
        %s362 = scalar_select %p361, %s360, 143
        %s363 = smul.addr %s362, 2
        %s364 = smul.addr %s363, 8
        %s365 = scalar_lea.vmem %s2, %s364
      $region40: #{_lambda_.13} parent=35 // pred_fallthru
        _
    $region36: #{_lambda_.13} parent=5 // pred_fallthru
      _
  $region6: #{_lambda_.13} parent=0 // loop_footer
    %s12 = sadd.s32 1, %s8
  $region7: #{_lambda_.13} parent=0 // loop_footer_branch
    %7 = sbr.rel target = $region3
  $region8: #{_lambda_.13} parent=0 // loop_exit
    _

// kernel: _lambda_.9
$region0: #{_lambda_.9}
  #allocation0 [shape = 'u32[]', space=smem, size = 0x4, offset = 0x4, fixed_abs, tag = 'smem constant byte address 0x4 - core index']
  #allocation1 [shape = 'u32[72,128]{1,0:T(1,128)}', space=vmem, size = 0x9000, scoped, tag = 'internal scratch']
  %s0 = inlined_call_operand.vmem [shape: f32[2,256,288], index: 0, kind: input, shape index: {}]
  %s1 = inlined_call_operand.vmem [shape: f32[288,32], index: 1, kind: input, shape index: {}]
  %s2 = inlined_call_operand.vmem [shape: f32[2,256,32], index: 2, kind: output, shape index: {}]
  %s3 = sld [smem:[#allocation0]]
  $region41: #{_lambda_.9} parent=0
    _
  %s5 = ssub.s32 1, %s3
  %s6 = scalar_select 0, %s5, %s3
  loop: start=0, step=1, limit=4
  $region2: #{_lambda_.9} parent=0 // loop_pre_header
    _
  $region3: #{_lambda_.9} parent=0 // loop_header
    %s8 = sphi 0, %s12
    %p9 = scmp.ge.s32.totalorder %s8, 4
    %s18 = sphi 0, %s20
    %s21 = sphi 0, %s18
    %s22 = sphi 0, %s21
    %s38 = sphi 0, %s22
    %s42 = sphi 0, %s42
    %s44 = sphi 0, %s42
    %s45 = sphi 0, %s44
    %s59 = sphi 0, %s45
    %s65 = sphi 0, %s67
    %s68 = sphi 0, %s65
    %s69 = sphi 0, %s68
    %s85 = sphi 0, %s69
  $region4: #{_lambda_.9} parent=0 // loop_header_branch
    %11 = sbr.rel (%p9) target = $region8
  $region5: #{_lambda_.9} parent=0 // loop_body
    %s13 = ssub.s32 %s8, 1
    %s14 = ssub.s32 %s8, 2
    %s15 = sadd.s32 %s8, 1
    %s16 = ssub.s32 %s8, %s15
    %p17 = scmp.eq.s32.totalorder %s16, 0
    %s19 = sadd.s32 %s18, 1
    %s20 = scalar_select %p17, %s18, %s19
    %p23 = pneg %p17
    %p24 = scmp.eq.s32.totalorder %s8, 1
    %p25 = por %p23, %p24
    %p26 = scmp.ne.s32.totalorder %s18, %s21
    %p27 = scmp.eq.s32.totalorder %s8, 0
    %p28 = por %p26, %p27
    %p29 = scmp.ne.s32.totalorder %s18, %s21
    %p30 = scmp.eq.s32.totalorder %s13, 1
    %p31 = por %p29, %p30
    %p32 = scmp.ne.s32.totalorder %s21, %s22
    %p33 = scmp.eq.s32.totalorder %s13, 0
    %p34 = por %p32, %p33
    %p35 = scmp.ne.s32.totalorder %s21, %s22
    %p36 = scmp.eq.s32.totalorder %s14, 1
    %p37 = por %p35, %p36
    %p39 = scmp.ne.s32.totalorder %s22, %s38
    %p40 = scmp.eq.s32.totalorder %s14, 0
    %p41 = por %p39, %p40
    %s43 = sadd.s32 %s42, 1
    %p46 = scmp.eq.s32.totalorder %s8, 1
    %p47 = scmp.ne.s32.totalorder %s42, %s44
    %p48 = scmp.eq.s32.totalorder %s8, 0
    %p49 = por %p47, %p48
    %p50 = scmp.ne.s32.totalorder %s42, %s44
    %p51 = scmp.eq.s32.totalorder %s13, 1
    %p52 = por %p50, %p51
    %p53 = scmp.ne.s32.totalorder %s44, %s45
    %p54 = scmp.eq.s32.totalorder %s13, 0
    %p55 = por %p53, %p54
    %p56 = scmp.ne.s32.totalorder %s44, %s45
    %p57 = scmp.eq.s32.totalorder %s14, 1
    %p58 = por %p56, %p57
    %p60 = scmp.ne.s32.totalorder %s45, %s59
    %p61 = scmp.eq.s32.totalorder %s14, 0
    %p62 = por %p60, %p61
    %s63 = ssub.s32 %s8, %s15
    %p64 = scmp.eq.s32.totalorder %s63, 0
    %s66 = sadd.s32 %s65, 1
    %s67 = scalar_select %p64, %s65, %s66
    %p70 = pneg %p64
    %p71 = scmp.eq.s32.totalorder %s8, 1
    %p72 = por %p70, %p71
    %p73 = scmp.ne.s32.totalorder %s65, %s68
    %p74 = scmp.eq.s32.totalorder %s8, 0
    %p75 = por %p73, %p74
    %p76 = scmp.ne.s32.totalorder %s65, %s68
    %p77 = scmp.eq.s32.totalorder %s13, 1
    %p78 = por %p76, %p77
    %p79 = scmp.ne.s32.totalorder %s68, %s69
    %p80 = scmp.eq.s32.totalorder %s13, 0
    %p81 = por %p79, %p80
    %p82 = scmp.ne.s32.totalorder %s68, %s69
    %p83 = scmp.eq.s32.totalorder %s14, 1
    %p84 = por %p82, %p83
    %p86 = scmp.ne.s32.totalorder %s69, %s85
    %p87 = scmp.eq.s32.totalorder %s14, 0
    %p88 = por %p86, %p87
    %p89 = scmp.le.s32.totalorder 1, %s8
    %p90 = scmp.lt.s32.totalorder %s8, 3
    %p91 = pnand %p89, %p90
    %p92 = pneg %p91
    // Predicated region
    $region9: #{_lambda_.9} parent=5 // pred_check
      _
    $region10: #{_lambda_.9} parent=5 // pred_check_branch
      %94 = sbr.rel (%p91) target = $region12
    $region11: #{_lambda_.9} parent=5 // pred_region
      %s95 = ssub.s32 %s8, 1
      // Predicated region
      $region13: #{_lambda_.9} parent=11 // pred_check
        %p96 = pneg %p55
      $region14: #{_lambda_.9} parent=11 // pred_check_branch
        %98 = sbr.rel (%p96) target = $region16
      $region15: #{_lambda_.9} parent=11 // pred_region
        _
      $region16: #{_lambda_.9} parent=11 // pred_fallthru
        _
    $region12: #{_lambda_.9} parent=5 // pred_fallthru
      _
    %p99 = scmp.lt.s32.totalorder %s8, 2
    // Predicated region
    $region17: #{_lambda_.9} parent=5 // pred_check
      %p100 = pneg %p99
    $region18: #{_lambda_.9} parent=5 // pred_check_branch
      %102 = sbr.rel (%p100) target = $region20
    $region19: #{_lambda_.9} parent=5 // pred_region
      // Predicated region
      $region21: #{_lambda_.9} parent=19 // pred_check
        %p103 = pneg %p28
      $region22: #{_lambda_.9} parent=19 // pred_check_branch
        %105 = sbr.rel (%p103) target = $region24
      $region23: #{_lambda_.9} parent=19 // pred_region
        %p106 = scmp.lt.s32.totalorder %s8, 1
        %s107 = scalar_select %p106, %s8, 1
        %s108 = smul.addr %s107, 96
        %s109 = smul.addr %s108, 8
        %s110 = scalar_lea.vmem %s0, %s109
      $region24: #{_lambda_.9} parent=19 // pred_fallthru
        _
    $region20: #{_lambda_.9} parent=5 // pred_fallthru
      _
    %p111 = scmp.le.s32.totalorder 1, %s8
    %p112 = scmp.lt.s32.totalorder %s8, 3
    %p113 = pnand %p111, %p112
    %p114 = pneg %p113
    // Predicated region
    $region25: #{_lambda_.9} parent=5 // pred_check
      _
    $region26: #{_lambda_.9} parent=5 // pred_check_branch
      %116 = sbr.rel (%p113) target = $region28
    $region27: #{_lambda_.9} parent=5 // pred_region
      %s117 = ssub.s32 %s8, 1
      %p118 = scmp.lt.s32.totalorder %s13, 1
      %s119 = scalar_select %p118, %s13, 1
      %s120 = smul.addr %s119, 96
      %s121 = smul.addr %s120, 8
      %s122 = scalar_lea.vmem %s0, %s121
      %p123 = pneg %p34
      %p124 = pneg %p31
      %p125 = pneg %p55
      %p126 = pneg %p52
      %p127 = pneg %p81
      %p128 = pneg %p78
      %p129 = scmp.lt.s32.totalorder %s13, 1
      %s130 = scalar_select %p129, %s13, 1
      %s131 = smul.addr %s130, 32
      %s132 = smul.addr %s131, 8
      %s133 = scalar_lea.vmem %s2, %s132
      %p134 = scmp.lt.s32.totalorder %s13, 1
      %s135 = scalar_select %p134, %s13, 1
      %s136 = smul.addr %s135, 96
      %s137 = smul.addr %s136, 8
      %s138 = scalar_lea.vmem %s0, %s137
      %p139 = scmp.lt.s32.totalorder %s13, 1
      %s140 = scalar_select %p139, %s13, 1
      %s141 = smul.addr %s140, 32
      %s142 = smul.addr %s141, 8
      %s143 = scalar_lea.vmem %s2, %s142
      %v145 = vld [vmem:[%s138] sm:$0xff]
      %v146 = vld [vmem:[%s138 + $0x8] sm:$0xff]
      %v147 = vld [vmem:[%s138 + $0x10] sm:$0xff]
      %v148 = vld [vmem:[%s138 + $0x18] sm:$0xff]
      %v149 = vld [vmem:[%s138 + $0x20] sm:$0xff]
      %v150 = vld [vmem:[%s138 + $0x28] sm:$0xff]
      %v151 = vld [vmem:[%s138 + $0x30] sm:$0xff]
      %v152 = vld [vmem:[%s138 + $0x38] sm:$0xff]
      %v153 = vld [vmem:[%s138 + $0x40] sm:$0xff]
      %v154 = vld [vmem:[%s138 + $0x48] sm:$0xff]
      %v155 = vld [vmem:[%s138 + $0x50] sm:$0xff]
      %v156 = vld [vmem:[%s138 + $0x58] sm:$0xff]
      %v157 = vld [vmem:[%s138 + $0x60] sm:$0xff]
      %v158 = vld [vmem:[%s138 + $0x68] sm:$0xff]
      %v159 = vld [vmem:[%s138 + $0x70] sm:$0xff]
      %v160 = vld [vmem:[%s138 + $0x78] sm:$0xff]
      %v161 = vld [vmem:[%s138 + $0x80] sm:$0xff]
      %v162 = vld [vmem:[%s138 + $0x88] sm:$0xff]
      %v163 = vld [vmem:[%s138 + $0x90] sm:$0xff]
      %v164 = vld [vmem:[%s138 + $0x98] sm:$0xff]
      %v165 = vld [vmem:[%s138 + $0xa0] sm:$0xff]
      %v166 = vld [vmem:[%s138 + $0xa8] sm:$0xff]
      %v167 = vld [vmem:[%s138 + $0xb0] sm:$0xff]
      %v168 = vld [vmem:[%s138 + $0xb8] sm:$0xff]
      %v169 = vld [vmem:[%s138 + $0xc0] sm:$0xff]
      %v170 = vld [vmem:[%s138 + $0xc8] sm:$0xff]
      %v171 = vld [vmem:[%s138 + $0xd0] sm:$0xff]
      %v172 = vld [vmem:[%s138 + $0xd8] sm:$0xff]
      %v173 = vld [vmem:[%s138 + $0xe0] sm:$0xff]
      %v174 = vld [vmem:[%s138 + $0xe8] sm:$0xff]
      %v175 = vld [vmem:[%s138 + $0xf0] sm:$0xff]
      %v176 = vld [vmem:[%s138 + $0xf8] sm:$0xff]
      %v177 = vld [vmem:[%s138 + $0x100] sm:$0xff]
      %v178 = vld [vmem:[%s138 + $0x108] sm:$0xff]
      %v179 = vld [vmem:[%s138 + $0x110] sm:$0xff]
      %v180 = vld [vmem:[%s138 + $0x118] sm:$0xff]
      %v181 = vld [vmem:[%s138 + $0x120] sm:$0xff]
      %v182 = vld [vmem:[%s138 + $0x128] sm:$0xff]
      %v183 = vld [vmem:[%s138 + $0x130] sm:$0xff]
      %v184 = vld [vmem:[%s138 + $0x138] sm:$0xff]
      %v185 = vld [vmem:[%s138 + $0x140] sm:$0xff]
      %v186 = vld [vmem:[%s138 + $0x148] sm:$0xff]
      %v187 = vld [vmem:[%s138 + $0x150] sm:$0xff]
      %v188 = vld [vmem:[%s138 + $0x158] sm:$0xff]
      %v189 = vld [vmem:[%s138 + $0x160] sm:$0xff]
      %v190 = vld [vmem:[%s138 + $0x168] sm:$0xff]
      %v191 = vld [vmem:[%s138 + $0x170] sm:$0xff]
      %v192 = vld [vmem:[%s138 + $0x178] sm:$0xff]
      %v193 = vld [vmem:[%s138 + $0x180] sm:$0xff]
      %v194 = vld [vmem:[%s138 + $0x188] sm:$0xff]
      %v195 = vld [vmem:[%s138 + $0x190] sm:$0xff]
      %v196 = vld [vmem:[%s138 + $0x198] sm:$0xff]
      %v197 = vld [vmem:[%s138 + $0x1a0] sm:$0xff]
      %v198 = vld [vmem:[%s138 + $0x1a8] sm:$0xff]
      %v199 = vld [vmem:[%s138 + $0x1b0] sm:$0xff]
      %v200 = vld [vmem:[%s138 + $0x1b8] sm:$0xff]
      %v201 = vld [vmem:[%s138 + $0x1c0] sm:$0xff]
      %v202 = vld [vmem:[%s138 + $0x1c8] sm:$0xff]
      %v203 = vld [vmem:[%s138 + $0x1d0] sm:$0xff]
      %v204 = vld [vmem:[%s138 + $0x1d8] sm:$0xff]
      %v205 = vld [vmem:[%s138 + $0x1e0] sm:$0xff]
      %v206 = vld [vmem:[%s138 + $0x1e8] sm:$0xff]
      %v207 = vld [vmem:[%s138 + $0x1f0] sm:$0xff]
      %v208 = vld [vmem:[%s138 + $0x1f8] sm:$0xff]
      %v209 = vld [vmem:[%s138 + $0x200] sm:$0xff]
      %v210 = vld [vmem:[%s138 + $0x208] sm:$0xff]
      %v211 = vld [vmem:[%s138 + $0x210] sm:$0xff]
      %v212 = vld [vmem:[%s138 + $0x218] sm:$0xff]
      %v213 = vld [vmem:[%s138 + $0x220] sm:$0xff]
      %v214 = vld [vmem:[%s138 + $0x228] sm:$0xff]
      %v215 = vld [vmem:[%s138 + $0x230] sm:$0xff]
      %v216 = vld [vmem:[%s138 + $0x238] sm:$0xff]
      %v217 = vld [vmem:[%s138 + $0x240] sm:$0xff]
      %v218 = vld [vmem:[%s138 + $0x248] sm:$0xff]
      %v219 = vld [vmem:[%s138 + $0x250] sm:$0xff]
      %v220 = vld [vmem:[%s138 + $0x258] sm:$0xff]
      %v221 = vld [vmem:[%s138 + $0x260] sm:$0xff]
      %v222 = vld [vmem:[%s138 + $0x268] sm:$0xff]
      %v223 = vld [vmem:[%s138 + $0x270] sm:$0xff]
      %v224 = vld [vmem:[%s138 + $0x278] sm:$0xff]
      %v225 = vld [vmem:[%s138 + $0x280] sm:$0xff]
      %v226 = vld [vmem:[%s138 + $0x288] sm:$0xff]
      %v227 = vld [vmem:[%s138 + $0x290] sm:$0xff]
      %v228 = vld [vmem:[%s138 + $0x298] sm:$0xff]
      %v229 = vld [vmem:[%s138 + $0x2a0] sm:$0xff]
      %v230 = vld [vmem:[%s138 + $0x2a8] sm:$0xff]
      %v231 = vld [vmem:[%s138 + $0x2b0] sm:$0xff]
      %v232 = vld [vmem:[%s138 + $0x2b8] sm:$0xff]
      %v233 = vld [vmem:[%s138 + $0x2c0] sm:$0xff]
      %v234 = vld [vmem:[%s138 + $0x2c8] sm:$0xff]
      %v235 = vld [vmem:[%s138 + $0x2d0] sm:$0xff]
      %v236 = vld [vmem:[%s138 + $0x2d8] sm:$0xff]
      %v237 = vld [vmem:[%s138 + $0x2e0] sm:$0xff]
      %v238 = vld [vmem:[%s138 + $0x2e8] sm:$0xff]
      %v239 = vld [vmem:[%s138 + $0x2f0] sm:$0xff]
      %v240 = vld [vmem:[%s138 + $0x2f8] sm:$0xff]
      %v241 = vpack.c.bf16 %v148, %v145
      %v242 = vpack.c.bf16 %v149, %v146
      %v243 = vpack.c.bf16 %v150, %v147
      %v244 = vpack.c.bf16 %v154, %v151
      %v245 = vpack.c.bf16 %v155, %v152
      %v246 = vpack.c.bf16 %v156, %v153
      %v247 = vpack.c.bf16 %v160, %v157
      %v248 = vpack.c.bf16 %v161, %v158
      %v249 = vpack.c.bf16 %v162, %v159
      %v250 = vpack.c.bf16 %v166, %v163
      %v251 = vpack.c.bf16 %v167, %v164
      %v252 = vpack.c.bf16 %v168, %v165
      %v253 = vpack.c.bf16 %v172, %v169
      %v254 = vpack.c.bf16 %v173, %v170
      %v255 = vpack.c.bf16 %v174, %v171
      %v256 = vpack.c.bf16 %v178, %v175
      %v257 = vpack.c.bf16 %v179, %v176
      %v258 = vpack.c.bf16 %v180, %v177
      %v259 = vpack.c.bf16 %v184, %v181
      %v260 = vpack.c.bf16 %v185, %v182
      %v261 = vpack.c.bf16 %v186, %v183
      %v262 = vpack.c.bf16 %v190, %v187
      %v263 = vpack.c.bf16 %v191, %v188
      %v264 = vpack.c.bf16 %v192, %v189
      %v265 = vpack.c.bf16 %v196, %v193
      %v266 = vpack.c.bf16 %v197, %v194
      %v267 = vpack.c.bf16 %v198, %v195
      %v268 = vpack.c.bf16 %v202, %v199
      %v269 = vpack.c.bf16 %v203, %v200
      %v270 = vpack.c.bf16 %v204, %v201
      %v271 = vpack.c.bf16 %v208, %v205
      %v272 = vpack.c.bf16 %v209, %v206
      %v273 = vpack.c.bf16 %v210, %v207
      %v274 = vpack.c.bf16 %v214, %v211
      %v275 = vpack.c.bf16 %v215, %v212
      %v276 = vpack.c.bf16 %v216, %v213
      %v277 = vpack.c.bf16 %v220, %v217
      %v278 = vpack.c.bf16 %v221, %v218
      %v279 = vpack.c.bf16 %v222, %v219
      %v280 = vpack.c.bf16 %v226, %v223
      %v281 = vpack.c.bf16 %v227, %v224
      %v282 = vpack.c.bf16 %v228, %v225
      %v283 = vpack.c.bf16 %v232, %v229
      %v284 = vpack.c.bf16 %v233, %v230
      %v285 = vpack.c.bf16 %v234, %v231
      %v286 = vpack.c.bf16 %v238, %v235
      %v287 = vpack.c.bf16 %v239, %v236
      %v288 = vpack.c.bf16 %v240, %v237
      %v289 = vld [vmem:[%s1] sm:$0xff]
      %v290 = vld [vmem:[%s1 + $0x8] sm:$0xff]
      %v291 = vld [vmem:[%s1 + $0x10] sm:$0xff]
      %v292 = vld [vmem:[%s1 + $0x18] sm:$0xff]
      %v293 = vld [vmem:[%s1 + $0x20] sm:$0xff]
      %v294 = vld [vmem:[%s1 + $0x28] sm:$0xff]
      %v295 = vld [vmem:[%s1 + $0x30] sm:$0xff]
      %v296 = vld [vmem:[%s1 + $0x38] sm:$0xff]
      %v297 = vld [vmem:[%s1 + $0x40] sm:$0xff]
      %v298 = vld [vmem:[%s1 + $0x48] sm:$0xff]
      %v299 = vld [vmem:[%s1 + $0x50] sm:$0xff]
      %v300 = vld [vmem:[%s1 + $0x58] sm:$0xff]
      %v301 = vld [vmem:[%s1 + $0x60] sm:$0xff]
      %v302 = vld [vmem:[%s1 + $0x68] sm:$0xff]
      %v303 = vld [vmem:[%s1 + $0x70] sm:$0xff]
      %v304 = vld [vmem:[%s1 + $0x78] sm:$0xff]
      %v305 = vld [vmem:[%s1 + $0x80] sm:$0xff]
      %v306 = vld [vmem:[%s1 + $0x88] sm:$0xff]
      %v307 = vld [vmem:[%s1 + $0x90] sm:$0xff]
      %v308 = vld [vmem:[%s1 + $0x98] sm:$0xff]
      %v309 = vld [vmem:[%s1 + $0xa0] sm:$0xff]
      %v310 = vld [vmem:[%s1 + $0xa8] sm:$0xff]
      %v311 = vld [vmem:[%s1 + $0xb0] sm:$0xff]
      %v312 = vld [vmem:[%s1 + $0xb8] sm:$0xff]
      %v313 = vld [vmem:[%s1 + $0xc0] sm:$0xff]
      %v314 = vld [vmem:[%s1 + $0xc8] sm:$0xff]
      %v315 = vld [vmem:[%s1 + $0xd0] sm:$0xff]
      %v316 = vld [vmem:[%s1 + $0xd8] sm:$0xff]
      %v317 = vld [vmem:[%s1 + $0xe0] sm:$0xff]
      %v318 = vld [vmem:[%s1 + $0xe8] sm:$0xff]
      %v319 = vld [vmem:[%s1 + $0xf0] sm:$0xff]
      %v320 = vld [vmem:[%s1 + $0xf8] sm:$0xff]
      %v321 = vld [vmem:[%s1 + $0x100] sm:$0xff]
      %v322 = vld [vmem:[%s1 + $0x108] sm:$0xff]
      %v323 = vld [vmem:[%s1 + $0x110] sm:$0xff]
      %v324 = vld [vmem:[%s1 + $0x118] sm:$0xff]
      %v325 = vpack.c.bf16 %v290, %v289
      %v326 = vpack.c.bf16 %v292, %v291
      %v327 = vpack.c.bf16 %v294, %v293
      %v328 = vpack.c.bf16 %v296, %v295
      %v329 = vpack.c.bf16 %v298, %v297
      %v330 = vpack.c.bf16 %v300, %v299
      %v331 = vpack.c.bf16 %v302, %v301
      %v332 = vpack.c.bf16 %v304, %v303
      %v333 = vpack.c.bf16 %v306, %v305
      %v334 = vpack.c.bf16 %v308, %v307
      %v335 = vpack.c.bf16 %v310, %v309
      %v336 = vpack.c.bf16 %v312, %v311
      %v337 = vpack.c.bf16 %v314, %v313
      %v338 = vpack.c.bf16 %v316, %v315
      %v339 = vpack.c.bf16 %v318, %v317
      %v340 = vpack.c.bf16 %v320, %v319
      %v341 = vpack.c.bf16 %v322, %v321
      %v342 = vpack.c.bf16 %v324, %v323
      %vm343 = vcmask 261120
      %v345 = vsel %vm343, %v243, 0
      %v348 = vsel %vm343, %v246, 0
      %v351 = vsel %vm343, %v249, 0
      %v354 = vsel %vm343, %v252, 0
      %v357 = vsel %vm343, %v255, 0
      %v360 = vsel %vm343, %v258, 0
      %v363 = vsel %vm343, %v261, 0
      %v366 = vsel %vm343, %v264, 0
      %v369 = vsel %vm343, %v267, 0
      %v372 = vsel %vm343, %v270, 0
      %v375 = vsel %vm343, %v273, 0
      %v378 = vsel %vm343, %v276, 0
      %v381 = vsel %vm343, %v279, 0
      %v384 = vsel %vm343, %v282, 0
      %v387 = vsel %vm343, %v285, 0
      %v390 = vsel %vm343, %v288, 0
      %392 = vmatpush.bf16.msra.mxu0 %v332
      %393 = vmatpush.bf16.msra.mxu0 %v331
      %394 = vmatpush.bf16.msra.mxu0 %v330
      %395 = vmatpush.bf16.msra.mxu0 %v329
      %396 = vmatpush.bf16.msra.mxu0 %v328
      %397 = vmatpush.bf16.msra.mxu0 %v327
      %398 = vmatpush.bf16.msra.mxu0 %v326
      %399 = vmatpush.bf16.msra.mxu0 %v325
      %400 = vmatmul.bf16.gmra.mxu0 %v241
      %v401 = vpop.f32.mrf.mxu0
      %v402 = vadd.f32 0.0, %v401
      %v403 = vpop.f32.mrf.mxu0
      %v404 = vadd.f32 0.0, %v403
      %405 = vmatmul.bf16.gmra.mxu0 %v244
      %v406 = vpop.f32.mrf.mxu0
      %v407 = vadd.f32 0.0, %v406
      %v408 = vpop.f32.mrf.mxu0
      %v409 = vadd.f32 0.0, %v408
      %410 = vmatmul.bf16.gmra.mxu0 %v247
      %v411 = vpop.f32.mrf.mxu0
      %v412 = vadd.f32 0.0, %v411
      %v413 = vpop.f32.mrf.mxu0
      %v414 = vadd.f32 0.0, %v413
      %415 = vmatmul.bf16.gmra.mxu0 %v250
      %v416 = vpop.f32.mrf.mxu0
      %v417 = vadd.f32 0.0, %v416
      %v418 = vpop.f32.mrf.mxu0
      %v419 = vadd.f32 0.0, %v418
      %420 = vmatmul.bf16.gmra.mxu0 %v253
      %v421 = vpop.f32.mrf.mxu0
      %v422 = vadd.f32 0.0, %v421
      %v423 = vpop.f32.mrf.mxu0
      %v424 = vadd.f32 0.0, %v423
      %425 = vmatmul.bf16.gmra.mxu0 %v256
      %v426 = vpop.f32.mrf.mxu0
      %v427 = vadd.f32 0.0, %v426
      %v428 = vpop.f32.mrf.mxu0
      %v429 = vadd.f32 0.0, %v428
      %430 = vmatmul.bf16.gmra.mxu0 %v259
      %v431 = vpop.f32.mrf.mxu0
      %v432 = vadd.f32 0.0, %v431
      %v433 = vpop.f32.mrf.mxu0
      %v434 = vadd.f32 0.0, %v433
      %435 = vmatmul.bf16.gmra.mxu0 %v262
      %v436 = vpop.f32.mrf.mxu0
      %v437 = vadd.f32 0.0, %v436
      %v438 = vpop.f32.mrf.mxu0
      %v439 = vadd.f32 0.0, %v438
      %440 = vmatmul.bf16.gmra.mxu0 %v265
      %v441 = vpop.f32.mrf.mxu0
      %v442 = vadd.f32 0.0, %v441
      %v443 = vpop.f32.mrf.mxu0
      %v444 = vadd.f32 0.0, %v443
      %445 = vmatmul.bf16.gmra.mxu0 %v268
      %v446 = vpop.f32.mrf.mxu0
      %v447 = vadd.f32 0.0, %v446
      %v448 = vpop.f32.mrf.mxu0
      %v449 = vadd.f32 0.0, %v448
      %450 = vmatmul.bf16.gmra.mxu0 %v271
      %v451 = vpop.f32.mrf.mxu0
      %v452 = vadd.f32 0.0, %v451
      %v453 = vpop.f32.mrf.mxu0
      %v454 = vadd.f32 0.0, %v453
      %455 = vmatmul.bf16.gmra.mxu0 %v274
      %v456 = vpop.f32.mrf.mxu0
      %v457 = vadd.f32 0.0, %v456
      %v458 = vpop.f32.mrf.mxu0
      %v459 = vadd.f32 0.0, %v458
      %460 = vmatmul.bf16.gmra.mxu0 %v277
      %v461 = vpop.f32.mrf.mxu0
      %v462 = vadd.f32 0.0, %v461
      %v463 = vpop.f32.mrf.mxu0
      %v464 = vadd.f32 0.0, %v463
      %465 = vmatmul.bf16.gmra.mxu0 %v280
      %v466 = vpop.f32.mrf.mxu0
      %v467 = vadd.f32 0.0, %v466
      %v468 = vpop.f32.mrf.mxu0
      %v469 = vadd.f32 0.0, %v468
      %470 = vmatmul.bf16.gmra.mxu0 %v283
      %v471 = vpop.f32.mrf.mxu0
      %v472 = vadd.f32 0.0, %v471
      %v473 = vpop.f32.mrf.mxu0
      %v474 = vadd.f32 0.0, %v473
      %475 = vmatmul.bf16.gmra.mxu0 %v286
      %v476 = vpop.f32.mrf.mxu0
      %v477 = vadd.f32 0.0, %v476
      %v478 = vpop.f32.mrf.mxu0
      %v479 = vadd.f32 0.0, %v478
      %480 = vdwg.mxu0
      %481 = vmatpush.bf16.msra.mxu0 %v340
      %482 = vmatpush.bf16.msra.mxu0 %v339
      %483 = vmatpush.bf16.msra.mxu0 %v338
      %484 = vmatpush.bf16.msra.mxu0 %v337
      %485 = vmatpush.bf16.msra.mxu0 %v336
      %486 = vmatpush.bf16.msra.mxu0 %v335
      %487 = vmatpush.bf16.msra.mxu0 %v334
      %488 = vmatpush.bf16.msra.mxu0 %v333
      %489 = vmatmul.bf16.gmra.mxu0 %v242
      %v490 = vpop.f32.mrf.mxu0
      %v491 = vadd.f32 %v402, %v490
      %v492 = vpop.f32.mrf.mxu0
      %v493 = vadd.f32 %v404, %v492
      %494 = vmatmul.bf16.gmra.mxu0 %v245
      %v495 = vpop.f32.mrf.mxu0
      %v496 = vadd.f32 %v407, %v495
      %v497 = vpop.f32.mrf.mxu0
      %v498 = vadd.f32 %v409, %v497
      %499 = vmatmul.bf16.gmra.mxu0 %v248
      %v500 = vpop.f32.mrf.mxu0
      %v501 = vadd.f32 %v412, %v500
      %v502 = vpop.f32.mrf.mxu0
      %v503 = vadd.f32 %v414, %v502
      %504 = vmatmul.bf16.gmra.mxu0 %v251
      %v505 = vpop.f32.mrf.mxu0
      %v506 = vadd.f32 %v417, %v505
      %v507 = vpop.f32.mrf.mxu0
      %v508 = vadd.f32 %v419, %v507
      %509 = vmatmul.bf16.gmra.mxu0 %v254
      %v510 = vpop.f32.mrf.mxu0
      %v511 = vadd.f32 %v422, %v510
      %v512 = vpop.f32.mrf.mxu0
      %v513 = vadd.f32 %v424, %v512
      %514 = vmatmul.bf16.gmra.mxu0 %v257
      %v515 = vpop.f32.mrf.mxu0
      %v516 = vadd.f32 %v427, %v515
      %v517 = vpop.f32.mrf.mxu0
      %v518 = vadd.f32 %v429, %v517
      %519 = vmatmul.bf16.gmra.mxu0 %v260
      %v520 = vpop.f32.mrf.mxu0
      %v521 = vadd.f32 %v432, %v520
      %v522 = vpop.f32.mrf.mxu0
      %v523 = vadd.f32 %v434, %v522
      %524 = vmatmul.bf16.gmra.mxu0 %v263
      %v525 = vpop.f32.mrf.mxu0
      %v526 = vadd.f32 %v437, %v525
      %v527 = vpop.f32.mrf.mxu0
      %v528 = vadd.f32 %v439, %v527
      %529 = vmatmul.bf16.gmra.mxu0 %v266
      %v530 = vpop.f32.mrf.mxu0
      %v531 = vadd.f32 %v442, %v530
      %v532 = vpop.f32.mrf.mxu0
      %v533 = vadd.f32 %v444, %v532
      %534 = vmatmul.bf16.gmra.mxu0 %v269
      %v535 = vpop.f32.mrf.mxu0
      %v536 = vadd.f32 %v447, %v535
      %v537 = vpop.f32.mrf.mxu0
      %v538 = vadd.f32 %v449, %v537
      %539 = vmatmul.bf16.gmra.mxu0 %v272
      %v540 = vpop.f32.mrf.mxu0
      %v541 = vadd.f32 %v452, %v540
      %v542 = vpop.f32.mrf.mxu0
      %v543 = vadd.f32 %v454, %v542
      %544 = vmatmul.bf16.gmra.mxu0 %v275
      %v545 = vpop.f32.mrf.mxu0
      %v546 = vadd.f32 %v457, %v545
      %v547 = vpop.f32.mrf.mxu0
      %v548 = vadd.f32 %v459, %v547
      %549 = vmatmul.bf16.gmra.mxu0 %v278
      %v550 = vpop.f32.mrf.mxu0
      %v551 = vadd.f32 %v462, %v550
      %v552 = vpop.f32.mrf.mxu0
      %v553 = vadd.f32 %v464, %v552
      %554 = vmatmul.bf16.gmra.mxu0 %v281
      %v555 = vpop.f32.mrf.mxu0
      %v556 = vadd.f32 %v467, %v555
      %v557 = vpop.f32.mrf.mxu0
      %v558 = vadd.f32 %v469, %v557
      %559 = vmatmul.bf16.gmra.mxu0 %v284
      %v560 = vpop.f32.mrf.mxu0
      %v561 = vadd.f32 %v472, %v560
      %v562 = vpop.f32.mrf.mxu0
      %v563 = vadd.f32 %v474, %v562
      %564 = vmatmul.bf16.gmra.mxu0 %v287
      %v565 = vpop.f32.mrf.mxu0
      %v566 = vadd.f32 %v477, %v565
      %v567 = vpop.f32.mrf.mxu0
      %v568 = vadd.f32 %v479, %v567
      %569 = vdwg.mxu0
      %570 = vmatpush.bf16.msra.mxu0 0
      %571 = vmatpush.bf16.msra.mxu0 0
      %572 = vmatpush.bf16.msra.mxu0 0
      %573 = vmatpush.bf16.msra.mxu0 0
      %574 = vmatpush.bf16.msra.mxu0 0
      %575 = vmatpush.bf16.msra.mxu0 0
      %576 = vmatpush.bf16.msra.mxu0 %v342
      %577 = vmatpush.bf16.msra.mxu0 %v341
      %578 = vmatmul.bf16.gmra.mxu0 %v345
      %v579 = vpop.f32.mrf.mxu0
      %v580 = vadd.f32 %v491, %v579
      %v581 = vpop.f32.mrf.mxu0
      %v582 = vadd.f32 %v493, %v581
      %583 = vmatmul.bf16.gmra.mxu0 %v348
      %v584 = vpop.f32.mrf.mxu0
      %v585 = vadd.f32 %v496, %v584
      %v586 = vpop.f32.mrf.mxu0
      %v587 = vadd.f32 %v498, %v586
      %588 = vmatmul.bf16.gmra.mxu0 %v351
      %v589 = vpop.f32.mrf.mxu0
      %v590 = vadd.f32 %v501, %v589
      %v591 = vpop.f32.mrf.mxu0
      %v592 = vadd.f32 %v503, %v591
      %593 = vmatmul.bf16.gmra.mxu0 %v354
      %v594 = vpop.f32.mrf.mxu0
      %v595 = vadd.f32 %v506, %v594
      %v596 = vpop.f32.mrf.mxu0
      %v597 = vadd.f32 %v508, %v596
      %598 = vmatmul.bf16.gmra.mxu0 %v357
      %v599 = vpop.f32.mrf.mxu0
      %v600 = vadd.f32 %v511, %v599
      %v601 = vpop.f32.mrf.mxu0
      %v602 = vadd.f32 %v513, %v601
      %603 = vmatmul.bf16.gmra.mxu0 %v360
      %v604 = vpop.f32.mrf.mxu0
      %v605 = vadd.f32 %v516, %v604
      %v606 = vpop.f32.mrf.mxu0
      %v607 = vadd.f32 %v518, %v606
      %608 = vmatmul.bf16.gmra.mxu0 %v363
      %v609 = vpop.f32.mrf.mxu0
      %v610 = vadd.f32 %v521, %v609
      %v611 = vpop.f32.mrf.mxu0
      %v612 = vadd.f32 %v523, %v611
      %613 = vmatmul.bf16.gmra.mxu0 %v366
      %v614 = vpop.f32.mrf.mxu0
      %v615 = vadd.f32 %v526, %v614
      %v616 = vpop.f32.mrf.mxu0
      %v617 = vadd.f32 %v528, %v616
      %618 = vmatmul.bf16.gmra.mxu0 %v369
      %v619 = vpop.f32.mrf.mxu0
      %v620 = vadd.f32 %v531, %v619
      %v621 = vpop.f32.mrf.mxu0
      %v622 = vadd.f32 %v533, %v621
      %623 = vmatmul.bf16.gmra.mxu0 %v372
      %v624 = vpop.f32.mrf.mxu0
      %v625 = vadd.f32 %v536, %v624
      %v626 = vpop.f32.mrf.mxu0
      %v627 = vadd.f32 %v538, %v626
      %628 = vmatmul.bf16.gmra.mxu0 %v375
      %v629 = vpop.f32.mrf.mxu0
      %v630 = vadd.f32 %v541, %v629
      %v631 = vpop.f32.mrf.mxu0
      %v632 = vadd.f32 %v543, %v631
      %633 = vmatmul.bf16.gmra.mxu0 %v378
      %v634 = vpop.f32.mrf.mxu0
      %v635 = vadd.f32 %v546, %v634
      %v636 = vpop.f32.mrf.mxu0
      %v637 = vadd.f32 %v548, %v636
      %638 = vmatmul.bf16.gmra.mxu0 %v381
      %v639 = vpop.f32.mrf.mxu0
      %v640 = vadd.f32 %v551, %v639
      %v641 = vpop.f32.mrf.mxu0
      %v642 = vadd.f32 %v553, %v641
      %643 = vmatmul.bf16.gmra.mxu0 %v384
      %v644 = vpop.f32.mrf.mxu0
      %v645 = vadd.f32 %v556, %v644
      %v646 = vpop.f32.mrf.mxu0
      %v647 = vadd.f32 %v558, %v646
      %648 = vmatmul.bf16.gmra.mxu0 %v387
      %v649 = vpop.f32.mrf.mxu0
      %v650 = vadd.f32 %v561, %v649
      %v651 = vpop.f32.mrf.mxu0
      %v652 = vadd.f32 %v563, %v651
      %653 = vmatmul.bf16.gmra.mxu0 %v390
      %v654 = vpop.f32.mrf.mxu0
      %v655 = vadd.f32 %v566, %v654
      %v656 = vpop.f32.mrf.mxu0
      %v657 = vadd.f32 %v568, %v656
      %658 = vdwg.mxu0
      %v659 = vsel %vm343, %v580, 0.0
      %v660 = vsel %vm343, %v582, 0.0
      %v661 = vadd.f32 %v659, %v660
      %v662 = vsel %vm343, %v585, 0.0
      %v663 = vadd.f32 %v661, %v662
      %v664 = vsel %vm343, %v587, 0.0
      %v665 = vadd.f32 %v663, %v664
      %v666 = vsel %vm343, %v590, 0.0
      %v667 = vadd.f32 %v665, %v666
      %v668 = vsel %vm343, %v592, 0.0
      %v669 = vadd.f32 %v667, %v668
      %v670 = vsel %vm343, %v595, 0.0
      %v671 = vadd.f32 %v669, %v670
      %v672 = vsel %vm343, %v597, 0.0
      %v673 = vadd.f32 %v671, %v672
      %v674 = vsel %vm343, %v600, 0.0
      %v675 = vadd.f32 %v673, %v674
      %v676 = vsel %vm343, %v602, 0.0
      %v677 = vadd.f32 %v675, %v676
      %v678 = vsel %vm343, %v605, 0.0
      %v679 = vadd.f32 %v677, %v678
      %v680 = vsel %vm343, %v607, 0.0
      %v681 = vadd.f32 %v679, %v680
      %v682 = vsel %vm343, %v610, 0.0
      %v683 = vadd.f32 %v681, %v682
      %v684 = vsel %vm343, %v612, 0.0
      %v685 = vadd.f32 %v683, %v684
      %v686 = vsel %vm343, %v615, 0.0
      %v687 = vadd.f32 %v685, %v686
      %v688 = vsel %vm343, %v617, 0.0
      %v689 = vadd.f32 %v687, %v688
      %v690 = vsel %vm343, %v620, 0.0
      %v691 = vadd.f32 %v689, %v690
      %v692 = vsel %vm343, %v622, 0.0
      %v693 = vadd.f32 %v691, %v692
      %v694 = vsel %vm343, %v625, 0.0
      %v695 = vadd.f32 %v693, %v694
      %v696 = vsel %vm343, %v627, 0.0
      %v697 = vadd.f32 %v695, %v696
      %v698 = vsel %vm343, %v630, 0.0
      %v699 = vadd.f32 %v697, %v698
      %v700 = vsel %vm343, %v632, 0.0
      %v701 = vadd.f32 %v699, %v700
      %v702 = vsel %vm343, %v635, 0.0
      %v703 = vadd.f32 %v701, %v702
      %v704 = vsel %vm343, %v637, 0.0
      %v705 = vadd.f32 %v703, %v704
      %v706 = vsel %vm343, %v640, 0.0
      %v707 = vadd.f32 %v705, %v706
      %v708 = vsel %vm343, %v642, 0.0
      %v709 = vadd.f32 %v707, %v708
      %v710 = vsel %vm343, %v645, 0.0
      %v711 = vadd.f32 %v709, %v710
      %v712 = vsel %vm343, %v647, 0.0
      %v713 = vadd.f32 %v711, %v712
      %v714 = vsel %vm343, %v650, 0.0
      %v715 = vadd.f32 %v713, %v714
      %v716 = vsel %vm343, %v652, 0.0
      %v717 = vadd.f32 %v715, %v716
      %v718 = vsel %vm343, %v655, 0.0
      %v719 = vadd.f32 %v717, %v718
      %v720 = vsel %vm343, %v657, 0.0
      %v721 = vadd.f32 %v719, %v720
      %v722 = vrot.slane %v721, 4
      %v723 = vadd.f32 %v721, %v722
      %v724 = vrot.slane %v723, 2
      %v725 = vadd.f32 %v723, %v724
      %v726 = vrot.slane %v725, 1
      %v727 = vadd.f32 %v725, %v726
      %v728 = vrcp.pop 256.0
      %v729 = vmul.f32 256.0, %v728
      %v730 = vsub.f32 1.0, %v729
      %v731 = vmul.f32 %v728, %v730
      %v732 = vadd.f32 %v728, %v731
      %vm733 = vweird.f32 %v728
      %v734 = vsel %vm733, %v728, %v732
      %v735 = vmul.f32 %v727, %v734
      %v736 = vmul.f32 %v580, %v580
      %v737 = vmul.f32 %v582, %v582
      %v738 = vmul.f32 %v585, %v585
      %v739 = vmul.f32 %v587, %v587
      %v740 = vmul.f32 %v590, %v590
      %v741 = vmul.f32 %v592, %v592
      %v742 = vmul.f32 %v595, %v595
      %v743 = vmul.f32 %v597, %v597
      %v744 = vmul.f32 %v600, %v600
      %v745 = vmul.f32 %v602, %v602
      %v746 = vmul.f32 %v605, %v605
      %v747 = vmul.f32 %v607, %v607
      %v748 = vmul.f32 %v610, %v610
      %v749 = vmul.f32 %v612, %v612
      %v750 = vmul.f32 %v615, %v615
      %v751 = vmul.f32 %v617, %v617
      %v752 = vmul.f32 %v620, %v620
      %v753 = vmul.f32 %v622, %v622
      %v754 = vmul.f32 %v625, %v625
      %v755 = vmul.f32 %v627, %v627
      %v756 = vmul.f32 %v630, %v630
      %v757 = vmul.f32 %v632, %v632
      %v758 = vmul.f32 %v635, %v635
      %v759 = vmul.f32 %v637, %v637
      %v760 = vmul.f32 %v640, %v640
      %v761 = vmul.f32 %v642, %v642
      %v762 = vmul.f32 %v645, %v645
      %v763 = vmul.f32 %v647, %v647
      %v764 = vmul.f32 %v650, %v650
      %v765 = vmul.f32 %v652, %v652
      %v766 = vmul.f32 %v655, %v655
      %v767 = vmul.f32 %v657, %v657
      %v768 = vsel %vm343, %v736, 0.0
      %v769 = vsel %vm343, %v737, 0.0
      %v770 = vadd.f32 %v768, %v769
      %v771 = vsel %vm343, %v738, 0.0
      %v772 = vadd.f32 %v770, %v771
      %v773 = vsel %vm343, %v739, 0.0
      %v774 = vadd.f32 %v772, %v773
      %v775 = vsel %vm343, %v740, 0.0
      %v776 = vadd.f32 %v774, %v775
      %v777 = vsel %vm343, %v741, 0.0
      %v778 = vadd.f32 %v776, %v777
      %v779 = vsel %vm343, %v742, 0.0
      %v780 = vadd.f32 %v778, %v779
      %v781 = vsel %vm343, %v743, 0.0
      %v782 = vadd.f32 %v780, %v781
      %v783 = vsel %vm343, %v744, 0.0
      %v784 = vadd.f32 %v782, %v783
      %v785 = vsel %vm343, %v745, 0.0
      %v786 = vadd.f32 %v784, %v785
      %v787 = vsel %vm343, %v746, 0.0
      %v788 = vadd.f32 %v786, %v787
      %v789 = vsel %vm343, %v747, 0.0
      %v790 = vadd.f32 %v788, %v789
      %v791 = vsel %vm343, %v748, 0.0
      %v792 = vadd.f32 %v790, %v791
      %v793 = vsel %vm343, %v749, 0.0
      %v794 = vadd.f32 %v792, %v793
      %v795 = vsel %vm343, %v750, 0.0
      %v796 = vadd.f32 %v794, %v795
      %v797 = vsel %vm343, %v751, 0.0
      %v798 = vadd.f32 %v796, %v797
      %v799 = vsel %vm343, %v752, 0.0
      %v800 = vadd.f32 %v798, %v799
      %v801 = vsel %vm343, %v753, 0.0
      %v802 = vadd.f32 %v800, %v801
      %v803 = vsel %vm343, %v754, 0.0
      %v804 = vadd.f32 %v802, %v803
      %v805 = vsel %vm343, %v755, 0.0
      %v806 = vadd.f32 %v804, %v805
      %v807 = vsel %vm343, %v756, 0.0
      %v808 = vadd.f32 %v806, %v807
      %v809 = vsel %vm343, %v757, 0.0
      %v810 = vadd.f32 %v808, %v809
      %v811 = vsel %vm343, %v758, 0.0
      %v812 = vadd.f32 %v810, %v811
      %v813 = vsel %vm343, %v759, 0.0
      %v814 = vadd.f32 %v812, %v813
      %v815 = vsel %vm343, %v760, 0.0
      %v816 = vadd.f32 %v814, %v815
      %v817 = vsel %vm343, %v761, 0.0
      %v818 = vadd.f32 %v816, %v817
      %v819 = vsel %vm343, %v762, 0.0
      %v820 = vadd.f32 %v818, %v819
      %v821 = vsel %vm343, %v763, 0.0
      %v822 = vadd.f32 %v820, %v821
      %v823 = vsel %vm343, %v764, 0.0
      %v824 = vadd.f32 %v822, %v823
      %v825 = vsel %vm343, %v765, 0.0
      %v826 = vadd.f32 %v824, %v825
      %v827 = vsel %vm343, %v766, 0.0
      %v828 = vadd.f32 %v826, %v827
      %v829 = vsel %vm343, %v767, 0.0
      %v830 = vadd.f32 %v828, %v829
      %v831 = vrot.slane %v830, 4
      %v832 = vadd.f32 %v830, %v831
      %v833 = vrot.slane %v832, 2
      %v834 = vadd.f32 %v832, %v833
      %v835 = vrot.slane %v834, 1
      %v836 = vadd.f32 %v834, %v835
      %v837 = vmul.f32 %v836, %v734
      %v838 = vsub.f32 %v580, %v735
      %v839 = vsub.f32 %v582, %v735
      %v840 = vsub.f32 %v585, %v735
      %v841 = vsub.f32 %v587, %v735
      %v842 = vsub.f32 %v590, %v735
      %v843 = vsub.f32 %v592, %v735
      %v844 = vsub.f32 %v595, %v735
      %v845 = vsub.f32 %v597, %v735
      %v846 = vsub.f32 %v600, %v735
      %v847 = vsub.f32 %v602, %v735
      %v848 = vsub.f32 %v605, %v735
      %v849 = vsub.f32 %v607, %v735
      %v850 = vsub.f32 %v610, %v735
      %v851 = vsub.f32 %v612, %v735
      %v852 = vsub.f32 %v615, %v735
      %v853 = vsub.f32 %v617, %v735
      %v854 = vsub.f32 %v620, %v735
      %v855 = vsub.f32 %v622, %v735
      %v856 = vsub.f32 %v625, %v735
      %v857 = vsub.f32 %v627, %v735
      %v858 = vsub.f32 %v630, %v735
      %v859 = vsub.f32 %v632, %v735
      %v860 = vsub.f32 %v635, %v735
      %v861 = vsub.f32 %v637, %v735
      %v862 = vsub.f32 %v640, %v735
      %v863 = vsub.f32 %v642, %v735
      %v864 = vsub.f32 %v645, %v735
      %v865 = vsub.f32 %v647, %v735
      %v866 = vsub.f32 %v650, %v735
      %v867 = vsub.f32 %v652, %v735
      %v868 = vsub.f32 %v655, %v735
      %v869 = vsub.f32 %v657, %v735
      %v870 = vmul.f32 %v735, %v735
      %v871 = vsub.f32 %v837, %v870
      %v872 = vadd.f32 %v871, 1e-05
      %v873 = vrsqrt.pop %v872
      %v874 = vmul.f32 %v873, %v872
      %v875 = vmul.f32 %v874, %v873
      %v876 = vmul.f32 0.5, %v875
      %v877 = vsub.f32 1.5, %v876
      %v878 = vmul.f32 %v873, %v877
      %vm879 = vweird.f32 %v872
      %vm880 = vweird.f32 %v873
      %vm881 = vmor %vm879, %vm880
      %v882 = vsel %vm881, %v873, %v878
      %v883 = vmul.f32 %v838, %v882
      %v884 = vmul.f32 %v839, %v882
      %v885 = vmul.f32 %v840, %v882
      %v886 = vmul.f32 %v841, %v882
      %v887 = vmul.f32 %v842, %v882
      %v888 = vmul.f32 %v843, %v882
      %v889 = vmul.f32 %v844, %v882
      %v890 = vmul.f32 %v845, %v882
      %v891 = vmul.f32 %v846, %v882
      %v892 = vmul.f32 %v847, %v882
      %v893 = vmul.f32 %v848, %v882
      %v894 = vmul.f32 %v849, %v882
      %v895 = vmul.f32 %v850, %v882
      %v896 = vmul.f32 %v851, %v882
      %v897 = vmul.f32 %v852, %v882
      %v898 = vmul.f32 %v853, %v882
      %v899 = vmul.f32 %v854, %v882
      %v900 = vmul.f32 %v855, %v882
      %v901 = vmul.f32 %v856, %v882
      %v902 = vmul.f32 %v857, %v882
      %v903 = vmul.f32 %v858, %v882
      %v904 = vmul.f32 %v859, %v882
      %v905 = vmul.f32 %v860, %v882
      %v906 = vmul.f32 %v861, %v882
      %v907 = vmul.f32 %v862, %v882
      %v908 = vmul.f32 %v863, %v882
      %v909 = vmul.f32 %v864, %v882
      %v910 = vmul.f32 %v865, %v882
      %v911 = vmul.f32 %v866, %v882
      %v912 = vmul.f32 %v867, %v882
      %v913 = vmul.f32 %v868, %v882
      %v914 = vmul.f32 %v869, %v882
      %v915 = vmax.f32 %v883, 0.0
      %v916 = vmax.f32 %v884, 0.0
      %v917 = vmax.f32 %v885, 0.0
      %v918 = vmax.f32 %v886, 0.0
      %v919 = vmax.f32 %v887, 0.0
      %v920 = vmax.f32 %v888, 0.0
      %v921 = vmax.f32 %v889, 0.0
      %v922 = vmax.f32 %v890, 0.0
      %v923 = vmax.f32 %v891, 0.0
      %v924 = vmax.f32 %v892, 0.0
      %v925 = vmax.f32 %v893, 0.0
      %v926 = vmax.f32 %v894, 0.0
      %v927 = vmax.f32 %v895, 0.0
      %v928 = vmax.f32 %v896, 0.0
      %v929 = vmax.f32 %v897, 0.0
      %v930 = vmax.f32 %v898, 0.0
      %v931 = vmax.f32 %v899, 0.0
      %v932 = vmax.f32 %v900, 0.0
      %v933 = vmax.f32 %v901, 0.0
      %v934 = vmax.f32 %v902, 0.0
      %v935 = vmax.f32 %v903, 0.0
      %v936 = vmax.f32 %v904, 0.0
      %v937 = vmax.f32 %v905, 0.0
      %v938 = vmax.f32 %v906, 0.0
      %v939 = vmax.f32 %v907, 0.0
      %v940 = vmax.f32 %v908, 0.0
      %v941 = vmax.f32 %v909, 0.0
      %v942 = vmax.f32 %v910, 0.0
      %v943 = vmax.f32 %v911, 0.0
      %v944 = vmax.f32 %v912, 0.0
      %v945 = vmax.f32 %v913, 0.0
      %v946 = vmax.f32 %v914, 0.0
      %947 = vst.msk [vmem:[%s143] sm:$0xff] %vm343, %v915
      %948 = vst.msk [vmem:[%s143 + $0x8] sm:$0xff] %vm343, %v916
      %949 = vst.msk [vmem:[%s143 + $0x10] sm:$0xff] %vm343, %v917
      %950 = vst.msk [vmem:[%s143 + $0x18] sm:$0xff] %vm343, %v918
      %951 = vst.msk [vmem:[%s143 + $0x20] sm:$0xff] %vm343, %v919
      %952 = vst.msk [vmem:[%s143 + $0x28] sm:$0xff] %vm343, %v920
      %953 = vst.msk [vmem:[%s143 + $0x30] sm:$0xff] %vm343, %v921
      %954 = vst.msk [vmem:[%s143 + $0x38] sm:$0xff] %vm343, %v922
      %955 = vst.msk [vmem:[%s143 + $0x40] sm:$0xff] %vm343, %v923
      %956 = vst.msk [vmem:[%s143 + $0x48] sm:$0xff] %vm343, %v924
      %957 = vst.msk [vmem:[%s143 + $0x50] sm:$0xff] %vm343, %v925
      %958 = vst.msk [vmem:[%s143 + $0x58] sm:$0xff] %vm343, %v926
      %959 = vst.msk [vmem:[%s143 + $0x60] sm:$0xff] %vm343, %v927
      %960 = vst.msk [vmem:[%s143 + $0x68] sm:$0xff] %vm343, %v928
      %961 = vst.msk [vmem:[%s143 + $0x70] sm:$0xff] %vm343, %v929
      %962 = vst.msk [vmem:[%s143 + $0x78] sm:$0xff] %vm343, %v930
      %963 = vst.msk [vmem:[%s143 + $0x80] sm:$0xff] %vm343, %v931
      %964 = vst.msk [vmem:[%s143 + $0x88] sm:$0xff] %vm343, %v932
      %965 = vst.msk [vmem:[%s143 + $0x90] sm:$0xff] %vm343, %v933
      %966 = vst.msk [vmem:[%s143 + $0x98] sm:$0xff] %vm343, %v934
      %967 = vst.msk [vmem:[%s143 + $0xa0] sm:$0xff] %vm343, %v935
      %968 = vst.msk [vmem:[%s143 + $0xa8] sm:$0xff] %vm343, %v936
      %969 = vst.msk [vmem:[%s143 + $0xb0] sm:$0xff] %vm343, %v937
      %970 = vst.msk [vmem:[%s143 + $0xb8] sm:$0xff] %vm343, %v938
      %971 = vst.msk [vmem:[%s143 + $0xc0] sm:$0xff] %vm343, %v939
      %972 = vst.msk [vmem:[%s143 + $0xc8] sm:$0xff] %vm343, %v940
      %973 = vst.msk [vmem:[%s143 + $0xd0] sm:$0xff] %vm343, %v941
      %974 = vst.msk [vmem:[%s143 + $0xd8] sm:$0xff] %vm343, %v942
      %975 = vst.msk [vmem:[%s143 + $0xe0] sm:$0xff] %vm343, %v943
      %976 = vst.msk [vmem:[%s143 + $0xe8] sm:$0xff] %vm343, %v944
      %977 = vst.msk [vmem:[%s143 + $0xf0] sm:$0xff] %vm343, %v945
      %978 = vst.msk [vmem:[%s143 + $0xf8] sm:$0xff] %vm343, %v946
      %p979 = scmp.lt.s32.totalorder %s13, 1
      %s980 = scalar_select %p979, %s13, 1
      %s981 = smul.addr %s980, 32
      %s982 = smul.addr %s981, 8
      %s983 = scalar_lea.vmem %s2, %s982
      // Predicated region
      $region29: #{_lambda_.9} parent=27 // pred_check
        %p984 = pneg %p78
      $region30: #{_lambda_.9} parent=27 // pred_check_branch
        %986 = sbr.rel (%p984) target = $region32
      $region31: #{_lambda_.9} parent=27 // pred_region
        _
      $region32: #{_lambda_.9} parent=27 // pred_fallthru
        _
    $region28: #{_lambda_.9} parent=5 // pred_fallthru
      _
    %p987 = scmp.le.s32.totalorder 2, %s8
    // Predicated region
    $region33: #{_lambda_.9} parent=5 // pred_check
      %p988 = pneg %p987
    $region34: #{_lambda_.9} parent=5 // pred_check_branch
      %990 = sbr.rel (%p988) target = $region36
    $region35: #{_lambda_.9} parent=5 // pred_region
      %s991 = ssub.s32 %s8, 2
      // Predicated region
      $region37: #{_lambda_.9} parent=35 // pred_check
        %p992 = pneg %p84
      $region38: #{_lambda_.9} parent=35 // pred_check_branch
        %994 = sbr.rel (%p992) target = $region40
      $region39: #{_lambda_.9} parent=35 // pred_region
        %p995 = scmp.lt.s32.totalorder %s14, 1
        %s996 = scalar_select %p995, %s14, 1
        %s997 = smul.addr %s996, 32
        %s998 = smul.addr %s997, 8
        %s999 = scalar_lea.vmem %s2, %s998
      $region40: #{_lambda_.9} parent=35 // pred_fallthru
        _
    $region36: #{_lambda_.9} parent=5 // pred_fallthru
      _
  $region6: #{_lambda_.9} parent=0 // loop_footer
    %s12 = sadd.s32 1, %s8
  $region7: #{_lambda_.9} parent=0 // loop_footer_branch
    %7 = sbr.rel target = $region3
  $region8: #{_lambda_.9} parent=0 // loop_exit
    _

// kernel: _lambda_.14
$region0: #{_lambda_.14}
  #allocation0 [shape = 'u32[]', space=smem, size = 0x4, offset = 0x4, fixed_abs, tag = 'smem constant byte address 0x4 - core index']
  #allocation1 [shape = 'u32[72,128]{1,0:T(1,128)}', space=vmem, size = 0x9000, scoped, tag = 'internal scratch']
  %s0 = inlined_call_operand.vmem [shape: f32[8,4,64,16], index: 0, kind: input, shape index: {}]
  %s1 = inlined_call_operand.vmem [shape: f32[8,4,256,16], index: 1, kind: input, shape index: {}]
  %s2 = inlined_call_operand.vmem [shape: f32[8,4,256,16], index: 2, kind: input, shape index: {}]
  %s3 = inlined_call_operand.vmem [shape: f32[8,4,64,256], index: 3, kind: input, shape index: {}]
  %s4 = inlined_call_operand.vmem [shape: f32[256,256], index: 4, kind: input, shape index: {}]
  %s5 = inlined_call_operand.vmem [shape: f32[8,1,256], index: 5, kind: input, shape index: {}]
  %s6 = inlined_call_operand.vmem [shape: f32[4,16,32], index: 6, kind: input, shape index: {}]
  %s7 = inlined_call_operand.vmem [shape: f32[1,32], index: 7, kind: input, shape index: {}]
  %s8 = inlined_call_operand.vmem [shape: f32[8,64,32], index: 8, kind: output, shape index: {}]
  %s9 = sld [smem:[#allocation0]]
  $region65: #{_lambda_.14} parent=0
    _
  %s11 = ssub.s32 1, %s9
  %s12 = scalar_select 0, %s11, %s9
  loop: start=0, step=1, limit=10
  $region2: #{_lambda_.14} parent=0 // loop_pre_header
    _
  $region3: #{_lambda_.14} parent=0 // loop_header
    %s14 = sphi 0, %s18
    %p15 = scmp.ge.s32.totalorder %s14, 10
    %s24 = sphi 0, %s26
    %s27 = sphi 0, %s24
    %s28 = sphi 0, %s27
    %s44 = sphi 0, %s28
    %s50 = sphi 0, %s52
    %s53 = sphi 0, %s50
    %s54 = sphi 0, %s53
    %s70 = sphi 0, %s54
    %s76 = sphi 0, %s78
    %s79 = sphi 0, %s76
    %s80 = sphi 0, %s79
    %s96 = sphi 0, %s80
    %s102 = sphi 0, %s104
    %s105 = sphi 0, %s102
    %s106 = sphi 0, %s105
    %s122 = sphi 0, %s106
    %s126 = sphi 0, %s126
    %s128 = sphi 0, %s126
    %s129 = sphi 0, %s128
    %s143 = sphi 0, %s129
    %s149 = sphi 0, %s151
    %s152 = sphi 0, %s149
    %s153 = sphi 0, %s152
    %s169 = sphi 0, %s153
    %s173 = sphi 0, %s173
    %s175 = sphi 0, %s173
    %s176 = sphi 0, %s175
    %s190 = sphi 0, %s176
    %s194 = sphi 0, %s194
    %s196 = sphi 0, %s194
    %s197 = sphi 0, %s196
    %s211 = sphi 0, %s197
    %s217 = sphi 0, %s219
    %s220 = sphi 0, %s217
    %s221 = sphi 0, %s220
    %s237 = sphi 0, %s221
  $region4: #{_lambda_.14} parent=0 // loop_header_branch
    %17 = sbr.rel (%p15) target = $region8
  $region5: #{_lambda_.14} parent=0 // loop_body
    %s19 = ssub.s32 %s14, 1
    %s20 = ssub.s32 %s14, 2
    %s21 = sadd.s32 %s14, 1
    %s22 = ssub.s32 %s14, %s21
    %p23 = scmp.eq.s32.totalorder %s22, 0
    %s25 = sadd.s32 %s24, 1
    %s26 = scalar_select %p23, %s24, %s25
    %p29 = pneg %p23
    %p30 = scmp.eq.s32.totalorder %s14, 7
    %p31 = por %p29, %p30
    %p32 = scmp.ne.s32.totalorder %s24, %s27
    %p33 = scmp.eq.s32.totalorder %s14, 0
    %p34 = por %p32, %p33
    %p35 = scmp.ne.s32.totalorder %s24, %s27
    %p36 = scmp.eq.s32.totalorder %s19, 7
    %p37 = por %p35, %p36
    %p38 = scmp.ne.s32.totalorder %s27, %s28
    %p39 = scmp.eq.s32.totalorder %s19, 0
    %p40 = por %p38, %p39
    %p41 = scmp.ne.s32.totalorder %s27, %s28
    %p42 = scmp.eq.s32.totalorder %s20, 7
    %p43 = por %p41, %p42
    %p45 = scmp.ne.s32.totalorder %s28, %s44
    %p46 = scmp.eq.s32.totalorder %s20, 0
    %p47 = por %p45, %p46
    %s48 = ssub.s32 %s14, %s21
    %p49 = scmp.eq.s32.totalorder %s48, 0
    %s51 = sadd.s32 %s50, 1
    %s52 = scalar_select %p49, %s50, %s51
    %p55 = pneg %p49
    %p56 = scmp.eq.s32.totalorder %s14, 7
    %p57 = por %p55, %p56
    %p58 = scmp.ne.s32.totalorder %s50, %s53
    %p59 = scmp.eq.s32.totalorder %s14, 0
    %p60 = por %p58, %p59
    %p61 = scmp.ne.s32.totalorder %s50, %s53
    %p62 = scmp.eq.s32.totalorder %s19, 7
    %p63 = por %p61, %p62
    %p64 = scmp.ne.s32.totalorder %s53, %s54
    %p65 = scmp.eq.s32.totalorder %s19, 0
    %p66 = por %p64, %p65
    %p67 = scmp.ne.s32.totalorder %s53, %s54
    %p68 = scmp.eq.s32.totalorder %s20, 7
    %p69 = por %p67, %p68
    %p71 = scmp.ne.s32.totalorder %s54, %s70
    %p72 = scmp.eq.s32.totalorder %s20, 0
    %p73 = por %p71, %p72
    %s74 = ssub.s32 %s14, %s21
    %p75 = scmp.eq.s32.totalorder %s74, 0
    %s77 = sadd.s32 %s76, 1
    %s78 = scalar_select %p75, %s76, %s77
    %p81 = pneg %p75
    %p82 = scmp.eq.s32.totalorder %s14, 7
    %p83 = por %p81, %p82
    %p84 = scmp.ne.s32.totalorder %s76, %s79
    %p85 = scmp.eq.s32.totalorder %s14, 0
    %p86 = por %p84, %p85
    %p87 = scmp.ne.s32.totalorder %s76, %s79
    %p88 = scmp.eq.s32.totalorder %s19, 7
    %p89 = por %p87, %p88
    %p90 = scmp.ne.s32.totalorder %s79, %s80
    %p91 = scmp.eq.s32.totalorder %s19, 0
    %p92 = por %p90, %p91
    %p93 = scmp.ne.s32.totalorder %s79, %s80
    %p94 = scmp.eq.s32.totalorder %s20, 7
    %p95 = por %p93, %p94
    %p97 = scmp.ne.s32.totalorder %s80, %s96
    %p98 = scmp.eq.s32.totalorder %s20, 0
    %p99 = por %p97, %p98
    %s100 = ssub.s32 %s14, %s21
    %p101 = scmp.eq.s32.totalorder %s100, 0
    %s103 = sadd.s32 %s102, 1
    %s104 = scalar_select %p101, %s102, %s103
    %p107 = pneg %p101
    %p108 = scmp.eq.s32.totalorder %s14, 7
    %p109 = por %p107, %p108
    %p110 = scmp.ne.s32.totalorder %s102, %s105
    %p111 = scmp.eq.s32.totalorder %s14, 0
    %p112 = por %p110, %p111
    %p113 = scmp.ne.s32.totalorder %s102, %s105
    %p114 = scmp.eq.s32.totalorder %s19, 7
    %p115 = por %p113, %p114
    %p116 = scmp.ne.s32.totalorder %s105, %s106
    %p117 = scmp.eq.s32.totalorder %s19, 0
    %p118 = por %p116, %p117
    %p119 = scmp.ne.s32.totalorder %s105, %s106
    %p120 = scmp.eq.s32.totalorder %s20, 7
    %p121 = por %p119, %p120
    %p123 = scmp.ne.s32.totalorder %s106, %s122
    %p124 = scmp.eq.s32.totalorder %s20, 0
    %p125 = por %p123, %p124
    %s127 = sadd.s32 %s126, 1
    %p130 = scmp.eq.s32.totalorder %s14, 7
    %p131 = scmp.ne.s32.totalorder %s126, %s128
    %p132 = scmp.eq.s32.totalorder %s14, 0
    %p133 = por %p131, %p132
    %p134 = scmp.ne.s32.totalorder %s126, %s128
    %p135 = scmp.eq.s32.totalorder %s19, 7
    %p136 = por %p134, %p135
    %p137 = scmp.ne.s32.totalorder %s128, %s129
    %p138 = scmp.eq.s32.totalorder %s19, 0
    %p139 = por %p137, %p138
    %p140 = scmp.ne.s32.totalorder %s128, %s129
    %p141 = scmp.eq.s32.totalorder %s20, 7
    %p142 = por %p140, %p141
    %p144 = scmp.ne.s32.totalorder %s129, %s143
    %p145 = scmp.eq.s32.totalorder %s20, 0
    %p146 = por %p144, %p145
    %s147 = ssub.s32 %s14, %s21
    %p148 = scmp.eq.s32.totalorder %s147, 0
    %s150 = sadd.s32 %s149, 1
    %s151 = scalar_select %p148, %s149, %s150
    %p154 = pneg %p148
    %p155 = scmp.eq.s32.totalorder %s14, 7
    %p156 = por %p154, %p155
    %p157 = scmp.ne.s32.totalorder %s149, %s152
    %p158 = scmp.eq.s32.totalorder %s14, 0
    %p159 = por %p157, %p158
    %p160 = scmp.ne.s32.totalorder %s149, %s152
    %p161 = scmp.eq.s32.totalorder %s19, 7
    %p162 = por %p160, %p161
    %p163 = scmp.ne.s32.totalorder %s152, %s153
    %p164 = scmp.eq.s32.totalorder %s19, 0
    %p165 = por %p163, %p164
    %p166 = scmp.ne.s32.totalorder %s152, %s153
    %p167 = scmp.eq.s32.totalorder %s20, 7
    %p168 = por %p166, %p167
    %p170 = scmp.ne.s32.totalorder %s153, %s169
    %p171 = scmp.eq.s32.totalorder %s20, 0
    %p172 = por %p170, %p171
    %s174 = sadd.s32 %s173, 1
    %p177 = scmp.eq.s32.totalorder %s14, 7
    %p178 = scmp.ne.s32.totalorder %s173, %s175
    %p179 = scmp.eq.s32.totalorder %s14, 0
    %p180 = por %p178, %p179
    %p181 = scmp.ne.s32.totalorder %s173, %s175
    %p182 = scmp.eq.s32.totalorder %s19, 7
    %p183 = por %p181, %p182
    %p184 = scmp.ne.s32.totalorder %s175, %s176
    %p185 = scmp.eq.s32.totalorder %s19, 0
    %p186 = por %p184, %p185
    %p187 = scmp.ne.s32.totalorder %s175, %s176
    %p188 = scmp.eq.s32.totalorder %s20, 7
    %p189 = por %p187, %p188
    %p191 = scmp.ne.s32.totalorder %s176, %s190
    %p192 = scmp.eq.s32.totalorder %s20, 0
    %p193 = por %p191, %p192
    %s195 = sadd.s32 %s194, 1
    %p198 = scmp.eq.s32.totalorder %s14, 7
    %p199 = scmp.ne.s32.totalorder %s194, %s196
    %p200 = scmp.eq.s32.totalorder %s14, 0
    %p201 = por %p199, %p200
    %p202 = scmp.ne.s32.totalorder %s194, %s196
    %p203 = scmp.eq.s32.totalorder %s19, 7
    %p204 = por %p202, %p203
    %p205 = scmp.ne.s32.totalorder %s196, %s197
    %p206 = scmp.eq.s32.totalorder %s19, 0
    %p207 = por %p205, %p206
    %p208 = scmp.ne.s32.totalorder %s196, %s197
    %p209 = scmp.eq.s32.totalorder %s20, 7
    %p210 = por %p208, %p209
    %p212 = scmp.ne.s32.totalorder %s197, %s211
    %p213 = scmp.eq.s32.totalorder %s20, 0
    %p214 = por %p212, %p213
    %s215 = ssub.s32 %s14, %s21
    %p216 = scmp.eq.s32.totalorder %s215, 0
    %s218 = sadd.s32 %s217, 1
    %s219 = scalar_select %p216, %s217, %s218
    %p222 = pneg %p216
    %p223 = scmp.eq.s32.totalorder %s14, 7
    %p224 = por %p222, %p223
    %p225 = scmp.ne.s32.totalorder %s217, %s220
    %p226 = scmp.eq.s32.totalorder %s14, 0
    %p227 = por %p225, %p226
    %p228 = scmp.ne.s32.totalorder %s217, %s220
    %p229 = scmp.eq.s32.totalorder %s19, 7
    %p230 = por %p228, %p229
    %p231 = scmp.ne.s32.totalorder %s220, %s221
    %p232 = scmp.eq.s32.totalorder %s19, 0
    %p233 = por %p231, %p232
    %p234 = scmp.ne.s32.totalorder %s220, %s221
    %p235 = scmp.eq.s32.totalorder %s20, 7
    %p236 = por %p234, %p235
    %p238 = scmp.ne.s32.totalorder %s221, %s237
    %p239 = scmp.eq.s32.totalorder %s20, 0
    %p240 = por %p238, %p239
    %p241 = scmp.le.s32.totalorder 1, %s14
    %p242 = scmp.lt.s32.totalorder %s14, 9
    %p243 = pnand %p241, %p242
    %p244 = pneg %p243
    // Predicated region
    $region9: #{_lambda_.14} parent=5 // pred_check
      _
    $region10: #{_lambda_.14} parent=5 // pred_check_branch
      %246 = sbr.rel (%p243) target = $region12
    $region11: #{_lambda_.14} parent=5 // pred_region
      %s247 = ssub.s32 %s14, 1
      // Predicated region
      $region13: #{_lambda_.14} parent=11 // pred_check
        %p248 = pneg %p139
      $region14: #{_lambda_.14} parent=11 // pred_check_branch
        %250 = sbr.rel (%p248) target = $region16
      $region15: #{_lambda_.14} parent=11 // pred_region
        _
      $region16: #{_lambda_.14} parent=11 // pred_fallthru
        _
      // Predicated region
      $region17: #{_lambda_.14} parent=11 // pred_check
        %p251 = pneg %p186
      $region18: #{_lambda_.14} parent=11 // pred_check_branch
        %253 = sbr.rel (%p251) target = $region20
      $region19: #{_lambda_.14} parent=11 // pred_region
        _
      $region20: #{_lambda_.14} parent=11 // pred_fallthru
        _
      // Predicated region
      $region21: #{_lambda_.14} parent=11 // pred_check
        %p254 = pneg %p207
      $region22: #{_lambda_.14} parent=11 // pred_check_branch
        %256 = sbr.rel (%p254) target = $region24
      $region23: #{_lambda_.14} parent=11 // pred_region
        _
      $region24: #{_lambda_.14} parent=11 // pred_fallthru
        _
    $region12: #{_lambda_.14} parent=5 // pred_fallthru
      _
    %p257 = scmp.lt.s32.totalorder %s14, 8
    // Predicated region
    $region25: #{_lambda_.14} parent=5 // pred_check
      %p258 = pneg %p257
    $region26: #{_lambda_.14} parent=5 // pred_check_branch
      %260 = sbr.rel (%p258) target = $region28
    $region27: #{_lambda_.14} parent=5 // pred_region
      // Predicated region
      $region29: #{_lambda_.14} parent=27 // pred_check
        %p261 = pneg %p34
      $region30: #{_lambda_.14} parent=27 // pred_check_branch
        %263 = sbr.rel (%p261) target = $region32
      $region31: #{_lambda_.14} parent=27 // pred_region
        %p264 = scmp.lt.s32.totalorder %s14, 7
        %s265 = scalar_select %p264, %s14, 7
        %s266 = smul.addr %s265, 32
        %s267 = smul.addr %s266, 8
        %s268 = scalar_lea.vmem %s0, %s267
      $region32: #{_lambda_.14} parent=27 // pred_fallthru
        _
      // Predicated region
      $region33: #{_lambda_.14} parent=27 // pred_check
        %p269 = pneg %p60
      $region34: #{_lambda_.14} parent=27 // pred_check_branch
        %271 = sbr.rel (%p269) target = $region36
      $region35: #{_lambda_.14} parent=27 // pred_region
        %p272 = scmp.lt.s32.totalorder %s14, 7
        %s273 = scalar_select %p272, %s14, 7
        %s274 = smul.addr %s273, 128
        %s275 = smul.addr %s274, 8
        %s276 = scalar_lea.vmem %s1, %s275
      $region36: #{_lambda_.14} parent=27 // pred_fallthru
        _
      // Predicated region
      $region37: #{_lambda_.14} parent=27 // pred_check
        %p277 = pneg %p86
      $region38: #{_lambda_.14} parent=27 // pred_check_branch
        %279 = sbr.rel (%p277) target = $region40
      $region39: #{_lambda_.14} parent=27 // pred_region
        %p280 = scmp.lt.s32.totalorder %s14, 7
        %s281 = scalar_select %p280, %s14, 7
        %s282 = smul.addr %s281, 128
        %s283 = smul.addr %s282, 8
        %s284 = scalar_lea.vmem %s2, %s283
      $region40: #{_lambda_.14} parent=27 // pred_fallthru
        _
      // Predicated region
      $region41: #{_lambda_.14} parent=27 // pred_check
        %p285 = pneg %p112
      $region42: #{_lambda_.14} parent=27 // pred_check_branch
        %287 = sbr.rel (%p285) target = $region44
      $region43: #{_lambda_.14} parent=27 // pred_region
        %p288 = scmp.lt.s32.totalorder %s14, 7
        %s289 = scalar_select %p288, %s14, 7
        %s290 = smul.addr %s289, 64
        %s291 = smul.addr %s290, 8
        %s292 = scalar_lea.vmem %s3, %s291
      $region44: #{_lambda_.14} parent=27 // pred_fallthru
        _
      // Predicated region
      $region45: #{_lambda_.14} parent=27 // pred_check
        %p293 = pneg %p159
      $region46: #{_lambda_.14} parent=27 // pred_check_branch
        %295 = sbr.rel (%p293) target = $region48
      $region47: #{_lambda_.14} parent=27 // pred_region
        %p296 = scmp.lt.s32.totalorder %s14, 7
        %s297 = scalar_select %p296, %s14, 7
        %s298 = smul.addr %s297, 2
        %s299 = scalar_lea.vmem %s5, %s298
      $region48: #{_lambda_.14} parent=27 // pred_fallthru
        _
    $region28: #{_lambda_.14} parent=5 // pred_fallthru
      _
    %p300 = scmp.le.s32.totalorder 1, %s14
    %p301 = scmp.lt.s32.totalorder %s14, 9
    %p302 = pnand %p300, %p301
    %p303 = pneg %p302
    // Predicated region
    $region49: #{_lambda_.14} parent=5 // pred_check
      _
    $region50: #{_lambda_.14} parent=5 // pred_check_branch
      %305 = sbr.rel (%p302) target = $region52
    $region51: #{_lambda_.14} parent=5 // pred_region
      %s306 = ssub.s32 %s14, 1
      %p307 = scmp.lt.s32.totalorder %s19, 7
      %s308 = scalar_select %p307, %s19, 7
      %s309 = smul.addr %s308, 32
      %s310 = smul.addr %s309, 8
      %s311 = scalar_lea.vmem %s0, %s310
      %p312 = pneg %p40
      %p313 = pneg %p37
      %p314 = scmp.lt.s32.totalorder %s19, 7
      %s315 = scalar_select %p314, %s19, 7
      %s316 = smul.addr %s315, 128
      %s317 = smul.addr %s316, 8
      %s318 = scalar_lea.vmem %s1, %s317
      %p319 = pneg %p66
      %p320 = pneg %p63
      %p321 = scmp.lt.s32.totalorder %s19, 7
      %s322 = scalar_select %p321, %s19, 7
      %s323 = smul.addr %s322, 128
      %s324 = smul.addr %s323, 8
      %s325 = scalar_lea.vmem %s2, %s324
      %p326 = pneg %p92
      %p327 = pneg %p89
      %p328 = scmp.lt.s32.totalorder %s19, 7
      %s329 = scalar_select %p328, %s19, 7
      %s330 = smul.addr %s329, 64
      %s331 = smul.addr %s330, 8
      %s332 = scalar_lea.vmem %s3, %s331
      %p333 = pneg %p118
      %p334 = pneg %p115
      %p335 = pneg %p139
      %p336 = pneg %p136
      %p337 = scmp.lt.s32.totalorder %s19, 7
      %s338 = scalar_select %p337, %s19, 7
      %s339 = smul.addr %s338, 2
      %s340 = scalar_lea.vmem %s5, %s339
      %p341 = pneg %p165
      %p342 = pneg %p162
      %p343 = pneg %p186
      %p344 = pneg %p183
      %p345 = pneg %p207
      %p346 = pneg %p204
      %p347 = pneg %p233
      %p348 = pneg %p230
      %p349 = scmp.lt.s32.totalorder %s19, 7
      %s350 = scalar_select %p349, %s19, 7
      %s351 = smul.addr %s350, 8
      %s352 = smul.addr %s351, 8
      %s353 = scalar_lea.vmem %s8, %s352
      %p354 = scmp.lt.s32.totalorder %s19, 7
      %s355 = scalar_select %p354, %s19, 7
      %s356 = smul.addr %s355, 32
      %s357 = smul.addr %s356, 8
      %s358 = scalar_lea.vmem %s0, %s357
      %p359 = scmp.lt.s32.totalorder %s19, 7
      %s360 = scalar_select %p359, %s19, 7
      %s361 = smul.addr %s360, 128
      %s362 = smul.addr %s361, 8
      %s363 = scalar_lea.vmem %s1, %s362
      %p364 = scmp.lt.s32.totalorder %s19, 7
      %s365 = scalar_select %p364, %s19, 7
      %s366 = smul.addr %s365, 128
      %s367 = smul.addr %s366, 8
      %s368 = scalar_lea.vmem %s2, %s367
      %p369 = scmp.lt.s32.totalorder %s19, 7
      %s370 = scalar_select %p369, %s19, 7
      %s371 = smul.addr %s370, 64
      %s372 = smul.addr %s371, 8
      %s373 = scalar_lea.vmem %s3, %s372
      %p374 = scmp.lt.s32.totalorder %s19, 7
      %s375 = scalar_select %p374, %s19, 7
      %s376 = smul.addr %s375, 2
      %s377 = scalar_lea.vmem %s5, %s376
      %p378 = scmp.lt.s32.totalorder %s19, 7
      %s379 = scalar_select %p378, %s19, 7
      %s380 = smul.addr %s379, 8
      %s381 = smul.addr %s380, 8
      %s382 = scalar_lea.vmem %s8, %s381
      %v384 = vld [vmem:[%s373] sm:$0xff]
      %v385 = vld [vmem:[%s373 + $0x8] sm:$0xff]
      %v386 = vld [vmem:[%s373 + $0x10] sm:$0xff]
      %v387 = vld [vmem:[%s373 + $0x18] sm:$0xff]
      %v388 = vld [vmem:[%s373 + $0x20] sm:$0xff]
      %v389 = vld [vmem:[%s373 + $0x28] sm:$0xff]
      %v390 = vld [vmem:[%s373 + $0x30] sm:$0xff]
      %v391 = vld [vmem:[%s373 + $0x38] sm:$0xff]
      %v392 = vld [vmem:[%s373 + $0x40] sm:$0xff]
      %v393 = vld [vmem:[%s373 + $0x48] sm:$0xff]
      %v394 = vld [vmem:[%s373 + $0x50] sm:$0xff]
      %v395 = vld [vmem:[%s373 + $0x58] sm:$0xff]
      %v396 = vld [vmem:[%s373 + $0x60] sm:$0xff]
      %v397 = vld [vmem:[%s373 + $0x68] sm:$0xff]
      %v398 = vld [vmem:[%s373 + $0x70] sm:$0xff]
      %v399 = vld [vmem:[%s373 + $0x78] sm:$0xff]
      %v400 = vld [vmem:[%s373 + $0x80] sm:$0xff]
      %v401 = vld [vmem:[%s373 + $0x88] sm:$0xff]
      %v402 = vld [vmem:[%s373 + $0x90] sm:$0xff]
      %v403 = vld [vmem:[%s373 + $0x98] sm:$0xff]
      %v404 = vld [vmem:[%s373 + $0xa0] sm:$0xff]
      %v405 = vld [vmem:[%s373 + $0xa8] sm:$0xff]
      %v406 = vld [vmem:[%s373 + $0xb0] sm:$0xff]
      %v407 = vld [vmem:[%s373 + $0xb8] sm:$0xff]
      %v408 = vld [vmem:[%s373 + $0xc0] sm:$0xff]
      %v409 = vld [vmem:[%s373 + $0xc8] sm:$0xff]
      %v410 = vld [vmem:[%s373 + $0xd0] sm:$0xff]
      %v411 = vld [vmem:[%s373 + $0xd8] sm:$0xff]
      %v412 = vld [vmem:[%s373 + $0xe0] sm:$0xff]
      %v413 = vld [vmem:[%s373 + $0xe8] sm:$0xff]
      %v414 = vld [vmem:[%s373 + $0xf0] sm:$0xff]
      %v415 = vld [vmem:[%s373 + $0xf8] sm:$0xff]
      %v416 = vld [vmem:[%s373 + $0x100] sm:$0xff]
      %v417 = vld [vmem:[%s373 + $0x108] sm:$0xff]
      %v418 = vld [vmem:[%s373 + $0x110] sm:$0xff]
      %v419 = vld [vmem:[%s373 + $0x118] sm:$0xff]
      %v420 = vld [vmem:[%s373 + $0x120] sm:$0xff]
      %v421 = vld [vmem:[%s373 + $0x128] sm:$0xff]
      %v422 = vld [vmem:[%s373 + $0x130] sm:$0xff]
      %v423 = vld [vmem:[%s373 + $0x138] sm:$0xff]
      %v424 = vld [vmem:[%s373 + $0x140] sm:$0xff]
      %v425 = vld [vmem:[%s373 + $0x148] sm:$0xff]
      %v426 = vld [vmem:[%s373 + $0x150] sm:$0xff]
      %v427 = vld [vmem:[%s373 + $0x158] sm:$0xff]
      %v428 = vld [vmem:[%s373 + $0x160] sm:$0xff]
      %v429 = vld [vmem:[%s373 + $0x168] sm:$0xff]
      %v430 = vld [vmem:[%s373 + $0x170] sm:$0xff]
      %v431 = vld [vmem:[%s373 + $0x178] sm:$0xff]
      %v432 = vld [vmem:[%s373 + $0x180] sm:$0xff]
      %v433 = vld [vmem:[%s373 + $0x188] sm:$0xff]
      %v434 = vld [vmem:[%s373 + $0x190] sm:$0xff]
      %v435 = vld [vmem:[%s373 + $0x198] sm:$0xff]
      %v436 = vld [vmem:[%s373 + $0x1a0] sm:$0xff]
      %v437 = vld [vmem:[%s373 + $0x1a8] sm:$0xff]
      %v438 = vld [vmem:[%s373 + $0x1b0] sm:$0xff]
      %v439 = vld [vmem:[%s373 + $0x1b8] sm:$0xff]
      %v440 = vld [vmem:[%s373 + $0x1c0] sm:$0xff]
      %v441 = vld [vmem:[%s373 + $0x1c8] sm:$0xff]
      %v442 = vld [vmem:[%s373 + $0x1d0] sm:$0xff]
      %v443 = vld [vmem:[%s373 + $0x1d8] sm:$0xff]
      %v444 = vld [vmem:[%s373 + $0x1e0] sm:$0xff]
      %v445 = vld [vmem:[%s373 + $0x1e8] sm:$0xff]
      %v446 = vld [vmem:[%s373 + $0x1f0] sm:$0xff]
      %v447 = vld [vmem:[%s373 + $0x1f8] sm:$0xff]
      %v448 = vpack.c.bf16 %v386, %v384
      %v449 = vpack.c.bf16 %v387, %v385
      %v450 = vpack.c.bf16 %v390, %v388
      %v451 = vpack.c.bf16 %v391, %v389
      %v452 = vpack.c.bf16 %v394, %v392
      %v453 = vpack.c.bf16 %v395, %v393
      %v454 = vpack.c.bf16 %v398, %v396
      %v455 = vpack.c.bf16 %v399, %v397
      %v456 = vpack.c.bf16 %v402, %v400
      %v457 = vpack.c.bf16 %v403, %v401
      %v458 = vpack.c.bf16 %v406, %v404
      %v459 = vpack.c.bf16 %v407, %v405
      %v460 = vpack.c.bf16 %v410, %v408
      %v461 = vpack.c.bf16 %v411, %v409
      %v462 = vpack.c.bf16 %v414, %v412
      %v463 = vpack.c.bf16 %v415, %v413
      %v464 = vpack.c.bf16 %v418, %v416
      %v465 = vpack.c.bf16 %v419, %v417
      %v466 = vpack.c.bf16 %v422, %v420
      %v467 = vpack.c.bf16 %v423, %v421
      %v468 = vpack.c.bf16 %v426, %v424
      %v469 = vpack.c.bf16 %v427, %v425
      %v470 = vpack.c.bf16 %v430, %v428
      %v471 = vpack.c.bf16 %v431, %v429
      %v472 = vpack.c.bf16 %v434, %v432
      %v473 = vpack.c.bf16 %v435, %v433
      %v474 = vpack.c.bf16 %v438, %v436
      %v475 = vpack.c.bf16 %v439, %v437
      %v476 = vpack.c.bf16 %v442, %v440
      %v477 = vpack.c.bf16 %v443, %v441
      %v478 = vpack.c.bf16 %v446, %v444
      %v479 = vpack.c.bf16 %v447, %v445
      %v480 = vld [vmem:[%s4] sm:$0xff]
      %v481 = vld [vmem:[%s4 + $0x8] sm:$0xff]
      %v482 = vld [vmem:[%s4 + $0x10] sm:$0xff]
      %v483 = vld [vmem:[%s4 + $0x18] sm:$0xff]
      %v484 = vld [vmem:[%s4 + $0x20] sm:$0xff]
      %v485 = vld [vmem:[%s4 + $0x28] sm:$0xff]
      %v486 = vld [vmem:[%s4 + $0x30] sm:$0xff]
      %v487 = vld [vmem:[%s4 + $0x38] sm:$0xff]
      %v488 = vld [vmem:[%s4 + $0x40] sm:$0xff]
      %v489 = vld [vmem:[%s4 + $0x48] sm:$0xff]
      %v490 = vld [vmem:[%s4 + $0x50] sm:$0xff]
      %v491 = vld [vmem:[%s4 + $0x58] sm:$0xff]
      %v492 = vld [vmem:[%s4 + $0x60] sm:$0xff]
      %v493 = vld [vmem:[%s4 + $0x68] sm:$0xff]
      %v494 = vld [vmem:[%s4 + $0x70] sm:$0xff]
      %v495 = vld [vmem:[%s4 + $0x78] sm:$0xff]
      %v496 = vld [vmem:[%s4 + $0x80] sm:$0xff]
      %v497 = vld [vmem:[%s4 + $0x88] sm:$0xff]
      %v498 = vld [vmem:[%s4 + $0x90] sm:$0xff]
      %v499 = vld [vmem:[%s4 + $0x98] sm:$0xff]
      %v500 = vld [vmem:[%s4 + $0xa0] sm:$0xff]
      %v501 = vld [vmem:[%s4 + $0xa8] sm:$0xff]
      %v502 = vld [vmem:[%s4 + $0xb0] sm:$0xff]
      %v503 = vld [vmem:[%s4 + $0xb8] sm:$0xff]
      %v504 = vld [vmem:[%s4 + $0xc0] sm:$0xff]
      %v505 = vld [vmem:[%s4 + $0xc8] sm:$0xff]
      %v506 = vld [vmem:[%s4 + $0xd0] sm:$0xff]
      %v507 = vld [vmem:[%s4 + $0xd8] sm:$0xff]
      %v508 = vld [vmem:[%s4 + $0xe0] sm:$0xff]
      %v509 = vld [vmem:[%s4 + $0xe8] sm:$0xff]
      %v510 = vld [vmem:[%s4 + $0xf0] sm:$0xff]
      %v511 = vld [vmem:[%s4 + $0xf8] sm:$0xff]
      %v512 = vld [vmem:[%s4 + $0x100] sm:$0xff]
      %v513 = vld [vmem:[%s4 + $0x108] sm:$0xff]
      %v514 = vld [vmem:[%s4 + $0x110] sm:$0xff]
      %v515 = vld [vmem:[%s4 + $0x118] sm:$0xff]
      %v516 = vld [vmem:[%s4 + $0x120] sm:$0xff]
      %v517 = vld [vmem:[%s4 + $0x128] sm:$0xff]
      %v518 = vld [vmem:[%s4 + $0x130] sm:$0xff]
      %v519 = vld [vmem:[%s4 + $0x138] sm:$0xff]
      %v520 = vld [vmem:[%s4 + $0x140] sm:$0xff]
      %v521 = vld [vmem:[%s4 + $0x148] sm:$0xff]
      %v522 = vld [vmem:[%s4 + $0x150] sm:$0xff]
      %v523 = vld [vmem:[%s4 + $0x158] sm:$0xff]
      %v524 = vld [vmem:[%s4 + $0x160] sm:$0xff]
      %v525 = vld [vmem:[%s4 + $0x168] sm:$0xff]
      %v526 = vld [vmem:[%s4 + $0x170] sm:$0xff]
      %v527 = vld [vmem:[%s4 + $0x178] sm:$0xff]
      %v528 = vld [vmem:[%s4 + $0x180] sm:$0xff]
      %v529 = vld [vmem:[%s4 + $0x188] sm:$0xff]
      %v530 = vld [vmem:[%s4 + $0x190] sm:$0xff]
      %v531 = vld [vmem:[%s4 + $0x198] sm:$0xff]
      %v532 = vld [vmem:[%s4 + $0x1a0] sm:$0xff]
      %v533 = vld [vmem:[%s4 + $0x1a8] sm:$0xff]
      %v534 = vld [vmem:[%s4 + $0x1b0] sm:$0xff]
      %v535 = vld [vmem:[%s4 + $0x1b8] sm:$0xff]
      %v536 = vld [vmem:[%s4 + $0x1c0] sm:$0xff]
      %v537 = vld [vmem:[%s4 + $0x1c8] sm:$0xff]
      %v538 = vld [vmem:[%s4 + $0x1d0] sm:$0xff]
      %v539 = vld [vmem:[%s4 + $0x1d8] sm:$0xff]
      %v540 = vld [vmem:[%s4 + $0x1e0] sm:$0xff]
      %v541 = vld [vmem:[%s4 + $0x1e8] sm:$0xff]
      %v542 = vld [vmem:[%s4 + $0x1f0] sm:$0xff]
      %v543 = vld [vmem:[%s4 + $0x1f8] sm:$0xff]
      %v544 = vpack.c.bf16 %v482, %v480
      %v545 = vpack.c.bf16 %v483, %v481
      %v546 = vpack.c.bf16 %v486, %v484
      %v547 = vpack.c.bf16 %v487, %v485
      %v548 = vpack.c.bf16 %v490, %v488
      %v549 = vpack.c.bf16 %v491, %v489
      %v550 = vpack.c.bf16 %v494, %v492
      %v551 = vpack.c.bf16 %v495, %v493
      %v552 = vpack.c.bf16 %v498, %v496
      %v553 = vpack.c.bf16 %v499, %v497
      %v554 = vpack.c.bf16 %v502, %v500
      %v555 = vpack.c.bf16 %v503, %v501
      %v556 = vpack.c.bf16 %v506, %v504
      %v557 = vpack.c.bf16 %v507, %v505
      %v558 = vpack.c.bf16 %v510, %v508
      %v559 = vpack.c.bf16 %v511, %v509
      %v560 = vpack.c.bf16 %v514, %v512
      %v561 = vpack.c.bf16 %v515, %v513
      %v562 = vpack.c.bf16 %v518, %v516
      %v563 = vpack.c.bf16 %v519, %v517
      %v564 = vpack.c.bf16 %v522, %v520
      %v565 = vpack.c.bf16 %v523, %v521
      %v566 = vpack.c.bf16 %v526, %v524
      %v567 = vpack.c.bf16 %v527, %v525
      %v568 = vpack.c.bf16 %v530, %v528
      %v569 = vpack.c.bf16 %v531, %v529
      %v570 = vpack.c.bf16 %v534, %v532
      %v571 = vpack.c.bf16 %v535, %v533
      %v572 = vpack.c.bf16 %v538, %v536
      %v573 = vpack.c.bf16 %v539, %v537
      %v574 = vpack.c.bf16 %v542, %v540
      %v575 = vpack.c.bf16 %v543, %v541
      %576 = vmatpush.bf16.msra.mxu0 %v558
      %577 = vmatpush.bf16.msra.mxu0 %v556
      %578 = vmatpush.bf16.msra.mxu0 %v554
      %579 = vmatpush.bf16.msra.mxu0 %v552
      %580 = vmatpush.bf16.msra.mxu0 %v550
      %581 = vmatpush.bf16.msra.mxu0 %v548
      %582 = vmatpush.bf16.msra.mxu0 %v546
      %583 = vmatpush.bf16.msra.mxu0 %v544
      %584 = vmatmul.bf16.gmra.mxu0 %v448
      %v585 = vpop.f32.mrf.mxu0
      %v586 = vadd.f32 0.0, %v585
      %v587 = vpop.f32.mrf.mxu0
      %v588 = vadd.f32 0.0, %v587
      %589 = vmatmul.bf16.gmra.mxu0 %v450
      %v590 = vpop.f32.mrf.mxu0
      %v591 = vadd.f32 0.0, %v590
      %v592 = vpop.f32.mrf.mxu0
      %v593 = vadd.f32 0.0, %v592
      %594 = vmatmul.bf16.gmra.mxu0 %v452
      %v595 = vpop.f32.mrf.mxu0
      %v596 = vadd.f32 0.0, %v595
      %v597 = vpop.f32.mrf.mxu0
      %v598 = vadd.f32 0.0, %v597
      %599 = vmatmul.bf16.gmra.mxu0 %v454
      %v600 = vpop.f32.mrf.mxu0
      %v601 = vadd.f32 0.0, %v600
      %v602 = vpop.f32.mrf.mxu0
      %v603 = vadd.f32 0.0, %v602
      %604 = vmatmul.bf16.gmra.mxu0 %v456
      %v605 = vpop.f32.mrf.mxu0
      %v606 = vadd.f32 0.0, %v605
      %v607 = vpop.f32.mrf.mxu0
      %v608 = vadd.f32 0.0, %v607
      %609 = vmatmul.bf16.gmra.mxu0 %v458
      %v610 = vpop.f32.mrf.mxu0
      %v611 = vadd.f32 0.0, %v610
      %v612 = vpop.f32.mrf.mxu0
      %v613 = vadd.f32 0.0, %v612
      %614 = vmatmul.bf16.gmra.mxu0 %v460
      %v615 = vpop.f32.mrf.mxu0
      %v616 = vadd.f32 0.0, %v615
      %v617 = vpop.f32.mrf.mxu0
      %v618 = vadd.f32 0.0, %v617
      %619 = vmatmul.bf16.gmra.mxu0 %v462
      %v620 = vpop.f32.mrf.mxu0
      %v621 = vadd.f32 0.0, %v620
      %v622 = vpop.f32.mrf.mxu0
      %v623 = vadd.f32 0.0, %v622
      %624 = vmatmul.bf16.gmra.mxu0 %v464
      %v625 = vpop.f32.mrf.mxu0
      %v626 = vadd.f32 0.0, %v625
      %v627 = vpop.f32.mrf.mxu0
      %v628 = vadd.f32 0.0, %v627
      %629 = vmatmul.bf16.gmra.mxu0 %v466
      %v630 = vpop.f32.mrf.mxu0
      %v631 = vadd.f32 0.0, %v630
      %v632 = vpop.f32.mrf.mxu0
      %v633 = vadd.f32 0.0, %v632
      %634 = vmatmul.bf16.gmra.mxu0 %v468
      %v635 = vpop.f32.mrf.mxu0
      %v636 = vadd.f32 0.0, %v635
      %v637 = vpop.f32.mrf.mxu0
      %v638 = vadd.f32 0.0, %v637
      %639 = vmatmul.bf16.gmra.mxu0 %v470
      %v640 = vpop.f32.mrf.mxu0
      %v641 = vadd.f32 0.0, %v640
      %v642 = vpop.f32.mrf.mxu0
      %v643 = vadd.f32 0.0, %v642
      %644 = vmatmul.bf16.gmra.mxu0 %v472
      %v645 = vpop.f32.mrf.mxu0
      %v646 = vadd.f32 0.0, %v645
      %v647 = vpop.f32.mrf.mxu0
      %v648 = vadd.f32 0.0, %v647
      %649 = vmatmul.bf16.gmra.mxu0 %v474
      %v650 = vpop.f32.mrf.mxu0
      %v651 = vadd.f32 0.0, %v650
      %v652 = vpop.f32.mrf.mxu0
      %v653 = vadd.f32 0.0, %v652
      %654 = vmatmul.bf16.gmra.mxu0 %v476
      %v655 = vpop.f32.mrf.mxu0
      %v656 = vadd.f32 0.0, %v655
      %v657 = vpop.f32.mrf.mxu0
      %v658 = vadd.f32 0.0, %v657
      %659 = vmatmul.bf16.gmra.mxu0 %v478
      %v660 = vpop.f32.mrf.mxu0
      %v661 = vadd.f32 0.0, %v660
      %v662 = vpop.f32.mrf.mxu0
      %v663 = vadd.f32 0.0, %v662
      %664 = vdwg.mxu0
      %665 = vmatpush.bf16.msra.mxu0 %v574
      %666 = vmatpush.bf16.msra.mxu0 %v572
      %667 = vmatpush.bf16.msra.mxu0 %v570
      %668 = vmatpush.bf16.msra.mxu0 %v568
      %669 = vmatpush.bf16.msra.mxu0 %v566
      %670 = vmatpush.bf16.msra.mxu0 %v564
      %671 = vmatpush.bf16.msra.mxu0 %v562
      %672 = vmatpush.bf16.msra.mxu0 %v560
      %673 = vmatmul.bf16.gmra.mxu0 %v449
      %v674 = vpop.f32.mrf.mxu0
      %v675 = vadd.f32 %v586, %v674
      %v676 = vpop.f32.mrf.mxu0
      %v677 = vadd.f32 %v588, %v676
      %678 = vmatmul.bf16.gmra.mxu0 %v451
      %v679 = vpop.f32.mrf.mxu0
      %v680 = vadd.f32 %v591, %v679
      %v681 = vpop.f32.mrf.mxu0
      %v682 = vadd.f32 %v593, %v681
      %683 = vmatmul.bf16.gmra.mxu0 %v453
      %v684 = vpop.f32.mrf.mxu0
      %v685 = vadd.f32 %v596, %v684
      %v686 = vpop.f32.mrf.mxu0
      %v687 = vadd.f32 %v598, %v686
      %688 = vmatmul.bf16.gmra.mxu0 %v455
      %v689 = vpop.f32.mrf.mxu0
      %v690 = vadd.f32 %v601, %v689
      %v691 = vpop.f32.mrf.mxu0
      %v692 = vadd.f32 %v603, %v691
      %693 = vmatmul.bf16.gmra.mxu0 %v457
      %v694 = vpop.f32.mrf.mxu0
      %v695 = vadd.f32 %v606, %v694
      %v696 = vpop.f32.mrf.mxu0
      %v697 = vadd.f32 %v608, %v696
      %698 = vmatmul.bf16.gmra.mxu0 %v459
      %v699 = vpop.f32.mrf.mxu0
      %v700 = vadd.f32 %v611, %v699
      %v701 = vpop.f32.mrf.mxu0
      %v702 = vadd.f32 %v613, %v701
      %703 = vmatmul.bf16.gmra.mxu0 %v461
      %v704 = vpop.f32.mrf.mxu0
      %v705 = vadd.f32 %v616, %v704
      %v706 = vpop.f32.mrf.mxu0
      %v707 = vadd.f32 %v618, %v706
      %708 = vmatmul.bf16.gmra.mxu0 %v463
      %v709 = vpop.f32.mrf.mxu0
      %v710 = vadd.f32 %v621, %v709
      %v711 = vpop.f32.mrf.mxu0
      %v712 = vadd.f32 %v623, %v711
      %713 = vmatmul.bf16.gmra.mxu0 %v465
      %v714 = vpop.f32.mrf.mxu0
      %v715 = vadd.f32 %v626, %v714
      %v716 = vpop.f32.mrf.mxu0
      %v717 = vadd.f32 %v628, %v716
      %718 = vmatmul.bf16.gmra.mxu0 %v467
      %v719 = vpop.f32.mrf.mxu0
      %v720 = vadd.f32 %v631, %v719
      %v721 = vpop.f32.mrf.mxu0
      %v722 = vadd.f32 %v633, %v721
      %723 = vmatmul.bf16.gmra.mxu0 %v469
      %v724 = vpop.f32.mrf.mxu0
      %v725 = vadd.f32 %v636, %v724
      %v726 = vpop.f32.mrf.mxu0
      %v727 = vadd.f32 %v638, %v726
      %728 = vmatmul.bf16.gmra.mxu0 %v471
      %v729 = vpop.f32.mrf.mxu0
      %v730 = vadd.f32 %v641, %v729
      %v731 = vpop.f32.mrf.mxu0
      %v732 = vadd.f32 %v643, %v731
      %733 = vmatmul.bf16.gmra.mxu0 %v473
      %v734 = vpop.f32.mrf.mxu0
      %v735 = vadd.f32 %v646, %v734
      %v736 = vpop.f32.mrf.mxu0
      %v737 = vadd.f32 %v648, %v736
      %738 = vmatmul.bf16.gmra.mxu0 %v475
      %v739 = vpop.f32.mrf.mxu0
      %v740 = vadd.f32 %v651, %v739
      %v741 = vpop.f32.mrf.mxu0
      %v742 = vadd.f32 %v653, %v741
      %743 = vmatmul.bf16.gmra.mxu0 %v477
      %v744 = vpop.f32.mrf.mxu0
      %v745 = vadd.f32 %v656, %v744
      %v746 = vpop.f32.mrf.mxu0
      %v747 = vadd.f32 %v658, %v746
      %748 = vmatmul.bf16.gmra.mxu0 %v479
      %v749 = vpop.f32.mrf.mxu0
      %v750 = vadd.f32 %v661, %v749
      %v751 = vpop.f32.mrf.mxu0
      %v752 = vadd.f32 %v663, %v751
      %753 = vdwg.mxu0
      %754 = vmatpush.bf16.msra.mxu0 %v559
      %755 = vmatpush.bf16.msra.mxu0 %v557
      %756 = vmatpush.bf16.msra.mxu0 %v555
      %757 = vmatpush.bf16.msra.mxu0 %v553
      %758 = vmatpush.bf16.msra.mxu0 %v551
      %759 = vmatpush.bf16.msra.mxu0 %v549
      %760 = vmatpush.bf16.msra.mxu0 %v547
      %761 = vmatpush.bf16.msra.mxu0 %v545
      %762 = vmatmul.bf16.gmra.mxu0 %v448
      %v763 = vpop.f32.mrf.mxu0
      %v764 = vadd.f32 0.0, %v763
      %v765 = vpop.f32.mrf.mxu0
      %v766 = vadd.f32 0.0, %v765
      %767 = vmatmul.bf16.gmra.mxu0 %v450
      %v768 = vpop.f32.mrf.mxu0
      %v769 = vadd.f32 0.0, %v768
      %v770 = vpop.f32.mrf.mxu0
      %v771 = vadd.f32 0.0, %v770
      %772 = vmatmul.bf16.gmra.mxu0 %v452
      %v773 = vpop.f32.mrf.mxu0
      %v774 = vadd.f32 0.0, %v773
      %v775 = vpop.f32.mrf.mxu0
      %v776 = vadd.f32 0.0, %v775
      %777 = vmatmul.bf16.gmra.mxu0 %v454
      %v778 = vpop.f32.mrf.mxu0
      %v779 = vadd.f32 0.0, %v778
      %v780 = vpop.f32.mrf.mxu0
      %v781 = vadd.f32 0.0, %v780
      %782 = vmatmul.bf16.gmra.mxu0 %v456
      %v783 = vpop.f32.mrf.mxu0
      %v784 = vadd.f32 0.0, %v783
      %v785 = vpop.f32.mrf.mxu0
      %v786 = vadd.f32 0.0, %v785
      %787 = vmatmul.bf16.gmra.mxu0 %v458
      %v788 = vpop.f32.mrf.mxu0
      %v789 = vadd.f32 0.0, %v788
      %v790 = vpop.f32.mrf.mxu0
      %v791 = vadd.f32 0.0, %v790
      %792 = vmatmul.bf16.gmra.mxu0 %v460
      %v793 = vpop.f32.mrf.mxu0
      %v794 = vadd.f32 0.0, %v793
      %v795 = vpop.f32.mrf.mxu0
      %v796 = vadd.f32 0.0, %v795
      %797 = vmatmul.bf16.gmra.mxu0 %v462
      %v798 = vpop.f32.mrf.mxu0
      %v799 = vadd.f32 0.0, %v798
      %v800 = vpop.f32.mrf.mxu0
      %v801 = vadd.f32 0.0, %v800
      %802 = vmatmul.bf16.gmra.mxu0 %v464
      %v803 = vpop.f32.mrf.mxu0
      %v804 = vadd.f32 0.0, %v803
      %v805 = vpop.f32.mrf.mxu0
      %v806 = vadd.f32 0.0, %v805
      %807 = vmatmul.bf16.gmra.mxu0 %v466
      %v808 = vpop.f32.mrf.mxu0
      %v809 = vadd.f32 0.0, %v808
      %v810 = vpop.f32.mrf.mxu0
      %v811 = vadd.f32 0.0, %v810
      %812 = vmatmul.bf16.gmra.mxu0 %v468
      %v813 = vpop.f32.mrf.mxu0
      %v814 = vadd.f32 0.0, %v813
      %v815 = vpop.f32.mrf.mxu0
      %v816 = vadd.f32 0.0, %v815
      %817 = vmatmul.bf16.gmra.mxu0 %v470
      %v818 = vpop.f32.mrf.mxu0
      %v819 = vadd.f32 0.0, %v818
      %v820 = vpop.f32.mrf.mxu0
      %v821 = vadd.f32 0.0, %v820
      %822 = vmatmul.bf16.gmra.mxu0 %v472
      %v823 = vpop.f32.mrf.mxu0
      %v824 = vadd.f32 0.0, %v823
      %v825 = vpop.f32.mrf.mxu0
      %v826 = vadd.f32 0.0, %v825
      %827 = vmatmul.bf16.gmra.mxu0 %v474
      %v828 = vpop.f32.mrf.mxu0
      %v829 = vadd.f32 0.0, %v828
      %v830 = vpop.f32.mrf.mxu0
      %v831 = vadd.f32 0.0, %v830
      %832 = vmatmul.bf16.gmra.mxu0 %v476
      %v833 = vpop.f32.mrf.mxu0
      %v834 = vadd.f32 0.0, %v833
      %v835 = vpop.f32.mrf.mxu0
      %v836 = vadd.f32 0.0, %v835
      %837 = vmatmul.bf16.gmra.mxu0 %v478
      %v838 = vpop.f32.mrf.mxu0
      %v839 = vadd.f32 0.0, %v838
      %v840 = vpop.f32.mrf.mxu0
      %v841 = vadd.f32 0.0, %v840
      %842 = vdwg.mxu0
      %843 = vmatpush.bf16.msra.mxu0 %v575
      %844 = vmatpush.bf16.msra.mxu0 %v573
      %845 = vmatpush.bf16.msra.mxu0 %v571
      %846 = vmatpush.bf16.msra.mxu0 %v569
      %847 = vmatpush.bf16.msra.mxu0 %v567
      %848 = vmatpush.bf16.msra.mxu0 %v565
      %849 = vmatpush.bf16.msra.mxu0 %v563
      %850 = vmatpush.bf16.msra.mxu0 %v561
      %851 = vmatmul.bf16.gmra.mxu0 %v449
      %v852 = vpop.f32.mrf.mxu0
      %v853 = vadd.f32 %v764, %v852
      %v854 = vpop.f32.mrf.mxu0
      %v855 = vadd.f32 %v766, %v854
      %856 = vmatmul.bf16.gmra.mxu0 %v451
      %v857 = vpop.f32.mrf.mxu0
      %v858 = vadd.f32 %v769, %v857
      %v859 = vpop.f32.mrf.mxu0
      %v860 = vadd.f32 %v771, %v859
      %861 = vmatmul.bf16.gmra.mxu0 %v453
      %v862 = vpop.f32.mrf.mxu0
      %v863 = vadd.f32 %v774, %v862
      %v864 = vpop.f32.mrf.mxu0
      %v865 = vadd.f32 %v776, %v864
      %866 = vmatmul.bf16.gmra.mxu0 %v455
      %v867 = vpop.f32.mrf.mxu0
      %v868 = vadd.f32 %v779, %v867
      %v869 = vpop.f32.mrf.mxu0
      %v870 = vadd.f32 %v781, %v869
      %871 = vmatmul.bf16.gmra.mxu0 %v457
      %v872 = vpop.f32.mrf.mxu0
      %v873 = vadd.f32 %v784, %v872
      %v874 = vpop.f32.mrf.mxu0
      %v875 = vadd.f32 %v786, %v874
      %876 = vmatmul.bf16.gmra.mxu0 %v459
      %v877 = vpop.f32.mrf.mxu0
      %v878 = vadd.f32 %v789, %v877
      %v879 = vpop.f32.mrf.mxu0
      %v880 = vadd.f32 %v791, %v879
      %881 = vmatmul.bf16.gmra.mxu0 %v461
      %v882 = vpop.f32.mrf.mxu0
      %v883 = vadd.f32 %v794, %v882
      %v884 = vpop.f32.mrf.mxu0
      %v885 = vadd.f32 %v796, %v884
      %886 = vmatmul.bf16.gmra.mxu0 %v463
      %v887 = vpop.f32.mrf.mxu0
      %v888 = vadd.f32 %v799, %v887
      %v889 = vpop.f32.mrf.mxu0
      %v890 = vadd.f32 %v801, %v889
      %891 = vmatmul.bf16.gmra.mxu0 %v465
      %v892 = vpop.f32.mrf.mxu0
      %v893 = vadd.f32 %v804, %v892
      %v894 = vpop.f32.mrf.mxu0
      %v895 = vadd.f32 %v806, %v894
      %896 = vmatmul.bf16.gmra.mxu0 %v467
      %v897 = vpop.f32.mrf.mxu0
      %v898 = vadd.f32 %v809, %v897
      %v899 = vpop.f32.mrf.mxu0
      %v900 = vadd.f32 %v811, %v899
      %901 = vmatmul.bf16.gmra.mxu0 %v469
      %v902 = vpop.f32.mrf.mxu0
      %v903 = vadd.f32 %v814, %v902
      %v904 = vpop.f32.mrf.mxu0
      %v905 = vadd.f32 %v816, %v904
      %906 = vmatmul.bf16.gmra.mxu0 %v471
      %v907 = vpop.f32.mrf.mxu0
      %v908 = vadd.f32 %v819, %v907
      %v909 = vpop.f32.mrf.mxu0
      %v910 = vadd.f32 %v821, %v909
      %911 = vmatmul.bf16.gmra.mxu0 %v473
      %v912 = vpop.f32.mrf.mxu0
      %v913 = vadd.f32 %v824, %v912
      %v914 = vpop.f32.mrf.mxu0
      %v915 = vadd.f32 %v826, %v914
      %916 = vmatmul.bf16.gmra.mxu0 %v475
      %v917 = vpop.f32.mrf.mxu0
      %v918 = vadd.f32 %v829, %v917
      %v919 = vpop.f32.mrf.mxu0
      %v920 = vadd.f32 %v831, %v919
      %921 = vmatmul.bf16.gmra.mxu0 %v477
      %v922 = vpop.f32.mrf.mxu0
      %v923 = vadd.f32 %v834, %v922
      %v924 = vpop.f32.mrf.mxu0
      %v925 = vadd.f32 %v836, %v924
      %926 = vmatmul.bf16.gmra.mxu0 %v479
      %v927 = vpop.f32.mrf.mxu0
      %v928 = vadd.f32 %v839, %v927
      %v929 = vpop.f32.mrf.mxu0
      %v930 = vadd.f32 %v841, %v929
      %931 = vdwg.mxu0
      %v932 = vld [vmem:[%s377] sm:$0x3]
      %v933 = vld [vmem:[%s358] sm:$0xff]
      %v934 = vld [vmem:[%s358 + $0x8] sm:$0xff]
      %v935 = vld [vmem:[%s358 + $0x10] sm:$0xff]
      %v936 = vld [vmem:[%s358 + $0x18] sm:$0xff]
      %v937 = vld [vmem:[%s358 + $0x20] sm:$0xff]
      %v938 = vld [vmem:[%s358 + $0x28] sm:$0xff]
      %v939 = vld [vmem:[%s358 + $0x30] sm:$0xff]
      %v940 = vld [vmem:[%s358 + $0x38] sm:$0xff]
      %v941 = vpack.c.bf16 %v934, %v933
      %v942 = vpack.c.bf16 %v936, %v935
      %v943 = vpack.c.bf16 %v938, %v937
      %v944 = vpack.c.bf16 %v940, %v939
      %v945 = vld [vmem:[%s363] sm:$0xff]
      %v946 = vld [vmem:[%s363 + $0x8] sm:$0xff]
      %v947 = vld [vmem:[%s363 + $0x10] sm:$0xff]
      %v948 = vld [vmem:[%s363 + $0x18] sm:$0xff]
      %v949 = vld [vmem:[%s363 + $0x20] sm:$0xff]
      %v950 = vld [vmem:[%s363 + $0x28] sm:$0xff]
      %v951 = vld [vmem:[%s363 + $0x30] sm:$0xff]
      %v952 = vld [vmem:[%s363 + $0x38] sm:$0xff]
      %v953 = vld [vmem:[%s363 + $0x40] sm:$0xff]
      %v954 = vld [vmem:[%s363 + $0x48] sm:$0xff]
      %v955 = vld [vmem:[%s363 + $0x50] sm:$0xff]
      %v956 = vld [vmem:[%s363 + $0x58] sm:$0xff]
      %v957 = vld [vmem:[%s363 + $0x60] sm:$0xff]
      %v958 = vld [vmem:[%s363 + $0x68] sm:$0xff]
      %v959 = vld [vmem:[%s363 + $0x70] sm:$0xff]
      %v960 = vld [vmem:[%s363 + $0x78] sm:$0xff]
      %v961 = vld [vmem:[%s363 + $0x80] sm:$0xff]
      %v962 = vld [vmem:[%s363 + $0x88] sm:$0xff]
      %v963 = vld [vmem:[%s363 + $0x90] sm:$0xff]
      %v964 = vld [vmem:[%s363 + $0x98] sm:$0xff]
      %v965 = vld [vmem:[%s363 + $0xa0] sm:$0xff]
      %v966 = vld [vmem:[%s363 + $0xa8] sm:$0xff]
      %v967 = vld [vmem:[%s363 + $0xb0] sm:$0xff]
      %v968 = vld [vmem:[%s363 + $0xb8] sm:$0xff]
      %v969 = vld [vmem:[%s363 + $0xc0] sm:$0xff]
      %v970 = vld [vmem:[%s363 + $0xc8] sm:$0xff]
      %v971 = vld [vmem:[%s363 + $0xd0] sm:$0xff]
      %v972 = vld [vmem:[%s363 + $0xd8] sm:$0xff]
      %v973 = vld [vmem:[%s363 + $0xe0] sm:$0xff]
      %v974 = vld [vmem:[%s363 + $0xe8] sm:$0xff]
      %v975 = vld [vmem:[%s363 + $0xf0] sm:$0xff]
      %v976 = vld [vmem:[%s363 + $0xf8] sm:$0xff]
      %v977 = vpack.c.bf16 %v946, %v945
      %v978 = vpack.c.bf16 %v948, %v947
      %v979 = vpack.c.bf16 %v950, %v949
      %v980 = vpack.c.bf16 %v952, %v951
      %v981 = vpack.c.bf16 %v954, %v953
      %v982 = vpack.c.bf16 %v956, %v955
      %v983 = vpack.c.bf16 %v958, %v957
      %v984 = vpack.c.bf16 %v960, %v959
      %v985 = vpack.c.bf16 %v962, %v961
      %v986 = vpack.c.bf16 %v964, %v963
      %v987 = vpack.c.bf16 %v966, %v965
      %v988 = vpack.c.bf16 %v968, %v967
      %v989 = vpack.c.bf16 %v970, %v969
      %v990 = vpack.c.bf16 %v972, %v971
      %v991 = vpack.c.bf16 %v974, %v973
      %v992 = vpack.c.bf16 %v976, %v975
      %v993 = vld [vmem:[%s368] sm:$0xff]
      %v994 = vld [vmem:[%s368 + $0x8] sm:$0xff]
      %v995 = vld [vmem:[%s368 + $0x10] sm:$0xff]
      %v996 = vld [vmem:[%s368 + $0x18] sm:$0xff]
      %v997 = vld [vmem:[%s368 + $0x20] sm:$0xff]
      %v998 = vld [vmem:[%s368 + $0x28] sm:$0xff]
      %v999 = vld [vmem:[%s368 + $0x30] sm:$0xff]
      %v1000 = vld [vmem:[%s368 + $0x38] sm:$0xff]
      %v1001 = vld [vmem:[%s368 + $0x40] sm:$0xff]
      %v1002 = vld [vmem:[%s368 + $0x48] sm:$0xff]
      %v1003 = vld [vmem:[%s368 + $0x50] sm:$0xff]
      %v1004 = vld [vmem:[%s368 + $0x58] sm:$0xff]
      %v1005 = vld [vmem:[%s368 + $0x60] sm:$0xff]
      %v1006 = vld [vmem:[%s368 + $0x68] sm:$0xff]
      %v1007 = vld [vmem:[%s368 + $0x70] sm:$0xff]
      %v1008 = vld [vmem:[%s368 + $0x78] sm:$0xff]
      %v1009 = vld [vmem:[%s368 + $0x80] sm:$0xff]
      %v1010 = vld [vmem:[%s368 + $0x88] sm:$0xff]
      %v1011 = vld [vmem:[%s368 + $0x90] sm:$0xff]
      %v1012 = vld [vmem:[%s368 + $0x98] sm:$0xff]
      %v1013 = vld [vmem:[%s368 + $0xa0] sm:$0xff]
      %v1014 = vld [vmem:[%s368 + $0xa8] sm:$0xff]
      %v1015 = vld [vmem:[%s368 + $0xb0] sm:$0xff]
      %v1016 = vld [vmem:[%s368 + $0xb8] sm:$0xff]
      %v1017 = vld [vmem:[%s368 + $0xc0] sm:$0xff]
      %v1018 = vld [vmem:[%s368 + $0xc8] sm:$0xff]
      %v1019 = vld [vmem:[%s368 + $0xd0] sm:$0xff]
      %v1020 = vld [vmem:[%s368 + $0xd8] sm:$0xff]
      %v1021 = vld [vmem:[%s368 + $0xe0] sm:$0xff]
      %v1022 = vld [vmem:[%s368 + $0xe8] sm:$0xff]
      %v1023 = vld [vmem:[%s368 + $0xf0] sm:$0xff]
      %v1024 = vld [vmem:[%s368 + $0xf8] sm:$0xff]
      %v1025 = vpack.c.bf16 %v994, %v993
      %v1026 = vpack.c.bf16 %v996, %v995
      %v1027 = vpack.c.bf16 %v998, %v997
      %v1028 = vpack.c.bf16 %v1000, %v999
      %v1029 = vpack.c.bf16 %v1002, %v1001
      %v1030 = vpack.c.bf16 %v1004, %v1003
      %v1031 = vpack.c.bf16 %v1006, %v1005
      %v1032 = vpack.c.bf16 %v1008, %v1007
      %v1033 = vpack.c.bf16 %v1010, %v1009
      %v1034 = vpack.c.bf16 %v1012, %v1011
      %v1035 = vpack.c.bf16 %v1014, %v1013
      %v1036 = vpack.c.bf16 %v1016, %v1015
      %v1037 = vpack.c.bf16 %v1018, %v1017
      %v1038 = vpack.c.bf16 %v1020, %v1019
      %v1039 = vpack.c.bf16 %v1022, %v1021
      %v1040 = vpack.c.bf16 %v1024, %v1023
      %vm1041 = vcmask 130048
      %v1043 = vsel %vm1041, %v941, 0
      %v1046 = vsel %vm1041, %v942, 0
      %v1049 = vsel %vm1041, %v943, 0
      %v1052 = vsel %vm1041, %v944, 0
      %v1055 = vsel %vm1041, %v977, 0
      %v1058 = vsel %vm1041, %v978, 0
      %v1061 = vsel %vm1041, %v979, 0
      %v1064 = vsel %vm1041, %v980, 0
      %v1067 = vsel %vm1041, %v981, 0
      %v1070 = vsel %vm1041, %v982, 0
      %v1073 = vsel %vm1041, %v983, 0
      %v1076 = vsel %vm1041, %v984, 0
      %v1079 = vsel %vm1041, %v985, 0
      %v1082 = vsel %vm1041, %v986, 0
      %v1085 = vsel %vm1041, %v987, 0
      %v1088 = vsel %vm1041, %v988, 0
      %v1091 = vsel %vm1041, %v989, 0
      %v1094 = vsel %vm1041, %v990, 0
      %v1097 = vsel %vm1041, %v991, 0
      %v1100 = vsel %vm1041, %v992, 0
      %1102 = vmatpush.bf16.xpose.msra.mxu0 %v1076
      %1103 = vmatpush.bf16.xpose.msra.mxu0 %v1073
      %1104 = vmatpush.bf16.xpose.msra.mxu0 %v1070
      %1105 = vmatpush.bf16.xpose.msra.mxu0 %v1067
      %1106 = vmatpush.bf16.xpose.msra.mxu0 %v1064
      %1107 = vmatpush.bf16.xpose.msra.mxu0 %v1061
      %1108 = vmatpush.bf16.xpose.msra.mxu0 %v1058
      %1109 = vmatpush.bf16.xpose.msra.mxu0 %v1055
      %1110 = vmatmul.bf16.gmra.mxu0 %v1043
      %v1111 = vpop.f32.mrf.mxu0
      %v1112 = vadd.f32 %v675, %v1111
      %v1113 = vpop.f32.mrf.mxu0
      %v1114 = vadd.f32 %v677, %v1113
      %1115 = vmatmul.bf16.gmra.mxu0 %v1046
      %v1116 = vpop.f32.mrf.mxu0
      %v1117 = vadd.f32 %v680, %v1116
      %v1118 = vpop.f32.mrf.mxu0
      %v1119 = vadd.f32 %v682, %v1118
      %1120 = vmatmul.bf16.gmra.mxu0 %v1049
      %v1121 = vpop.f32.mrf.mxu0
      %v1122 = vadd.f32 %v685, %v1121
      %v1123 = vpop.f32.mrf.mxu0
      %v1124 = vadd.f32 %v687, %v1123
      %1125 = vmatmul.bf16.gmra.mxu0 %v1052
      %v1126 = vpop.f32.mrf.mxu0
      %v1127 = vadd.f32 %v690, %v1126
      %v1128 = vpop.f32.mrf.mxu0
      %v1129 = vadd.f32 %v692, %v1128
      %1130 = vdwg.mxu0
      %1131 = vmatpush.bf16.xpose.msra.mxu0 %v1100
      %1132 = vmatpush.bf16.xpose.msra.mxu0 %v1097
      %1133 = vmatpush.bf16.xpose.msra.mxu0 %v1094
      %1134 = vmatpush.bf16.xpose.msra.mxu0 %v1091
      %1135 = vmatpush.bf16.xpose.msra.mxu0 %v1088
      %1136 = vmatpush.bf16.xpose.msra.mxu0 %v1085
      %1137 = vmatpush.bf16.xpose.msra.mxu0 %v1082
      %1138 = vmatpush.bf16.xpose.msra.mxu0 %v1079
      %1139 = vmatmul.bf16.gmra.mxu0 %v1043
      %v1140 = vpop.f32.mrf.mxu0
      %v1141 = vadd.f32 %v853, %v1140
      %v1142 = vpop.f32.mrf.mxu0
      %v1143 = vadd.f32 %v855, %v1142
      %1144 = vmatmul.bf16.gmra.mxu0 %v1046
      %v1145 = vpop.f32.mrf.mxu0
      %v1146 = vadd.f32 %v858, %v1145
      %v1147 = vpop.f32.mrf.mxu0
      %v1148 = vadd.f32 %v860, %v1147
      %1149 = vmatmul.bf16.gmra.mxu0 %v1049
      %v1150 = vpop.f32.mrf.mxu0
      %v1151 = vadd.f32 %v863, %v1150
      %v1152 = vpop.f32.mrf.mxu0
      %v1153 = vadd.f32 %v865, %v1152
      %1154 = vmatmul.bf16.gmra.mxu0 %v1052
      %v1155 = vpop.f32.mrf.mxu0
      %v1156 = vadd.f32 %v868, %v1155
      %v1157 = vpop.f32.mrf.mxu0
      %v1158 = vadd.f32 %v870, %v1157
      %1159 = vdwg.mxu0
      %v1161 = vperm.slane %v932, 0
      %v1162 = vperm.slane %v932, 1
      %v1165 = vadd.f32 %v1112, %v1161
      %v1166 = vadd.f32 %v1141, %v1162
      %v1167 = vadd.f32 %v1114, %v1161
      %v1168 = vadd.f32 %v1143, %v1162
      %v1169 = vadd.f32 %v1117, %v1161
      %v1170 = vadd.f32 %v1146, %v1162
      %v1171 = vadd.f32 %v1119, %v1161
      %v1172 = vadd.f32 %v1148, %v1162
      %v1173 = vadd.f32 %v1122, %v1161
      %v1174 = vadd.f32 %v1151, %v1162
      %v1175 = vadd.f32 %v1124, %v1161
      %v1176 = vadd.f32 %v1153, %v1162
      %v1177 = vadd.f32 %v1127, %v1161
      %v1178 = vadd.f32 %v1156, %v1162
      %v1179 = vadd.f32 %v1129, %v1161
      %v1180 = vadd.f32 %v1158, %v1162
      %v1181 = vmax.f32 %v1165, %v1166
      %1182 = vmax.xlane.f32.xlu0 %v1181
      %v1183 = vpop.xlane.xlu0 %1182
      %v1184 = vmax.f32 %v1167, %v1168
      %1185 = vmax.xlane.f32.xlu0 %v1184
      %v1186 = vpop.xlane.xlu0 %1185
      %v1187 = vmax.f32 %v1169, %v1170
      %1188 = vmax.xlane.f32.xlu0 %v1187
      %v1189 = vpop.xlane.xlu0 %1188
      %v1190 = vmax.f32 %v1171, %v1172
      %1191 = vmax.xlane.f32.xlu0 %v1190
      %v1192 = vpop.xlane.xlu0 %1191
      %v1193 = vmax.f32 %v1173, %v1174
      %1194 = vmax.xlane.f32.xlu0 %v1193
      %v1195 = vpop.xlane.xlu0 %1194
      %v1196 = vmax.f32 %v1175, %v1176
      %1197 = vmax.xlane.f32.xlu0 %v1196
      %v1198 = vpop.xlane.xlu0 %1197
      %v1199 = vmax.f32 %v1177, %v1178
      %1200 = vmax.xlane.f32.xlu0 %v1199
      %v1201 = vpop.xlane.xlu0 %1200
      %v1202 = vmax.f32 %v1179, %v1180
      %1203 = vmax.xlane.f32.xlu0 %v1202
      %v1204 = vpop.xlane.xlu0 %1203
      %v1205 = vsub.f32 %v1165, %v1183
      %v1206 = vsub.f32 %v1166, %v1183
      %v1207 = vsub.f32 %v1167, %v1186
      %v1208 = vsub.f32 %v1168, %v1186
      %v1209 = vsub.f32 %v1169, %v1189
      %v1210 = vsub.f32 %v1170, %v1189
      %v1211 = vsub.f32 %v1171, %v1192
      %v1212 = vsub.f32 %v1172, %v1192
      %v1213 = vsub.f32 %v1173, %v1195
      %v1214 = vsub.f32 %v1174, %v1195
      %v1215 = vsub.f32 %v1175, %v1198
      %v1216 = vsub.f32 %v1176, %v1198
      %v1217 = vsub.f32 %v1177, %v1201
      %v1218 = vsub.f32 %v1178, %v1201
      %v1219 = vsub.f32 %v1179, %v1204
      %v1220 = vsub.f32 %v1180, %v1204
      %v1221 = vmul.f32 %v1205, 1.442695
      %v1222 = vpow.pop %v1221
      %v1223 = vmul.f32 %v1206, 1.442695
      %v1224 = vpow.pop %v1223
      %v1225 = vmul.f32 %v1207, 1.442695
      %v1226 = vpow.pop %v1225
      %v1227 = vmul.f32 %v1208, 1.442695
      %v1228 = vpow.pop %v1227
      %v1229 = vmul.f32 %v1209, 1.442695
      %v1230 = vpow.pop %v1229
      %v1231 = vmul.f32 %v1210, 1.442695
      %v1232 = vpow.pop %v1231
      %v1233 = vmul.f32 %v1211, 1.442695
      %v1234 = vpow.pop %v1233
      %v1235 = vmul.f32 %v1212, 1.442695
      %v1236 = vpow.pop %v1235
      %v1237 = vmul.f32 %v1213, 1.442695
      %v1238 = vpow.pop %v1237
      %v1239 = vmul.f32 %v1214, 1.442695
      %v1240 = vpow.pop %v1239
      %v1241 = vmul.f32 %v1215, 1.442695
      %v1242 = vpow.pop %v1241
      %v1243 = vmul.f32 %v1216, 1.442695
      %v1244 = vpow.pop %v1243
      %v1245 = vmul.f32 %v1217, 1.442695
      %v1246 = vpow.pop %v1245
      %v1247 = vmul.f32 %v1218, 1.442695
      %v1248 = vpow.pop %v1247
      %v1249 = vmul.f32 %v1219, 1.442695
      %v1250 = vpow.pop %v1249
      %v1251 = vmul.f32 %v1220, 1.442695
      %v1252 = vpow.pop %v1251
      %v1253 = vadd.f32 %v1222, %v1224
      %1254 = vadd.xlane.f32.xlu0 %v1253
      %v1255 = vpop.xlane.xlu0 %1254
      %v1256 = vadd.f32 %v1226, %v1228
      %1257 = vadd.xlane.f32.xlu0 %v1256
      %v1258 = vpop.xlane.xlu0 %1257
      %v1259 = vadd.f32 %v1230, %v1232
      %1260 = vadd.xlane.f32.xlu0 %v1259
      %v1261 = vpop.xlane.xlu0 %1260
      %v1262 = vadd.f32 %v1234, %v1236
      %1263 = vadd.xlane.f32.xlu0 %v1262
      %v1264 = vpop.xlane.xlu0 %1263
      %v1265 = vadd.f32 %v1238, %v1240
      %1266 = vadd.xlane.f32.xlu0 %v1265
      %v1267 = vpop.xlane.xlu0 %1266
      %v1268 = vadd.f32 %v1242, %v1244
      %1269 = vadd.xlane.f32.xlu0 %v1268
      %v1270 = vpop.xlane.xlu0 %1269
      %v1271 = vadd.f32 %v1246, %v1248
      %1272 = vadd.xlane.f32.xlu0 %v1271
      %v1273 = vpop.xlane.xlu0 %1272
      %v1274 = vadd.f32 %v1250, %v1252
      %1275 = vadd.xlane.f32.xlu0 %v1274
      %v1276 = vpop.xlane.xlu0 %1275
      %v1277 = vrcp.pop %v1255
      %v1278 = vmul.f32 %v1255, %v1277
      %v1279 = vsub.f32 1.0, %v1278
      %v1280 = vmul.f32 %v1277, %v1279
      %v1281 = vadd.f32 %v1277, %v1280
      %vm1282 = vweird.f32 %v1255
      %vm1283 = vweird.f32 %v1277
      %vm1284 = vmor %vm1282, %vm1283
      %v1285 = vsel %vm1284, %v1277, %v1281
      %v1286 = vand.u32 2147483647, %v1255
      %vm1287 = vcmp.eq.f32.partialorder %v1286, 8.507059e+37
      %v1288 = vand.u32 %v1255, 2147483648
      %v1289 = vor.u32 1.1754944e-38, %v1288
      %v1290 = vsel %vm1287, %v1289, %v1285
      %v1291 = vmul.f32 %v1222, %v1290
      %v1292 = vmul.f32 %v1224, %v1290
      %v1293 = vrcp.pop %v1258
      %v1294 = vmul.f32 %v1258, %v1293
      %v1295 = vsub.f32 1.0, %v1294
      %v1296 = vmul.f32 %v1293, %v1295
      %v1297 = vadd.f32 %v1293, %v1296
      %vm1298 = vweird.f32 %v1258
      %vm1299 = vweird.f32 %v1293
      %vm1300 = vmor %vm1298, %vm1299
      %v1301 = vsel %vm1300, %v1293, %v1297
      %v1302 = vand.u32 2147483647, %v1258
      %vm1303 = vcmp.eq.f32.partialorder %v1302, 8.507059e+37
      %v1304 = vand.u32 %v1258, 2147483648
      %v1305 = vor.u32 1.1754944e-38, %v1304
      %v1306 = vsel %vm1303, %v1305, %v1301
      %v1307 = vmul.f32 %v1226, %v1306
      %v1308 = vmul.f32 %v1228, %v1306
      %v1309 = vrcp.pop %v1261
      %v1310 = vmul.f32 %v1261, %v1309
      %v1311 = vsub.f32 1.0, %v1310
      %v1312 = vmul.f32 %v1309, %v1311
      %v1313 = vadd.f32 %v1309, %v1312
      %vm1314 = vweird.f32 %v1261
      %vm1315 = vweird.f32 %v1309
      %vm1316 = vmor %vm1314, %vm1315
      %v1317 = vsel %vm1316, %v1309, %v1313
      %v1318 = vand.u32 2147483647, %v1261
      %vm1319 = vcmp.eq.f32.partialorder %v1318, 8.507059e+37
      %v1320 = vand.u32 %v1261, 2147483648
      %v1321 = vor.u32 1.1754944e-38, %v1320
      %v1322 = vsel %vm1319, %v1321, %v1317
      %v1323 = vmul.f32 %v1230, %v1322
      %v1324 = vmul.f32 %v1232, %v1322
      %v1325 = vrcp.pop %v1264
      %v1326 = vmul.f32 %v1264, %v1325
      %v1327 = vsub.f32 1.0, %v1326
      %v1328 = vmul.f32 %v1325, %v1327
      %v1329 = vadd.f32 %v1325, %v1328
      %vm1330 = vweird.f32 %v1264
      %vm1331 = vweird.f32 %v1325
      %vm1332 = vmor %vm1330, %vm1331
      %v1333 = vsel %vm1332, %v1325, %v1329
      %v1334 = vand.u32 2147483647, %v1264
      %vm1335 = vcmp.eq.f32.partialorder %v1334, 8.507059e+37
      %v1336 = vand.u32 %v1264, 2147483648
      %v1337 = vor.u32 1.1754944e-38, %v1336
      %v1338 = vsel %vm1335, %v1337, %v1333
      %v1339 = vmul.f32 %v1234, %v1338
      %v1340 = vmul.f32 %v1236, %v1338
      %v1341 = vrcp.pop %v1267
      %v1342 = vmul.f32 %v1267, %v1341
      %v1343 = vsub.f32 1.0, %v1342
      %v1344 = vmul.f32 %v1341, %v1343
      %v1345 = vadd.f32 %v1341, %v1344
      %vm1346 = vweird.f32 %v1267
      %vm1347 = vweird.f32 %v1341
      %vm1348 = vmor %vm1346, %vm1347
      %v1349 = vsel %vm1348, %v1341, %v1345
      %v1350 = vand.u32 2147483647, %v1267
      %vm1351 = vcmp.eq.f32.partialorder %v1350, 8.507059e+37
      %v1352 = vand.u32 %v1267, 2147483648
      %v1353 = vor.u32 1.1754944e-38, %v1352
      %v1354 = vsel %vm1351, %v1353, %v1349
      %v1355 = vmul.f32 %v1238, %v1354
      %v1356 = vmul.f32 %v1240, %v1354
      %v1357 = vrcp.pop %v1270
      %v1358 = vmul.f32 %v1270, %v1357
      %v1359 = vsub.f32 1.0, %v1358
      %v1360 = vmul.f32 %v1357, %v1359
      %v1361 = vadd.f32 %v1357, %v1360
      %vm1362 = vweird.f32 %v1270
      %vm1363 = vweird.f32 %v1357
      %vm1364 = vmor %vm1362, %vm1363
      %v1365 = vsel %vm1364, %v1357, %v1361
      %v1366 = vand.u32 2147483647, %v1270
      %vm1367 = vcmp.eq.f32.partialorder %v1366, 8.507059e+37
      %v1368 = vand.u32 %v1270, 2147483648
      %v1369 = vor.u32 1.1754944e-38, %v1368
      %v1370 = vsel %vm1367, %v1369, %v1365
      %v1371 = vmul.f32 %v1242, %v1370
      %v1372 = vmul.f32 %v1244, %v1370
      %v1373 = vrcp.pop %v1273
      %v1374 = vmul.f32 %v1273, %v1373
      %v1375 = vsub.f32 1.0, %v1374
      %v1376 = vmul.f32 %v1373, %v1375
      %v1377 = vadd.f32 %v1373, %v1376
      %vm1378 = vweird.f32 %v1273
      %vm1379 = vweird.f32 %v1373
      %vm1380 = vmor %vm1378, %vm1379
      %v1381 = vsel %vm1380, %v1373, %v1377
      %v1382 = vand.u32 2147483647, %v1273
      %vm1383 = vcmp.eq.f32.partialorder %v1382, 8.507059e+37
      %v1384 = vand.u32 %v1273, 2147483648
      %v1385 = vor.u32 1.1754944e-38, %v1384
      %v1386 = vsel %vm1383, %v1385, %v1381
      %v1387 = vmul.f32 %v1246, %v1386
      %v1388 = vmul.f32 %v1248, %v1386
      %v1389 = vrcp.pop %v1276
      %v1390 = vmul.f32 %v1276, %v1389
      %v1391 = vsub.f32 1.0, %v1390
      %v1392 = vmul.f32 %v1389, %v1391
      %v1393 = vadd.f32 %v1389, %v1392
      %vm1394 = vweird.f32 %v1276
      %vm1395 = vweird.f32 %v1389
      %vm1396 = vmor %vm1394, %vm1395
      %v1397 = vsel %vm1396, %v1389, %v1393
      %v1398 = vand.u32 2147483647, %v1276
      %vm1399 = vcmp.eq.f32.partialorder %v1398, 8.507059e+37
      %v1400 = vand.u32 %v1276, 2147483648
      %v1401 = vor.u32 1.1754944e-38, %v1400
      %v1402 = vsel %vm1399, %v1401, %v1397
      %v1403 = vmul.f32 %v1250, %v1402
      %v1404 = vmul.f32 %v1252, %v1402
      %v1405 = vpack.c.bf16 %v1307, %v1291
      %v1406 = vpack.c.bf16 %v1308, %v1292
      %v1407 = vpack.c.bf16 %v1339, %v1323
      %v1408 = vpack.c.bf16 %v1340, %v1324
      %v1409 = vpack.c.bf16 %v1371, %v1355
      %v1410 = vpack.c.bf16 %v1372, %v1356
      %v1411 = vpack.c.bf16 %v1403, %v1387
      %v1412 = vpack.c.bf16 %v1404, %v1388
      %1413 = vmatpush.bf16.msra.mxu0 %v1032
      %1414 = vmatpush.bf16.msra.mxu0 %v1031
      %1415 = vmatpush.bf16.msra.mxu0 %v1030
      %1416 = vmatpush.bf16.msra.mxu0 %v1029
      %1417 = vmatpush.bf16.msra.mxu0 %v1028
      %1418 = vmatpush.bf16.msra.mxu0 %v1027
      %1419 = vmatpush.bf16.msra.mxu0 %v1026
      %1420 = vmatpush.bf16.msra.mxu0 %v1025
      %1421 = vmatmul.bf16.gmra.mxu0 %v1405
      %v1422 = vpop.f32.mrf.mxu0
      %v1423 = vadd.f32 0.0, %v1422
      %v1424 = vpop.f32.mrf.mxu0
      %v1425 = vadd.f32 0.0, %v1424
      %1426 = vmatmul.bf16.gmra.mxu0 %v1407
      %v1427 = vpop.f32.mrf.mxu0
      %v1428 = vadd.f32 0.0, %v1427
      %v1429 = vpop.f32.mrf.mxu0
      %v1430 = vadd.f32 0.0, %v1429
      %1431 = vmatmul.bf16.gmra.mxu0 %v1409
      %v1432 = vpop.f32.mrf.mxu0
      %v1433 = vadd.f32 0.0, %v1432
      %v1434 = vpop.f32.mrf.mxu0
      %v1435 = vadd.f32 0.0, %v1434
      %1436 = vmatmul.bf16.gmra.mxu0 %v1411
      %v1437 = vpop.f32.mrf.mxu0
      %v1438 = vadd.f32 0.0, %v1437
      %v1439 = vpop.f32.mrf.mxu0
      %v1440 = vadd.f32 0.0, %v1439
      %1441 = vdwg.mxu0
      %1442 = vmatpush.bf16.msra.mxu0 %v1040
      %1443 = vmatpush.bf16.msra.mxu0 %v1039
      %1444 = vmatpush.bf16.msra.mxu0 %v1038
      %1445 = vmatpush.bf16.msra.mxu0 %v1037
      %1446 = vmatpush.bf16.msra.mxu0 %v1036
      %1447 = vmatpush.bf16.msra.mxu0 %v1035
      %1448 = vmatpush.bf16.msra.mxu0 %v1034
      %1449 = vmatpush.bf16.msra.mxu0 %v1033
      %1450 = vmatmul.bf16.gmra.mxu0 %v1406
      %v1451 = vpop.f32.mrf.mxu0
      %v1452 = vadd.f32 %v1423, %v1451
      %v1453 = vpop.f32.mrf.mxu0
      %v1454 = vadd.f32 %v1425, %v1453
      %1455 = vmatmul.bf16.gmra.mxu0 %v1408
      %v1456 = vpop.f32.mrf.mxu0
      %v1457 = vadd.f32 %v1428, %v1456
      %v1458 = vpop.f32.mrf.mxu0
      %v1459 = vadd.f32 %v1430, %v1458
      %1460 = vmatmul.bf16.gmra.mxu0 %v1410
      %v1461 = vpop.f32.mrf.mxu0
      %v1462 = vadd.f32 %v1433, %v1461
      %v1463 = vpop.f32.mrf.mxu0
      %v1464 = vadd.f32 %v1435, %v1463
      %1465 = vmatmul.bf16.gmra.mxu0 %v1412
      %v1466 = vpop.f32.mrf.mxu0
      %v1467 = vadd.f32 %v1438, %v1466
      %v1468 = vpop.f32.mrf.mxu0
      %v1469 = vadd.f32 %v1440, %v1468
      %1470 = vdwg.mxu0
      %v1471 = vpack.c.bf16 %v1454, %v1452
      %v1472 = vpack.c.bf16 %v1459, %v1457
      %v1473 = vpack.c.bf16 %v1464, %v1462
      %v1474 = vpack.c.bf16 %v1469, %v1467
      %v1475 = vld [vmem:[%s6] sm:$0xff]
      %v1476 = vld [vmem:[%s6 + $0x8] sm:$0xff]
      %v1477 = vpack.c.bf16 %v1476, %v1475
      %s1478 = scalar_lea.vmem %s358, 64
      %v1479 = vld [vmem:[%s1478] sm:$0xff]
      %v1480 = vld [vmem:[%s1478 + $0x8] sm:$0xff]
      %v1481 = vld [vmem:[%s1478 + $0x10] sm:$0xff]
      %v1482 = vld [vmem:[%s1478 + $0x18] sm:$0xff]
      %v1483 = vld [vmem:[%s1478 + $0x20] sm:$0xff]
      %v1484 = vld [vmem:[%s1478 + $0x28] sm:$0xff]
      %v1485 = vld [vmem:[%s1478 + $0x30] sm:$0xff]
      %v1486 = vld [vmem:[%s1478 + $0x38] sm:$0xff]
      %v1487 = vpack.c.bf16 %v1480, %v1479
      %v1488 = vpack.c.bf16 %v1482, %v1481
      %v1489 = vpack.c.bf16 %v1484, %v1483
      %v1490 = vpack.c.bf16 %v1486, %v1485
      %s1491 = scalar_lea.vmem %s363, 256
      %v1492 = vld [vmem:[%s1491] sm:$0xff]
      %v1493 = vld [vmem:[%s1491 + $0x8] sm:$0xff]
      %v1494 = vld [vmem:[%s1491 + $0x10] sm:$0xff]
      %v1495 = vld [vmem:[%s1491 + $0x18] sm:$0xff]
      %v1496 = vld [vmem:[%s1491 + $0x20] sm:$0xff]
      %v1497 = vld [vmem:[%s1491 + $0x28] sm:$0xff]
      %v1498 = vld [vmem:[%s1491 + $0x30] sm:$0xff]
      %v1499 = vld [vmem:[%s1491 + $0x38] sm:$0xff]
      %v1500 = vld [vmem:[%s1491 + $0x40] sm:$0xff]
      %v1501 = vld [vmem:[%s1491 + $0x48] sm:$0xff]
      %v1502 = vld [vmem:[%s1491 + $0x50] sm:$0xff]
      %v1503 = vld [vmem:[%s1491 + $0x58] sm:$0xff]
      %v1504 = vld [vmem:[%s1491 + $0x60] sm:$0xff]
      %v1505 = vld [vmem:[%s1491 + $0x68] sm:$0xff]
      %v1506 = vld [vmem:[%s1491 + $0x70] sm:$0xff]
      %v1507 = vld [vmem:[%s1491 + $0x78] sm:$0xff]
      %v1508 = vld [vmem:[%s1491 + $0x80] sm:$0xff]
      %v1509 = vld [vmem:[%s1491 + $0x88] sm:$0xff]
      %v1510 = vld [vmem:[%s1491 + $0x90] sm:$0xff]
      %v1511 = vld [vmem:[%s1491 + $0x98] sm:$0xff]
      %v1512 = vld [vmem:[%s1491 + $0xa0] sm:$0xff]
      %v1513 = vld [vmem:[%s1491 + $0xa8] sm:$0xff]
      %v1514 = vld [vmem:[%s1491 + $0xb0] sm:$0xff]
      %v1515 = vld [vmem:[%s1491 + $0xb8] sm:$0xff]
      %v1516 = vld [vmem:[%s1491 + $0xc0] sm:$0xff]
      %v1517 = vld [vmem:[%s1491 + $0xc8] sm:$0xff]
      %v1518 = vld [vmem:[%s1491 + $0xd0] sm:$0xff]
      %v1519 = vld [vmem:[%s1491 + $0xd8] sm:$0xff]
      %v1520 = vld [vmem:[%s1491 + $0xe0] sm:$0xff]
      %v1521 = vld [vmem:[%s1491 + $0xe8] sm:$0xff]
      %v1522 = vld [vmem:[%s1491 + $0xf0] sm:$0xff]
      %v1523 = vld [vmem:[%s1491 + $0xf8] sm:$0xff]
      %v1524 = vpack.c.bf16 %v1493, %v1492
      %v1525 = vpack.c.bf16 %v1495, %v1494
      %v1526 = vpack.c.bf16 %v1497, %v1496
      %v1527 = vpack.c.bf16 %v1499, %v1498
      %v1528 = vpack.c.bf16 %v1501, %v1500
      %v1529 = vpack.c.bf16 %v1503, %v1502
      %v1530 = vpack.c.bf16 %v1505, %v1504
      %v1531 = vpack.c.bf16 %v1507, %v1506
      %v1532 = vpack.c.bf16 %v1509, %v1508
      %v1533 = vpack.c.bf16 %v1511, %v1510
      %v1534 = vpack.c.bf16 %v1513, %v1512
      %v1535 = vpack.c.bf16 %v1515, %v1514
      %v1536 = vpack.c.bf16 %v1517, %v1516
      %v1537 = vpack.c.bf16 %v1519, %v1518
      %v1538 = vpack.c.bf16 %v1521, %v1520
      %v1539 = vpack.c.bf16 %v1523, %v1522
      %s1540 = scalar_lea.vmem %s368, 256
      %v1541 = vld [vmem:[%s1540] sm:$0xff]
      %v1542 = vld [vmem:[%s1540 + $0x8] sm:$0xff]
      %v1543 = vld [vmem:[%s1540 + $0x10] sm:$0xff]
      %v1544 = vld [vmem:[%s1540 + $0x18] sm:$0xff]
      %v1545 = vld [vmem:[%s1540 + $0x20] sm:$0xff]
      %v1546 = vld [vmem:[%s1540 + $0x28] sm:$0xff]
      %v1547 = vld [vmem:[%s1540 + $0x30] sm:$0xff]
      %v1548 = vld [vmem:[%s1540 + $0x38] sm:$0xff]
      %v1549 = vld [vmem:[%s1540 + $0x40] sm:$0xff]
      %v1550 = vld [vmem:[%s1540 + $0x48] sm:$0xff]
      %v1551 = vld [vmem:[%s1540 + $0x50] sm:$0xff]
      %v1552 = vld [vmem:[%s1540 + $0x58] sm:$0xff]
      %v1553 = vld [vmem:[%s1540 + $0x60] sm:$0xff]
      %v1554 = vld [vmem:[%s1540 + $0x68] sm:$0xff]
      %v1555 = vld [vmem:[%s1540 + $0x70] sm:$0xff]
      %v1556 = vld [vmem:[%s1540 + $0x78] sm:$0xff]
      %v1557 = vld [vmem:[%s1540 + $0x80] sm:$0xff]
      %v1558 = vld [vmem:[%s1540 + $0x88] sm:$0xff]
      %v1559 = vld [vmem:[%s1540 + $0x90] sm:$0xff]
      %v1560 = vld [vmem:[%s1540 + $0x98] sm:$0xff]
      %v1561 = vld [vmem:[%s1540 + $0xa0] sm:$0xff]
      %v1562 = vld [vmem:[%s1540 + $0xa8] sm:$0xff]
      %v1563 = vld [vmem:[%s1540 + $0xb0] sm:$0xff]
      %v1564 = vld [vmem:[%s1540 + $0xb8] sm:$0xff]
      %v1565 = vld [vmem:[%s1540 + $0xc0] sm:$0xff]
      %v1566 = vld [vmem:[%s1540 + $0xc8] sm:$0xff]
      %v1567 = vld [vmem:[%s1540 + $0xd0] sm:$0xff]
      %v1568 = vld [vmem:[%s1540 + $0xd8] sm:$0xff]
      %v1569 = vld [vmem:[%s1540 + $0xe0] sm:$0xff]
      %v1570 = vld [vmem:[%s1540 + $0xe8] sm:$0xff]
      %v1571 = vld [vmem:[%s1540 + $0xf0] sm:$0xff]
      %v1572 = vld [vmem:[%s1540 + $0xf8] sm:$0xff]
      %v1573 = vpack.c.bf16 %v1542, %v1541
      %v1574 = vpack.c.bf16 %v1544, %v1543
      %v1575 = vpack.c.bf16 %v1546, %v1545
      %v1576 = vpack.c.bf16 %v1548, %v1547
      %v1577 = vpack.c.bf16 %v1550, %v1549
      %v1578 = vpack.c.bf16 %v1552, %v1551
      %v1579 = vpack.c.bf16 %v1554, %v1553
      %v1580 = vpack.c.bf16 %v1556, %v1555
      %v1581 = vpack.c.bf16 %v1558, %v1557
      %v1582 = vpack.c.bf16 %v1560, %v1559
      %v1583 = vpack.c.bf16 %v1562, %v1561
      %v1584 = vpack.c.bf16 %v1564, %v1563
      %v1585 = vpack.c.bf16 %v1566, %v1565
      %v1586 = vpack.c.bf16 %v1568, %v1567
      %v1587 = vpack.c.bf16 %v1570, %v1569
      %v1588 = vpack.c.bf16 %v1572, %v1571
      %v1590 = vsel %vm1041, %v1487, 0
      %v1593 = vsel %vm1041, %v1488, 0
      %v1596 = vsel %vm1041, %v1489, 0
      %v1599 = vsel %vm1041, %v1490, 0
      %v1602 = vsel %vm1041, %v1524, 0
      %v1605 = vsel %vm1041, %v1525, 0
      %v1608 = vsel %vm1041, %v1526, 0
      %v1611 = vsel %vm1041, %v1527, 0
      %v1614 = vsel %vm1041, %v1528, 0
      %v1617 = vsel %vm1041, %v1529, 0
      %v1620 = vsel %vm1041, %v1530, 0
      %v1623 = vsel %vm1041, %v1531, 0
      %v1626 = vsel %vm1041, %v1532, 0
      %v1629 = vsel %vm1041, %v1533, 0
      %v1632 = vsel %vm1041, %v1534, 0
      %v1635 = vsel %vm1041, %v1535, 0
      %v1638 = vsel %vm1041, %v1536, 0
      %v1641 = vsel %vm1041, %v1537, 0
      %v1644 = vsel %vm1041, %v1538, 0
      %v1647 = vsel %vm1041, %v1539, 0
      %1649 = vmatpush.bf16.xpose.msra.mxu0 %v1623
      %1650 = vmatpush.bf16.xpose.msra.mxu0 %v1620
      %1651 = vmatpush.bf16.xpose.msra.mxu0 %v1617
      %1652 = vmatpush.bf16.xpose.msra.mxu0 %v1614
      %1653 = vmatpush.bf16.xpose.msra.mxu0 %v1611
      %1654 = vmatpush.bf16.xpose.msra.mxu0 %v1608
      %1655 = vmatpush.bf16.xpose.msra.mxu0 %v1605
      %1656 = vmatpush.bf16.xpose.msra.mxu0 %v1602
      %1657 = vmatmul.bf16.gmra.mxu0 %v1590
      %v1658 = vpop.f32.mrf.mxu0
      %v1659 = vadd.f32 %v695, %v1658
      %v1660 = vpop.f32.mrf.mxu0
      %v1661 = vadd.f32 %v697, %v1660
      %1662 = vmatmul.bf16.gmra.mxu0 %v1593
      %v1663 = vpop.f32.mrf.mxu0
      %v1664 = vadd.f32 %v700, %v1663
      %v1665 = vpop.f32.mrf.mxu0
      %v1666 = vadd.f32 %v702, %v1665
      %1667 = vmatmul.bf16.gmra.mxu0 %v1596
      %v1668 = vpop.f32.mrf.mxu0
      %v1669 = vadd.f32 %v705, %v1668
      %v1670 = vpop.f32.mrf.mxu0
      %v1671 = vadd.f32 %v707, %v1670
      %1672 = vmatmul.bf16.gmra.mxu0 %v1599
      %v1673 = vpop.f32.mrf.mxu0
      %v1674 = vadd.f32 %v710, %v1673
      %v1675 = vpop.f32.mrf.mxu0
      %v1676 = vadd.f32 %v712, %v1675
      %1677 = vdwg.mxu0
      %1678 = vmatpush.bf16.xpose.msra.mxu0 %v1647
      %1679 = vmatpush.bf16.xpose.msra.mxu0 %v1644
      %1680 = vmatpush.bf16.xpose.msra.mxu0 %v1641
      %1681 = vmatpush.bf16.xpose.msra.mxu0 %v1638
      %1682 = vmatpush.bf16.xpose.msra.mxu0 %v1635
      %1683 = vmatpush.bf16.xpose.msra.mxu0 %v1632
      %1684 = vmatpush.bf16.xpose.msra.mxu0 %v1629
      %1685 = vmatpush.bf16.xpose.msra.mxu0 %v1626
      %1686 = vmatmul.bf16.gmra.mxu0 %v1590
      %v1687 = vpop.f32.mrf.mxu0
      %v1688 = vadd.f32 %v873, %v1687
      %v1689 = vpop.f32.mrf.mxu0
      %v1690 = vadd.f32 %v875, %v1689
      %1691 = vmatmul.bf16.gmra.mxu0 %v1593
      %v1692 = vpop.f32.mrf.mxu0
      %v1693 = vadd.f32 %v878, %v1692
      %v1694 = vpop.f32.mrf.mxu0
      %v1695 = vadd.f32 %v880, %v1694
      %1696 = vmatmul.bf16.gmra.mxu0 %v1596
      %v1697 = vpop.f32.mrf.mxu0
      %v1698 = vadd.f32 %v883, %v1697
      %v1699 = vpop.f32.mrf.mxu0
      %v1700 = vadd.f32 %v885, %v1699
      %1701 = vmatmul.bf16.gmra.mxu0 %v1599
      %v1702 = vpop.f32.mrf.mxu0
      %v1703 = vadd.f32 %v888, %v1702
      %v1704 = vpop.f32.mrf.mxu0
      %v1705 = vadd.f32 %v890, %v1704
      %1706 = vdwg.mxu0
      %v1707 = vadd.f32 %v1659, %v1161
      %v1708 = vadd.f32 %v1688, %v1162
      %v1709 = vadd.f32 %v1661, %v1161
      %v1710 = vadd.f32 %v1690, %v1162
      %v1711 = vadd.f32 %v1664, %v1161
      %v1712 = vadd.f32 %v1693, %v1162
      %v1713 = vadd.f32 %v1666, %v1161
      %v1714 = vadd.f32 %v1695, %v1162
      %v1715 = vadd.f32 %v1669, %v1161
      %v1716 = vadd.f32 %v1698, %v1162
      %v1717 = vadd.f32 %v1671, %v1161
      %v1718 = vadd.f32 %v1700, %v1162
      %v1719 = vadd.f32 %v1674, %v1161
      %v1720 = vadd.f32 %v1703, %v1162
      %v1721 = vadd.f32 %v1676, %v1161
      %v1722 = vadd.f32 %v1705, %v1162
      %v1723 = vmax.f32 %v1707, %v1708
      %1724 = vmax.xlane.f32.xlu0 %v1723
      %v1725 = vpop.xlane.xlu0 %1724
      %v1726 = vmax.f32 %v1709, %v1710
      %1727 = vmax.xlane.f32.xlu0 %v1726
      %v1728 = vpop.xlane.xlu0 %1727
      %v1729 = vmax.f32 %v1711, %v1712
      %1730 = vmax.xlane.f32.xlu0 %v1729
      %v1731 = vpop.xlane.xlu0 %1730
      %v1732 = vmax.f32 %v1713, %v1714
      %1733 = vmax.xlane.f32.xlu0 %v1732
      %v1734 = vpop.xlane.xlu0 %1733
      %v1735 = vmax.f32 %v1715, %v1716
      %1736 = vmax.xlane.f32.xlu0 %v1735
      %v1737 = vpop.xlane.xlu0 %1736
      %v1738 = vmax.f32 %v1717, %v1718
      %1739 = vmax.xlane.f32.xlu0 %v1738
      %v1740 = vpop.xlane.xlu0 %1739
      %v1741 = vmax.f32 %v1719, %v1720
      %1742 = vmax.xlane.f32.xlu0 %v1741
      %v1743 = vpop.xlane.xlu0 %1742
      %v1744 = vmax.f32 %v1721, %v1722
      %1745 = vmax.xlane.f32.xlu0 %v1744
      %v1746 = vpop.xlane.xlu0 %1745
      %v1747 = vsub.f32 %v1707, %v1725
      %v1748 = vsub.f32 %v1708, %v1725
      %v1749 = vsub.f32 %v1709, %v1728
      %v1750 = vsub.f32 %v1710, %v1728
      %v1751 = vsub.f32 %v1711, %v1731
      %v1752 = vsub.f32 %v1712, %v1731
      %v1753 = vsub.f32 %v1713, %v1734
      %v1754 = vsub.f32 %v1714, %v1734
      %v1755 = vsub.f32 %v1715, %v1737
      %v1756 = vsub.f32 %v1716, %v1737
      %v1757 = vsub.f32 %v1717, %v1740
      %v1758 = vsub.f32 %v1718, %v1740
      %v1759 = vsub.f32 %v1719, %v1743
      %v1760 = vsub.f32 %v1720, %v1743
      %v1761 = vsub.f32 %v1721, %v1746
      %v1762 = vsub.f32 %v1722, %v1746
      %v1763 = vmul.f32 %v1747, 1.442695
      %v1764 = vpow.pop %v1763
      %v1765 = vmul.f32 %v1748, 1.442695
      %v1766 = vpow.pop %v1765
      %v1767 = vmul.f32 %v1749, 1.442695
      %v1768 = vpow.pop %v1767
      %v1769 = vmul.f32 %v1750, 1.442695
      %v1770 = vpow.pop %v1769
      %v1771 = vmul.f32 %v1751, 1.442695
      %v1772 = vpow.pop %v1771
      %v1773 = vmul.f32 %v1752, 1.442695
      %v1774 = vpow.pop %v1773
      %v1775 = vmul.f32 %v1753, 1.442695
      %v1776 = vpow.pop %v1775
      %v1777 = vmul.f32 %v1754, 1.442695
      %v1778 = vpow.pop %v1777
      %v1779 = vmul.f32 %v1755, 1.442695
      %v1780 = vpow.pop %v1779
      %v1781 = vmul.f32 %v1756, 1.442695
      %v1782 = vpow.pop %v1781
      %v1783 = vmul.f32 %v1757, 1.442695
      %v1784 = vpow.pop %v1783
      %v1785 = vmul.f32 %v1758, 1.442695
      %v1786 = vpow.pop %v1785
      %v1787 = vmul.f32 %v1759, 1.442695
      %v1788 = vpow.pop %v1787
      %v1789 = vmul.f32 %v1760, 1.442695
      %v1790 = vpow.pop %v1789
      %v1791 = vmul.f32 %v1761, 1.442695
      %v1792 = vpow.pop %v1791
      %v1793 = vmul.f32 %v1762, 1.442695
      %v1794 = vpow.pop %v1793
      %v1795 = vadd.f32 %v1764, %v1766
      %1796 = vadd.xlane.f32.xlu0 %v1795
      %v1797 = vpop.xlane.xlu0 %1796
      %v1798 = vadd.f32 %v1768, %v1770
      %1799 = vadd.xlane.f32.xlu0 %v1798
      %v1800 = vpop.xlane.xlu0 %1799
      %v1801 = vadd.f32 %v1772, %v1774
      %1802 = vadd.xlane.f32.xlu0 %v1801
      %v1803 = vpop.xlane.xlu0 %1802
      %v1804 = vadd.f32 %v1776, %v1778
      %1805 = vadd.xlane.f32.xlu0 %v1804
      %v1806 = vpop.xlane.xlu0 %1805
      %v1807 = vadd.f32 %v1780, %v1782
      %1808 = vadd.xlane.f32.xlu0 %v1807
      %v1809 = vpop.xlane.xlu0 %1808
      %v1810 = vadd.f32 %v1784, %v1786
      %1811 = vadd.xlane.f32.xlu0 %v1810
      %v1812 = vpop.xlane.xlu0 %1811
      %v1813 = vadd.f32 %v1788, %v1790
      %1814 = vadd.xlane.f32.xlu0 %v1813
      %v1815 = vpop.xlane.xlu0 %1814
      %v1816 = vadd.f32 %v1792, %v1794
      %1817 = vadd.xlane.f32.xlu0 %v1816
      %v1818 = vpop.xlane.xlu0 %1817
      %v1819 = vrcp.pop %v1797
      %v1820 = vmul.f32 %v1797, %v1819
      %v1821 = vsub.f32 1.0, %v1820
      %v1822 = vmul.f32 %v1819, %v1821
      %v1823 = vadd.f32 %v1819, %v1822
      %vm1824 = vweird.f32 %v1797
      %vm1825 = vweird.f32 %v1819
      %vm1826 = vmor %vm1824, %vm1825
      %v1827 = vsel %vm1826, %v1819, %v1823
      %v1828 = vand.u32 2147483647, %v1797
      %vm1829 = vcmp.eq.f32.partialorder %v1828, 8.507059e+37
      %v1830 = vand.u32 %v1797, 2147483648
      %v1831 = vor.u32 1.1754944e-38, %v1830
      %v1832 = vsel %vm1829, %v1831, %v1827
      %v1833 = vmul.f32 %v1764, %v1832
      %v1834 = vmul.f32 %v1766, %v1832
      %v1835 = vrcp.pop %v1800
      %v1836 = vmul.f32 %v1800, %v1835
      %v1837 = vsub.f32 1.0, %v1836
      %v1838 = vmul.f32 %v1835, %v1837
      %v1839 = vadd.f32 %v1835, %v1838
      %vm1840 = vweird.f32 %v1800
      %vm1841 = vweird.f32 %v1835
      %vm1842 = vmor %vm1840, %vm1841
      %v1843 = vsel %vm1842, %v1835, %v1839
      %v1844 = vand.u32 2147483647, %v1800
      %vm1845 = vcmp.eq.f32.partialorder %v1844, 8.507059e+37
      %v1846 = vand.u32 %v1800, 2147483648
      %v1847 = vor.u32 1.1754944e-38, %v1846
      %v1848 = vsel %vm1845, %v1847, %v1843
      %v1849 = vmul.f32 %v1768, %v1848
      %v1850 = vmul.f32 %v1770, %v1848
      %v1851 = vrcp.pop %v1803
      %v1852 = vmul.f32 %v1803, %v1851
      %v1853 = vsub.f32 1.0, %v1852
      %v1854 = vmul.f32 %v1851, %v1853
      %v1855 = vadd.f32 %v1851, %v1854
      %vm1856 = vweird.f32 %v1803
      %vm1857 = vweird.f32 %v1851
      %vm1858 = vmor %vm1856, %vm1857
      %v1859 = vsel %vm1858, %v1851, %v1855
      %v1860 = vand.u32 2147483647, %v1803
      %vm1861 = vcmp.eq.f32.partialorder %v1860, 8.507059e+37
      %v1862 = vand.u32 %v1803, 2147483648
      %v1863 = vor.u32 1.1754944e-38, %v1862
      %v1864 = vsel %vm1861, %v1863, %v1859
      %v1865 = vmul.f32 %v1772, %v1864
      %v1866 = vmul.f32 %v1774, %v1864
      %v1867 = vrcp.pop %v1806
      %v1868 = vmul.f32 %v1806, %v1867
      %v1869 = vsub.f32 1.0, %v1868
      %v1870 = vmul.f32 %v1867, %v1869
      %v1871 = vadd.f32 %v1867, %v1870
      %vm1872 = vweird.f32 %v1806
      %vm1873 = vweird.f32 %v1867
      %vm1874 = vmor %vm1872, %vm1873
      %v1875 = vsel %vm1874, %v1867, %v1871
      %v1876 = vand.u32 2147483647, %v1806
      %vm1877 = vcmp.eq.f32.partialorder %v1876, 8.507059e+37
      %v1878 = vand.u32 %v1806, 2147483648
      %v1879 = vor.u32 1.1754944e-38, %v1878
      %v1880 = vsel %vm1877, %v1879, %v1875
      %v1881 = vmul.f32 %v1776, %v1880
      %v1882 = vmul.f32 %v1778, %v1880
      %v1883 = vrcp.pop %v1809
      %v1884 = vmul.f32 %v1809, %v1883
      %v1885 = vsub.f32 1.0, %v1884
      %v1886 = vmul.f32 %v1883, %v1885
      %v1887 = vadd.f32 %v1883, %v1886
      %vm1888 = vweird.f32 %v1809
      %vm1889 = vweird.f32 %v1883
      %vm1890 = vmor %vm1888, %vm1889
      %v1891 = vsel %vm1890, %v1883, %v1887
      %v1892 = vand.u32 2147483647, %v1809
      %vm1893 = vcmp.eq.f32.partialorder %v1892, 8.507059e+37
      %v1894 = vand.u32 %v1809, 2147483648
      %v1895 = vor.u32 1.1754944e-38, %v1894
      %v1896 = vsel %vm1893, %v1895, %v1891
      %v1897 = vmul.f32 %v1780, %v1896
      %v1898 = vmul.f32 %v1782, %v1896
      %v1899 = vrcp.pop %v1812
      %v1900 = vmul.f32 %v1812, %v1899
      %v1901 = vsub.f32 1.0, %v1900
      %v1902 = vmul.f32 %v1899, %v1901
      %v1903 = vadd.f32 %v1899, %v1902
      %vm1904 = vweird.f32 %v1812
      %vm1905 = vweird.f32 %v1899
      %vm1906 = vmor %vm1904, %vm1905
      %v1907 = vsel %vm1906, %v1899, %v1903
      %v1908 = vand.u32 2147483647, %v1812
      %vm1909 = vcmp.eq.f32.partialorder %v1908, 8.507059e+37
      %v1910 = vand.u32 %v1812, 2147483648
      %v1911 = vor.u32 1.1754944e-38, %v1910
      %v1912 = vsel %vm1909, %v1911, %v1907
      %v1913 = vmul.f32 %v1784, %v1912
      %v1914 = vmul.f32 %v1786, %v1912
      %v1915 = vrcp.pop %v1815
      %v1916 = vmul.f32 %v1815, %v1915
      %v1917 = vsub.f32 1.0, %v1916
      %v1918 = vmul.f32 %v1915, %v1917
      %v1919 = vadd.f32 %v1915, %v1918
      %vm1920 = vweird.f32 %v1815
      %vm1921 = vweird.f32 %v1915
      %vm1922 = vmor %vm1920, %vm1921
      %v1923 = vsel %vm1922, %v1915, %v1919
      %v1924 = vand.u32 2147483647, %v1815
      %vm1925 = vcmp.eq.f32.partialorder %v1924, 8.507059e+37
      %v1926 = vand.u32 %v1815, 2147483648
      %v1927 = vor.u32 1.1754944e-38, %v1926
      %v1928 = vsel %vm1925, %v1927, %v1923
      %v1929 = vmul.f32 %v1788, %v1928
      %v1930 = vmul.f32 %v1790, %v1928
      %v1931 = vrcp.pop %v1818
      %v1932 = vmul.f32 %v1818, %v1931
      %v1933 = vsub.f32 1.0, %v1932
      %v1934 = vmul.f32 %v1931, %v1933
      %v1935 = vadd.f32 %v1931, %v1934
      %vm1936 = vweird.f32 %v1818
      %vm1937 = vweird.f32 %v1931
      %vm1938 = vmor %vm1936, %vm1937
      %v1939 = vsel %vm1938, %v1931, %v1935
      %v1940 = vand.u32 2147483647, %v1818
      %vm1941 = vcmp.eq.f32.partialorder %v1940, 8.507059e+37
      %v1942 = vand.u32 %v1818, 2147483648
      %v1943 = vor.u32 1.1754944e-38, %v1942
      %v1944 = vsel %vm1941, %v1943, %v1939
      %v1945 = vmul.f32 %v1792, %v1944
      %v1946 = vmul.f32 %v1794, %v1944
      %v1947 = vpack.c.bf16 %v1849, %v1833
      %v1948 = vpack.c.bf16 %v1850, %v1834
      %v1949 = vpack.c.bf16 %v1881, %v1865
      %v1950 = vpack.c.bf16 %v1882, %v1866
      %v1951 = vpack.c.bf16 %v1913, %v1897
      %v1952 = vpack.c.bf16 %v1914, %v1898
      %v1953 = vpack.c.bf16 %v1945, %v1929
      %v1954 = vpack.c.bf16 %v1946, %v1930
      %1955 = vmatpush.bf16.msra.mxu0 %v1580
      %1956 = vmatpush.bf16.msra.mxu0 %v1579
      %1957 = vmatpush.bf16.msra.mxu0 %v1578
      %1958 = vmatpush.bf16.msra.mxu0 %v1577
      %1959 = vmatpush.bf16.msra.mxu0 %v1576
      %1960 = vmatpush.bf16.msra.mxu0 %v1575
      %1961 = vmatpush.bf16.msra.mxu0 %v1574
      %1962 = vmatpush.bf16.msra.mxu0 %v1573
      %1963 = vmatmul.bf16.gmra.mxu0 %v1947
      %v1964 = vpop.f32.mrf.mxu0
      %v1965 = vadd.f32 0.0, %v1964
      %v1966 = vpop.f32.mrf.mxu0
      %v1967 = vadd.f32 0.0, %v1966
      %1968 = vmatmul.bf16.gmra.mxu0 %v1949
      %v1969 = vpop.f32.mrf.mxu0
      %v1970 = vadd.f32 0.0, %v1969
      %v1971 = vpop.f32.mrf.mxu0
      %v1972 = vadd.f32 0.0, %v1971
      %1973 = vmatmul.bf16.gmra.mxu0 %v1951
      %v1974 = vpop.f32.mrf.mxu0
      %v1975 = vadd.f32 0.0, %v1974
      %v1976 = vpop.f32.mrf.mxu0
      %v1977 = vadd.f32 0.0, %v1976
      %1978 = vmatmul.bf16.gmra.mxu0 %v1953
      %v1979 = vpop.f32.mrf.mxu0
      %v1980 = vadd.f32 0.0, %v1979
      %v1981 = vpop.f32.mrf.mxu0
      %v1982 = vadd.f32 0.0, %v1981
      %1983 = vdwg.mxu0
      %1984 = vmatpush.bf16.msra.mxu0 %v1588
      %1985 = vmatpush.bf16.msra.mxu0 %v1587
      %1986 = vmatpush.bf16.msra.mxu0 %v1586
      %1987 = vmatpush.bf16.msra.mxu0 %v1585
      %1988 = vmatpush.bf16.msra.mxu0 %v1584
      %1989 = vmatpush.bf16.msra.mxu0 %v1583
      %1990 = vmatpush.bf16.msra.mxu0 %v1582
      %1991 = vmatpush.bf16.msra.mxu0 %v1581
      %1992 = vmatmul.bf16.gmra.mxu0 %v1948
      %v1993 = vpop.f32.mrf.mxu0
      %v1994 = vadd.f32 %v1965, %v1993
      %v1995 = vpop.f32.mrf.mxu0
      %v1996 = vadd.f32 %v1967, %v1995
      %1997 = vmatmul.bf16.gmra.mxu0 %v1950
      %v1998 = vpop.f32.mrf.mxu0
      %v1999 = vadd.f32 %v1970, %v1998
      %v2000 = vpop.f32.mrf.mxu0
      %v2001 = vadd.f32 %v1972, %v2000
      %2002 = vmatmul.bf16.gmra.mxu0 %v1952
      %v2003 = vpop.f32.mrf.mxu0
      %v2004 = vadd.f32 %v1975, %v2003
      %v2005 = vpop.f32.mrf.mxu0
      %v2006 = vadd.f32 %v1977, %v2005
      %2007 = vmatmul.bf16.gmra.mxu0 %v1954
      %v2008 = vpop.f32.mrf.mxu0
      %v2009 = vadd.f32 %v1980, %v2008
      %v2010 = vpop.f32.mrf.mxu0
      %v2011 = vadd.f32 %v1982, %v2010
      %2012 = vdwg.mxu0
      %v2013 = vpack.c.bf16 %v1996, %v1994
      %v2014 = vpack.c.bf16 %v2001, %v1999
      %v2015 = vpack.c.bf16 %v2006, %v2004
      %v2016 = vpack.c.bf16 %v2011, %v2009
      %s2017 = scalar_lea.vmem %s6, 16
      %v2018 = vld [vmem:[%s2017] sm:$0xff]
      %v2019 = vld [vmem:[%s2017 + $0x8] sm:$0xff]
      %v2020 = vpack.c.bf16 %v2019, %v2018
      %v2022 = vsel %vm1041, %v2013, 0
      %v2025 = vsel %vm1041, %v2014, 0
      %v2028 = vsel %vm1041, %v2015, 0
      %v2031 = vsel %vm1041, %v2016, 0
      %2033 = vmatpush.bf16.msra.mxu0 0
      %2034 = vmatpush.bf16.msra.mxu0 0
      %2035 = vmatpush.bf16.msra.mxu0 0
      %2036 = vmatpush.bf16.msra.mxu0 0
      %2037 = vmatpush.bf16.msra.mxu0 0
      %2038 = vmatpush.bf16.msra.mxu0 0
      %2039 = vmatpush.bf16.msra.mxu0 0
      %2040 = vmatpush.bf16.msra.mxu0 %v2020
      %2041 = vmatmul.bf16.gmra.mxu0 %v2022
      %v2042 = vpop.f32.mrf.mxu0
      %v2043 = vadd.f32 0.0, %v2042
      %v2044 = vpop.f32.mrf.mxu0
      %v2045 = vadd.f32 0.0, %v2044
      %2046 = vmatmul.bf16.gmra.mxu0 %v2025
      %v2047 = vpop.f32.mrf.mxu0
      %v2048 = vadd.f32 0.0, %v2047
      %v2049 = vpop.f32.mrf.mxu0
      %v2050 = vadd.f32 0.0, %v2049
      %2051 = vmatmul.bf16.gmra.mxu0 %v2028
      %v2052 = vpop.f32.mrf.mxu0
      %v2053 = vadd.f32 0.0, %v2052
      %v2054 = vpop.f32.mrf.mxu0
      %v2055 = vadd.f32 0.0, %v2054
      %2056 = vmatmul.bf16.gmra.mxu0 %v2031
      %v2057 = vpop.f32.mrf.mxu0
      %v2058 = vadd.f32 0.0, %v2057
      %v2059 = vpop.f32.mrf.mxu0
      %v2060 = vadd.f32 0.0, %v2059
      %2061 = vdwg.mxu0
      %v2063 = vsel %vm1041, %v1471, 0
      %v2066 = vsel %vm1041, %v1472, 0
      %v2069 = vsel %vm1041, %v1473, 0
      %v2072 = vsel %vm1041, %v1474, 0
      %2074 = vmatpush.bf16.msra.mxu0 0
      %2075 = vmatpush.bf16.msra.mxu0 0
      %2076 = vmatpush.bf16.msra.mxu0 0
      %2077 = vmatpush.bf16.msra.mxu0 0
      %2078 = vmatpush.bf16.msra.mxu0 0
      %2079 = vmatpush.bf16.msra.mxu0 0
      %2080 = vmatpush.bf16.msra.mxu0 0
      %2081 = vmatpush.bf16.msra.mxu0 %v1477
      %2082 = vmatmul.bf16.gmra.mxu0 %v2063
      %v2083 = vpop.f32.mrf.mxu0
      %v2084 = vadd.f32 %v2043, %v2083
      %v2085 = vpop.f32.mrf.mxu0
      %v2086 = vadd.f32 %v2045, %v2085
      %2087 = vmatmul.bf16.gmra.mxu0 %v2066
      %v2088 = vpop.f32.mrf.mxu0
      %v2089 = vadd.f32 %v2048, %v2088
      %v2090 = vpop.f32.mrf.mxu0
      %v2091 = vadd.f32 %v2050, %v2090
      %2092 = vmatmul.bf16.gmra.mxu0 %v2069
      %v2093 = vpop.f32.mrf.mxu0
      %v2094 = vadd.f32 %v2053, %v2093
      %v2095 = vpop.f32.mrf.mxu0
      %v2096 = vadd.f32 %v2055, %v2095
      %2097 = vmatmul.bf16.gmra.mxu0 %v2072
      %v2098 = vpop.f32.mrf.mxu0
      %v2099 = vadd.f32 %v2058, %v2098
      %v2100 = vpop.f32.mrf.mxu0
      %v2101 = vadd.f32 %v2060, %v2100
      %2102 = vdwg.mxu0
      %s2103 = scalar_lea.vmem %s358, 128
      %v2104 = vld [vmem:[%s2103] sm:$0xff]
      %v2105 = vld [vmem:[%s2103 + $0x8] sm:$0xff]
      %v2106 = vld [vmem:[%s2103 + $0x10] sm:$0xff]
      %v2107 = vld [vmem:[%s2103 + $0x18] sm:$0xff]
      %v2108 = vld [vmem:[%s2103 + $0x20] sm:$0xff]
      %v2109 = vld [vmem:[%s2103 + $0x28] sm:$0xff]
      %v2110 = vld [vmem:[%s2103 + $0x30] sm:$0xff]
      %v2111 = vld [vmem:[%s2103 + $0x38] sm:$0xff]
      %v2112 = vpack.c.bf16 %v2105, %v2104
      %v2113 = vpack.c.bf16 %v2107, %v2106
      %v2114 = vpack.c.bf16 %v2109, %v2108
      %v2115 = vpack.c.bf16 %v2111, %v2110
      %s2116 = scalar_lea.vmem %s363, 512
      %v2117 = vld [vmem:[%s2116] sm:$0xff]
      %v2118 = vld [vmem:[%s2116 + $0x8] sm:$0xff]
      %v2119 = vld [vmem:[%s2116 + $0x10] sm:$0xff]
      %v2120 = vld [vmem:[%s2116 + $0x18] sm:$0xff]
      %v2121 = vld [vmem:[%s2116 + $0x20] sm:$0xff]
      %v2122 = vld [vmem:[%s2116 + $0x28] sm:$0xff]
      %v2123 = vld [vmem:[%s2116 + $0x30] sm:$0xff]
      %v2124 = vld [vmem:[%s2116 + $0x38] sm:$0xff]
      %v2125 = vld [vmem:[%s2116 + $0x40] sm:$0xff]
      %v2126 = vld [vmem:[%s2116 + $0x48] sm:$0xff]
      %v2127 = vld [vmem:[%s2116 + $0x50] sm:$0xff]
      %v2128 = vld [vmem:[%s2116 + $0x58] sm:$0xff]
      %v2129 = vld [vmem:[%s2116 + $0x60] sm:$0xff]
      %v2130 = vld [vmem:[%s2116 + $0x68] sm:$0xff]
      %v2131 = vld [vmem:[%s2116 + $0x70] sm:$0xff]
      %v2132 = vld [vmem:[%s2116 + $0x78] sm:$0xff]
      %v2133 = vld [vmem:[%s2116 + $0x80] sm:$0xff]
      %v2134 = vld [vmem:[%s2116 + $0x88] sm:$0xff]
      %v2135 = vld [vmem:[%s2116 + $0x90] sm:$0xff]
      %v2136 = vld [vmem:[%s2116 + $0x98] sm:$0xff]
      %v2137 = vld [vmem:[%s2116 + $0xa0] sm:$0xff]
      %v2138 = vld [vmem:[%s2116 + $0xa8] sm:$0xff]
      %v2139 = vld [vmem:[%s2116 + $0xb0] sm:$0xff]
      %v2140 = vld [vmem:[%s2116 + $0xb8] sm:$0xff]
      %v2141 = vld [vmem:[%s2116 + $0xc0] sm:$0xff]
      %v2142 = vld [vmem:[%s2116 + $0xc8] sm:$0xff]
      %v2143 = vld [vmem:[%s2116 + $0xd0] sm:$0xff]
      %v2144 = vld [vmem:[%s2116 + $0xd8] sm:$0xff]
      %v2145 = vld [vmem:[%s2116 + $0xe0] sm:$0xff]
      %v2146 = vld [vmem:[%s2116 + $0xe8] sm:$0xff]
      %v2147 = vld [vmem:[%s2116 + $0xf0] sm:$0xff]
      %v2148 = vld [vmem:[%s2116 + $0xf8] sm:$0xff]
      %v2149 = vpack.c.bf16 %v2118, %v2117
      %v2150 = vpack.c.bf16 %v2120, %v2119
      %v2151 = vpack.c.bf16 %v2122, %v2121
      %v2152 = vpack.c.bf16 %v2124, %v2123
      %v2153 = vpack.c.bf16 %v2126, %v2125
      %v2154 = vpack.c.bf16 %v2128, %v2127
      %v2155 = vpack.c.bf16 %v2130, %v2129
      %v2156 = vpack.c.bf16 %v2132, %v2131
      %v2157 = vpack.c.bf16 %v2134, %v2133
      %v2158 = vpack.c.bf16 %v2136, %v2135
      %v2159 = vpack.c.bf16 %v2138, %v2137
      %v2160 = vpack.c.bf16 %v2140, %v2139
      %v2161 = vpack.c.bf16 %v2142, %v2141
      %v2162 = vpack.c.bf16 %v2144, %v2143
      %v2163 = vpack.c.bf16 %v2146, %v2145
      %v2164 = vpack.c.bf16 %v2148, %v2147
      %s2165 = scalar_lea.vmem %s368, 512
      %v2166 = vld [vmem:[%s2165] sm:$0xff]
      %v2167 = vld [vmem:[%s2165 + $0x8] sm:$0xff]
      %v2168 = vld [vmem:[%s2165 + $0x10] sm:$0xff]
      %v2169 = vld [vmem:[%s2165 + $0x18] sm:$0xff]
      %v2170 = vld [vmem:[%s2165 + $0x20] sm:$0xff]
      %v2171 = vld [vmem:[%s2165 + $0x28] sm:$0xff]
      %v2172 = vld [vmem:[%s2165 + $0x30] sm:$0xff]
      %v2173 = vld [vmem:[%s2165 + $0x38] sm:$0xff]
      %v2174 = vld [vmem:[%s2165 + $0x40] sm:$0xff]
      %v2175 = vld [vmem:[%s2165 + $0x48] sm:$0xff]
      %v2176 = vld [vmem:[%s2165 + $0x50] sm:$0xff]
      %v2177 = vld [vmem:[%s2165 + $0x58] sm:$0xff]
      %v2178 = vld [vmem:[%s2165 + $0x60] sm:$0xff]
      %v2179 = vld [vmem:[%s2165 + $0x68] sm:$0xff]
      %v2180 = vld [vmem:[%s2165 + $0x70] sm:$0xff]
      %v2181 = vld [vmem:[%s2165 + $0x78] sm:$0xff]
      %v2182 = vld [vmem:[%s2165 + $0x80] sm:$0xff]
      %v2183 = vld [vmem:[%s2165 + $0x88] sm:$0xff]
      %v2184 = vld [vmem:[%s2165 + $0x90] sm:$0xff]
      %v2185 = vld [vmem:[%s2165 + $0x98] sm:$0xff]
      %v2186 = vld [vmem:[%s2165 + $0xa0] sm:$0xff]
      %v2187 = vld [vmem:[%s2165 + $0xa8] sm:$0xff]
      %v2188 = vld [vmem:[%s2165 + $0xb0] sm:$0xff]
      %v2189 = vld [vmem:[%s2165 + $0xb8] sm:$0xff]
      %v2190 = vld [vmem:[%s2165 + $0xc0] sm:$0xff]
      %v2191 = vld [vmem:[%s2165 + $0xc8] sm:$0xff]
      %v2192 = vld [vmem:[%s2165 + $0xd0] sm:$0xff]
      %v2193 = vld [vmem:[%s2165 + $0xd8] sm:$0xff]
      %v2194 = vld [vmem:[%s2165 + $0xe0] sm:$0xff]
      %v2195 = vld [vmem:[%s2165 + $0xe8] sm:$0xff]
      %v2196 = vld [vmem:[%s2165 + $0xf0] sm:$0xff]
      %v2197 = vld [vmem:[%s2165 + $0xf8] sm:$0xff]
      %v2198 = vpack.c.bf16 %v2167, %v2166
      %v2199 = vpack.c.bf16 %v2169, %v2168
      %v2200 = vpack.c.bf16 %v2171, %v2170
      %v2201 = vpack.c.bf16 %v2173, %v2172
      %v2202 = vpack.c.bf16 %v2175, %v2174
      %v2203 = vpack.c.bf16 %v2177, %v2176
      %v2204 = vpack.c.bf16 %v2179, %v2178
      %v2205 = vpack.c.bf16 %v2181, %v2180
      %v2206 = vpack.c.bf16 %v2183, %v2182
      %v2207 = vpack.c.bf16 %v2185, %v2184
      %v2208 = vpack.c.bf16 %v2187, %v2186
      %v2209 = vpack.c.bf16 %v2189, %v2188
      %v2210 = vpack.c.bf16 %v2191, %v2190
      %v2211 = vpack.c.bf16 %v2193, %v2192
      %v2212 = vpack.c.bf16 %v2195, %v2194
      %v2213 = vpack.c.bf16 %v2197, %v2196
      %v2215 = vsel %vm1041, %v2112, 0
      %v2218 = vsel %vm1041, %v2113, 0
      %v2221 = vsel %vm1041, %v2114, 0
      %v2224 = vsel %vm1041, %v2115, 0
      %v2227 = vsel %vm1041, %v2149, 0
      %v2230 = vsel %vm1041, %v2150, 0
      %v2233 = vsel %vm1041, %v2151, 0
      %v2236 = vsel %vm1041, %v2152, 0
      %v2239 = vsel %vm1041, %v2153, 0
      %v2242 = vsel %vm1041, %v2154, 0
      %v2245 = vsel %vm1041, %v2155, 0
      %v2248 = vsel %vm1041, %v2156, 0
      %v2251 = vsel %vm1041, %v2157, 0
      %v2254 = vsel %vm1041, %v2158, 0
      %v2257 = vsel %vm1041, %v2159, 0
      %v2260 = vsel %vm1041, %v2160, 0
      %v2263 = vsel %vm1041, %v2161, 0
      %v2266 = vsel %vm1041, %v2162, 0
      %v2269 = vsel %vm1041, %v2163, 0
      %v2272 = vsel %vm1041, %v2164, 0
      %2274 = vmatpush.bf16.xpose.msra.mxu0 %v2248
      %2275 = vmatpush.bf16.xpose.msra.mxu0 %v2245
      %2276 = vmatpush.bf16.xpose.msra.mxu0 %v2242
      %2277 = vmatpush.bf16.xpose.msra.mxu0 %v2239
      %2278 = vmatpush.bf16.xpose.msra.mxu0 %v2236
      %2279 = vmatpush.bf16.xpose.msra.mxu0 %v2233
      %2280 = vmatpush.bf16.xpose.msra.mxu0 %v2230
      %2281 = vmatpush.bf16.xpose.msra.mxu0 %v2227
      %2282 = vmatmul.bf16.gmra.mxu0 %v2215
      %v2283 = vpop.f32.mrf.mxu0
      %v2284 = vadd.f32 %v715, %v2283
      %v2285 = vpop.f32.mrf.mxu0
      %v2286 = vadd.f32 %v717, %v2285
      %2287 = vmatmul.bf16.gmra.mxu0 %v2218
      %v2288 = vpop.f32.mrf.mxu0
      %v2289 = vadd.f32 %v720, %v2288
      %v2290 = vpop.f32.mrf.mxu0
      %v2291 = vadd.f32 %v722, %v2290
      %2292 = vmatmul.bf16.gmra.mxu0 %v2221
      %v2293 = vpop.f32.mrf.mxu0
      %v2294 = vadd.f32 %v725, %v2293
      %v2295 = vpop.f32.mrf.mxu0
      %v2296 = vadd.f32 %v727, %v2295
      %2297 = vmatmul.bf16.gmra.mxu0 %v2224
      %v2298 = vpop.f32.mrf.mxu0
      %v2299 = vadd.f32 %v730, %v2298
      %v2300 = vpop.f32.mrf.mxu0
      %v2301 = vadd.f32 %v732, %v2300
      %2302 = vdwg.mxu0
      %2303 = vmatpush.bf16.xpose.msra.mxu0 %v2272
      %2304 = vmatpush.bf16.xpose.msra.mxu0 %v2269
      %2305 = vmatpush.bf16.xpose.msra.mxu0 %v2266
      %2306 = vmatpush.bf16.xpose.msra.mxu0 %v2263
      %2307 = vmatpush.bf16.xpose.msra.mxu0 %v2260
      %2308 = vmatpush.bf16.xpose.msra.mxu0 %v2257
      %2309 = vmatpush.bf16.xpose.msra.mxu0 %v2254
      %2310 = vmatpush.bf16.xpose.msra.mxu0 %v2251
      %2311 = vmatmul.bf16.gmra.mxu0 %v2215
      %v2312 = vpop.f32.mrf.mxu0
      %v2313 = vadd.f32 %v893, %v2312
      %v2314 = vpop.f32.mrf.mxu0
      %v2315 = vadd.f32 %v895, %v2314
      %2316 = vmatmul.bf16.gmra.mxu0 %v2218
      %v2317 = vpop.f32.mrf.mxu0
      %v2318 = vadd.f32 %v898, %v2317
      %v2319 = vpop.f32.mrf.mxu0
      %v2320 = vadd.f32 %v900, %v2319
      %2321 = vmatmul.bf16.gmra.mxu0 %v2221
      %v2322 = vpop.f32.mrf.mxu0
      %v2323 = vadd.f32 %v903, %v2322
      %v2324 = vpop.f32.mrf.mxu0
      %v2325 = vadd.f32 %v905, %v2324
      %2326 = vmatmul.bf16.gmra.mxu0 %v2224
      %v2327 = vpop.f32.mrf.mxu0
      %v2328 = vadd.f32 %v908, %v2327
      %v2329 = vpop.f32.mrf.mxu0
      %v2330 = vadd.f32 %v910, %v2329
      %2331 = vdwg.mxu0
      %v2332 = vadd.f32 %v2284, %v1161
      %v2333 = vadd.f32 %v2313, %v1162
      %v2334 = vadd.f32 %v2286, %v1161
      %v2335 = vadd.f32 %v2315, %v1162
      %v2336 = vadd.f32 %v2289, %v1161
      %v2337 = vadd.f32 %v2318, %v1162
      %v2338 = vadd.f32 %v2291, %v1161
      %v2339 = vadd.f32 %v2320, %v1162
      %v2340 = vadd.f32 %v2294, %v1161
      %v2341 = vadd.f32 %v2323, %v1162
      %v2342 = vadd.f32 %v2296, %v1161
      %v2343 = vadd.f32 %v2325, %v1162
      %v2344 = vadd.f32 %v2299, %v1161
      %v2345 = vadd.f32 %v2328, %v1162
      %v2346 = vadd.f32 %v2301, %v1161
      %v2347 = vadd.f32 %v2330, %v1162
      %v2348 = vmax.f32 %v2332, %v2333
      %2349 = vmax.xlane.f32.xlu0 %v2348
      %v2350 = vpop.xlane.xlu0 %2349
      %v2351 = vmax.f32 %v2334, %v2335
      %2352 = vmax.xlane.f32.xlu0 %v2351
      %v2353 = vpop.xlane.xlu0 %2352
      %v2354 = vmax.f32 %v2336, %v2337
      %2355 = vmax.xlane.f32.xlu0 %v2354
      %v2356 = vpop.xlane.xlu0 %2355
      %v2357 = vmax.f32 %v2338, %v2339
      %2358 = vmax.xlane.f32.xlu0 %v2357
      %v2359 = vpop.xlane.xlu0 %2358
      %v2360 = vmax.f32 %v2340, %v2341
      %2361 = vmax.xlane.f32.xlu0 %v2360
      %v2362 = vpop.xlane.xlu0 %2361
      %v2363 = vmax.f32 %v2342, %v2343
      %2364 = vmax.xlane.f32.xlu0 %v2363
      %v2365 = vpop.xlane.xlu0 %2364
      %v2366 = vmax.f32 %v2344, %v2345
      %2367 = vmax.xlane.f32.xlu0 %v2366
      %v2368 = vpop.xlane.xlu0 %2367
      %v2369 = vmax.f32 %v2346, %v2347
      %2370 = vmax.xlane.f32.xlu0 %v2369
      %v2371 = vpop.xlane.xlu0 %2370
      %v2372 = vsub.f32 %v2332, %v2350
      %v2373 = vsub.f32 %v2333, %v2350
      %v2374 = vsub.f32 %v2334, %v2353
      %v2375 = vsub.f32 %v2335, %v2353
      %v2376 = vsub.f32 %v2336, %v2356
      %v2377 = vsub.f32 %v2337, %v2356
      %v2378 = vsub.f32 %v2338, %v2359
      %v2379 = vsub.f32 %v2339, %v2359
      %v2380 = vsub.f32 %v2340, %v2362
      %v2381 = vsub.f32 %v2341, %v2362
      %v2382 = vsub.f32 %v2342, %v2365
      %v2383 = vsub.f32 %v2343, %v2365
      %v2384 = vsub.f32 %v2344, %v2368
      %v2385 = vsub.f32 %v2345, %v2368
      %v2386 = vsub.f32 %v2346, %v2371
      %v2387 = vsub.f32 %v2347, %v2371
      %v2388 = vmul.f32 %v2372, 1.442695
      %v2389 = vpow.pop %v2388
      %v2390 = vmul.f32 %v2373, 1.442695
      %v2391 = vpow.pop %v2390
      %v2392 = vmul.f32 %v2374, 1.442695
      %v2393 = vpow.pop %v2392
      %v2394 = vmul.f32 %v2375, 1.442695
      %v2395 = vpow.pop %v2394
      %v2396 = vmul.f32 %v2376, 1.442695
      %v2397 = vpow.pop %v2396
      %v2398 = vmul.f32 %v2377, 1.442695
      %v2399 = vpow.pop %v2398
      %v2400 = vmul.f32 %v2378, 1.442695
      %v2401 = vpow.pop %v2400
      %v2402 = vmul.f32 %v2379, 1.442695
      %v2403 = vpow.pop %v2402
      %v2404 = vmul.f32 %v2380, 1.442695
      %v2405 = vpow.pop %v2404
      %v2406 = vmul.f32 %v2381, 1.442695
      %v2407 = vpow.pop %v2406
      %v2408 = vmul.f32 %v2382, 1.442695
      %v2409 = vpow.pop %v2408
      %v2410 = vmul.f32 %v2383, 1.442695
      %v2411 = vpow.pop %v2410
      %v2412 = vmul.f32 %v2384, 1.442695
      %v2413 = vpow.pop %v2412
      %v2414 = vmul.f32 %v2385, 1.442695
      %v2415 = vpow.pop %v2414
      %v2416 = vmul.f32 %v2386, 1.442695
      %v2417 = vpow.pop %v2416
      %v2418 = vmul.f32 %v2387, 1.442695
      %v2419 = vpow.pop %v2418
      %v2420 = vadd.f32 %v2389, %v2391
      %2421 = vadd.xlane.f32.xlu0 %v2420
      %v2422 = vpop.xlane.xlu0 %2421
      %v2423 = vadd.f32 %v2393, %v2395
      %2424 = vadd.xlane.f32.xlu0 %v2423
      %v2425 = vpop.xlane.xlu0 %2424
      %v2426 = vadd.f32 %v2397, %v2399
      %2427 = vadd.xlane.f32.xlu0 %v2426
      %v2428 = vpop.xlane.xlu0 %2427
      %v2429 = vadd.f32 %v2401, %v2403
      %2430 = vadd.xlane.f32.xlu0 %v2429
      %v2431 = vpop.xlane.xlu0 %2430
      %v2432 = vadd.f32 %v2405, %v2407
      %2433 = vadd.xlane.f32.xlu0 %v2432
      %v2434 = vpop.xlane.xlu0 %2433
      %v2435 = vadd.f32 %v2409, %v2411
      %2436 = vadd.xlane.f32.xlu0 %v2435
      %v2437 = vpop.xlane.xlu0 %2436
      %v2438 = vadd.f32 %v2413, %v2415
      %2439 = vadd.xlane.f32.xlu0 %v2438
      %v2440 = vpop.xlane.xlu0 %2439
      %v2441 = vadd.f32 %v2417, %v2419
      %2442 = vadd.xlane.f32.xlu0 %v2441
      %v2443 = vpop.xlane.xlu0 %2442
      %v2444 = vrcp.pop %v2422
      %v2445 = vmul.f32 %v2422, %v2444
      %v2446 = vsub.f32 1.0, %v2445
      %v2447 = vmul.f32 %v2444, %v2446
      %v2448 = vadd.f32 %v2444, %v2447
      %vm2449 = vweird.f32 %v2422
      %vm2450 = vweird.f32 %v2444
      %vm2451 = vmor %vm2449, %vm2450
      %v2452 = vsel %vm2451, %v2444, %v2448
      %v2453 = vand.u32 2147483647, %v2422
      %vm2454 = vcmp.eq.f32.partialorder %v2453, 8.507059e+37
      %v2455 = vand.u32 %v2422, 2147483648
      %v2456 = vor.u32 1.1754944e-38, %v2455
      %v2457 = vsel %vm2454, %v2456, %v2452
      %v2458 = vmul.f32 %v2389, %v2457
      %v2459 = vmul.f32 %v2391, %v2457
      %v2460 = vrcp.pop %v2425
      %v2461 = vmul.f32 %v2425, %v2460
      %v2462 = vsub.f32 1.0, %v2461
      %v2463 = vmul.f32 %v2460, %v2462
      %v2464 = vadd.f32 %v2460, %v2463
      %vm2465 = vweird.f32 %v2425
      %vm2466 = vweird.f32 %v2460
      %vm2467 = vmor %vm2465, %vm2466
      %v2468 = vsel %vm2467, %v2460, %v2464
      %v2469 = vand.u32 2147483647, %v2425
      %vm2470 = vcmp.eq.f32.partialorder %v2469, 8.507059e+37
      %v2471 = vand.u32 %v2425, 2147483648
      %v2472 = vor.u32 1.1754944e-38, %v2471
      %v2473 = vsel %vm2470, %v2472, %v2468
      %v2474 = vmul.f32 %v2393, %v2473
      %v2475 = vmul.f32 %v2395, %v2473
      %v2476 = vrcp.pop %v2428
      %v2477 = vmul.f32 %v2428, %v2476
      %v2478 = vsub.f32 1.0, %v2477
      %v2479 = vmul.f32 %v2476, %v2478
      %v2480 = vadd.f32 %v2476, %v2479
      %vm2481 = vweird.f32 %v2428
      %vm2482 = vweird.f32 %v2476
      %vm2483 = vmor %vm2481, %vm2482
      %v2484 = vsel %vm2483, %v2476, %v2480
      %v2485 = vand.u32 2147483647, %v2428
      %vm2486 = vcmp.eq.f32.partialorder %v2485, 8.507059e+37
      %v2487 = vand.u32 %v2428, 2147483648
      %v2488 = vor.u32 1.1754944e-38, %v2487
      %v2489 = vsel %vm2486, %v2488, %v2484
      %v2490 = vmul.f32 %v2397, %v2489
      %v2491 = vmul.f32 %v2399, %v2489
      %v2492 = vrcp.pop %v2431
      %v2493 = vmul.f32 %v2431, %v2492
      %v2494 = vsub.f32 1.0, %v2493
      %v2495 = vmul.f32 %v2492, %v2494
      %v2496 = vadd.f32 %v2492, %v2495
      %vm2497 = vweird.f32 %v2431
      %vm2498 = vweird.f32 %v2492
      %vm2499 = vmor %vm2497, %vm2498
      %v2500 = vsel %vm2499, %v2492, %v2496
      %v2501 = vand.u32 2147483647, %v2431
      %vm2502 = vcmp.eq.f32.partialorder %v2501, 8.507059e+37
      %v2503 = vand.u32 %v2431, 2147483648
      %v2504 = vor.u32 1.1754944e-38, %v2503
      %v2505 = vsel %vm2502, %v2504, %v2500
      %v2506 = vmul.f32 %v2401, %v2505
      %v2507 = vmul.f32 %v2403, %v2505
      %v2508 = vrcp.pop %v2434
      %v2509 = vmul.f32 %v2434, %v2508
      %v2510 = vsub.f32 1.0, %v2509
      %v2511 = vmul.f32 %v2508, %v2510
      %v2512 = vadd.f32 %v2508, %v2511
      %vm2513 = vweird.f32 %v2434
      %vm2514 = vweird.f32 %v2508
      %vm2515 = vmor %vm2513, %vm2514
      %v2516 = vsel %vm2515, %v2508, %v2512
      %v2517 = vand.u32 2147483647, %v2434
      %vm2518 = vcmp.eq.f32.partialorder %v2517, 8.507059e+37
      %v2519 = vand.u32 %v2434, 2147483648
      %v2520 = vor.u32 1.1754944e-38, %v2519
      %v2521 = vsel %vm2518, %v2520, %v2516
      %v2522 = vmul.f32 %v2405, %v2521
      %v2523 = vmul.f32 %v2407, %v2521
      %v2524 = vrcp.pop %v2437
      %v2525 = vmul.f32 %v2437, %v2524
      %v2526 = vsub.f32 1.0, %v2525
      %v2527 = vmul.f32 %v2524, %v2526
      %v2528 = vadd.f32 %v2524, %v2527
      %vm2529 = vweird.f32 %v2437
      %vm2530 = vweird.f32 %v2524
      %vm2531 = vmor %vm2529, %vm2530
      %v2532 = vsel %vm2531, %v2524, %v2528
      %v2533 = vand.u32 2147483647, %v2437
      %vm2534 = vcmp.eq.f32.partialorder %v2533, 8.507059e+37
      %v2535 = vand.u32 %v2437, 2147483648
      %v2536 = vor.u32 1.1754944e-38, %v2535
      %v2537 = vsel %vm2534, %v2536, %v2532
      %v2538 = vmul.f32 %v2409, %v2537
      %v2539 = vmul.f32 %v2411, %v2537
      %v2540 = vrcp.pop %v2440
      %v2541 = vmul.f32 %v2440, %v2540
      %v2542 = vsub.f32 1.0, %v2541
      %v2543 = vmul.f32 %v2540, %v2542
      %v2544 = vadd.f32 %v2540, %v2543
      %vm2545 = vweird.f32 %v2440
      %vm2546 = vweird.f32 %v2540
      %vm2547 = vmor %vm2545, %vm2546
      %v2548 = vsel %vm2547, %v2540, %v2544
      %v2549 = vand.u32 2147483647, %v2440
      %vm2550 = vcmp.eq.f32.partialorder %v2549, 8.507059e+37
      %v2551 = vand.u32 %v2440, 2147483648
      %v2552 = vor.u32 1.1754944e-38, %v2551
      %v2553 = vsel %vm2550, %v2552, %v2548
      %v2554 = vmul.f32 %v2413, %v2553
      %v2555 = vmul.f32 %v2415, %v2553
      %v2556 = vrcp.pop %v2443
      %v2557 = vmul.f32 %v2443, %v2556
      %v2558 = vsub.f32 1.0, %v2557
      %v2559 = vmul.f32 %v2556, %v2558
      %v2560 = vadd.f32 %v2556, %v2559
      %vm2561 = vweird.f32 %v2443
      %vm2562 = vweird.f32 %v2556
      %vm2563 = vmor %vm2561, %vm2562
      %v2564 = vsel %vm2563, %v2556, %v2560
      %v2565 = vand.u32 2147483647, %v2443
      %vm2566 = vcmp.eq.f32.partialorder %v2565, 8.507059e+37
      %v2567 = vand.u32 %v2443, 2147483648
      %v2568 = vor.u32 1.1754944e-38, %v2567
      %v2569 = vsel %vm2566, %v2568, %v2564
      %v2570 = vmul.f32 %v2417, %v2569
      %v2571 = vmul.f32 %v2419, %v2569
      %v2572 = vpack.c.bf16 %v2474, %v2458
      %v2573 = vpack.c.bf16 %v2475, %v2459
      %v2574 = vpack.c.bf16 %v2506, %v2490
      %v2575 = vpack.c.bf16 %v2507, %v2491
      %v2576 = vpack.c.bf16 %v2538, %v2522
      %v2577 = vpack.c.bf16 %v2539, %v2523
      %v2578 = vpack.c.bf16 %v2570, %v2554
      %v2579 = vpack.c.bf16 %v2571, %v2555
      %2580 = vmatpush.bf16.msra.mxu0 %v2205
      %2581 = vmatpush.bf16.msra.mxu0 %v2204
      %2582 = vmatpush.bf16.msra.mxu0 %v2203
      %2583 = vmatpush.bf16.msra.mxu0 %v2202
      %2584 = vmatpush.bf16.msra.mxu0 %v2201
      %2585 = vmatpush.bf16.msra.mxu0 %v2200
      %2586 = vmatpush.bf16.msra.mxu0 %v2199
      %2587 = vmatpush.bf16.msra.mxu0 %v2198
      %2588 = vmatmul.bf16.gmra.mxu0 %v2572
      %v2589 = vpop.f32.mrf.mxu0
      %v2590 = vadd.f32 0.0, %v2589
      %v2591 = vpop.f32.mrf.mxu0
      %v2592 = vadd.f32 0.0, %v2591
      %2593 = vmatmul.bf16.gmra.mxu0 %v2574
      %v2594 = vpop.f32.mrf.mxu0
      %v2595 = vadd.f32 0.0, %v2594
      %v2596 = vpop.f32.mrf.mxu0
      %v2597 = vadd.f32 0.0, %v2596
      %2598 = vmatmul.bf16.gmra.mxu0 %v2576
      %v2599 = vpop.f32.mrf.mxu0
      %v2600 = vadd.f32 0.0, %v2599
      %v2601 = vpop.f32.mrf.mxu0
      %v2602 = vadd.f32 0.0, %v2601
      %2603 = vmatmul.bf16.gmra.mxu0 %v2578
      %v2604 = vpop.f32.mrf.mxu0
      %v2605 = vadd.f32 0.0, %v2604
      %v2606 = vpop.f32.mrf.mxu0
      %v2607 = vadd.f32 0.0, %v2606
      %2608 = vdwg.mxu0
      %2609 = vmatpush.bf16.msra.mxu0 %v2213
      %2610 = vmatpush.bf16.msra.mxu0 %v2212
      %2611 = vmatpush.bf16.msra.mxu0 %v2211
      %2612 = vmatpush.bf16.msra.mxu0 %v2210
      %2613 = vmatpush.bf16.msra.mxu0 %v2209
      %2614 = vmatpush.bf16.msra.mxu0 %v2208
      %2615 = vmatpush.bf16.msra.mxu0 %v2207
      %2616 = vmatpush.bf16.msra.mxu0 %v2206
      %2617 = vmatmul.bf16.gmra.mxu0 %v2573
      %v2618 = vpop.f32.mrf.mxu0
      %v2619 = vadd.f32 %v2590, %v2618
      %v2620 = vpop.f32.mrf.mxu0
      %v2621 = vadd.f32 %v2592, %v2620
      %2622 = vmatmul.bf16.gmra.mxu0 %v2575
      %v2623 = vpop.f32.mrf.mxu0
      %v2624 = vadd.f32 %v2595, %v2623
      %v2625 = vpop.f32.mrf.mxu0
      %v2626 = vadd.f32 %v2597, %v2625
      %2627 = vmatmul.bf16.gmra.mxu0 %v2577
      %v2628 = vpop.f32.mrf.mxu0
      %v2629 = vadd.f32 %v2600, %v2628
      %v2630 = vpop.f32.mrf.mxu0
      %v2631 = vadd.f32 %v2602, %v2630
      %2632 = vmatmul.bf16.gmra.mxu0 %v2579
      %v2633 = vpop.f32.mrf.mxu0
      %v2634 = vadd.f32 %v2605, %v2633
      %v2635 = vpop.f32.mrf.mxu0
      %v2636 = vadd.f32 %v2607, %v2635
      %2637 = vdwg.mxu0
      %v2638 = vpack.c.bf16 %v2621, %v2619
      %v2639 = vpack.c.bf16 %v2626, %v2624
      %v2640 = vpack.c.bf16 %v2631, %v2629
      %v2641 = vpack.c.bf16 %v2636, %v2634
      %s2642 = scalar_lea.vmem %s6, 32
      %v2643 = vld [vmem:[%s2642] sm:$0xff]
      %v2644 = vld [vmem:[%s2642 + $0x8] sm:$0xff]
      %v2645 = vpack.c.bf16 %v2644, %v2643
      %v2647 = vsel %vm1041, %v2638, 0
      %v2650 = vsel %vm1041, %v2639, 0
      %v2653 = vsel %vm1041, %v2640, 0
      %v2656 = vsel %vm1041, %v2641, 0
      %2658 = vmatpush.bf16.msra.mxu0 0
      %2659 = vmatpush.bf16.msra.mxu0 0
      %2660 = vmatpush.bf16.msra.mxu0 0
      %2661 = vmatpush.bf16.msra.mxu0 0
      %2662 = vmatpush.bf16.msra.mxu0 0
      %2663 = vmatpush.bf16.msra.mxu0 0
      %2664 = vmatpush.bf16.msra.mxu0 0
      %2665 = vmatpush.bf16.msra.mxu0 %v2645
      %2666 = vmatmul.bf16.gmra.mxu0 %v2647
      %v2667 = vpop.f32.mrf.mxu0
      %v2668 = vadd.f32 0.0, %v2667
      %v2669 = vpop.f32.mrf.mxu0
      %v2670 = vadd.f32 0.0, %v2669
      %2671 = vmatmul.bf16.gmra.mxu0 %v2650
      %v2672 = vpop.f32.mrf.mxu0
      %v2673 = vadd.f32 0.0, %v2672
      %v2674 = vpop.f32.mrf.mxu0
      %v2675 = vadd.f32 0.0, %v2674
      %2676 = vmatmul.bf16.gmra.mxu0 %v2653
      %v2677 = vpop.f32.mrf.mxu0
      %v2678 = vadd.f32 0.0, %v2677
      %v2679 = vpop.f32.mrf.mxu0
      %v2680 = vadd.f32 0.0, %v2679
      %2681 = vmatmul.bf16.gmra.mxu0 %v2656
      %v2682 = vpop.f32.mrf.mxu0
      %v2683 = vadd.f32 0.0, %v2682
      %v2684 = vpop.f32.mrf.mxu0
      %v2685 = vadd.f32 0.0, %v2684
      %2686 = vdwg.mxu0
      %v2687 = vadd.f32 %v2084, %v2668
      %v2688 = vadd.f32 %v2086, %v2670
      %v2689 = vadd.f32 %v2089, %v2673
      %v2690 = vadd.f32 %v2091, %v2675
      %v2691 = vadd.f32 %v2094, %v2678
      %v2692 = vadd.f32 %v2096, %v2680
      %v2693 = vadd.f32 %v2099, %v2683
      %v2694 = vadd.f32 %v2101, %v2685
      %s2695 = scalar_lea.vmem %s358, 192
      %v2696 = vld [vmem:[%s2695] sm:$0xff]
      %v2697 = vld [vmem:[%s2695 + $0x8] sm:$0xff]
      %v2698 = vld [vmem:[%s2695 + $0x10] sm:$0xff]
      %v2699 = vld [vmem:[%s2695 + $0x18] sm:$0xff]
      %v2700 = vld [vmem:[%s2695 + $0x20] sm:$0xff]
      %v2701 = vld [vmem:[%s2695 + $0x28] sm:$0xff]
      %v2702 = vld [vmem:[%s2695 + $0x30] sm:$0xff]
      %v2703 = vld [vmem:[%s2695 + $0x38] sm:$0xff]
      %v2704 = vpack.c.bf16 %v2697, %v2696
      %v2705 = vpack.c.bf16 %v2699, %v2698
      %v2706 = vpack.c.bf16 %v2701, %v2700
      %v2707 = vpack.c.bf16 %v2703, %v2702
      %s2708 = scalar_lea.vmem %s363, 768
      %v2709 = vld [vmem:[%s2708] sm:$0xff]
      %v2710 = vld [vmem:[%s2708 + $0x8] sm:$0xff]
      %v2711 = vld [vmem:[%s2708 + $0x10] sm:$0xff]
      %v2712 = vld [vmem:[%s2708 + $0x18] sm:$0xff]
      %v2713 = vld [vmem:[%s2708 + $0x20] sm:$0xff]
      %v2714 = vld [vmem:[%s2708 + $0x28] sm:$0xff]
      %v2715 = vld [vmem:[%s2708 + $0x30] sm:$0xff]
      %v2716 = vld [vmem:[%s2708 + $0x38] sm:$0xff]
      %v2717 = vld [vmem:[%s2708 + $0x40] sm:$0xff]
      %v2718 = vld [vmem:[%s2708 + $0x48] sm:$0xff]
      %v2719 = vld [vmem:[%s2708 + $0x50] sm:$0xff]
      %v2720 = vld [vmem:[%s2708 + $0x58] sm:$0xff]
      %v2721 = vld [vmem:[%s2708 + $0x60] sm:$0xff]
      %v2722 = vld [vmem:[%s2708 + $0x68] sm:$0xff]
      %v2723 = vld [vmem:[%s2708 + $0x70] sm:$0xff]
      %v2724 = vld [vmem:[%s2708 + $0x78] sm:$0xff]
      %v2725 = vld [vmem:[%s2708 + $0x80] sm:$0xff]
      %v2726 = vld [vmem:[%s2708 + $0x88] sm:$0xff]
      %v2727 = vld [vmem:[%s2708 + $0x90] sm:$0xff]
      %v2728 = vld [vmem:[%s2708 + $0x98] sm:$0xff]
      %v2729 = vld [vmem:[%s2708 + $0xa0] sm:$0xff]
      %v2730 = vld [vmem:[%s2708 + $0xa8] sm:$0xff]
      %v2731 = vld [vmem:[%s2708 + $0xb0] sm:$0xff]
      %v2732 = vld [vmem:[%s2708 + $0xb8] sm:$0xff]
      %v2733 = vld [vmem:[%s2708 + $0xc0] sm:$0xff]
      %v2734 = vld [vmem:[%s2708 + $0xc8] sm:$0xff]
      %v2735 = vld [vmem:[%s2708 + $0xd0] sm:$0xff]
      %v2736 = vld [vmem:[%s2708 + $0xd8] sm:$0xff]
      %v2737 = vld [vmem:[%s2708 + $0xe0] sm:$0xff]
      %v2738 = vld [vmem:[%s2708 + $0xe8] sm:$0xff]
      %v2739 = vld [vmem:[%s2708 + $0xf0] sm:$0xff]
      %v2740 = vld [vmem:[%s2708 + $0xf8] sm:$0xff]
      %v2741 = vpack.c.bf16 %v2710, %v2709
      %v2742 = vpack.c.bf16 %v2712, %v2711
      %v2743 = vpack.c.bf16 %v2714, %v2713
      %v2744 = vpack.c.bf16 %v2716, %v2715
      %v2745 = vpack.c.bf16 %v2718, %v2717
      %v2746 = vpack.c.bf16 %v2720, %v2719
      %v2747 = vpack.c.bf16 %v2722, %v2721
      %v2748 = vpack.c.bf16 %v2724, %v2723
      %v2749 = vpack.c.bf16 %v2726, %v2725
      %v2750 = vpack.c.bf16 %v2728, %v2727
      %v2751 = vpack.c.bf16 %v2730, %v2729
      %v2752 = vpack.c.bf16 %v2732, %v2731
      %v2753 = vpack.c.bf16 %v2734, %v2733
      %v2754 = vpack.c.bf16 %v2736, %v2735
      %v2755 = vpack.c.bf16 %v2738, %v2737
      %v2756 = vpack.c.bf16 %v2740, %v2739
      %s2757 = scalar_lea.vmem %s368, 768
      %v2758 = vld [vmem:[%s2757] sm:$0xff]
      %v2759 = vld [vmem:[%s2757 + $0x8] sm:$0xff]
      %v2760 = vld [vmem:[%s2757 + $0x10] sm:$0xff]
      %v2761 = vld [vmem:[%s2757 + $0x18] sm:$0xff]
      %v2762 = vld [vmem:[%s2757 + $0x20] sm:$0xff]
      %v2763 = vld [vmem:[%s2757 + $0x28] sm:$0xff]
      %v2764 = vld [vmem:[%s2757 + $0x30] sm:$0xff]
      %v2765 = vld [vmem:[%s2757 + $0x38] sm:$0xff]
      %v2766 = vld [vmem:[%s2757 + $0x40] sm:$0xff]
      %v2767 = vld [vmem:[%s2757 + $0x48] sm:$0xff]
      %v2768 = vld [vmem:[%s2757 + $0x50] sm:$0xff]
      %v2769 = vld [vmem:[%s2757 + $0x58] sm:$0xff]
      %v2770 = vld [vmem:[%s2757 + $0x60] sm:$0xff]
      %v2771 = vld [vmem:[%s2757 + $0x68] sm:$0xff]
      %v2772 = vld [vmem:[%s2757 + $0x70] sm:$0xff]
      %v2773 = vld [vmem:[%s2757 + $0x78] sm:$0xff]
      %v2774 = vld [vmem:[%s2757 + $0x80] sm:$0xff]
      %v2775 = vld [vmem:[%s2757 + $0x88] sm:$0xff]
      %v2776 = vld [vmem:[%s2757 + $0x90] sm:$0xff]
      %v2777 = vld [vmem:[%s2757 + $0x98] sm:$0xff]
      %v2778 = vld [vmem:[%s2757 + $0xa0] sm:$0xff]
      %v2779 = vld [vmem:[%s2757 + $0xa8] sm:$0xff]
      %v2780 = vld [vmem:[%s2757 + $0xb0] sm:$0xff]
      %v2781 = vld [vmem:[%s2757 + $0xb8] sm:$0xff]
      %v2782 = vld [vmem:[%s2757 + $0xc0] sm:$0xff]
      %v2783 = vld [vmem:[%s2757 + $0xc8] sm:$0xff]
      %v2784 = vld [vmem:[%s2757 + $0xd0] sm:$0xff]
      %v2785 = vld [vmem:[%s2757 + $0xd8] sm:$0xff]
      %v2786 = vld [vmem:[%s2757 + $0xe0] sm:$0xff]
      %v2787 = vld [vmem:[%s2757 + $0xe8] sm:$0xff]
      %v2788 = vld [vmem:[%s2757 + $0xf0] sm:$0xff]
      %v2789 = vld [vmem:[%s2757 + $0xf8] sm:$0xff]
      %v2790 = vpack.c.bf16 %v2759, %v2758
      %v2791 = vpack.c.bf16 %v2761, %v2760
      %v2792 = vpack.c.bf16 %v2763, %v2762
      %v2793 = vpack.c.bf16 %v2765, %v2764
      %v2794 = vpack.c.bf16 %v2767, %v2766
      %v2795 = vpack.c.bf16 %v2769, %v2768
      %v2796 = vpack.c.bf16 %v2771, %v2770
      %v2797 = vpack.c.bf16 %v2773, %v2772
      %v2798 = vpack.c.bf16 %v2775, %v2774
      %v2799 = vpack.c.bf16 %v2777, %v2776
      %v2800 = vpack.c.bf16 %v2779, %v2778
      %v2801 = vpack.c.bf16 %v2781, %v2780
      %v2802 = vpack.c.bf16 %v2783, %v2782
      %v2803 = vpack.c.bf16 %v2785, %v2784
      %v2804 = vpack.c.bf16 %v2787, %v2786
      %v2805 = vpack.c.bf16 %v2789, %v2788
      %v2807 = vsel %vm1041, %v2704, 0
      %v2810 = vsel %vm1041, %v2705, 0
      %v2813 = vsel %vm1041, %v2706, 0
      %v2816 = vsel %vm1041, %v2707, 0
      %v2819 = vsel %vm1041, %v2741, 0
      %v2822 = vsel %vm1041, %v2742, 0
      %v2825 = vsel %vm1041, %v2743, 0
      %v2828 = vsel %vm1041, %v2744, 0
      %v2831 = vsel %vm1041, %v2745, 0
      %v2834 = vsel %vm1041, %v2746, 0
      %v2837 = vsel %vm1041, %v2747, 0
      %v2840 = vsel %vm1041, %v2748, 0
      %v2843 = vsel %vm1041, %v2749, 0
      %v2846 = vsel %vm1041, %v2750, 0
      %v2849 = vsel %vm1041, %v2751, 0
      %v2852 = vsel %vm1041, %v2752, 0
      %v2855 = vsel %vm1041, %v2753, 0
      %v2858 = vsel %vm1041, %v2754, 0
      %v2861 = vsel %vm1041, %v2755, 0
      %v2864 = vsel %vm1041, %v2756, 0
      %2866 = vmatpush.bf16.xpose.msra.mxu0 %v2840
      %2867 = vmatpush.bf16.xpose.msra.mxu0 %v2837
      %2868 = vmatpush.bf16.xpose.msra.mxu0 %v2834
      %2869 = vmatpush.bf16.xpose.msra.mxu0 %v2831
      %2870 = vmatpush.bf16.xpose.msra.mxu0 %v2828
      %2871 = vmatpush.bf16.xpose.msra.mxu0 %v2825
      %2872 = vmatpush.bf16.xpose.msra.mxu0 %v2822
      %2873 = vmatpush.bf16.xpose.msra.mxu0 %v2819
      %2874 = vmatmul.bf16.gmra.mxu0 %v2807
      %v2875 = vpop.f32.mrf.mxu0
      %v2876 = vadd.f32 %v735, %v2875
      %v2877 = vpop.f32.mrf.mxu0
      %v2878 = vadd.f32 %v737, %v2877
      %2879 = vmatmul.bf16.gmra.mxu0 %v2810
      %v2880 = vpop.f32.mrf.mxu0
      %v2881 = vadd.f32 %v740, %v2880
      %v2882 = vpop.f32.mrf.mxu0
      %v2883 = vadd.f32 %v742, %v2882
      %2884 = vmatmul.bf16.gmra.mxu0 %v2813
      %v2885 = vpop.f32.mrf.mxu0
      %v2886 = vadd.f32 %v745, %v2885
      %v2887 = vpop.f32.mrf.mxu0
      %v2888 = vadd.f32 %v747, %v2887
      %2889 = vmatmul.bf16.gmra.mxu0 %v2816
      %v2890 = vpop.f32.mrf.mxu0
      %v2891 = vadd.f32 %v750, %v2890
      %v2892 = vpop.f32.mrf.mxu0
      %v2893 = vadd.f32 %v752, %v2892
      %2894 = vdwg.mxu0
      %2895 = vmatpush.bf16.xpose.msra.mxu0 %v2864
      %2896 = vmatpush.bf16.xpose.msra.mxu0 %v2861
      %2897 = vmatpush.bf16.xpose.msra.mxu0 %v2858
      %2898 = vmatpush.bf16.xpose.msra.mxu0 %v2855
      %2899 = vmatpush.bf16.xpose.msra.mxu0 %v2852
      %2900 = vmatpush.bf16.xpose.msra.mxu0 %v2849
      %2901 = vmatpush.bf16.xpose.msra.mxu0 %v2846
      %2902 = vmatpush.bf16.xpose.msra.mxu0 %v2843
      %2903 = vmatmul.bf16.gmra.mxu0 %v2807
      %v2904 = vpop.f32.mrf.mxu0
      %v2905 = vadd.f32 %v913, %v2904
      %v2906 = vpop.f32.mrf.mxu0
      %v2907 = vadd.f32 %v915, %v2906
      %2908 = vmatmul.bf16.gmra.mxu0 %v2810
      %v2909 = vpop.f32.mrf.mxu0
      %v2910 = vadd.f32 %v918, %v2909
      %v2911 = vpop.f32.mrf.mxu0
      %v2912 = vadd.f32 %v920, %v2911
      %2913 = vmatmul.bf16.gmra.mxu0 %v2813
      %v2914 = vpop.f32.mrf.mxu0
      %v2915 = vadd.f32 %v923, %v2914
      %v2916 = vpop.f32.mrf.mxu0
      %v2917 = vadd.f32 %v925, %v2916
      %2918 = vmatmul.bf16.gmra.mxu0 %v2816
      %v2919 = vpop.f32.mrf.mxu0
      %v2920 = vadd.f32 %v928, %v2919
      %v2921 = vpop.f32.mrf.mxu0
      %v2922 = vadd.f32 %v930, %v2921
      %2923 = vdwg.mxu0
      %v2924 = vadd.f32 %v2876, %v1161
      %v2925 = vadd.f32 %v2905, %v1162
      %v2926 = vadd.f32 %v2878, %v1161
      %v2927 = vadd.f32 %v2907, %v1162
      %v2928 = vadd.f32 %v2881, %v1161
      %v2929 = vadd.f32 %v2910, %v1162
      %v2930 = vadd.f32 %v2883, %v1161
      %v2931 = vadd.f32 %v2912, %v1162
      %v2932 = vadd.f32 %v2886, %v1161
      %v2933 = vadd.f32 %v2915, %v1162
      %v2934 = vadd.f32 %v2888, %v1161
      %v2935 = vadd.f32 %v2917, %v1162
      %v2936 = vadd.f32 %v2891, %v1161
      %v2937 = vadd.f32 %v2920, %v1162
      %v2938 = vadd.f32 %v2893, %v1161
      %v2939 = vadd.f32 %v2922, %v1162
      %v2940 = vmax.f32 %v2924, %v2925
      %2941 = vmax.xlane.f32.xlu0 %v2940
      %v2942 = vpop.xlane.xlu0 %2941
      %v2943 = vmax.f32 %v2926, %v2927
      %2944 = vmax.xlane.f32.xlu0 %v2943
      %v2945 = vpop.xlane.xlu0 %2944
      %v2946 = vmax.f32 %v2928, %v2929
      %2947 = vmax.xlane.f32.xlu0 %v2946
      %v2948 = vpop.xlane.xlu0 %2947
      %v2949 = vmax.f32 %v2930, %v2931
      %2950 = vmax.xlane.f32.xlu0 %v2949
      %v2951 = vpop.xlane.xlu0 %2950
      %v2952 = vmax.f32 %v2932, %v2933
      %2953 = vmax.xlane.f32.xlu0 %v2952
      %v2954 = vpop.xlane.xlu0 %2953
      %v2955 = vmax.f32 %v2934, %v2935
      %2956 = vmax.xlane.f32.xlu0 %v2955
      %v2957 = vpop.xlane.xlu0 %2956
      %v2958 = vmax.f32 %v2936, %v2937
      %2959 = vmax.xlane.f32.xlu0 %v2958
      %v2960 = vpop.xlane.xlu0 %2959
      %v2961 = vmax.f32 %v2938, %v2939
      %2962 = vmax.xlane.f32.xlu0 %v2961
      %v2963 = vpop.xlane.xlu0 %2962
      %v2964 = vsub.f32 %v2924, %v2942
      %v2965 = vsub.f32 %v2925, %v2942
      %v2966 = vsub.f32 %v2926, %v2945
      %v2967 = vsub.f32 %v2927, %v2945
      %v2968 = vsub.f32 %v2928, %v2948
      %v2969 = vsub.f32 %v2929, %v2948
      %v2970 = vsub.f32 %v2930, %v2951
      %v2971 = vsub.f32 %v2931, %v2951
      %v2972 = vsub.f32 %v2932, %v2954
      %v2973 = vsub.f32 %v2933, %v2954
      %v2974 = vsub.f32 %v2934, %v2957
      %v2975 = vsub.f32 %v2935, %v2957
      %v2976 = vsub.f32 %v2936, %v2960
      %v2977 = vsub.f32 %v2937, %v2960
      %v2978 = vsub.f32 %v2938, %v2963
      %v2979 = vsub.f32 %v2939, %v2963
      %v2980 = vmul.f32 %v2964, 1.442695
      %v2981 = vpow.pop %v2980
      %v2982 = vmul.f32 %v2965, 1.442695
      %v2983 = vpow.pop %v2982
      %v2984 = vmul.f32 %v2966, 1.442695
      %v2985 = vpow.pop %v2984
      %v2986 = vmul.f32 %v2967, 1.442695
      %v2987 = vpow.pop %v2986
      %v2988 = vmul.f32 %v2968, 1.442695
      %v2989 = vpow.pop %v2988
      %v2990 = vmul.f32 %v2969, 1.442695
      %v2991 = vpow.pop %v2990
      %v2992 = vmul.f32 %v2970, 1.442695
      %v2993 = vpow.pop %v2992
      %v2994 = vmul.f32 %v2971, 1.442695
      %v2995 = vpow.pop %v2994
      %v2996 = vmul.f32 %v2972, 1.442695
      %v2997 = vpow.pop %v2996
      %v2998 = vmul.f32 %v2973, 1.442695
      %v2999 = vpow.pop %v2998
      %v3000 = vmul.f32 %v2974, 1.442695
      %v3001 = vpow.pop %v3000
      %v3002 = vmul.f32 %v2975, 1.442695
      %v3003 = vpow.pop %v3002
      %v3004 = vmul.f32 %v2976, 1.442695
      %v3005 = vpow.pop %v3004
      %v3006 = vmul.f32 %v2977, 1.442695
      %v3007 = vpow.pop %v3006
      %v3008 = vmul.f32 %v2978, 1.442695
      %v3009 = vpow.pop %v3008
      %v3010 = vmul.f32 %v2979, 1.442695
      %v3011 = vpow.pop %v3010
      %v3012 = vadd.f32 %v2981, %v2983
      %3013 = vadd.xlane.f32.xlu0 %v3012
      %v3014 = vpop.xlane.xlu0 %3013
      %v3015 = vadd.f32 %v2985, %v2987
      %3016 = vadd.xlane.f32.xlu0 %v3015
      %v3017 = vpop.xlane.xlu0 %3016
      %v3018 = vadd.f32 %v2989, %v2991
      %3019 = vadd.xlane.f32.xlu0 %v3018
      %v3020 = vpop.xlane.xlu0 %3019
      %v3021 = vadd.f32 %v2993, %v2995
      %3022 = vadd.xlane.f32.xlu0 %v3021
      %v3023 = vpop.xlane.xlu0 %3022
      %v3024 = vadd.f32 %v2997, %v2999
      %3025 = vadd.xlane.f32.xlu0 %v3024
      %v3026 = vpop.xlane.xlu0 %3025
      %v3027 = vadd.f32 %v3001, %v3003
      %3028 = vadd.xlane.f32.xlu0 %v3027
      %v3029 = vpop.xlane.xlu0 %3028
      %v3030 = vadd.f32 %v3005, %v3007
      %3031 = vadd.xlane.f32.xlu0 %v3030
      %v3032 = vpop.xlane.xlu0 %3031
      %v3033 = vadd.f32 %v3009, %v3011
      %3034 = vadd.xlane.f32.xlu0 %v3033
      %v3035 = vpop.xlane.xlu0 %3034
      %v3036 = vrcp.pop %v3014
      %v3037 = vmul.f32 %v3014, %v3036
      %v3038 = vsub.f32 1.0, %v3037
      %v3039 = vmul.f32 %v3036, %v3038
      %v3040 = vadd.f32 %v3036, %v3039
      %vm3041 = vweird.f32 %v3014
      %vm3042 = vweird.f32 %v3036
      %vm3043 = vmor %vm3041, %vm3042
      %v3044 = vsel %vm3043, %v3036, %v3040
      %v3045 = vand.u32 2147483647, %v3014
      %vm3046 = vcmp.eq.f32.partialorder %v3045, 8.507059e+37
      %v3047 = vand.u32 %v3014, 2147483648
      %v3048 = vor.u32 1.1754944e-38, %v3047
      %v3049 = vsel %vm3046, %v3048, %v3044
      %v3050 = vmul.f32 %v2981, %v3049
      %v3051 = vmul.f32 %v2983, %v3049
      %v3052 = vrcp.pop %v3017
      %v3053 = vmul.f32 %v3017, %v3052
      %v3054 = vsub.f32 1.0, %v3053
      %v3055 = vmul.f32 %v3052, %v3054
      %v3056 = vadd.f32 %v3052, %v3055
      %vm3057 = vweird.f32 %v3017
      %vm3058 = vweird.f32 %v3052
      %vm3059 = vmor %vm3057, %vm3058
      %v3060 = vsel %vm3059, %v3052, %v3056
      %v3061 = vand.u32 2147483647, %v3017
      %vm3062 = vcmp.eq.f32.partialorder %v3061, 8.507059e+37
      %v3063 = vand.u32 %v3017, 2147483648
      %v3064 = vor.u32 1.1754944e-38, %v3063
      %v3065 = vsel %vm3062, %v3064, %v3060
      %v3066 = vmul.f32 %v2985, %v3065
      %v3067 = vmul.f32 %v2987, %v3065
      %v3068 = vrcp.pop %v3020
      %v3069 = vmul.f32 %v3020, %v3068
      %v3070 = vsub.f32 1.0, %v3069
      %v3071 = vmul.f32 %v3068, %v3070
      %v3072 = vadd.f32 %v3068, %v3071
      %vm3073 = vweird.f32 %v3020
      %vm3074 = vweird.f32 %v3068
      %vm3075 = vmor %vm3073, %vm3074
      %v3076 = vsel %vm3075, %v3068, %v3072
      %v3077 = vand.u32 2147483647, %v3020
      %vm3078 = vcmp.eq.f32.partialorder %v3077, 8.507059e+37
      %v3079 = vand.u32 %v3020, 2147483648
      %v3080 = vor.u32 1.1754944e-38, %v3079
      %v3081 = vsel %vm3078, %v3080, %v3076
      %v3082 = vmul.f32 %v2989, %v3081
      %v3083 = vmul.f32 %v2991, %v3081
      %v3084 = vrcp.pop %v3023
      %v3085 = vmul.f32 %v3023, %v3084
      %v3086 = vsub.f32 1.0, %v3085
      %v3087 = vmul.f32 %v3084, %v3086
      %v3088 = vadd.f32 %v3084, %v3087
      %vm3089 = vweird.f32 %v3023
      %vm3090 = vweird.f32 %v3084
      %vm3091 = vmor %vm3089, %vm3090
      %v3092 = vsel %vm3091, %v3084, %v3088
      %v3093 = vand.u32 2147483647, %v3023
      %vm3094 = vcmp.eq.f32.partialorder %v3093, 8.507059e+37
      %v3095 = vand.u32 %v3023, 2147483648
      %v3096 = vor.u32 1.1754944e-38, %v3095
      %v3097 = vsel %vm3094, %v3096, %v3092
      %v3098 = vmul.f32 %v2993, %v3097
      %v3099 = vmul.f32 %v2995, %v3097
      %v3100 = vrcp.pop %v3026
      %v3101 = vmul.f32 %v3026, %v3100
      %v3102 = vsub.f32 1.0, %v3101
      %v3103 = vmul.f32 %v3100, %v3102
      %v3104 = vadd.f32 %v3100, %v3103
      %vm3105 = vweird.f32 %v3026
      %vm3106 = vweird.f32 %v3100
      %vm3107 = vmor %vm3105, %vm3106
      %v3108 = vsel %vm3107, %v3100, %v3104
      %v3109 = vand.u32 2147483647, %v3026
      %vm3110 = vcmp.eq.f32.partialorder %v3109, 8.507059e+37
      %v3111 = vand.u32 %v3026, 2147483648
      %v3112 = vor.u32 1.1754944e-38, %v3111
      %v3113 = vsel %vm3110, %v3112, %v3108
      %v3114 = vmul.f32 %v2997, %v3113
      %v3115 = vmul.f32 %v2999, %v3113
      %v3116 = vrcp.pop %v3029
      %v3117 = vmul.f32 %v3029, %v3116
      %v3118 = vsub.f32 1.0, %v3117
      %v3119 = vmul.f32 %v3116, %v3118
      %v3120 = vadd.f32 %v3116, %v3119
      %vm3121 = vweird.f32 %v3029
      %vm3122 = vweird.f32 %v3116
      %vm3123 = vmor %vm3121, %vm3122
      %v3124 = vsel %vm3123, %v3116, %v3120
      %v3125 = vand.u32 2147483647, %v3029
      %vm3126 = vcmp.eq.f32.partialorder %v3125, 8.507059e+37
      %v3127 = vand.u32 %v3029, 2147483648
      %v3128 = vor.u32 1.1754944e-38, %v3127
      %v3129 = vsel %vm3126, %v3128, %v3124
      %v3130 = vmul.f32 %v3001, %v3129
      %v3131 = vmul.f32 %v3003, %v3129
      %v3132 = vrcp.pop %v3032
      %v3133 = vmul.f32 %v3032, %v3132
      %v3134 = vsub.f32 1.0, %v3133
      %v3135 = vmul.f32 %v3132, %v3134
      %v3136 = vadd.f32 %v3132, %v3135
      %vm3137 = vweird.f32 %v3032
      %vm3138 = vweird.f32 %v3132
      %vm3139 = vmor %vm3137, %vm3138
      %v3140 = vsel %vm3139, %v3132, %v3136
      %v3141 = vand.u32 2147483647, %v3032
      %vm3142 = vcmp.eq.f32.partialorder %v3141, 8.507059e+37
      %v3143 = vand.u32 %v3032, 2147483648
      %v3144 = vor.u32 1.1754944e-38, %v3143
      %v3145 = vsel %vm3142, %v3144, %v3140
      %v3146 = vmul.f32 %v3005, %v3145
      %v3147 = vmul.f32 %v3007, %v3145
      %v3148 = vrcp.pop %v3035
      %v3149 = vmul.f32 %v3035, %v3148
      %v3150 = vsub.f32 1.0, %v3149
      %v3151 = vmul.f32 %v3148, %v3150
      %v3152 = vadd.f32 %v3148, %v3151
      %vm3153 = vweird.f32 %v3035
      %vm3154 = vweird.f32 %v3148
      %vm3155 = vmor %vm3153, %vm3154
      %v3156 = vsel %vm3155, %v3148, %v3152
      %v3157 = vand.u32 2147483647, %v3035
      %vm3158 = vcmp.eq.f32.partialorder %v3157, 8.507059e+37
      %v3159 = vand.u32 %v3035, 2147483648
      %v3160 = vor.u32 1.1754944e-38, %v3159
      %v3161 = vsel %vm3158, %v3160, %v3156
      %v3162 = vmul.f32 %v3009, %v3161
      %v3163 = vmul.f32 %v3011, %v3161
      %v3164 = vpack.c.bf16 %v3066, %v3050
      %v3165 = vpack.c.bf16 %v3067, %v3051
      %v3166 = vpack.c.bf16 %v3098, %v3082
      %v3167 = vpack.c.bf16 %v3099, %v3083
      %v3168 = vpack.c.bf16 %v3130, %v3114
      %v3169 = vpack.c.bf16 %v3131, %v3115
      %v3170 = vpack.c.bf16 %v3162, %v3146
      %v3171 = vpack.c.bf16 %v3163, %v3147
      %3172 = vmatpush.bf16.msra.mxu0 %v2797
      %3173 = vmatpush.bf16.msra.mxu0 %v2796
      %3174 = vmatpush.bf16.msra.mxu0 %v2795
      %3175 = vmatpush.bf16.msra.mxu0 %v2794
      %3176 = vmatpush.bf16.msra.mxu0 %v2793
      %3177 = vmatpush.bf16.msra.mxu0 %v2792
      %3178 = vmatpush.bf16.msra.mxu0 %v2791
      %3179 = vmatpush.bf16.msra.mxu0 %v2790
      %3180 = vmatmul.bf16.gmra.mxu0 %v3164
      %v3181 = vpop.f32.mrf.mxu0
      %v3182 = vadd.f32 0.0, %v3181
      %v3183 = vpop.f32.mrf.mxu0
      %v3184 = vadd.f32 0.0, %v3183
      %3185 = vmatmul.bf16.gmra.mxu0 %v3166
      %v3186 = vpop.f32.mrf.mxu0
      %v3187 = vadd.f32 0.0, %v3186
      %v3188 = vpop.f32.mrf.mxu0
      %v3189 = vadd.f32 0.0, %v3188
      %3190 = vmatmul.bf16.gmra.mxu0 %v3168
      %v3191 = vpop.f32.mrf.mxu0
      %v3192 = vadd.f32 0.0, %v3191
      %v3193 = vpop.f32.mrf.mxu0
      %v3194 = vadd.f32 0.0, %v3193
      %3195 = vmatmul.bf16.gmra.mxu0 %v3170
      %v3196 = vpop.f32.mrf.mxu0
      %v3197 = vadd.f32 0.0, %v3196
      %v3198 = vpop.f32.mrf.mxu0
      %v3199 = vadd.f32 0.0, %v3198
      %3200 = vdwg.mxu0
      %3201 = vmatpush.bf16.msra.mxu0 %v2805
      %3202 = vmatpush.bf16.msra.mxu0 %v2804
      %3203 = vmatpush.bf16.msra.mxu0 %v2803
      %3204 = vmatpush.bf16.msra.mxu0 %v2802
      %3205 = vmatpush.bf16.msra.mxu0 %v2801
      %3206 = vmatpush.bf16.msra.mxu0 %v2800
      %3207 = vmatpush.bf16.msra.mxu0 %v2799
      %3208 = vmatpush.bf16.msra.mxu0 %v2798
      %3209 = vmatmul.bf16.gmra.mxu0 %v3165
      %v3210 = vpop.f32.mrf.mxu0
      %v3211 = vadd.f32 %v3182, %v3210
      %v3212 = vpop.f32.mrf.mxu0
      %v3213 = vadd.f32 %v3184, %v3212
      %3214 = vmatmul.bf16.gmra.mxu0 %v3167
      %v3215 = vpop.f32.mrf.mxu0
      %v3216 = vadd.f32 %v3187, %v3215
      %v3217 = vpop.f32.mrf.mxu0
      %v3218 = vadd.f32 %v3189, %v3217
      %3219 = vmatmul.bf16.gmra.mxu0 %v3169
      %v3220 = vpop.f32.mrf.mxu0
      %v3221 = vadd.f32 %v3192, %v3220
      %v3222 = vpop.f32.mrf.mxu0
      %v3223 = vadd.f32 %v3194, %v3222
      %3224 = vmatmul.bf16.gmra.mxu0 %v3171
      %v3225 = vpop.f32.mrf.mxu0
      %v3226 = vadd.f32 %v3197, %v3225
      %v3227 = vpop.f32.mrf.mxu0
      %v3228 = vadd.f32 %v3199, %v3227
      %3229 = vdwg.mxu0
      %v3230 = vpack.c.bf16 %v3213, %v3211
      %v3231 = vpack.c.bf16 %v3218, %v3216
      %v3232 = vpack.c.bf16 %v3223, %v3221
      %v3233 = vpack.c.bf16 %v3228, %v3226
      %s3234 = scalar_lea.vmem %s6, 48
      %v3235 = vld [vmem:[%s3234] sm:$0xff]
      %v3236 = vld [vmem:[%s3234 + $0x8] sm:$0xff]
      %v3237 = vpack.c.bf16 %v3236, %v3235
      %v3239 = vsel %vm1041, %v3230, 0
      %v3242 = vsel %vm1041, %v3231, 0
      %v3245 = vsel %vm1041, %v3232, 0
      %v3248 = vsel %vm1041, %v3233, 0
      %3250 = vmatpush.bf16.msra.mxu0 0
      %3251 = vmatpush.bf16.msra.mxu0 0
      %3252 = vmatpush.bf16.msra.mxu0 0
      %3253 = vmatpush.bf16.msra.mxu0 0
      %3254 = vmatpush.bf16.msra.mxu0 0
      %3255 = vmatpush.bf16.msra.mxu0 0
      %3256 = vmatpush.bf16.msra.mxu0 0
      %3257 = vmatpush.bf16.msra.mxu0 %v3237
      %3258 = vmatmul.bf16.gmra.mxu0 %v3239
      %v3259 = vpop.f32.mrf.mxu0
      %v3260 = vadd.f32 0.0, %v3259
      %v3261 = vpop.f32.mrf.mxu0
      %v3262 = vadd.f32 0.0, %v3261
      %3263 = vmatmul.bf16.gmra.mxu0 %v3242
      %v3264 = vpop.f32.mrf.mxu0
      %v3265 = vadd.f32 0.0, %v3264
      %v3266 = vpop.f32.mrf.mxu0
      %v3267 = vadd.f32 0.0, %v3266
      %3268 = vmatmul.bf16.gmra.mxu0 %v3245
      %v3269 = vpop.f32.mrf.mxu0
      %v3270 = vadd.f32 0.0, %v3269
      %v3271 = vpop.f32.mrf.mxu0
      %v3272 = vadd.f32 0.0, %v3271
      %3273 = vmatmul.bf16.gmra.mxu0 %v3248
      %v3274 = vpop.f32.mrf.mxu0
      %v3275 = vadd.f32 0.0, %v3274
      %v3276 = vpop.f32.mrf.mxu0
      %v3277 = vadd.f32 0.0, %v3276
      %3278 = vdwg.mxu0
      %v3279 = vadd.f32 %v2687, %v3260
      %v3280 = vadd.f32 %v2688, %v3262
      %v3281 = vadd.f32 %v2689, %v3265
      %v3282 = vadd.f32 %v2690, %v3267
      %v3283 = vadd.f32 %v2691, %v3270
      %v3284 = vadd.f32 %v2692, %v3272
      %v3285 = vadd.f32 %v2693, %v3275
      %v3286 = vadd.f32 %v2694, %v3277
      %v3287 = vld [vmem:[%s7] sm:$0x1]
      %v3289 = vperm.slane %v3287, 0
      %v3291 = vadd.f32 %v3279, %v3289
      %v3292 = vadd.f32 %v3280, %v3289
      %v3293 = vadd.f32 %v3281, %v3289
      %v3294 = vadd.f32 %v3282, %v3289
      %v3295 = vadd.f32 %v3283, %v3289
      %v3296 = vadd.f32 %v3284, %v3289
      %v3297 = vadd.f32 %v3285, %v3289
      %v3298 = vadd.f32 %v3286, %v3289
      %vm3299 = vcmask 261120
      %3300 = vst.msk [vmem:[%s382] sm:$0xff] %vm3299, %v3291
      %3301 = vst.msk [vmem:[%s382 + $0x8] sm:$0xff] %vm3299, %v3292
      %3302 = vst.msk [vmem:[%s382 + $0x10] sm:$0xff] %vm3299, %v3293
      %3303 = vst.msk [vmem:[%s382 + $0x18] sm:$0xff] %vm3299, %v3294
      %3304 = vst.msk [vmem:[%s382 + $0x20] sm:$0xff] %vm3299, %v3295
      %3305 = vst.msk [vmem:[%s382 + $0x28] sm:$0xff] %vm3299, %v3296
      %3306 = vst.msk [vmem:[%s382 + $0x30] sm:$0xff] %vm3299, %v3297
      %3307 = vst.msk [vmem:[%s382 + $0x38] sm:$0xff] %vm3299, %v3298
      %p3308 = scmp.lt.s32.totalorder %s19, 7
      %s3309 = scalar_select %p3308, %s19, 7
      %s3310 = smul.addr %s3309, 8
      %s3311 = smul.addr %s3310, 8
      %s3312 = scalar_lea.vmem %s8, %s3311
      // Predicated region
      $region53: #{_lambda_.14} parent=51 // pred_check
        %p3313 = pneg %p230
      $region54: #{_lambda_.14} parent=51 // pred_check_branch
        %3315 = sbr.rel (%p3313) target = $region56
      $region55: #{_lambda_.14} parent=51 // pred_region
        _
      $region56: #{_lambda_.14} parent=51 // pred_fallthru
        _
    $region52: #{_lambda_.14} parent=5 // pred_fallthru
      _
    %p3316 = scmp.le.s32.totalorder 2, %s14
    // Predicated region
    $region57: #{_lambda_.14} parent=5 // pred_check
      %p3317 = pneg %p3316
    $region58: #{_lambda_.14} parent=5 // pred_check_branch
      %3319 = sbr.rel (%p3317) target = $region60
    $region59: #{_lambda_.14} parent=5 // pred_region
      %s3320 = ssub.s32 %s14, 2
      // Predicated region
      $region61: #{_lambda_.14} parent=59 // pred_check
        %p3321 = pneg %p236
      $region62: #{_lambda_.14} parent=59 // pred_check_branch
        %3323 = sbr.rel (%p3321) target = $region64
      $region63: #{_lambda_.14} parent=59 // pred_region
        %p3324 = scmp.lt.s32.totalorder %s20, 7
        %s3325 = scalar_select %p3324, %s20, 7
        %s3326 = smul.addr %s3325, 8
        %s3327 = smul.addr %s3326, 8
        %s3328 = scalar_lea.vmem %s8, %s3327
      $region64: #{_lambda_.14} parent=59 // pred_fallthru
        _
    $region60: #{_lambda_.14} parent=5 // pred_fallthru
      _
  $region6: #{_lambda_.14} parent=0 // loop_footer
    %s18 = sadd.s32 1, %s14
  $region7: #{_lambda_.14} parent=0 // loop_footer_branch
    %13 = sbr.rel target = $region3
  $region8: #{_lambda_.14} parent=0 // loop_exit
    _

// kernel: _lambda_.10
$region0: #{_lambda_.10}
  #allocation0 [shape = 'u32[]', space=smem, size = 0x4, offset = 0x4, fixed_abs, tag = 'smem constant byte address 0x4 - core index']
  #allocation1 [shape = 'u32[72,128]{1,0:T(1,128)}', space=vmem, size = 0x9000, scoped, tag = 'internal scratch']
  %s0 = inlined_call_operand.vmem [shape: f32[2,256,288], index: 0, kind: input, shape index: {}]
  %s1 = inlined_call_operand.vmem [shape: f32[288,32], index: 1, kind: input, shape index: {}]
  %s2 = inlined_call_operand.vmem [shape: f32[2,256,32], index: 2, kind: input, shape index: {}]
  %s3 = inlined_call_operand.vmem [shape: f32[2,256,32], index: 3, kind: output, shape index: {}]
  %s4 = sld [smem:[#allocation0]]
  $region45: #{_lambda_.10} parent=0
    _
  %s6 = ssub.s32 1, %s4
  %s7 = scalar_select 0, %s6, %s4
  loop: start=0, step=1, limit=4
  $region2: #{_lambda_.10} parent=0 // loop_pre_header
    _
  $region3: #{_lambda_.10} parent=0 // loop_header
    %s9 = sphi 0, %s13
    %p10 = scmp.ge.s32.totalorder %s9, 4
    %s19 = sphi 0, %s21
    %s22 = sphi 0, %s19
    %s23 = sphi 0, %s22
    %s39 = sphi 0, %s23
    %s43 = sphi 0, %s43
    %s45 = sphi 0, %s43
    %s46 = sphi 0, %s45
    %s60 = sphi 0, %s46
    %s66 = sphi 0, %s68
    %s69 = sphi 0, %s66
    %s70 = sphi 0, %s69
    %s86 = sphi 0, %s70
    %s92 = sphi 0, %s94
    %s95 = sphi 0, %s92
    %s96 = sphi 0, %s95
    %s112 = sphi 0, %s96
  $region4: #{_lambda_.10} parent=0 // loop_header_branch
    %12 = sbr.rel (%p10) target = $region8
  $region5: #{_lambda_.10} parent=0 // loop_body
    %s14 = ssub.s32 %s9, 1
    %s15 = ssub.s32 %s9, 2
    %s16 = sadd.s32 %s9, 1
    %s17 = ssub.s32 %s9, %s16
    %p18 = scmp.eq.s32.totalorder %s17, 0
    %s20 = sadd.s32 %s19, 1
    %s21 = scalar_select %p18, %s19, %s20
    %p24 = pneg %p18
    %p25 = scmp.eq.s32.totalorder %s9, 1
    %p26 = por %p24, %p25
    %p27 = scmp.ne.s32.totalorder %s19, %s22
    %p28 = scmp.eq.s32.totalorder %s9, 0
    %p29 = por %p27, %p28
    %p30 = scmp.ne.s32.totalorder %s19, %s22
    %p31 = scmp.eq.s32.totalorder %s14, 1
    %p32 = por %p30, %p31
    %p33 = scmp.ne.s32.totalorder %s22, %s23
    %p34 = scmp.eq.s32.totalorder %s14, 0
    %p35 = por %p33, %p34
    %p36 = scmp.ne.s32.totalorder %s22, %s23
    %p37 = scmp.eq.s32.totalorder %s15, 1
    %p38 = por %p36, %p37
    %p40 = scmp.ne.s32.totalorder %s23, %s39
    %p41 = scmp.eq.s32.totalorder %s15, 0
    %p42 = por %p40, %p41
    %s44 = sadd.s32 %s43, 1
    %p47 = scmp.eq.s32.totalorder %s9, 1
    %p48 = scmp.ne.s32.totalorder %s43, %s45
    %p49 = scmp.eq.s32.totalorder %s9, 0
    %p50 = por %p48, %p49
    %p51 = scmp.ne.s32.totalorder %s43, %s45
    %p52 = scmp.eq.s32.totalorder %s14, 1
    %p53 = por %p51, %p52
    %p54 = scmp.ne.s32.totalorder %s45, %s46
    %p55 = scmp.eq.s32.totalorder %s14, 0
    %p56 = por %p54, %p55
    %p57 = scmp.ne.s32.totalorder %s45, %s46
    %p58 = scmp.eq.s32.totalorder %s15, 1
    %p59 = por %p57, %p58
    %p61 = scmp.ne.s32.totalorder %s46, %s60
    %p62 = scmp.eq.s32.totalorder %s15, 0
    %p63 = por %p61, %p62
    %s64 = ssub.s32 %s9, %s16
    %p65 = scmp.eq.s32.totalorder %s64, 0
    %s67 = sadd.s32 %s66, 1
    %s68 = scalar_select %p65, %s66, %s67
    %p71 = pneg %p65
    %p72 = scmp.eq.s32.totalorder %s9, 1
    %p73 = por %p71, %p72
    %p74 = scmp.ne.s32.totalorder %s66, %s69
    %p75 = scmp.eq.s32.totalorder %s9, 0
    %p76 = por %p74, %p75
    %p77 = scmp.ne.s32.totalorder %s66, %s69
    %p78 = scmp.eq.s32.totalorder %s14, 1
    %p79 = por %p77, %p78
    %p80 = scmp.ne.s32.totalorder %s69, %s70
    %p81 = scmp.eq.s32.totalorder %s14, 0
    %p82 = por %p80, %p81
    %p83 = scmp.ne.s32.totalorder %s69, %s70
    %p84 = scmp.eq.s32.totalorder %s15, 1
    %p85 = por %p83, %p84
    %p87 = scmp.ne.s32.totalorder %s70, %s86
    %p88 = scmp.eq.s32.totalorder %s15, 0
    %p89 = por %p87, %p88
    %s90 = ssub.s32 %s9, %s16
    %p91 = scmp.eq.s32.totalorder %s90, 0
    %s93 = sadd.s32 %s92, 1
    %s94 = scalar_select %p91, %s92, %s93
    %p97 = pneg %p91
    %p98 = scmp.eq.s32.totalorder %s9, 1
    %p99 = por %p97, %p98
    %p100 = scmp.ne.s32.totalorder %s92, %s95
    %p101 = scmp.eq.s32.totalorder %s9, 0
    %p102 = por %p100, %p101
    %p103 = scmp.ne.s32.totalorder %s92, %s95
    %p104 = scmp.eq.s32.totalorder %s14, 1
    %p105 = por %p103, %p104
    %p106 = scmp.ne.s32.totalorder %s95, %s96
    %p107 = scmp.eq.s32.totalorder %s14, 0
    %p108 = por %p106, %p107
    %p109 = scmp.ne.s32.totalorder %s95, %s96
    %p110 = scmp.eq.s32.totalorder %s15, 1
    %p111 = por %p109, %p110
    %p113 = scmp.ne.s32.totalorder %s96, %s112
    %p114 = scmp.eq.s32.totalorder %s15, 0
    %p115 = por %p113, %p114
    %p116 = scmp.le.s32.totalorder 1, %s9
    %p117 = scmp.lt.s32.totalorder %s9, 3
    %p118 = pnand %p116, %p117
    %p119 = pneg %p118
    // Predicated region
    $region9: #{_lambda_.10} parent=5 // pred_check
      _
    $region10: #{_lambda_.10} parent=5 // pred_check_branch
      %121 = sbr.rel (%p118) target = $region12
    $region11: #{_lambda_.10} parent=5 // pred_region
      %s122 = ssub.s32 %s9, 1
      // Predicated region
      $region13: #{_lambda_.10} parent=11 // pred_check
        %p123 = pneg %p56
      $region14: #{_lambda_.10} parent=11 // pred_check_branch
        %125 = sbr.rel (%p123) target = $region16
      $region15: #{_lambda_.10} parent=11 // pred_region
        _
      $region16: #{_lambda_.10} parent=11 // pred_fallthru
        _
    $region12: #{_lambda_.10} parent=5 // pred_fallthru
      _
    %p126 = scmp.lt.s32.totalorder %s9, 2
    // Predicated region
    $region17: #{_lambda_.10} parent=5 // pred_check
      %p127 = pneg %p126
    $region18: #{_lambda_.10} parent=5 // pred_check_branch
      %129 = sbr.rel (%p127) target = $region20
    $region19: #{_lambda_.10} parent=5 // pred_region
      // Predicated region
      $region21: #{_lambda_.10} parent=19 // pred_check
        %p130 = pneg %p29
      $region22: #{_lambda_.10} parent=19 // pred_check_branch
        %132 = sbr.rel (%p130) target = $region24
      $region23: #{_lambda_.10} parent=19 // pred_region
        %p133 = scmp.lt.s32.totalorder %s9, 1
        %s134 = scalar_select %p133, %s9, 1
        %s135 = smul.addr %s134, 96
        %s136 = smul.addr %s135, 8
        %s137 = scalar_lea.vmem %s0, %s136
      $region24: #{_lambda_.10} parent=19 // pred_fallthru
        _
      // Predicated region
      $region25: #{_lambda_.10} parent=19 // pred_check
        %p138 = pneg %p76
      $region26: #{_lambda_.10} parent=19 // pred_check_branch
        %140 = sbr.rel (%p138) target = $region28
      $region27: #{_lambda_.10} parent=19 // pred_region
        %p141 = scmp.lt.s32.totalorder %s9, 1
        %s142 = scalar_select %p141, %s9, 1
        %s143 = smul.addr %s142, 32
        %s144 = smul.addr %s143, 8
        %s145 = scalar_lea.vmem %s2, %s144
      $region28: #{_lambda_.10} parent=19 // pred_fallthru
        _
    $region20: #{_lambda_.10} parent=5 // pred_fallthru
      _
    %p146 = scmp.le.s32.totalorder 1, %s9
    %p147 = scmp.lt.s32.totalorder %s9, 3
    %p148 = pnand %p146, %p147
    %p149 = pneg %p148
    // Predicated region
    $region29: #{_lambda_.10} parent=5 // pred_check
      _
    $region30: #{_lambda_.10} parent=5 // pred_check_branch
      %151 = sbr.rel (%p148) target = $region32
    $region31: #{_lambda_.10} parent=5 // pred_region
      %s152 = ssub.s32 %s9, 1
      %p153 = scmp.lt.s32.totalorder %s14, 1
      %s154 = scalar_select %p153, %s14, 1
      %s155 = smul.addr %s154, 96
      %s156 = smul.addr %s155, 8
      %s157 = scalar_lea.vmem %s0, %s156
      %p158 = pneg %p35
      %p159 = pneg %p32
      %p160 = pneg %p56
      %p161 = pneg %p53
      %p162 = scmp.lt.s32.totalorder %s14, 1
      %s163 = scalar_select %p162, %s14, 1
      %s164 = smul.addr %s163, 32
      %s165 = smul.addr %s164, 8
      %s166 = scalar_lea.vmem %s2, %s165
      %p167 = pneg %p82
      %p168 = pneg %p79
      %p169 = pneg %p108
      %p170 = pneg %p105
      %p171 = scmp.lt.s32.totalorder %s14, 1
      %s172 = scalar_select %p171, %s14, 1
      %s173 = smul.addr %s172, 32
      %s174 = smul.addr %s173, 8
      %s175 = scalar_lea.vmem %s3, %s174
      %p176 = scmp.lt.s32.totalorder %s14, 1
      %s177 = scalar_select %p176, %s14, 1
      %s178 = smul.addr %s177, 96
      %s179 = smul.addr %s178, 8
      %s180 = scalar_lea.vmem %s0, %s179
      %p181 = scmp.lt.s32.totalorder %s14, 1
      %s182 = scalar_select %p181, %s14, 1
      %s183 = smul.addr %s182, 32
      %s184 = smul.addr %s183, 8
      %s185 = scalar_lea.vmem %s2, %s184
      %p186 = scmp.lt.s32.totalorder %s14, 1
      %s187 = scalar_select %p186, %s14, 1
      %s188 = smul.addr %s187, 32
      %s189 = smul.addr %s188, 8
      %s190 = scalar_lea.vmem %s3, %s189
      %v192 = vld [vmem:[%s180] sm:$0xff]
      %v193 = vld [vmem:[%s180 + $0x8] sm:$0xff]
      %v194 = vld [vmem:[%s180 + $0x10] sm:$0xff]
      %v195 = vld [vmem:[%s180 + $0x18] sm:$0xff]
      %v196 = vld [vmem:[%s180 + $0x20] sm:$0xff]
      %v197 = vld [vmem:[%s180 + $0x28] sm:$0xff]
      %v198 = vld [vmem:[%s180 + $0x30] sm:$0xff]
      %v199 = vld [vmem:[%s180 + $0x38] sm:$0xff]
      %v200 = vld [vmem:[%s180 + $0x40] sm:$0xff]
      %v201 = vld [vmem:[%s180 + $0x48] sm:$0xff]
      %v202 = vld [vmem:[%s180 + $0x50] sm:$0xff]
      %v203 = vld [vmem:[%s180 + $0x58] sm:$0xff]
      %v204 = vld [vmem:[%s180 + $0x60] sm:$0xff]
      %v205 = vld [vmem:[%s180 + $0x68] sm:$0xff]
      %v206 = vld [vmem:[%s180 + $0x70] sm:$0xff]
      %v207 = vld [vmem:[%s180 + $0x78] sm:$0xff]
      %v208 = vld [vmem:[%s180 + $0x80] sm:$0xff]
      %v209 = vld [vmem:[%s180 + $0x88] sm:$0xff]
      %v210 = vld [vmem:[%s180 + $0x90] sm:$0xff]
      %v211 = vld [vmem:[%s180 + $0x98] sm:$0xff]
      %v212 = vld [vmem:[%s180 + $0xa0] sm:$0xff]
      %v213 = vld [vmem:[%s180 + $0xa8] sm:$0xff]
      %v214 = vld [vmem:[%s180 + $0xb0] sm:$0xff]
      %v215 = vld [vmem:[%s180 + $0xb8] sm:$0xff]
      %v216 = vld [vmem:[%s180 + $0xc0] sm:$0xff]
      %v217 = vld [vmem:[%s180 + $0xc8] sm:$0xff]
      %v218 = vld [vmem:[%s180 + $0xd0] sm:$0xff]
      %v219 = vld [vmem:[%s180 + $0xd8] sm:$0xff]
      %v220 = vld [vmem:[%s180 + $0xe0] sm:$0xff]
      %v221 = vld [vmem:[%s180 + $0xe8] sm:$0xff]
      %v222 = vld [vmem:[%s180 + $0xf0] sm:$0xff]
      %v223 = vld [vmem:[%s180 + $0xf8] sm:$0xff]
      %v224 = vld [vmem:[%s180 + $0x100] sm:$0xff]
      %v225 = vld [vmem:[%s180 + $0x108] sm:$0xff]
      %v226 = vld [vmem:[%s180 + $0x110] sm:$0xff]
      %v227 = vld [vmem:[%s180 + $0x118] sm:$0xff]
      %v228 = vld [vmem:[%s180 + $0x120] sm:$0xff]
      %v229 = vld [vmem:[%s180 + $0x128] sm:$0xff]
      %v230 = vld [vmem:[%s180 + $0x130] sm:$0xff]
      %v231 = vld [vmem:[%s180 + $0x138] sm:$0xff]
      %v232 = vld [vmem:[%s180 + $0x140] sm:$0xff]
      %v233 = vld [vmem:[%s180 + $0x148] sm:$0xff]
      %v234 = vld [vmem:[%s180 + $0x150] sm:$0xff]
      %v235 = vld [vmem:[%s180 + $0x158] sm:$0xff]
      %v236 = vld [vmem:[%s180 + $0x160] sm:$0xff]
      %v237 = vld [vmem:[%s180 + $0x168] sm:$0xff]
      %v238 = vld [vmem:[%s180 + $0x170] sm:$0xff]
      %v239 = vld [vmem:[%s180 + $0x178] sm:$0xff]
      %v240 = vld [vmem:[%s180 + $0x180] sm:$0xff]
      %v241 = vld [vmem:[%s180 + $0x188] sm:$0xff]
      %v242 = vld [vmem:[%s180 + $0x190] sm:$0xff]
      %v243 = vld [vmem:[%s180 + $0x198] sm:$0xff]
      %v244 = vld [vmem:[%s180 + $0x1a0] sm:$0xff]
      %v245 = vld [vmem:[%s180 + $0x1a8] sm:$0xff]
      %v246 = vld [vmem:[%s180 + $0x1b0] sm:$0xff]
      %v247 = vld [vmem:[%s180 + $0x1b8] sm:$0xff]
      %v248 = vld [vmem:[%s180 + $0x1c0] sm:$0xff]
      %v249 = vld [vmem:[%s180 + $0x1c8] sm:$0xff]
      %v250 = vld [vmem:[%s180 + $0x1d0] sm:$0xff]
      %v251 = vld [vmem:[%s180 + $0x1d8] sm:$0xff]
      %v252 = vld [vmem:[%s180 + $0x1e0] sm:$0xff]
      %v253 = vld [vmem:[%s180 + $0x1e8] sm:$0xff]
      %v254 = vld [vmem:[%s180 + $0x1f0] sm:$0xff]
      %v255 = vld [vmem:[%s180 + $0x1f8] sm:$0xff]
      %v256 = vld [vmem:[%s180 + $0x200] sm:$0xff]
      %v257 = vld [vmem:[%s180 + $0x208] sm:$0xff]
      %v258 = vld [vmem:[%s180 + $0x210] sm:$0xff]
      %v259 = vld [vmem:[%s180 + $0x218] sm:$0xff]
      %v260 = vld [vmem:[%s180 + $0x220] sm:$0xff]
      %v261 = vld [vmem:[%s180 + $0x228] sm:$0xff]
      %v262 = vld [vmem:[%s180 + $0x230] sm:$0xff]
      %v263 = vld [vmem:[%s180 + $0x238] sm:$0xff]
      %v264 = vld [vmem:[%s180 + $0x240] sm:$0xff]
      %v265 = vld [vmem:[%s180 + $0x248] sm:$0xff]
      %v266 = vld [vmem:[%s180 + $0x250] sm:$0xff]
      %v267 = vld [vmem:[%s180 + $0x258] sm:$0xff]
      %v268 = vld [vmem:[%s180 + $0x260] sm:$0xff]
      %v269 = vld [vmem:[%s180 + $0x268] sm:$0xff]
      %v270 = vld [vmem:[%s180 + $0x270] sm:$0xff]
      %v271 = vld [vmem:[%s180 + $0x278] sm:$0xff]
      %v272 = vld [vmem:[%s180 + $0x280] sm:$0xff]
      %v273 = vld [vmem:[%s180 + $0x288] sm:$0xff]
      %v274 = vld [vmem:[%s180 + $0x290] sm:$0xff]
      %v275 = vld [vmem:[%s180 + $0x298] sm:$0xff]
      %v276 = vld [vmem:[%s180 + $0x2a0] sm:$0xff]
      %v277 = vld [vmem:[%s180 + $0x2a8] sm:$0xff]
      %v278 = vld [vmem:[%s180 + $0x2b0] sm:$0xff]
      %v279 = vld [vmem:[%s180 + $0x2b8] sm:$0xff]
      %v280 = vld [vmem:[%s180 + $0x2c0] sm:$0xff]
      %v281 = vld [vmem:[%s180 + $0x2c8] sm:$0xff]
      %v282 = vld [vmem:[%s180 + $0x2d0] sm:$0xff]
      %v283 = vld [vmem:[%s180 + $0x2d8] sm:$0xff]
      %v284 = vld [vmem:[%s180 + $0x2e0] sm:$0xff]
      %v285 = vld [vmem:[%s180 + $0x2e8] sm:$0xff]
      %v286 = vld [vmem:[%s180 + $0x2f0] sm:$0xff]
      %v287 = vld [vmem:[%s180 + $0x2f8] sm:$0xff]
      %v288 = vpack.c.bf16 %v195, %v192
      %v289 = vpack.c.bf16 %v196, %v193
      %v290 = vpack.c.bf16 %v197, %v194
      %v291 = vpack.c.bf16 %v201, %v198
      %v292 = vpack.c.bf16 %v202, %v199
      %v293 = vpack.c.bf16 %v203, %v200
      %v294 = vpack.c.bf16 %v207, %v204
      %v295 = vpack.c.bf16 %v208, %v205
      %v296 = vpack.c.bf16 %v209, %v206
      %v297 = vpack.c.bf16 %v213, %v210
      %v298 = vpack.c.bf16 %v214, %v211
      %v299 = vpack.c.bf16 %v215, %v212
      %v300 = vpack.c.bf16 %v219, %v216
      %v301 = vpack.c.bf16 %v220, %v217
      %v302 = vpack.c.bf16 %v221, %v218
      %v303 = vpack.c.bf16 %v225, %v222
      %v304 = vpack.c.bf16 %v226, %v223
      %v305 = vpack.c.bf16 %v227, %v224
      %v306 = vpack.c.bf16 %v231, %v228
      %v307 = vpack.c.bf16 %v232, %v229
      %v308 = vpack.c.bf16 %v233, %v230
      %v309 = vpack.c.bf16 %v237, %v234
      %v310 = vpack.c.bf16 %v238, %v235
      %v311 = vpack.c.bf16 %v239, %v236
      %v312 = vpack.c.bf16 %v243, %v240
      %v313 = vpack.c.bf16 %v244, %v241
      %v314 = vpack.c.bf16 %v245, %v242
      %v315 = vpack.c.bf16 %v249, %v246
      %v316 = vpack.c.bf16 %v250, %v247
      %v317 = vpack.c.bf16 %v251, %v248
      %v318 = vpack.c.bf16 %v255, %v252
      %v319 = vpack.c.bf16 %v256, %v253
      %v320 = vpack.c.bf16 %v257, %v254
      %v321 = vpack.c.bf16 %v261, %v258
      %v322 = vpack.c.bf16 %v262, %v259
      %v323 = vpack.c.bf16 %v263, %v260
      %v324 = vpack.c.bf16 %v267, %v264
      %v325 = vpack.c.bf16 %v268, %v265
      %v326 = vpack.c.bf16 %v269, %v266
      %v327 = vpack.c.bf16 %v273, %v270
      %v328 = vpack.c.bf16 %v274, %v271
      %v329 = vpack.c.bf16 %v275, %v272
      %v330 = vpack.c.bf16 %v279, %v276
      %v331 = vpack.c.bf16 %v280, %v277
      %v332 = vpack.c.bf16 %v281, %v278
      %v333 = vpack.c.bf16 %v285, %v282
      %v334 = vpack.c.bf16 %v286, %v283
      %v335 = vpack.c.bf16 %v287, %v284
      %v336 = vld [vmem:[%s1] sm:$0xff]
      %v337 = vld [vmem:[%s1 + $0x8] sm:$0xff]
      %v338 = vld [vmem:[%s1 + $0x10] sm:$0xff]
      %v339 = vld [vmem:[%s1 + $0x18] sm:$0xff]
      %v340 = vld [vmem:[%s1 + $0x20] sm:$0xff]
      %v341 = vld [vmem:[%s1 + $0x28] sm:$0xff]
      %v342 = vld [vmem:[%s1 + $0x30] sm:$0xff]
      %v343 = vld [vmem:[%s1 + $0x38] sm:$0xff]
      %v344 = vld [vmem:[%s1 + $0x40] sm:$0xff]
      %v345 = vld [vmem:[%s1 + $0x48] sm:$0xff]
      %v346 = vld [vmem:[%s1 + $0x50] sm:$0xff]
      %v347 = vld [vmem:[%s1 + $0x58] sm:$0xff]
      %v348 = vld [vmem:[%s1 + $0x60] sm:$0xff]
      %v349 = vld [vmem:[%s1 + $0x68] sm:$0xff]
      %v350 = vld [vmem:[%s1 + $0x70] sm:$0xff]
      %v351 = vld [vmem:[%s1 + $0x78] sm:$0xff]
      %v352 = vld [vmem:[%s1 + $0x80] sm:$0xff]
      %v353 = vld [vmem:[%s1 + $0x88] sm:$0xff]
      %v354 = vld [vmem:[%s1 + $0x90] sm:$0xff]
      %v355 = vld [vmem:[%s1 + $0x98] sm:$0xff]
      %v356 = vld [vmem:[%s1 + $0xa0] sm:$0xff]
      %v357 = vld [vmem:[%s1 + $0xa8] sm:$0xff]
      %v358 = vld [vmem:[%s1 + $0xb0] sm:$0xff]
      %v359 = vld [vmem:[%s1 + $0xb8] sm:$0xff]
      %v360 = vld [vmem:[%s1 + $0xc0] sm:$0xff]
      %v361 = vld [vmem:[%s1 + $0xc8] sm:$0xff]
      %v362 = vld [vmem:[%s1 + $0xd0] sm:$0xff]
      %v363 = vld [vmem:[%s1 + $0xd8] sm:$0xff]
      %v364 = vld [vmem:[%s1 + $0xe0] sm:$0xff]
      %v365 = vld [vmem:[%s1 + $0xe8] sm:$0xff]
      %v366 = vld [vmem:[%s1 + $0xf0] sm:$0xff]
      %v367 = vld [vmem:[%s1 + $0xf8] sm:$0xff]
      %v368 = vld [vmem:[%s1 + $0x100] sm:$0xff]
      %v369 = vld [vmem:[%s1 + $0x108] sm:$0xff]
      %v370 = vld [vmem:[%s1 + $0x110] sm:$0xff]
      %v371 = vld [vmem:[%s1 + $0x118] sm:$0xff]
      %v372 = vpack.c.bf16 %v337, %v336
      %v373 = vpack.c.bf16 %v339, %v338
      %v374 = vpack.c.bf16 %v341, %v340
      %v375 = vpack.c.bf16 %v343, %v342
      %v376 = vpack.c.bf16 %v345, %v344
      %v377 = vpack.c.bf16 %v347, %v346
      %v378 = vpack.c.bf16 %v349, %v348
      %v379 = vpack.c.bf16 %v351, %v350
      %v380 = vpack.c.bf16 %v353, %v352
      %v381 = vpack.c.bf16 %v355, %v354
      %v382 = vpack.c.bf16 %v357, %v356
      %v383 = vpack.c.bf16 %v359, %v358
      %v384 = vpack.c.bf16 %v361, %v360
      %v385 = vpack.c.bf16 %v363, %v362
      %v386 = vpack.c.bf16 %v365, %v364
      %v387 = vpack.c.bf16 %v367, %v366
      %v388 = vpack.c.bf16 %v369, %v368
      %v389 = vpack.c.bf16 %v371, %v370
      %vm390 = vcmask 261120
      %v392 = vsel %vm390, %v290, 0
      %v395 = vsel %vm390, %v293, 0
      %v398 = vsel %vm390, %v296, 0
      %v401 = vsel %vm390, %v299, 0
      %v404 = vsel %vm390, %v302, 0
      %v407 = vsel %vm390, %v305, 0
      %v410 = vsel %vm390, %v308, 0
      %v413 = vsel %vm390, %v311, 0
      %v416 = vsel %vm390, %v314, 0
      %v419 = vsel %vm390, %v317, 0
      %v422 = vsel %vm390, %v320, 0
      %v425 = vsel %vm390, %v323, 0
      %v428 = vsel %vm390, %v326, 0
      %v431 = vsel %vm390, %v329, 0
      %v434 = vsel %vm390, %v332, 0
      %v437 = vsel %vm390, %v335, 0
      %439 = vmatpush.bf16.msra.mxu0 %v379
      %440 = vmatpush.bf16.msra.mxu0 %v378
      %441 = vmatpush.bf16.msra.mxu0 %v377
      %442 = vmatpush.bf16.msra.mxu0 %v376
      %443 = vmatpush.bf16.msra.mxu0 %v375
      %444 = vmatpush.bf16.msra.mxu0 %v374
      %445 = vmatpush.bf16.msra.mxu0 %v373
      %446 = vmatpush.bf16.msra.mxu0 %v372
      %447 = vmatmul.bf16.gmra.mxu0 %v288
      %v448 = vpop.f32.mrf.mxu0
      %v449 = vadd.f32 0.0, %v448
      %v450 = vpop.f32.mrf.mxu0
      %v451 = vadd.f32 0.0, %v450
      %452 = vmatmul.bf16.gmra.mxu0 %v291
      %v453 = vpop.f32.mrf.mxu0
      %v454 = vadd.f32 0.0, %v453
      %v455 = vpop.f32.mrf.mxu0
      %v456 = vadd.f32 0.0, %v455
      %457 = vmatmul.bf16.gmra.mxu0 %v294
      %v458 = vpop.f32.mrf.mxu0
      %v459 = vadd.f32 0.0, %v458
      %v460 = vpop.f32.mrf.mxu0
      %v461 = vadd.f32 0.0, %v460
      %462 = vmatmul.bf16.gmra.mxu0 %v297
      %v463 = vpop.f32.mrf.mxu0
      %v464 = vadd.f32 0.0, %v463
      %v465 = vpop.f32.mrf.mxu0
      %v466 = vadd.f32 0.0, %v465
      %467 = vmatmul.bf16.gmra.mxu0 %v300
      %v468 = vpop.f32.mrf.mxu0
      %v469 = vadd.f32 0.0, %v468
      %v470 = vpop.f32.mrf.mxu0
      %v471 = vadd.f32 0.0, %v470
      %472 = vmatmul.bf16.gmra.mxu0 %v303
      %v473 = vpop.f32.mrf.mxu0
      %v474 = vadd.f32 0.0, %v473
      %v475 = vpop.f32.mrf.mxu0
      %v476 = vadd.f32 0.0, %v475
      %477 = vmatmul.bf16.gmra.mxu0 %v306
      %v478 = vpop.f32.mrf.mxu0
      %v479 = vadd.f32 0.0, %v478
      %v480 = vpop.f32.mrf.mxu0
      %v481 = vadd.f32 0.0, %v480
      %482 = vmatmul.bf16.gmra.mxu0 %v309
      %v483 = vpop.f32.mrf.mxu0
      %v484 = vadd.f32 0.0, %v483
      %v485 = vpop.f32.mrf.mxu0
      %v486 = vadd.f32 0.0, %v485
      %487 = vmatmul.bf16.gmra.mxu0 %v312
      %v488 = vpop.f32.mrf.mxu0
      %v489 = vadd.f32 0.0, %v488
      %v490 = vpop.f32.mrf.mxu0
      %v491 = vadd.f32 0.0, %v490
      %492 = vmatmul.bf16.gmra.mxu0 %v315
      %v493 = vpop.f32.mrf.mxu0
      %v494 = vadd.f32 0.0, %v493
      %v495 = vpop.f32.mrf.mxu0
      %v496 = vadd.f32 0.0, %v495
      %497 = vmatmul.bf16.gmra.mxu0 %v318
      %v498 = vpop.f32.mrf.mxu0
      %v499 = vadd.f32 0.0, %v498
      %v500 = vpop.f32.mrf.mxu0
      %v501 = vadd.f32 0.0, %v500
      %502 = vmatmul.bf16.gmra.mxu0 %v321
      %v503 = vpop.f32.mrf.mxu0
      %v504 = vadd.f32 0.0, %v503
      %v505 = vpop.f32.mrf.mxu0
      %v506 = vadd.f32 0.0, %v505
      %507 = vmatmul.bf16.gmra.mxu0 %v324
      %v508 = vpop.f32.mrf.mxu0
      %v509 = vadd.f32 0.0, %v508
      %v510 = vpop.f32.mrf.mxu0
      %v511 = vadd.f32 0.0, %v510
      %512 = vmatmul.bf16.gmra.mxu0 %v327
      %v513 = vpop.f32.mrf.mxu0
      %v514 = vadd.f32 0.0, %v513
      %v515 = vpop.f32.mrf.mxu0
      %v516 = vadd.f32 0.0, %v515
      %517 = vmatmul.bf16.gmra.mxu0 %v330
      %v518 = vpop.f32.mrf.mxu0
      %v519 = vadd.f32 0.0, %v518
      %v520 = vpop.f32.mrf.mxu0
      %v521 = vadd.f32 0.0, %v520
      %522 = vmatmul.bf16.gmra.mxu0 %v333
      %v523 = vpop.f32.mrf.mxu0
      %v524 = vadd.f32 0.0, %v523
      %v525 = vpop.f32.mrf.mxu0
      %v526 = vadd.f32 0.0, %v525
      %527 = vdwg.mxu0
      %528 = vmatpush.bf16.msra.mxu0 %v387
      %529 = vmatpush.bf16.msra.mxu0 %v386
      %530 = vmatpush.bf16.msra.mxu0 %v385
      %531 = vmatpush.bf16.msra.mxu0 %v384
      %532 = vmatpush.bf16.msra.mxu0 %v383
      %533 = vmatpush.bf16.msra.mxu0 %v382
      %534 = vmatpush.bf16.msra.mxu0 %v381
      %535 = vmatpush.bf16.msra.mxu0 %v380
      %536 = vmatmul.bf16.gmra.mxu0 %v289
      %v537 = vpop.f32.mrf.mxu0
      %v538 = vadd.f32 %v449, %v537
      %v539 = vpop.f32.mrf.mxu0
      %v540 = vadd.f32 %v451, %v539
      %541 = vmatmul.bf16.gmra.mxu0 %v292
      %v542 = vpop.f32.mrf.mxu0
      %v543 = vadd.f32 %v454, %v542
      %v544 = vpop.f32.mrf.mxu0
      %v545 = vadd.f32 %v456, %v544
      %546 = vmatmul.bf16.gmra.mxu0 %v295
      %v547 = vpop.f32.mrf.mxu0
      %v548 = vadd.f32 %v459, %v547
      %v549 = vpop.f32.mrf.mxu0
      %v550 = vadd.f32 %v461, %v549
      %551 = vmatmul.bf16.gmra.mxu0 %v298
      %v552 = vpop.f32.mrf.mxu0
      %v553 = vadd.f32 %v464, %v552
      %v554 = vpop.f32.mrf.mxu0
      %v555 = vadd.f32 %v466, %v554
      %556 = vmatmul.bf16.gmra.mxu0 %v301
      %v557 = vpop.f32.mrf.mxu0
      %v558 = vadd.f32 %v469, %v557
      %v559 = vpop.f32.mrf.mxu0
      %v560 = vadd.f32 %v471, %v559
      %561 = vmatmul.bf16.gmra.mxu0 %v304
      %v562 = vpop.f32.mrf.mxu0
      %v563 = vadd.f32 %v474, %v562
      %v564 = vpop.f32.mrf.mxu0
      %v565 = vadd.f32 %v476, %v564
      %566 = vmatmul.bf16.gmra.mxu0 %v307
      %v567 = vpop.f32.mrf.mxu0
      %v568 = vadd.f32 %v479, %v567
      %v569 = vpop.f32.mrf.mxu0
      %v570 = vadd.f32 %v481, %v569
      %571 = vmatmul.bf16.gmra.mxu0 %v310
      %v572 = vpop.f32.mrf.mxu0
      %v573 = vadd.f32 %v484, %v572
      %v574 = vpop.f32.mrf.mxu0
      %v575 = vadd.f32 %v486, %v574
      %576 = vmatmul.bf16.gmra.mxu0 %v313
      %v577 = vpop.f32.mrf.mxu0
      %v578 = vadd.f32 %v489, %v577
      %v579 = vpop.f32.mrf.mxu0
      %v580 = vadd.f32 %v491, %v579
      %581 = vmatmul.bf16.gmra.mxu0 %v316
      %v582 = vpop.f32.mrf.mxu0
      %v583 = vadd.f32 %v494, %v582
      %v584 = vpop.f32.mrf.mxu0
      %v585 = vadd.f32 %v496, %v584
      %586 = vmatmul.bf16.gmra.mxu0 %v319
      %v587 = vpop.f32.mrf.mxu0
      %v588 = vadd.f32 %v499, %v587
      %v589 = vpop.f32.mrf.mxu0
      %v590 = vadd.f32 %v501, %v589
      %591 = vmatmul.bf16.gmra.mxu0 %v322
      %v592 = vpop.f32.mrf.mxu0
      %v593 = vadd.f32 %v504, %v592
      %v594 = vpop.f32.mrf.mxu0
      %v595 = vadd.f32 %v506, %v594
      %596 = vmatmul.bf16.gmra.mxu0 %v325
      %v597 = vpop.f32.mrf.mxu0
      %v598 = vadd.f32 %v509, %v597
      %v599 = vpop.f32.mrf.mxu0
      %v600 = vadd.f32 %v511, %v599
      %601 = vmatmul.bf16.gmra.mxu0 %v328
      %v602 = vpop.f32.mrf.mxu0
      %v603 = vadd.f32 %v514, %v602
      %v604 = vpop.f32.mrf.mxu0
      %v605 = vadd.f32 %v516, %v604
      %606 = vmatmul.bf16.gmra.mxu0 %v331
      %v607 = vpop.f32.mrf.mxu0
      %v608 = vadd.f32 %v519, %v607
      %v609 = vpop.f32.mrf.mxu0
      %v610 = vadd.f32 %v521, %v609
      %611 = vmatmul.bf16.gmra.mxu0 %v334
      %v612 = vpop.f32.mrf.mxu0
      %v613 = vadd.f32 %v524, %v612
      %v614 = vpop.f32.mrf.mxu0
      %v615 = vadd.f32 %v526, %v614
      %616 = vdwg.mxu0
      %617 = vmatpush.bf16.msra.mxu0 0
      %618 = vmatpush.bf16.msra.mxu0 0
      %619 = vmatpush.bf16.msra.mxu0 0
      %620 = vmatpush.bf16.msra.mxu0 0
      %621 = vmatpush.bf16.msra.mxu0 0
      %622 = vmatpush.bf16.msra.mxu0 0
      %623 = vmatpush.bf16.msra.mxu0 %v389
      %624 = vmatpush.bf16.msra.mxu0 %v388
      %625 = vmatmul.bf16.gmra.mxu0 %v392
      %v626 = vpop.f32.mrf.mxu0
      %v627 = vadd.f32 %v538, %v626
      %v628 = vpop.f32.mrf.mxu0
      %v629 = vadd.f32 %v540, %v628
      %630 = vmatmul.bf16.gmra.mxu0 %v395
      %v631 = vpop.f32.mrf.mxu0
      %v632 = vadd.f32 %v543, %v631
      %v633 = vpop.f32.mrf.mxu0
      %v634 = vadd.f32 %v545, %v633
      %635 = vmatmul.bf16.gmra.mxu0 %v398
      %v636 = vpop.f32.mrf.mxu0
      %v637 = vadd.f32 %v548, %v636
      %v638 = vpop.f32.mrf.mxu0
      %v639 = vadd.f32 %v550, %v638
      %640 = vmatmul.bf16.gmra.mxu0 %v401
      %v641 = vpop.f32.mrf.mxu0
      %v642 = vadd.f32 %v553, %v641
      %v643 = vpop.f32.mrf.mxu0
      %v644 = vadd.f32 %v555, %v643
      %645 = vmatmul.bf16.gmra.mxu0 %v404
      %v646 = vpop.f32.mrf.mxu0
      %v647 = vadd.f32 %v558, %v646
      %v648 = vpop.f32.mrf.mxu0
      %v649 = vadd.f32 %v560, %v648
      %650 = vmatmul.bf16.gmra.mxu0 %v407
      %v651 = vpop.f32.mrf.mxu0
      %v652 = vadd.f32 %v563, %v651
      %v653 = vpop.f32.mrf.mxu0
      %v654 = vadd.f32 %v565, %v653
      %655 = vmatmul.bf16.gmra.mxu0 %v410
      %v656 = vpop.f32.mrf.mxu0
      %v657 = vadd.f32 %v568, %v656
      %v658 = vpop.f32.mrf.mxu0
      %v659 = vadd.f32 %v570, %v658
      %660 = vmatmul.bf16.gmra.mxu0 %v413
      %v661 = vpop.f32.mrf.mxu0
      %v662 = vadd.f32 %v573, %v661
      %v663 = vpop.f32.mrf.mxu0
      %v664 = vadd.f32 %v575, %v663
      %665 = vmatmul.bf16.gmra.mxu0 %v416
      %v666 = vpop.f32.mrf.mxu0
      %v667 = vadd.f32 %v578, %v666
      %v668 = vpop.f32.mrf.mxu0
      %v669 = vadd.f32 %v580, %v668
      %670 = vmatmul.bf16.gmra.mxu0 %v419
      %v671 = vpop.f32.mrf.mxu0
      %v672 = vadd.f32 %v583, %v671
      %v673 = vpop.f32.mrf.mxu0
      %v674 = vadd.f32 %v585, %v673
      %675 = vmatmul.bf16.gmra.mxu0 %v422
      %v676 = vpop.f32.mrf.mxu0
      %v677 = vadd.f32 %v588, %v676
      %v678 = vpop.f32.mrf.mxu0
      %v679 = vadd.f32 %v590, %v678
      %680 = vmatmul.bf16.gmra.mxu0 %v425
      %v681 = vpop.f32.mrf.mxu0
      %v682 = vadd.f32 %v593, %v681
      %v683 = vpop.f32.mrf.mxu0
      %v684 = vadd.f32 %v595, %v683
      %685 = vmatmul.bf16.gmra.mxu0 %v428
      %v686 = vpop.f32.mrf.mxu0
      %v687 = vadd.f32 %v598, %v686
      %v688 = vpop.f32.mrf.mxu0
      %v689 = vadd.f32 %v600, %v688
      %690 = vmatmul.bf16.gmra.mxu0 %v431
      %v691 = vpop.f32.mrf.mxu0
      %v692 = vadd.f32 %v603, %v691
      %v693 = vpop.f32.mrf.mxu0
      %v694 = vadd.f32 %v605, %v693
      %695 = vmatmul.bf16.gmra.mxu0 %v434
      %v696 = vpop.f32.mrf.mxu0
      %v697 = vadd.f32 %v608, %v696
      %v698 = vpop.f32.mrf.mxu0
      %v699 = vadd.f32 %v610, %v698
      %700 = vmatmul.bf16.gmra.mxu0 %v437
      %v701 = vpop.f32.mrf.mxu0
      %v702 = vadd.f32 %v613, %v701
      %v703 = vpop.f32.mrf.mxu0
      %v704 = vadd.f32 %v615, %v703
      %705 = vdwg.mxu0
      %v706 = vsel %vm390, %v627, 0.0
      %v707 = vsel %vm390, %v629, 0.0
      %v708 = vadd.f32 %v706, %v707
      %v709 = vsel %vm390, %v632, 0.0
      %v710 = vadd.f32 %v708, %v709
      %v711 = vsel %vm390, %v634, 0.0
      %v712 = vadd.f32 %v710, %v711
      %v713 = vsel %vm390, %v637, 0.0
      %v714 = vadd.f32 %v712, %v713
      %v715 = vsel %vm390, %v639, 0.0
      %v716 = vadd.f32 %v714, %v715
      %v717 = vsel %vm390, %v642, 0.0
      %v718 = vadd.f32 %v716, %v717
      %v719 = vsel %vm390, %v644, 0.0
      %v720 = vadd.f32 %v718, %v719
      %v721 = vsel %vm390, %v647, 0.0
      %v722 = vadd.f32 %v720, %v721
      %v723 = vsel %vm390, %v649, 0.0
      %v724 = vadd.f32 %v722, %v723
      %v725 = vsel %vm390, %v652, 0.0
      %v726 = vadd.f32 %v724, %v725
      %v727 = vsel %vm390, %v654, 0.0
      %v728 = vadd.f32 %v726, %v727
      %v729 = vsel %vm390, %v657, 0.0
      %v730 = vadd.f32 %v728, %v729
      %v731 = vsel %vm390, %v659, 0.0
      %v732 = vadd.f32 %v730, %v731
      %v733 = vsel %vm390, %v662, 0.0
      %v734 = vadd.f32 %v732, %v733
      %v735 = vsel %vm390, %v664, 0.0
      %v736 = vadd.f32 %v734, %v735
      %v737 = vsel %vm390, %v667, 0.0
      %v738 = vadd.f32 %v736, %v737
      %v739 = vsel %vm390, %v669, 0.0
      %v740 = vadd.f32 %v738, %v739
      %v741 = vsel %vm390, %v672, 0.0
      %v742 = vadd.f32 %v740, %v741
      %v743 = vsel %vm390, %v674, 0.0
      %v744 = vadd.f32 %v742, %v743
      %v745 = vsel %vm390, %v677, 0.0
      %v746 = vadd.f32 %v744, %v745
      %v747 = vsel %vm390, %v679, 0.0
      %v748 = vadd.f32 %v746, %v747
      %v749 = vsel %vm390, %v682, 0.0
      %v750 = vadd.f32 %v748, %v749
      %v751 = vsel %vm390, %v684, 0.0
      %v752 = vadd.f32 %v750, %v751
      %v753 = vsel %vm390, %v687, 0.0
      %v754 = vadd.f32 %v752, %v753
      %v755 = vsel %vm390, %v689, 0.0
      %v756 = vadd.f32 %v754, %v755
      %v757 = vsel %vm390, %v692, 0.0
      %v758 = vadd.f32 %v756, %v757
      %v759 = vsel %vm390, %v694, 0.0
      %v760 = vadd.f32 %v758, %v759
      %v761 = vsel %vm390, %v697, 0.0
      %v762 = vadd.f32 %v760, %v761
      %v763 = vsel %vm390, %v699, 0.0
      %v764 = vadd.f32 %v762, %v763
      %v765 = vsel %vm390, %v702, 0.0
      %v766 = vadd.f32 %v764, %v765
      %v767 = vsel %vm390, %v704, 0.0
      %v768 = vadd.f32 %v766, %v767
      %v769 = vrot.slane %v768, 4
      %v770 = vadd.f32 %v768, %v769
      %v771 = vrot.slane %v770, 2
      %v772 = vadd.f32 %v770, %v771
      %v773 = vrot.slane %v772, 1
      %v774 = vadd.f32 %v772, %v773
      %v775 = vrcp.pop 256.0
      %v776 = vmul.f32 256.0, %v775
      %v777 = vsub.f32 1.0, %v776
      %v778 = vmul.f32 %v775, %v777
      %v779 = vadd.f32 %v775, %v778
      %vm780 = vweird.f32 %v775
      %v781 = vsel %vm780, %v775, %v779
      %v782 = vmul.f32 %v774, %v781
      %v783 = vmul.f32 %v627, %v627
      %v784 = vmul.f32 %v629, %v629
      %v785 = vmul.f32 %v632, %v632
      %v786 = vmul.f32 %v634, %v634
      %v787 = vmul.f32 %v637, %v637
      %v788 = vmul.f32 %v639, %v639
      %v789 = vmul.f32 %v642, %v642
      %v790 = vmul.f32 %v644, %v644
      %v791 = vmul.f32 %v647, %v647
      %v792 = vmul.f32 %v649, %v649
      %v793 = vmul.f32 %v652, %v652
      %v794 = vmul.f32 %v654, %v654
      %v795 = vmul.f32 %v657, %v657
      %v796 = vmul.f32 %v659, %v659
      %v797 = vmul.f32 %v662, %v662
      %v798 = vmul.f32 %v664, %v664
      %v799 = vmul.f32 %v667, %v667
      %v800 = vmul.f32 %v669, %v669
      %v801 = vmul.f32 %v672, %v672
      %v802 = vmul.f32 %v674, %v674
      %v803 = vmul.f32 %v677, %v677
      %v804 = vmul.f32 %v679, %v679
      %v805 = vmul.f32 %v682, %v682
      %v806 = vmul.f32 %v684, %v684
      %v807 = vmul.f32 %v687, %v687
      %v808 = vmul.f32 %v689, %v689
      %v809 = vmul.f32 %v692, %v692
      %v810 = vmul.f32 %v694, %v694
      %v811 = vmul.f32 %v697, %v697
      %v812 = vmul.f32 %v699, %v699
      %v813 = vmul.f32 %v702, %v702
      %v814 = vmul.f32 %v704, %v704
      %v815 = vsel %vm390, %v783, 0.0
      %v816 = vsel %vm390, %v784, 0.0
      %v817 = vadd.f32 %v815, %v816
      %v818 = vsel %vm390, %v785, 0.0
      %v819 = vadd.f32 %v817, %v818
      %v820 = vsel %vm390, %v786, 0.0
      %v821 = vadd.f32 %v819, %v820
      %v822 = vsel %vm390, %v787, 0.0
      %v823 = vadd.f32 %v821, %v822
      %v824 = vsel %vm390, %v788, 0.0
      %v825 = vadd.f32 %v823, %v824
      %v826 = vsel %vm390, %v789, 0.0
      %v827 = vadd.f32 %v825, %v826
      %v828 = vsel %vm390, %v790, 0.0
      %v829 = vadd.f32 %v827, %v828
      %v830 = vsel %vm390, %v791, 0.0
      %v831 = vadd.f32 %v829, %v830
      %v832 = vsel %vm390, %v792, 0.0
      %v833 = vadd.f32 %v831, %v832
      %v834 = vsel %vm390, %v793, 0.0
      %v835 = vadd.f32 %v833, %v834
      %v836 = vsel %vm390, %v794, 0.0
      %v837 = vadd.f32 %v835, %v836
      %v838 = vsel %vm390, %v795, 0.0
      %v839 = vadd.f32 %v837, %v838
      %v840 = vsel %vm390, %v796, 0.0
      %v841 = vadd.f32 %v839, %v840
      %v842 = vsel %vm390, %v797, 0.0
      %v843 = vadd.f32 %v841, %v842
      %v844 = vsel %vm390, %v798, 0.0
      %v845 = vadd.f32 %v843, %v844
      %v846 = vsel %vm390, %v799, 0.0
      %v847 = vadd.f32 %v845, %v846
      %v848 = vsel %vm390, %v800, 0.0
      %v849 = vadd.f32 %v847, %v848
      %v850 = vsel %vm390, %v801, 0.0
      %v851 = vadd.f32 %v849, %v850
      %v852 = vsel %vm390, %v802, 0.0
      %v853 = vadd.f32 %v851, %v852
      %v854 = vsel %vm390, %v803, 0.0
      %v855 = vadd.f32 %v853, %v854
      %v856 = vsel %vm390, %v804, 0.0
      %v857 = vadd.f32 %v855, %v856
      %v858 = vsel %vm390, %v805, 0.0
      %v859 = vadd.f32 %v857, %v858
      %v860 = vsel %vm390, %v806, 0.0
      %v861 = vadd.f32 %v859, %v860
      %v862 = vsel %vm390, %v807, 0.0
      %v863 = vadd.f32 %v861, %v862
      %v864 = vsel %vm390, %v808, 0.0
      %v865 = vadd.f32 %v863, %v864
      %v866 = vsel %vm390, %v809, 0.0
      %v867 = vadd.f32 %v865, %v866
      %v868 = vsel %vm390, %v810, 0.0
      %v869 = vadd.f32 %v867, %v868
      %v870 = vsel %vm390, %v811, 0.0
      %v871 = vadd.f32 %v869, %v870
      %v872 = vsel %vm390, %v812, 0.0
      %v873 = vadd.f32 %v871, %v872
      %v874 = vsel %vm390, %v813, 0.0
      %v875 = vadd.f32 %v873, %v874
      %v876 = vsel %vm390, %v814, 0.0
      %v877 = vadd.f32 %v875, %v876
      %v878 = vrot.slane %v877, 4
      %v879 = vadd.f32 %v877, %v878
      %v880 = vrot.slane %v879, 2
      %v881 = vadd.f32 %v879, %v880
      %v882 = vrot.slane %v881, 1
      %v883 = vadd.f32 %v881, %v882
      %v884 = vmul.f32 %v883, %v781
      %v885 = vsub.f32 %v627, %v782
      %v886 = vsub.f32 %v629, %v782
      %v887 = vsub.f32 %v632, %v782
      %v888 = vsub.f32 %v634, %v782
      %v889 = vsub.f32 %v637, %v782
      %v890 = vsub.f32 %v639, %v782
      %v891 = vsub.f32 %v642, %v782
      %v892 = vsub.f32 %v644, %v782
      %v893 = vsub.f32 %v647, %v782
      %v894 = vsub.f32 %v649, %v782
      %v895 = vsub.f32 %v652, %v782
      %v896 = vsub.f32 %v654, %v782
      %v897 = vsub.f32 %v657, %v782
      %v898 = vsub.f32 %v659, %v782
      %v899 = vsub.f32 %v662, %v782
      %v900 = vsub.f32 %v664, %v782
      %v901 = vsub.f32 %v667, %v782
      %v902 = vsub.f32 %v669, %v782
      %v903 = vsub.f32 %v672, %v782
      %v904 = vsub.f32 %v674, %v782
      %v905 = vsub.f32 %v677, %v782
      %v906 = vsub.f32 %v679, %v782
      %v907 = vsub.f32 %v682, %v782
      %v908 = vsub.f32 %v684, %v782
      %v909 = vsub.f32 %v687, %v782
      %v910 = vsub.f32 %v689, %v782
      %v911 = vsub.f32 %v692, %v782
      %v912 = vsub.f32 %v694, %v782
      %v913 = vsub.f32 %v697, %v782
      %v914 = vsub.f32 %v699, %v782
      %v915 = vsub.f32 %v702, %v782
      %v916 = vsub.f32 %v704, %v782
      %v917 = vmul.f32 %v782, %v782
      %v918 = vsub.f32 %v884, %v917
      %v919 = vadd.f32 %v918, 1e-05
      %v920 = vrsqrt.pop %v919
      %v921 = vmul.f32 %v920, %v919
      %v922 = vmul.f32 %v921, %v920
      %v923 = vmul.f32 0.5, %v922
      %v924 = vsub.f32 1.5, %v923
      %v925 = vmul.f32 %v920, %v924
      %vm926 = vweird.f32 %v919
      %vm927 = vweird.f32 %v920
      %vm928 = vmor %vm926, %vm927
      %v929 = vsel %vm928, %v920, %v925
      %v930 = vmul.f32 %v885, %v929
      %v931 = vmul.f32 %v886, %v929
      %v932 = vmul.f32 %v887, %v929
      %v933 = vmul.f32 %v888, %v929
      %v934 = vmul.f32 %v889, %v929
      %v935 = vmul.f32 %v890, %v929
      %v936 = vmul.f32 %v891, %v929
      %v937 = vmul.f32 %v892, %v929
      %v938 = vmul.f32 %v893, %v929
      %v939 = vmul.f32 %v894, %v929
      %v940 = vmul.f32 %v895, %v929
      %v941 = vmul.f32 %v896, %v929
      %v942 = vmul.f32 %v897, %v929
      %v943 = vmul.f32 %v898, %v929
      %v944 = vmul.f32 %v899, %v929
      %v945 = vmul.f32 %v900, %v929
      %v946 = vmul.f32 %v901, %v929
      %v947 = vmul.f32 %v902, %v929
      %v948 = vmul.f32 %v903, %v929
      %v949 = vmul.f32 %v904, %v929
      %v950 = vmul.f32 %v905, %v929
      %v951 = vmul.f32 %v906, %v929
      %v952 = vmul.f32 %v907, %v929
      %v953 = vmul.f32 %v908, %v929
      %v954 = vmul.f32 %v909, %v929
      %v955 = vmul.f32 %v910, %v929
      %v956 = vmul.f32 %v911, %v929
      %v957 = vmul.f32 %v912, %v929
      %v958 = vmul.f32 %v913, %v929
      %v959 = vmul.f32 %v914, %v929
      %v960 = vmul.f32 %v915, %v929
      %v961 = vmul.f32 %v916, %v929
      %v962 = vld [vmem:[%s185] sm:$0xff]
      %v963 = vld [vmem:[%s185 + $0x8] sm:$0xff]
      %v964 = vld [vmem:[%s185 + $0x10] sm:$0xff]
      %v965 = vld [vmem:[%s185 + $0x18] sm:$0xff]
      %v966 = vld [vmem:[%s185 + $0x20] sm:$0xff]
      %v967 = vld [vmem:[%s185 + $0x28] sm:$0xff]
      %v968 = vld [vmem:[%s185 + $0x30] sm:$0xff]
      %v969 = vld [vmem:[%s185 + $0x38] sm:$0xff]
      %v970 = vld [vmem:[%s185 + $0x40] sm:$0xff]
      %v971 = vld [vmem:[%s185 + $0x48] sm:$0xff]
      %v972 = vld [vmem:[%s185 + $0x50] sm:$0xff]
      %v973 = vld [vmem:[%s185 + $0x58] sm:$0xff]
      %v974 = vld [vmem:[%s185 + $0x60] sm:$0xff]
      %v975 = vld [vmem:[%s185 + $0x68] sm:$0xff]
      %v976 = vld [vmem:[%s185 + $0x70] sm:$0xff]
      %v977 = vld [vmem:[%s185 + $0x78] sm:$0xff]
      %v978 = vld [vmem:[%s185 + $0x80] sm:$0xff]
      %v979 = vld [vmem:[%s185 + $0x88] sm:$0xff]
      %v980 = vld [vmem:[%s185 + $0x90] sm:$0xff]
      %v981 = vld [vmem:[%s185 + $0x98] sm:$0xff]
      %v982 = vld [vmem:[%s185 + $0xa0] sm:$0xff]
      %v983 = vld [vmem:[%s185 + $0xa8] sm:$0xff]
      %v984 = vld [vmem:[%s185 + $0xb0] sm:$0xff]
      %v985 = vld [vmem:[%s185 + $0xb8] sm:$0xff]
      %v986 = vld [vmem:[%s185 + $0xc0] sm:$0xff]
      %v987 = vld [vmem:[%s185 + $0xc8] sm:$0xff]
      %v988 = vld [vmem:[%s185 + $0xd0] sm:$0xff]
      %v989 = vld [vmem:[%s185 + $0xd8] sm:$0xff]
      %v990 = vld [vmem:[%s185 + $0xe0] sm:$0xff]
      %v991 = vld [vmem:[%s185 + $0xe8] sm:$0xff]
      %v992 = vld [vmem:[%s185 + $0xf0] sm:$0xff]
      %v993 = vld [vmem:[%s185 + $0xf8] sm:$0xff]
      %v994 = vadd.f32 %v930, %v962
      %v995 = vadd.f32 %v931, %v963
      %v996 = vadd.f32 %v932, %v964
      %v997 = vadd.f32 %v933, %v965
      %v998 = vadd.f32 %v934, %v966
      %v999 = vadd.f32 %v935, %v967
      %v1000 = vadd.f32 %v936, %v968
      %v1001 = vadd.f32 %v937, %v969
      %v1002 = vadd.f32 %v938, %v970
      %v1003 = vadd.f32 %v939, %v971
      %v1004 = vadd.f32 %v940, %v972
      %v1005 = vadd.f32 %v941, %v973
      %v1006 = vadd.f32 %v942, %v974
      %v1007 = vadd.f32 %v943, %v975
      %v1008 = vadd.f32 %v944, %v976
      %v1009 = vadd.f32 %v945, %v977
      %v1010 = vadd.f32 %v946, %v978
      %v1011 = vadd.f32 %v947, %v979
      %v1012 = vadd.f32 %v948, %v980
      %v1013 = vadd.f32 %v949, %v981
      %v1014 = vadd.f32 %v950, %v982
      %v1015 = vadd.f32 %v951, %v983
      %v1016 = vadd.f32 %v952, %v984
      %v1017 = vadd.f32 %v953, %v985
      %v1018 = vadd.f32 %v954, %v986
      %v1019 = vadd.f32 %v955, %v987
      %v1020 = vadd.f32 %v956, %v988
      %v1021 = vadd.f32 %v957, %v989
      %v1022 = vadd.f32 %v958, %v990
      %v1023 = vadd.f32 %v959, %v991
      %v1024 = vadd.f32 %v960, %v992
      %v1025 = vadd.f32 %v961, %v993
      %v1026 = vmax.f32 %v994, 0.0
      %v1027 = vmax.f32 %v995, 0.0
      %v1028 = vmax.f32 %v996, 0.0
      %v1029 = vmax.f32 %v997, 0.0
      %v1030 = vmax.f32 %v998, 0.0
      %v1031 = vmax.f32 %v999, 0.0
      %v1032 = vmax.f32 %v1000, 0.0
      %v1033 = vmax.f32 %v1001, 0.0
      %v1034 = vmax.f32 %v1002, 0.0
      %v1035 = vmax.f32 %v1003, 0.0
      %v1036 = vmax.f32 %v1004, 0.0
      %v1037 = vmax.f32 %v1005, 0.0
      %v1038 = vmax.f32 %v1006, 0.0
      %v1039 = vmax.f32 %v1007, 0.0
      %v1040 = vmax.f32 %v1008, 0.0
      %v1041 = vmax.f32 %v1009, 0.0
      %v1042 = vmax.f32 %v1010, 0.0
      %v1043 = vmax.f32 %v1011, 0.0
      %v1044 = vmax.f32 %v1012, 0.0
      %v1045 = vmax.f32 %v1013, 0.0
      %v1046 = vmax.f32 %v1014, 0.0
      %v1047 = vmax.f32 %v1015, 0.0
      %v1048 = vmax.f32 %v1016, 0.0
      %v1049 = vmax.f32 %v1017, 0.0
      %v1050 = vmax.f32 %v1018, 0.0
      %v1051 = vmax.f32 %v1019, 0.0
      %v1052 = vmax.f32 %v1020, 0.0
      %v1053 = vmax.f32 %v1021, 0.0
      %v1054 = vmax.f32 %v1022, 0.0
      %v1055 = vmax.f32 %v1023, 0.0
      %v1056 = vmax.f32 %v1024, 0.0
      %v1057 = vmax.f32 %v1025, 0.0
      %1058 = vst.msk [vmem:[%s190] sm:$0xff] %vm390, %v1026
      %1059 = vst.msk [vmem:[%s190 + $0x8] sm:$0xff] %vm390, %v1027
      %1060 = vst.msk [vmem:[%s190 + $0x10] sm:$0xff] %vm390, %v1028
      %1061 = vst.msk [vmem:[%s190 + $0x18] sm:$0xff] %vm390, %v1029
      %1062 = vst.msk [vmem:[%s190 + $0x20] sm:$0xff] %vm390, %v1030
      %1063 = vst.msk [vmem:[%s190 + $0x28] sm:$0xff] %vm390, %v1031
      %1064 = vst.msk [vmem:[%s190 + $0x30] sm:$0xff] %vm390, %v1032
      %1065 = vst.msk [vmem:[%s190 + $0x38] sm:$0xff] %vm390, %v1033
      %1066 = vst.msk [vmem:[%s190 + $0x40] sm:$0xff] %vm390, %v1034
      %1067 = vst.msk [vmem:[%s190 + $0x48] sm:$0xff] %vm390, %v1035
      %1068 = vst.msk [vmem:[%s190 + $0x50] sm:$0xff] %vm390, %v1036
      %1069 = vst.msk [vmem:[%s190 + $0x58] sm:$0xff] %vm390, %v1037
      %1070 = vst.msk [vmem:[%s190 + $0x60] sm:$0xff] %vm390, %v1038
      %1071 = vst.msk [vmem:[%s190 + $0x68] sm:$0xff] %vm390, %v1039
      %1072 = vst.msk [vmem:[%s190 + $0x70] sm:$0xff] %vm390, %v1040
      %1073 = vst.msk [vmem:[%s190 + $0x78] sm:$0xff] %vm390, %v1041
      %1074 = vst.msk [vmem:[%s190 + $0x80] sm:$0xff] %vm390, %v1042
      %1075 = vst.msk [vmem:[%s190 + $0x88] sm:$0xff] %vm390, %v1043
      %1076 = vst.msk [vmem:[%s190 + $0x90] sm:$0xff] %vm390, %v1044
      %1077 = vst.msk [vmem:[%s190 + $0x98] sm:$0xff] %vm390, %v1045
      %1078 = vst.msk [vmem:[%s190 + $0xa0] sm:$0xff] %vm390, %v1046
      %1079 = vst.msk [vmem:[%s190 + $0xa8] sm:$0xff] %vm390, %v1047
      %1080 = vst.msk [vmem:[%s190 + $0xb0] sm:$0xff] %vm390, %v1048
      %1081 = vst.msk [vmem:[%s190 + $0xb8] sm:$0xff] %vm390, %v1049
      %1082 = vst.msk [vmem:[%s190 + $0xc0] sm:$0xff] %vm390, %v1050
      %1083 = vst.msk [vmem:[%s190 + $0xc8] sm:$0xff] %vm390, %v1051
      %1084 = vst.msk [vmem:[%s190 + $0xd0] sm:$0xff] %vm390, %v1052
      %1085 = vst.msk [vmem:[%s190 + $0xd8] sm:$0xff] %vm390, %v1053
      %1086 = vst.msk [vmem:[%s190 + $0xe0] sm:$0xff] %vm390, %v1054
      %1087 = vst.msk [vmem:[%s190 + $0xe8] sm:$0xff] %vm390, %v1055
      %1088 = vst.msk [vmem:[%s190 + $0xf0] sm:$0xff] %vm390, %v1056
      %1089 = vst.msk [vmem:[%s190 + $0xf8] sm:$0xff] %vm390, %v1057
      %p1090 = scmp.lt.s32.totalorder %s14, 1
      %s1091 = scalar_select %p1090, %s14, 1
      %s1092 = smul.addr %s1091, 32
      %s1093 = smul.addr %s1092, 8
      %s1094 = scalar_lea.vmem %s3, %s1093
      // Predicated region
      $region33: #{_lambda_.10} parent=31 // pred_check
        %p1095 = pneg %p105
      $region34: #{_lambda_.10} parent=31 // pred_check_branch
        %1097 = sbr.rel (%p1095) target = $region36
      $region35: #{_lambda_.10} parent=31 // pred_region
        _
      $region36: #{_lambda_.10} parent=31 // pred_fallthru
        _
    $region32: #{_lambda_.10} parent=5 // pred_fallthru
      _
    %p1098 = scmp.le.s32.totalorder 2, %s9
    // Predicated region
    $region37: #{_lambda_.10} parent=5 // pred_check
      %p1099 = pneg %p1098
    $region38: #{_lambda_.10} parent=5 // pred_check_branch
      %1101 = sbr.rel (%p1099) target = $region40
    $region39: #{_lambda_.10} parent=5 // pred_region
      %s1102 = ssub.s32 %s9, 2
      // Predicated region
      $region41: #{_lambda_.10} parent=39 // pred_check
        %p1103 = pneg %p111
      $region42: #{_lambda_.10} parent=39 // pred_check_branch
        %1105 = sbr.rel (%p1103) target = $region44
      $region43: #{_lambda_.10} parent=39 // pred_region
        %p1106 = scmp.lt.s32.totalorder %s15, 1
        %s1107 = scalar_select %p1106, %s15, 1
        %s1108 = smul.addr %s1107, 32
        %s1109 = smul.addr %s1108, 8
        %s1110 = scalar_lea.vmem %s3, %s1109
      $region44: #{_lambda_.10} parent=39 // pred_fallthru
        _
    $region40: #{_lambda_.10} parent=5 // pred_fallthru
      _
  $region6: #{_lambda_.10} parent=0 // loop_footer
    %s13 = sadd.s32 1, %s9
  $region7: #{_lambda_.10} parent=0 // loop_footer_branch
    %8 = sbr.rel target = $region3
  $region8: #{_lambda_.10} parent=0 // loop_exit
    _

// kernel: _lambda_.15
$region0: #{_lambda_.15}
  #allocation0 [shape = 'u32[]', space=smem, size = 0x4, offset = 0x4, fixed_abs, tag = 'smem constant byte address 0x4 - core index']
  #allocation1 [shape = 'u32[72,128]{1,0:T(1,128)}', space=vmem, size = 0x9000, scoped, tag = 'internal scratch']
  %s0 = inlined_call_operand.vmem [shape: f32[2,256,576], index: 0, kind: input, shape index: {}]
  %s1 = inlined_call_operand.vmem [shape: f32[576,32], index: 1, kind: input, shape index: {}]
  %s2 = inlined_call_operand.vmem [shape: f32[32,4], index: 2, kind: input, shape index: {}]
  %s3 = inlined_call_operand.vmem [shape: f32[1,4], index: 3, kind: input, shape index: {}]
  %s4 = inlined_call_operand.vmem [shape: f32[2,256,4], index: 4, kind: output, shape index: {}]
  %s5 = sld [smem:[#allocation0]]
  $region49: #{_lambda_.15} parent=0
    _
  %s7 = ssub.s32 1, %s5
  %s8 = scalar_select 0, %s7, %s5
  loop: start=0, step=1, limit=4
  $region2: #{_lambda_.15} parent=0 // loop_pre_header
    _
  $region3: #{_lambda_.15} parent=0 // loop_header
    %s10 = sphi 0, %s14
    %p11 = scmp.ge.s32.totalorder %s10, 4
    %s20 = sphi 0, %s22
    %s23 = sphi 0, %s20
    %s24 = sphi 0, %s23
    %s40 = sphi 0, %s24
    %s44 = sphi 0, %s44
    %s46 = sphi 0, %s44
    %s47 = sphi 0, %s46
    %s61 = sphi 0, %s47
    %s65 = sphi 0, %s65
    %s67 = sphi 0, %s65
    %s68 = sphi 0, %s67
    %s82 = sphi 0, %s68
    %s86 = sphi 0, %s86
    %s88 = sphi 0, %s86
    %s89 = sphi 0, %s88
    %s103 = sphi 0, %s89
    %s109 = sphi 0, %s111
    %s112 = sphi 0, %s109
    %s113 = sphi 0, %s112
    %s129 = sphi 0, %s113
  $region4: #{_lambda_.15} parent=0 // loop_header_branch
    %13 = sbr.rel (%p11) target = $region8
  $region5: #{_lambda_.15} parent=0 // loop_body
    %s15 = ssub.s32 %s10, 1
    %s16 = ssub.s32 %s10, 2
    %s17 = sadd.s32 %s10, 1
    %s18 = ssub.s32 %s10, %s17
    %p19 = scmp.eq.s32.totalorder %s18, 0
    %s21 = sadd.s32 %s20, 1
    %s22 = scalar_select %p19, %s20, %s21
    %p25 = pneg %p19
    %p26 = scmp.eq.s32.totalorder %s10, 1
    %p27 = por %p25, %p26
    %p28 = scmp.ne.s32.totalorder %s20, %s23
    %p29 = scmp.eq.s32.totalorder %s10, 0
    %p30 = por %p28, %p29
    %p31 = scmp.ne.s32.totalorder %s20, %s23
    %p32 = scmp.eq.s32.totalorder %s15, 1
    %p33 = por %p31, %p32
    %p34 = scmp.ne.s32.totalorder %s23, %s24
    %p35 = scmp.eq.s32.totalorder %s15, 0
    %p36 = por %p34, %p35
    %p37 = scmp.ne.s32.totalorder %s23, %s24
    %p38 = scmp.eq.s32.totalorder %s16, 1
    %p39 = por %p37, %p38
    %p41 = scmp.ne.s32.totalorder %s24, %s40
    %p42 = scmp.eq.s32.totalorder %s16, 0
    %p43 = por %p41, %p42
    %s45 = sadd.s32 %s44, 1
    %p48 = scmp.eq.s32.totalorder %s10, 1
    %p49 = scmp.ne.s32.totalorder %s44, %s46
    %p50 = scmp.eq.s32.totalorder %s10, 0
    %p51 = por %p49, %p50
    %p52 = scmp.ne.s32.totalorder %s44, %s46
    %p53 = scmp.eq.s32.totalorder %s15, 1
    %p54 = por %p52, %p53
    %p55 = scmp.ne.s32.totalorder %s46, %s47
    %p56 = scmp.eq.s32.totalorder %s15, 0
    %p57 = por %p55, %p56
    %p58 = scmp.ne.s32.totalorder %s46, %s47
    %p59 = scmp.eq.s32.totalorder %s16, 1
    %p60 = por %p58, %p59
    %p62 = scmp.ne.s32.totalorder %s47, %s61
    %p63 = scmp.eq.s32.totalorder %s16, 0
    %p64 = por %p62, %p63
    %s66 = sadd.s32 %s65, 1
    %p69 = scmp.eq.s32.totalorder %s10, 1
    %p70 = scmp.ne.s32.totalorder %s65, %s67
    %p71 = scmp.eq.s32.totalorder %s10, 0
    %p72 = por %p70, %p71
    %p73 = scmp.ne.s32.totalorder %s65, %s67
    %p74 = scmp.eq.s32.totalorder %s15, 1
    %p75 = por %p73, %p74
    %p76 = scmp.ne.s32.totalorder %s67, %s68
    %p77 = scmp.eq.s32.totalorder %s15, 0
    %p78 = por %p76, %p77
    %p79 = scmp.ne.s32.totalorder %s67, %s68
    %p80 = scmp.eq.s32.totalorder %s16, 1
    %p81 = por %p79, %p80
    %p83 = scmp.ne.s32.totalorder %s68, %s82
    %p84 = scmp.eq.s32.totalorder %s16, 0
    %p85 = por %p83, %p84
    %s87 = sadd.s32 %s86, 1
    %p90 = scmp.eq.s32.totalorder %s10, 1
    %p91 = scmp.ne.s32.totalorder %s86, %s88
    %p92 = scmp.eq.s32.totalorder %s10, 0
    %p93 = por %p91, %p92
    %p94 = scmp.ne.s32.totalorder %s86, %s88
    %p95 = scmp.eq.s32.totalorder %s15, 1
    %p96 = por %p94, %p95
    %p97 = scmp.ne.s32.totalorder %s88, %s89
    %p98 = scmp.eq.s32.totalorder %s15, 0
    %p99 = por %p97, %p98
    %p100 = scmp.ne.s32.totalorder %s88, %s89
    %p101 = scmp.eq.s32.totalorder %s16, 1
    %p102 = por %p100, %p101
    %p104 = scmp.ne.s32.totalorder %s89, %s103
    %p105 = scmp.eq.s32.totalorder %s16, 0
    %p106 = por %p104, %p105
    %s107 = ssub.s32 %s10, %s17
    %p108 = scmp.eq.s32.totalorder %s107, 0
    %s110 = sadd.s32 %s109, 1
    %s111 = scalar_select %p108, %s109, %s110
    %p114 = pneg %p108
    %p115 = scmp.eq.s32.totalorder %s10, 1
    %p116 = por %p114, %p115
    %p117 = scmp.ne.s32.totalorder %s109, %s112
    %p118 = scmp.eq.s32.totalorder %s10, 0
    %p119 = por %p117, %p118
    %p120 = scmp.ne.s32.totalorder %s109, %s112
    %p121 = scmp.eq.s32.totalorder %s15, 1
    %p122 = por %p120, %p121
    %p123 = scmp.ne.s32.totalorder %s112, %s113
    %p124 = scmp.eq.s32.totalorder %s15, 0
    %p125 = por %p123, %p124
    %p126 = scmp.ne.s32.totalorder %s112, %s113
    %p127 = scmp.eq.s32.totalorder %s16, 1
    %p128 = por %p126, %p127
    %p130 = scmp.ne.s32.totalorder %s113, %s129
    %p131 = scmp.eq.s32.totalorder %s16, 0
    %p132 = por %p130, %p131
    %p133 = scmp.le.s32.totalorder 1, %s10
    %p134 = scmp.lt.s32.totalorder %s10, 3
    %p135 = pnand %p133, %p134
    %p136 = pneg %p135
    // Predicated region
    $region9: #{_lambda_.15} parent=5 // pred_check
      _
    $region10: #{_lambda_.15} parent=5 // pred_check_branch
      %138 = sbr.rel (%p135) target = $region12
    $region11: #{_lambda_.15} parent=5 // pred_region
      %s139 = ssub.s32 %s10, 1
      // Predicated region
      $region13: #{_lambda_.15} parent=11 // pred_check
        %p140 = pneg %p57
      $region14: #{_lambda_.15} parent=11 // pred_check_branch
        %142 = sbr.rel (%p140) target = $region16
      $region15: #{_lambda_.15} parent=11 // pred_region
        _
      $region16: #{_lambda_.15} parent=11 // pred_fallthru
        _
      // Predicated region
      $region17: #{_lambda_.15} parent=11 // pred_check
        %p143 = pneg %p78
      $region18: #{_lambda_.15} parent=11 // pred_check_branch
        %145 = sbr.rel (%p143) target = $region20
      $region19: #{_lambda_.15} parent=11 // pred_region
        _
      $region20: #{_lambda_.15} parent=11 // pred_fallthru
        _
      // Predicated region
      $region21: #{_lambda_.15} parent=11 // pred_check
        %p146 = pneg %p99
      $region22: #{_lambda_.15} parent=11 // pred_check_branch
        %148 = sbr.rel (%p146) target = $region24
      $region23: #{_lambda_.15} parent=11 // pred_region
        _
      $region24: #{_lambda_.15} parent=11 // pred_fallthru
        _
    $region12: #{_lambda_.15} parent=5 // pred_fallthru
      _
    %p149 = scmp.lt.s32.totalorder %s10, 2
    // Predicated region
    $region25: #{_lambda_.15} parent=5 // pred_check
      %p150 = pneg %p149
    $region26: #{_lambda_.15} parent=5 // pred_check_branch
      %152 = sbr.rel (%p150) target = $region28
    $region27: #{_lambda_.15} parent=5 // pred_region
      // Predicated region
      $region29: #{_lambda_.15} parent=27 // pred_check
        %p153 = pneg %p30
      $region30: #{_lambda_.15} parent=27 // pred_check_branch
        %155 = sbr.rel (%p153) target = $region32
      $region31: #{_lambda_.15} parent=27 // pred_region
        %p156 = scmp.lt.s32.totalorder %s10, 1
        %s157 = scalar_select %p156, %s10, 1
        %s158 = smul.addr %s157, 160
        %s159 = smul.addr %s158, 8
        %s160 = scalar_lea.vmem %s0, %s159
      $region32: #{_lambda_.15} parent=27 // pred_fallthru
        _
    $region28: #{_lambda_.15} parent=5 // pred_fallthru
      _
    %p161 = scmp.le.s32.totalorder 1, %s10
    %p162 = scmp.lt.s32.totalorder %s10, 3
    %p163 = pnand %p161, %p162
    %p164 = pneg %p163
    // Predicated region
    $region33: #{_lambda_.15} parent=5 // pred_check
      _
    $region34: #{_lambda_.15} parent=5 // pred_check_branch
      %166 = sbr.rel (%p163) target = $region36
    $region35: #{_lambda_.15} parent=5 // pred_region
      %s167 = ssub.s32 %s10, 1
      %p168 = scmp.lt.s32.totalorder %s15, 1
      %s169 = scalar_select %p168, %s15, 1
      %s170 = smul.addr %s169, 160
      %s171 = smul.addr %s170, 8
      %s172 = scalar_lea.vmem %s0, %s171
      %p173 = pneg %p36
      %p174 = pneg %p33
      %p175 = pneg %p57
      %p176 = pneg %p54
      %p177 = pneg %p78
      %p178 = pneg %p75
      %p179 = pneg %p99
      %p180 = pneg %p96
      %p181 = pneg %p125
      %p182 = pneg %p122
      %p183 = scmp.lt.s32.totalorder %s15, 1
      %s184 = scalar_select %p183, %s15, 1
      %s185 = smul.addr %s184, 32
      %s186 = smul.addr %s185, 8
      %s187 = scalar_lea.vmem %s4, %s186
      %p188 = scmp.lt.s32.totalorder %s15, 1
      %s189 = scalar_select %p188, %s15, 1
      %s190 = smul.addr %s189, 160
      %s191 = smul.addr %s190, 8
      %s192 = scalar_lea.vmem %s0, %s191
      %p193 = scmp.lt.s32.totalorder %s15, 1
      %s194 = scalar_select %p193, %s15, 1
      %s195 = smul.addr %s194, 32
      %s196 = smul.addr %s195, 8
      %s197 = scalar_lea.vmem %s4, %s196
      %v199 = vld [vmem:[%s192] sm:$0xff]
      %v200 = vld [vmem:[%s192 + $0x8] sm:$0xff]
      %v201 = vld [vmem:[%s192 + $0x10] sm:$0xff]
      %v202 = vld [vmem:[%s192 + $0x18] sm:$0xff]
      %v203 = vld [vmem:[%s192 + $0x20] sm:$0xff]
      %v204 = vld [vmem:[%s192 + $0x28] sm:$0xff]
      %v205 = vld [vmem:[%s192 + $0x30] sm:$0xff]
      %v206 = vld [vmem:[%s192 + $0x38] sm:$0xff]
      %v207 = vld [vmem:[%s192 + $0x40] sm:$0xff]
      %v208 = vld [vmem:[%s192 + $0x48] sm:$0xff]
      %v209 = vld [vmem:[%s192 + $0x50] sm:$0xff]
      %v210 = vld [vmem:[%s192 + $0x58] sm:$0xff]
      %v211 = vld [vmem:[%s192 + $0x60] sm:$0xff]
      %v212 = vld [vmem:[%s192 + $0x68] sm:$0xff]
      %v213 = vld [vmem:[%s192 + $0x70] sm:$0xff]
      %v214 = vld [vmem:[%s192 + $0x78] sm:$0xff]
      %v215 = vld [vmem:[%s192 + $0x80] sm:$0xff]
      %v216 = vld [vmem:[%s192 + $0x88] sm:$0xff]
      %v217 = vld [vmem:[%s192 + $0x90] sm:$0xff]
      %v218 = vld [vmem:[%s192 + $0x98] sm:$0xff]
      %v219 = vld [vmem:[%s192 + $0xa0] sm:$0xff]
      %v220 = vld [vmem:[%s192 + $0xa8] sm:$0xff]
      %v221 = vld [vmem:[%s192 + $0xb0] sm:$0xff]
      %v222 = vld [vmem:[%s192 + $0xb8] sm:$0xff]
      %v223 = vld [vmem:[%s192 + $0xc0] sm:$0xff]
      %v224 = vld [vmem:[%s192 + $0xc8] sm:$0xff]
      %v225 = vld [vmem:[%s192 + $0xd0] sm:$0xff]
      %v226 = vld [vmem:[%s192 + $0xd8] sm:$0xff]
      %v227 = vld [vmem:[%s192 + $0xe0] sm:$0xff]
      %v228 = vld [vmem:[%s192 + $0xe8] sm:$0xff]
      %v229 = vld [vmem:[%s192 + $0xf0] sm:$0xff]
      %v230 = vld [vmem:[%s192 + $0xf8] sm:$0xff]
      %v231 = vld [vmem:[%s192 + $0x100] sm:$0xff]
      %v232 = vld [vmem:[%s192 + $0x108] sm:$0xff]
      %v233 = vld [vmem:[%s192 + $0x110] sm:$0xff]
      %v234 = vld [vmem:[%s192 + $0x118] sm:$0xff]
      %v235 = vld [vmem:[%s192 + $0x120] sm:$0xff]
      %v236 = vld [vmem:[%s192 + $0x128] sm:$0xff]
      %v237 = vld [vmem:[%s192 + $0x130] sm:$0xff]
      %v238 = vld [vmem:[%s192 + $0x138] sm:$0xff]
      %v239 = vld [vmem:[%s192 + $0x140] sm:$0xff]
      %v240 = vld [vmem:[%s192 + $0x148] sm:$0xff]
      %v241 = vld [vmem:[%s192 + $0x150] sm:$0xff]
      %v242 = vld [vmem:[%s192 + $0x158] sm:$0xff]
      %v243 = vld [vmem:[%s192 + $0x160] sm:$0xff]
      %v244 = vld [vmem:[%s192 + $0x168] sm:$0xff]
      %v245 = vld [vmem:[%s192 + $0x170] sm:$0xff]
      %v246 = vld [vmem:[%s192 + $0x178] sm:$0xff]
      %v247 = vld [vmem:[%s192 + $0x180] sm:$0xff]
      %v248 = vld [vmem:[%s192 + $0x188] sm:$0xff]
      %v249 = vld [vmem:[%s192 + $0x190] sm:$0xff]
      %v250 = vld [vmem:[%s192 + $0x198] sm:$0xff]
      %v251 = vld [vmem:[%s192 + $0x1a0] sm:$0xff]
      %v252 = vld [vmem:[%s192 + $0x1a8] sm:$0xff]
      %v253 = vld [vmem:[%s192 + $0x1b0] sm:$0xff]
      %v254 = vld [vmem:[%s192 + $0x1b8] sm:$0xff]
      %v255 = vld [vmem:[%s192 + $0x1c0] sm:$0xff]
      %v256 = vld [vmem:[%s192 + $0x1c8] sm:$0xff]
      %v257 = vld [vmem:[%s192 + $0x1d0] sm:$0xff]
      %v258 = vld [vmem:[%s192 + $0x1d8] sm:$0xff]
      %v259 = vld [vmem:[%s192 + $0x1e0] sm:$0xff]
      %v260 = vld [vmem:[%s192 + $0x1e8] sm:$0xff]
      %v261 = vld [vmem:[%s192 + $0x1f0] sm:$0xff]
      %v262 = vld [vmem:[%s192 + $0x1f8] sm:$0xff]
      %v263 = vld [vmem:[%s192 + $0x200] sm:$0xff]
      %v264 = vld [vmem:[%s192 + $0x208] sm:$0xff]
      %v265 = vld [vmem:[%s192 + $0x210] sm:$0xff]
      %v266 = vld [vmem:[%s192 + $0x218] sm:$0xff]
      %v267 = vld [vmem:[%s192 + $0x220] sm:$0xff]
      %v268 = vld [vmem:[%s192 + $0x228] sm:$0xff]
      %v269 = vld [vmem:[%s192 + $0x230] sm:$0xff]
      %v270 = vld [vmem:[%s192 + $0x238] sm:$0xff]
      %v271 = vld [vmem:[%s192 + $0x240] sm:$0xff]
      %v272 = vld [vmem:[%s192 + $0x248] sm:$0xff]
      %v273 = vld [vmem:[%s192 + $0x250] sm:$0xff]
      %v274 = vld [vmem:[%s192 + $0x258] sm:$0xff]
      %v275 = vld [vmem:[%s192 + $0x260] sm:$0xff]
      %v276 = vld [vmem:[%s192 + $0x268] sm:$0xff]
      %v277 = vld [vmem:[%s192 + $0x270] sm:$0xff]
      %v278 = vld [vmem:[%s192 + $0x278] sm:$0xff]
      %v279 = vld [vmem:[%s192 + $0x280] sm:$0xff]
      %v280 = vld [vmem:[%s192 + $0x288] sm:$0xff]
      %v281 = vld [vmem:[%s192 + $0x290] sm:$0xff]
      %v282 = vld [vmem:[%s192 + $0x298] sm:$0xff]
      %v283 = vld [vmem:[%s192 + $0x2a0] sm:$0xff]
      %v284 = vld [vmem:[%s192 + $0x2a8] sm:$0xff]
      %v285 = vld [vmem:[%s192 + $0x2b0] sm:$0xff]
      %v286 = vld [vmem:[%s192 + $0x2b8] sm:$0xff]
      %v287 = vld [vmem:[%s192 + $0x2c0] sm:$0xff]
      %v288 = vld [vmem:[%s192 + $0x2c8] sm:$0xff]
      %v289 = vld [vmem:[%s192 + $0x2d0] sm:$0xff]
      %v290 = vld [vmem:[%s192 + $0x2d8] sm:$0xff]
      %v291 = vld [vmem:[%s192 + $0x2e0] sm:$0xff]
      %v292 = vld [vmem:[%s192 + $0x2e8] sm:$0xff]
      %v293 = vld [vmem:[%s192 + $0x2f0] sm:$0xff]
      %v294 = vld [vmem:[%s192 + $0x2f8] sm:$0xff]
      %v295 = vld [vmem:[%s192 + $0x300] sm:$0xff]
      %v296 = vld [vmem:[%s192 + $0x308] sm:$0xff]
      %v297 = vld [vmem:[%s192 + $0x310] sm:$0xff]
      %v298 = vld [vmem:[%s192 + $0x318] sm:$0xff]
      %v299 = vld [vmem:[%s192 + $0x320] sm:$0xff]
      %v300 = vld [vmem:[%s192 + $0x328] sm:$0xff]
      %v301 = vld [vmem:[%s192 + $0x330] sm:$0xff]
      %v302 = vld [vmem:[%s192 + $0x338] sm:$0xff]
      %v303 = vld [vmem:[%s192 + $0x340] sm:$0xff]
      %v304 = vld [vmem:[%s192 + $0x348] sm:$0xff]
      %v305 = vld [vmem:[%s192 + $0x350] sm:$0xff]
      %v306 = vld [vmem:[%s192 + $0x358] sm:$0xff]
      %v307 = vld [vmem:[%s192 + $0x360] sm:$0xff]
      %v308 = vld [vmem:[%s192 + $0x368] sm:$0xff]
      %v309 = vld [vmem:[%s192 + $0x370] sm:$0xff]
      %v310 = vld [vmem:[%s192 + $0x378] sm:$0xff]
      %v311 = vld [vmem:[%s192 + $0x380] sm:$0xff]
      %v312 = vld [vmem:[%s192 + $0x388] sm:$0xff]
      %v313 = vld [vmem:[%s192 + $0x390] sm:$0xff]
      %v314 = vld [vmem:[%s192 + $0x398] sm:$0xff]
      %v315 = vld [vmem:[%s192 + $0x3a0] sm:$0xff]
      %v316 = vld [vmem:[%s192 + $0x3a8] sm:$0xff]
      %v317 = vld [vmem:[%s192 + $0x3b0] sm:$0xff]
      %v318 = vld [vmem:[%s192 + $0x3b8] sm:$0xff]
      %v319 = vld [vmem:[%s192 + $0x3c0] sm:$0xff]
      %v320 = vld [vmem:[%s192 + $0x3c8] sm:$0xff]
      %v321 = vld [vmem:[%s192 + $0x3d0] sm:$0xff]
      %v322 = vld [vmem:[%s192 + $0x3d8] sm:$0xff]
      %v323 = vld [vmem:[%s192 + $0x3e0] sm:$0xff]
      %v324 = vld [vmem:[%s192 + $0x3e8] sm:$0xff]
      %v325 = vld [vmem:[%s192 + $0x3f0] sm:$0xff]
      %v326 = vld [vmem:[%s192 + $0x3f8] sm:$0xff]
      %v327 = vld [vmem:[%s192 + $0x400] sm:$0xff]
      %v328 = vld [vmem:[%s192 + $0x408] sm:$0xff]
      %v329 = vld [vmem:[%s192 + $0x410] sm:$0xff]
      %v330 = vld [vmem:[%s192 + $0x418] sm:$0xff]
      %v331 = vld [vmem:[%s192 + $0x420] sm:$0xff]
      %v332 = vld [vmem:[%s192 + $0x428] sm:$0xff]
      %v333 = vld [vmem:[%s192 + $0x430] sm:$0xff]
      %v334 = vld [vmem:[%s192 + $0x438] sm:$0xff]
      %v335 = vld [vmem:[%s192 + $0x440] sm:$0xff]
      %v336 = vld [vmem:[%s192 + $0x448] sm:$0xff]
      %v337 = vld [vmem:[%s192 + $0x450] sm:$0xff]
      %v338 = vld [vmem:[%s192 + $0x458] sm:$0xff]
      %v339 = vld [vmem:[%s192 + $0x460] sm:$0xff]
      %v340 = vld [vmem:[%s192 + $0x468] sm:$0xff]
      %v341 = vld [vmem:[%s192 + $0x470] sm:$0xff]
      %v342 = vld [vmem:[%s192 + $0x478] sm:$0xff]
      %v343 = vld [vmem:[%s192 + $0x480] sm:$0xff]
      %v344 = vld [vmem:[%s192 + $0x488] sm:$0xff]
      %v345 = vld [vmem:[%s192 + $0x490] sm:$0xff]
      %v346 = vld [vmem:[%s192 + $0x498] sm:$0xff]
      %v347 = vld [vmem:[%s192 + $0x4a0] sm:$0xff]
      %v348 = vld [vmem:[%s192 + $0x4a8] sm:$0xff]
      %v349 = vld [vmem:[%s192 + $0x4b0] sm:$0xff]
      %v350 = vld [vmem:[%s192 + $0x4b8] sm:$0xff]
      %v351 = vld [vmem:[%s192 + $0x4c0] sm:$0xff]
      %v352 = vld [vmem:[%s192 + $0x4c8] sm:$0xff]
      %v353 = vld [vmem:[%s192 + $0x4d0] sm:$0xff]
      %v354 = vld [vmem:[%s192 + $0x4d8] sm:$0xff]
      %v355 = vld [vmem:[%s192 + $0x4e0] sm:$0xff]
      %v356 = vld [vmem:[%s192 + $0x4e8] sm:$0xff]
      %v357 = vld [vmem:[%s192 + $0x4f0] sm:$0xff]
      %v358 = vld [vmem:[%s192 + $0x4f8] sm:$0xff]
      %v359 = vpack.c.bf16 %v204, %v199
      %v360 = vpack.c.bf16 %v205, %v200
      %v361 = vpack.c.bf16 %v206, %v201
      %v362 = vpack.c.bf16 %v207, %v202
      %v363 = vpack.c.bf16 %v208, %v203
      %v364 = vpack.c.bf16 %v214, %v209
      %v365 = vpack.c.bf16 %v215, %v210
      %v366 = vpack.c.bf16 %v216, %v211
      %v367 = vpack.c.bf16 %v217, %v212
      %v368 = vpack.c.bf16 %v218, %v213
      %v369 = vpack.c.bf16 %v224, %v219
      %v370 = vpack.c.bf16 %v225, %v220
      %v371 = vpack.c.bf16 %v226, %v221
      %v372 = vpack.c.bf16 %v227, %v222
      %v373 = vpack.c.bf16 %v228, %v223
      %v374 = vpack.c.bf16 %v234, %v229
      %v375 = vpack.c.bf16 %v235, %v230
      %v376 = vpack.c.bf16 %v236, %v231
      %v377 = vpack.c.bf16 %v237, %v232
      %v378 = vpack.c.bf16 %v238, %v233
      %v379 = vpack.c.bf16 %v244, %v239
      %v380 = vpack.c.bf16 %v245, %v240
      %v381 = vpack.c.bf16 %v246, %v241
      %v382 = vpack.c.bf16 %v247, %v242
      %v383 = vpack.c.bf16 %v248, %v243
      %v384 = vpack.c.bf16 %v254, %v249
      %v385 = vpack.c.bf16 %v255, %v250
      %v386 = vpack.c.bf16 %v256, %v251
      %v387 = vpack.c.bf16 %v257, %v252
      %v388 = vpack.c.bf16 %v258, %v253
      %v389 = vpack.c.bf16 %v264, %v259
      %v390 = vpack.c.bf16 %v265, %v260
      %v391 = vpack.c.bf16 %v266, %v261
      %v392 = vpack.c.bf16 %v267, %v262
      %v393 = vpack.c.bf16 %v268, %v263
      %v394 = vpack.c.bf16 %v274, %v269
      %v395 = vpack.c.bf16 %v275, %v270
      %v396 = vpack.c.bf16 %v276, %v271
      %v397 = vpack.c.bf16 %v277, %v272
      %v398 = vpack.c.bf16 %v278, %v273
      %v399 = vpack.c.bf16 %v284, %v279
      %v400 = vpack.c.bf16 %v285, %v280
      %v401 = vpack.c.bf16 %v286, %v281
      %v402 = vpack.c.bf16 %v287, %v282
      %v403 = vpack.c.bf16 %v288, %v283
      %v404 = vpack.c.bf16 %v294, %v289
      %v405 = vpack.c.bf16 %v295, %v290
      %v406 = vpack.c.bf16 %v296, %v291
      %v407 = vpack.c.bf16 %v297, %v292
      %v408 = vpack.c.bf16 %v298, %v293
      %v409 = vpack.c.bf16 %v304, %v299
      %v410 = vpack.c.bf16 %v305, %v300
      %v411 = vpack.c.bf16 %v306, %v301
      %v412 = vpack.c.bf16 %v307, %v302
      %v413 = vpack.c.bf16 %v308, %v303
      %v414 = vpack.c.bf16 %v314, %v309
      %v415 = vpack.c.bf16 %v315, %v310
      %v416 = vpack.c.bf16 %v316, %v311
      %v417 = vpack.c.bf16 %v317, %v312
      %v418 = vpack.c.bf16 %v318, %v313
      %v419 = vpack.c.bf16 %v324, %v319
      %v420 = vpack.c.bf16 %v325, %v320
      %v421 = vpack.c.bf16 %v326, %v321
      %v422 = vpack.c.bf16 %v327, %v322
      %v423 = vpack.c.bf16 %v328, %v323
      %v424 = vpack.c.bf16 %v334, %v329
      %v425 = vpack.c.bf16 %v335, %v330
      %v426 = vpack.c.bf16 %v336, %v331
      %v427 = vpack.c.bf16 %v337, %v332
      %v428 = vpack.c.bf16 %v338, %v333
      %v429 = vpack.c.bf16 %v344, %v339
      %v430 = vpack.c.bf16 %v345, %v340
      %v431 = vpack.c.bf16 %v346, %v341
      %v432 = vpack.c.bf16 %v347, %v342
      %v433 = vpack.c.bf16 %v348, %v343
      %v434 = vpack.c.bf16 %v354, %v349
      %v435 = vpack.c.bf16 %v355, %v350
      %v436 = vpack.c.bf16 %v356, %v351
      %v437 = vpack.c.bf16 %v357, %v352
      %v438 = vpack.c.bf16 %v358, %v353
      %v439 = vld [vmem:[%s1] sm:$0xff]
      %v440 = vld [vmem:[%s1 + $0x8] sm:$0xff]
      %v441 = vld [vmem:[%s1 + $0x10] sm:$0xff]
      %v442 = vld [vmem:[%s1 + $0x18] sm:$0xff]
      %v443 = vld [vmem:[%s1 + $0x20] sm:$0xff]
      %v444 = vld [vmem:[%s1 + $0x28] sm:$0xff]
      %v445 = vld [vmem:[%s1 + $0x30] sm:$0xff]
      %v446 = vld [vmem:[%s1 + $0x38] sm:$0xff]
      %v447 = vld [vmem:[%s1 + $0x40] sm:$0xff]
      %v448 = vld [vmem:[%s1 + $0x48] sm:$0xff]
      %v449 = vld [vmem:[%s1 + $0x50] sm:$0xff]
      %v450 = vld [vmem:[%s1 + $0x58] sm:$0xff]
      %v451 = vld [vmem:[%s1 + $0x60] sm:$0xff]
      %v452 = vld [vmem:[%s1 + $0x68] sm:$0xff]
      %v453 = vld [vmem:[%s1 + $0x70] sm:$0xff]
      %v454 = vld [vmem:[%s1 + $0x78] sm:$0xff]
      %v455 = vld [vmem:[%s1 + $0x80] sm:$0xff]
      %v456 = vld [vmem:[%s1 + $0x88] sm:$0xff]
      %v457 = vld [vmem:[%s1 + $0x90] sm:$0xff]
      %v458 = vld [vmem:[%s1 + $0x98] sm:$0xff]
      %v459 = vld [vmem:[%s1 + $0xa0] sm:$0xff]
      %v460 = vld [vmem:[%s1 + $0xa8] sm:$0xff]
      %v461 = vld [vmem:[%s1 + $0xb0] sm:$0xff]
      %v462 = vld [vmem:[%s1 + $0xb8] sm:$0xff]
      %v463 = vld [vmem:[%s1 + $0xc0] sm:$0xff]
      %v464 = vld [vmem:[%s1 + $0xc8] sm:$0xff]
      %v465 = vld [vmem:[%s1 + $0xd0] sm:$0xff]
      %v466 = vld [vmem:[%s1 + $0xd8] sm:$0xff]
      %v467 = vld [vmem:[%s1 + $0xe0] sm:$0xff]
      %v468 = vld [vmem:[%s1 + $0xe8] sm:$0xff]
      %v469 = vld [vmem:[%s1 + $0xf0] sm:$0xff]
      %v470 = vld [vmem:[%s1 + $0xf8] sm:$0xff]
      %v471 = vld [vmem:[%s1 + $0x100] sm:$0xff]
      %v472 = vld [vmem:[%s1 + $0x108] sm:$0xff]
      %v473 = vld [vmem:[%s1 + $0x110] sm:$0xff]
      %v474 = vld [vmem:[%s1 + $0x118] sm:$0xff]
      %v475 = vld [vmem:[%s1 + $0x120] sm:$0xff]
      %v476 = vld [vmem:[%s1 + $0x128] sm:$0xff]
      %v477 = vld [vmem:[%s1 + $0x130] sm:$0xff]
      %v478 = vld [vmem:[%s1 + $0x138] sm:$0xff]
      %v479 = vld [vmem:[%s1 + $0x140] sm:$0xff]
      %v480 = vld [vmem:[%s1 + $0x148] sm:$0xff]
      %v481 = vld [vmem:[%s1 + $0x150] sm:$0xff]
      %v482 = vld [vmem:[%s1 + $0x158] sm:$0xff]
      %v483 = vld [vmem:[%s1 + $0x160] sm:$0xff]
      %v484 = vld [vmem:[%s1 + $0x168] sm:$0xff]
      %v485 = vld [vmem:[%s1 + $0x170] sm:$0xff]
      %v486 = vld [vmem:[%s1 + $0x178] sm:$0xff]
      %v487 = vld [vmem:[%s1 + $0x180] sm:$0xff]
      %v488 = vld [vmem:[%s1 + $0x188] sm:$0xff]
      %v489 = vld [vmem:[%s1 + $0x190] sm:$0xff]
      %v490 = vld [vmem:[%s1 + $0x198] sm:$0xff]
      %v491 = vld [vmem:[%s1 + $0x1a0] sm:$0xff]
      %v492 = vld [vmem:[%s1 + $0x1a8] sm:$0xff]
      %v493 = vld [vmem:[%s1 + $0x1b0] sm:$0xff]
      %v494 = vld [vmem:[%s1 + $0x1b8] sm:$0xff]
      %v495 = vld [vmem:[%s1 + $0x1c0] sm:$0xff]
      %v496 = vld [vmem:[%s1 + $0x1c8] sm:$0xff]
      %v497 = vld [vmem:[%s1 + $0x1d0] sm:$0xff]
      %v498 = vld [vmem:[%s1 + $0x1d8] sm:$0xff]
      %v499 = vld [vmem:[%s1 + $0x1e0] sm:$0xff]
      %v500 = vld [vmem:[%s1 + $0x1e8] sm:$0xff]
      %v501 = vld [vmem:[%s1 + $0x1f0] sm:$0xff]
      %v502 = vld [vmem:[%s1 + $0x1f8] sm:$0xff]
      %v503 = vld [vmem:[%s1 + $0x200] sm:$0xff]
      %v504 = vld [vmem:[%s1 + $0x208] sm:$0xff]
      %v505 = vld [vmem:[%s1 + $0x210] sm:$0xff]
      %v506 = vld [vmem:[%s1 + $0x218] sm:$0xff]
      %v507 = vld [vmem:[%s1 + $0x220] sm:$0xff]
      %v508 = vld [vmem:[%s1 + $0x228] sm:$0xff]
      %v509 = vld [vmem:[%s1 + $0x230] sm:$0xff]
      %v510 = vld [vmem:[%s1 + $0x238] sm:$0xff]
      %v511 = vpack.c.bf16 %v440, %v439
      %v512 = vpack.c.bf16 %v442, %v441
      %v513 = vpack.c.bf16 %v444, %v443
      %v514 = vpack.c.bf16 %v446, %v445
      %v515 = vpack.c.bf16 %v448, %v447
      %v516 = vpack.c.bf16 %v450, %v449
      %v517 = vpack.c.bf16 %v452, %v451
      %v518 = vpack.c.bf16 %v454, %v453
      %v519 = vpack.c.bf16 %v456, %v455
      %v520 = vpack.c.bf16 %v458, %v457
      %v521 = vpack.c.bf16 %v460, %v459
      %v522 = vpack.c.bf16 %v462, %v461
      %v523 = vpack.c.bf16 %v464, %v463
      %v524 = vpack.c.bf16 %v466, %v465
      %v525 = vpack.c.bf16 %v468, %v467
      %v526 = vpack.c.bf16 %v470, %v469
      %v527 = vpack.c.bf16 %v472, %v471
      %v528 = vpack.c.bf16 %v474, %v473
      %v529 = vpack.c.bf16 %v476, %v475
      %v530 = vpack.c.bf16 %v478, %v477
      %v531 = vpack.c.bf16 %v480, %v479
      %v532 = vpack.c.bf16 %v482, %v481
      %v533 = vpack.c.bf16 %v484, %v483
      %v534 = vpack.c.bf16 %v486, %v485
      %v535 = vpack.c.bf16 %v488, %v487
      %v536 = vpack.c.bf16 %v490, %v489
      %v537 = vpack.c.bf16 %v492, %v491
      %v538 = vpack.c.bf16 %v494, %v493
      %v539 = vpack.c.bf16 %v496, %v495
      %v540 = vpack.c.bf16 %v498, %v497
      %v541 = vpack.c.bf16 %v500, %v499
      %v542 = vpack.c.bf16 %v502, %v501
      %v543 = vpack.c.bf16 %v504, %v503
      %v544 = vpack.c.bf16 %v506, %v505
      %v545 = vpack.c.bf16 %v508, %v507
      %v546 = vpack.c.bf16 %v510, %v509
      %vm547 = vcmask 523264
      %v549 = vsel %vm547, %v363, 0
      %v552 = vsel %vm547, %v368, 0
      %v555 = vsel %vm547, %v373, 0
      %v558 = vsel %vm547, %v378, 0
      %v561 = vsel %vm547, %v383, 0
      %v564 = vsel %vm547, %v388, 0
      %v567 = vsel %vm547, %v393, 0
      %v570 = vsel %vm547, %v398, 0
      %v573 = vsel %vm547, %v403, 0
      %v576 = vsel %vm547, %v408, 0
      %v579 = vsel %vm547, %v413, 0
      %v582 = vsel %vm547, %v418, 0
      %v585 = vsel %vm547, %v423, 0
      %v588 = vsel %vm547, %v428, 0
      %v591 = vsel %vm547, %v433, 0
      %v594 = vsel %vm547, %v438, 0
      %596 = vmatpush.bf16.msra.mxu0 %v518
      %597 = vmatpush.bf16.msra.mxu0 %v517
      %598 = vmatpush.bf16.msra.mxu0 %v516
      %599 = vmatpush.bf16.msra.mxu0 %v515
      %600 = vmatpush.bf16.msra.mxu0 %v514
      %601 = vmatpush.bf16.msra.mxu0 %v513
      %602 = vmatpush.bf16.msra.mxu0 %v512
      %603 = vmatpush.bf16.msra.mxu0 %v511
      %604 = vmatmul.bf16.gmra.mxu0 %v359
      %v605 = vpop.f32.mrf.mxu0
      %v606 = vadd.f32 0.0, %v605
      %v607 = vpop.f32.mrf.mxu0
      %v608 = vadd.f32 0.0, %v607
      %609 = vmatmul.bf16.gmra.mxu0 %v364
      %v610 = vpop.f32.mrf.mxu0
      %v611 = vadd.f32 0.0, %v610
      %v612 = vpop.f32.mrf.mxu0
      %v613 = vadd.f32 0.0, %v612
      %614 = vmatmul.bf16.gmra.mxu0 %v369
      %v615 = vpop.f32.mrf.mxu0
      %v616 = vadd.f32 0.0, %v615
      %v617 = vpop.f32.mrf.mxu0
      %v618 = vadd.f32 0.0, %v617
      %619 = vmatmul.bf16.gmra.mxu0 %v374
      %v620 = vpop.f32.mrf.mxu0
      %v621 = vadd.f32 0.0, %v620
      %v622 = vpop.f32.mrf.mxu0
      %v623 = vadd.f32 0.0, %v622
      %624 = vmatmul.bf16.gmra.mxu0 %v379
      %v625 = vpop.f32.mrf.mxu0
      %v626 = vadd.f32 0.0, %v625
      %v627 = vpop.f32.mrf.mxu0
      %v628 = vadd.f32 0.0, %v627
      %629 = vmatmul.bf16.gmra.mxu0 %v384
      %v630 = vpop.f32.mrf.mxu0
      %v631 = vadd.f32 0.0, %v630
      %v632 = vpop.f32.mrf.mxu0
      %v633 = vadd.f32 0.0, %v632
      %634 = vmatmul.bf16.gmra.mxu0 %v389
      %v635 = vpop.f32.mrf.mxu0
      %v636 = vadd.f32 0.0, %v635
      %v637 = vpop.f32.mrf.mxu0
      %v638 = vadd.f32 0.0, %v637
      %639 = vmatmul.bf16.gmra.mxu0 %v394
      %v640 = vpop.f32.mrf.mxu0
      %v641 = vadd.f32 0.0, %v640
      %v642 = vpop.f32.mrf.mxu0
      %v643 = vadd.f32 0.0, %v642
      %644 = vmatmul.bf16.gmra.mxu0 %v399
      %v645 = vpop.f32.mrf.mxu0
      %v646 = vadd.f32 0.0, %v645
      %v647 = vpop.f32.mrf.mxu0
      %v648 = vadd.f32 0.0, %v647
      %649 = vmatmul.bf16.gmra.mxu0 %v404
      %v650 = vpop.f32.mrf.mxu0
      %v651 = vadd.f32 0.0, %v650
      %v652 = vpop.f32.mrf.mxu0
      %v653 = vadd.f32 0.0, %v652
      %654 = vmatmul.bf16.gmra.mxu0 %v409
      %v655 = vpop.f32.mrf.mxu0
      %v656 = vadd.f32 0.0, %v655
      %v657 = vpop.f32.mrf.mxu0
      %v658 = vadd.f32 0.0, %v657
      %659 = vmatmul.bf16.gmra.mxu0 %v414
      %v660 = vpop.f32.mrf.mxu0
      %v661 = vadd.f32 0.0, %v660
      %v662 = vpop.f32.mrf.mxu0
      %v663 = vadd.f32 0.0, %v662
      %664 = vmatmul.bf16.gmra.mxu0 %v419
      %v665 = vpop.f32.mrf.mxu0
      %v666 = vadd.f32 0.0, %v665
      %v667 = vpop.f32.mrf.mxu0
      %v668 = vadd.f32 0.0, %v667
      %669 = vmatmul.bf16.gmra.mxu0 %v424
      %v670 = vpop.f32.mrf.mxu0
      %v671 = vadd.f32 0.0, %v670
      %v672 = vpop.f32.mrf.mxu0
      %v673 = vadd.f32 0.0, %v672
      %674 = vmatmul.bf16.gmra.mxu0 %v429
      %v675 = vpop.f32.mrf.mxu0
      %v676 = vadd.f32 0.0, %v675
      %v677 = vpop.f32.mrf.mxu0
      %v678 = vadd.f32 0.0, %v677
      %679 = vmatmul.bf16.gmra.mxu0 %v434
      %v680 = vpop.f32.mrf.mxu0
      %v681 = vadd.f32 0.0, %v680
      %v682 = vpop.f32.mrf.mxu0
      %v683 = vadd.f32 0.0, %v682
      %684 = vdwg.mxu0
      %685 = vmatpush.bf16.msra.mxu0 %v526
      %686 = vmatpush.bf16.msra.mxu0 %v525
      %687 = vmatpush.bf16.msra.mxu0 %v524
      %688 = vmatpush.bf16.msra.mxu0 %v523
      %689 = vmatpush.bf16.msra.mxu0 %v522
      %690 = vmatpush.bf16.msra.mxu0 %v521
      %691 = vmatpush.bf16.msra.mxu0 %v520
      %692 = vmatpush.bf16.msra.mxu0 %v519
      %693 = vmatmul.bf16.gmra.mxu0 %v360
      %v694 = vpop.f32.mrf.mxu0
      %v695 = vadd.f32 %v606, %v694
      %v696 = vpop.f32.mrf.mxu0
      %v697 = vadd.f32 %v608, %v696
      %698 = vmatmul.bf16.gmra.mxu0 %v365
      %v699 = vpop.f32.mrf.mxu0
      %v700 = vadd.f32 %v611, %v699
      %v701 = vpop.f32.mrf.mxu0
      %v702 = vadd.f32 %v613, %v701
      %703 = vmatmul.bf16.gmra.mxu0 %v370
      %v704 = vpop.f32.mrf.mxu0
      %v705 = vadd.f32 %v616, %v704
      %v706 = vpop.f32.mrf.mxu0
      %v707 = vadd.f32 %v618, %v706
      %708 = vmatmul.bf16.gmra.mxu0 %v375
      %v709 = vpop.f32.mrf.mxu0
      %v710 = vadd.f32 %v621, %v709
      %v711 = vpop.f32.mrf.mxu0
      %v712 = vadd.f32 %v623, %v711
      %713 = vmatmul.bf16.gmra.mxu0 %v380
      %v714 = vpop.f32.mrf.mxu0
      %v715 = vadd.f32 %v626, %v714
      %v716 = vpop.f32.mrf.mxu0
      %v717 = vadd.f32 %v628, %v716
      %718 = vmatmul.bf16.gmra.mxu0 %v385
      %v719 = vpop.f32.mrf.mxu0
      %v720 = vadd.f32 %v631, %v719
      %v721 = vpop.f32.mrf.mxu0
      %v722 = vadd.f32 %v633, %v721
      %723 = vmatmul.bf16.gmra.mxu0 %v390
      %v724 = vpop.f32.mrf.mxu0
      %v725 = vadd.f32 %v636, %v724
      %v726 = vpop.f32.mrf.mxu0
      %v727 = vadd.f32 %v638, %v726
      %728 = vmatmul.bf16.gmra.mxu0 %v395
      %v729 = vpop.f32.mrf.mxu0
      %v730 = vadd.f32 %v641, %v729
      %v731 = vpop.f32.mrf.mxu0
      %v732 = vadd.f32 %v643, %v731
      %733 = vmatmul.bf16.gmra.mxu0 %v400
      %v734 = vpop.f32.mrf.mxu0
      %v735 = vadd.f32 %v646, %v734
      %v736 = vpop.f32.mrf.mxu0
      %v737 = vadd.f32 %v648, %v736
      %738 = vmatmul.bf16.gmra.mxu0 %v405
      %v739 = vpop.f32.mrf.mxu0
      %v740 = vadd.f32 %v651, %v739
      %v741 = vpop.f32.mrf.mxu0
      %v742 = vadd.f32 %v653, %v741
      %743 = vmatmul.bf16.gmra.mxu0 %v410
      %v744 = vpop.f32.mrf.mxu0
      %v745 = vadd.f32 %v656, %v744
      %v746 = vpop.f32.mrf.mxu0
      %v747 = vadd.f32 %v658, %v746
      %748 = vmatmul.bf16.gmra.mxu0 %v415
      %v749 = vpop.f32.mrf.mxu0
      %v750 = vadd.f32 %v661, %v749
      %v751 = vpop.f32.mrf.mxu0
      %v752 = vadd.f32 %v663, %v751
      %753 = vmatmul.bf16.gmra.mxu0 %v420
      %v754 = vpop.f32.mrf.mxu0
      %v755 = vadd.f32 %v666, %v754
      %v756 = vpop.f32.mrf.mxu0
      %v757 = vadd.f32 %v668, %v756
      %758 = vmatmul.bf16.gmra.mxu0 %v425
      %v759 = vpop.f32.mrf.mxu0
      %v760 = vadd.f32 %v671, %v759
      %v761 = vpop.f32.mrf.mxu0
      %v762 = vadd.f32 %v673, %v761
      %763 = vmatmul.bf16.gmra.mxu0 %v430
      %v764 = vpop.f32.mrf.mxu0
      %v765 = vadd.f32 %v676, %v764
      %v766 = vpop.f32.mrf.mxu0
      %v767 = vadd.f32 %v678, %v766
      %768 = vmatmul.bf16.gmra.mxu0 %v435
      %v769 = vpop.f32.mrf.mxu0
      %v770 = vadd.f32 %v681, %v769
      %v771 = vpop.f32.mrf.mxu0
      %v772 = vadd.f32 %v683, %v771
      %773 = vdwg.mxu0
      %774 = vmatpush.bf16.msra.mxu0 %v534
      %775 = vmatpush.bf16.msra.mxu0 %v533
      %776 = vmatpush.bf16.msra.mxu0 %v532
      %777 = vmatpush.bf16.msra.mxu0 %v531
      %778 = vmatpush.bf16.msra.mxu0 %v530
      %779 = vmatpush.bf16.msra.mxu0 %v529
      %780 = vmatpush.bf16.msra.mxu0 %v528
      %781 = vmatpush.bf16.msra.mxu0 %v527
      %782 = vmatmul.bf16.gmra.mxu0 %v361
      %v783 = vpop.f32.mrf.mxu0
      %v784 = vadd.f32 %v695, %v783
      %v785 = vpop.f32.mrf.mxu0
      %v786 = vadd.f32 %v697, %v785
      %787 = vmatmul.bf16.gmra.mxu0 %v366
      %v788 = vpop.f32.mrf.mxu0
      %v789 = vadd.f32 %v700, %v788
      %v790 = vpop.f32.mrf.mxu0
      %v791 = vadd.f32 %v702, %v790
      %792 = vmatmul.bf16.gmra.mxu0 %v371
      %v793 = vpop.f32.mrf.mxu0
      %v794 = vadd.f32 %v705, %v793
      %v795 = vpop.f32.mrf.mxu0
      %v796 = vadd.f32 %v707, %v795
      %797 = vmatmul.bf16.gmra.mxu0 %v376
      %v798 = vpop.f32.mrf.mxu0
      %v799 = vadd.f32 %v710, %v798
      %v800 = vpop.f32.mrf.mxu0
      %v801 = vadd.f32 %v712, %v800
      %802 = vmatmul.bf16.gmra.mxu0 %v381
      %v803 = vpop.f32.mrf.mxu0
      %v804 = vadd.f32 %v715, %v803
      %v805 = vpop.f32.mrf.mxu0
      %v806 = vadd.f32 %v717, %v805
      %807 = vmatmul.bf16.gmra.mxu0 %v386
      %v808 = vpop.f32.mrf.mxu0
      %v809 = vadd.f32 %v720, %v808
      %v810 = vpop.f32.mrf.mxu0
      %v811 = vadd.f32 %v722, %v810
      %812 = vmatmul.bf16.gmra.mxu0 %v391
      %v813 = vpop.f32.mrf.mxu0
      %v814 = vadd.f32 %v725, %v813
      %v815 = vpop.f32.mrf.mxu0
      %v816 = vadd.f32 %v727, %v815
      %817 = vmatmul.bf16.gmra.mxu0 %v396
      %v818 = vpop.f32.mrf.mxu0
      %v819 = vadd.f32 %v730, %v818
      %v820 = vpop.f32.mrf.mxu0
      %v821 = vadd.f32 %v732, %v820
      %822 = vmatmul.bf16.gmra.mxu0 %v401
      %v823 = vpop.f32.mrf.mxu0
      %v824 = vadd.f32 %v735, %v823
      %v825 = vpop.f32.mrf.mxu0
      %v826 = vadd.f32 %v737, %v825
      %827 = vmatmul.bf16.gmra.mxu0 %v406
      %v828 = vpop.f32.mrf.mxu0
      %v829 = vadd.f32 %v740, %v828
      %v830 = vpop.f32.mrf.mxu0
      %v831 = vadd.f32 %v742, %v830
      %832 = vmatmul.bf16.gmra.mxu0 %v411
      %v833 = vpop.f32.mrf.mxu0
      %v834 = vadd.f32 %v745, %v833
      %v835 = vpop.f32.mrf.mxu0
      %v836 = vadd.f32 %v747, %v835
      %837 = vmatmul.bf16.gmra.mxu0 %v416
      %v838 = vpop.f32.mrf.mxu0
      %v839 = vadd.f32 %v750, %v838
      %v840 = vpop.f32.mrf.mxu0
      %v841 = vadd.f32 %v752, %v840
      %842 = vmatmul.bf16.gmra.mxu0 %v421
      %v843 = vpop.f32.mrf.mxu0
      %v844 = vadd.f32 %v755, %v843
      %v845 = vpop.f32.mrf.mxu0
      %v846 = vadd.f32 %v757, %v845
      %847 = vmatmul.bf16.gmra.mxu0 %v426
      %v848 = vpop.f32.mrf.mxu0
      %v849 = vadd.f32 %v760, %v848
      %v850 = vpop.f32.mrf.mxu0
      %v851 = vadd.f32 %v762, %v850
      %852 = vmatmul.bf16.gmra.mxu0 %v431
      %v853 = vpop.f32.mrf.mxu0
      %v854 = vadd.f32 %v765, %v853
      %v855 = vpop.f32.mrf.mxu0
      %v856 = vadd.f32 %v767, %v855
      %857 = vmatmul.bf16.gmra.mxu0 %v436
      %v858 = vpop.f32.mrf.mxu0
      %v859 = vadd.f32 %v770, %v858
      %v860 = vpop.f32.mrf.mxu0
      %v861 = vadd.f32 %v772, %v860
      %862 = vdwg.mxu0
      %863 = vmatpush.bf16.msra.mxu0 %v542
      %864 = vmatpush.bf16.msra.mxu0 %v541
      %865 = vmatpush.bf16.msra.mxu0 %v540
      %866 = vmatpush.bf16.msra.mxu0 %v539
      %867 = vmatpush.bf16.msra.mxu0 %v538
      %868 = vmatpush.bf16.msra.mxu0 %v537
      %869 = vmatpush.bf16.msra.mxu0 %v536
      %870 = vmatpush.bf16.msra.mxu0 %v535
      %871 = vmatmul.bf16.gmra.mxu0 %v362
      %v872 = vpop.f32.mrf.mxu0
      %v873 = vadd.f32 %v784, %v872
      %v874 = vpop.f32.mrf.mxu0
      %v875 = vadd.f32 %v786, %v874
      %876 = vmatmul.bf16.gmra.mxu0 %v367
      %v877 = vpop.f32.mrf.mxu0
      %v878 = vadd.f32 %v789, %v877
      %v879 = vpop.f32.mrf.mxu0
      %v880 = vadd.f32 %v791, %v879
      %881 = vmatmul.bf16.gmra.mxu0 %v372
      %v882 = vpop.f32.mrf.mxu0
      %v883 = vadd.f32 %v794, %v882
      %v884 = vpop.f32.mrf.mxu0
      %v885 = vadd.f32 %v796, %v884
      %886 = vmatmul.bf16.gmra.mxu0 %v377
      %v887 = vpop.f32.mrf.mxu0
      %v888 = vadd.f32 %v799, %v887
      %v889 = vpop.f32.mrf.mxu0
      %v890 = vadd.f32 %v801, %v889
      %891 = vmatmul.bf16.gmra.mxu0 %v382
      %v892 = vpop.f32.mrf.mxu0
      %v893 = vadd.f32 %v804, %v892
      %v894 = vpop.f32.mrf.mxu0
      %v895 = vadd.f32 %v806, %v894
      %896 = vmatmul.bf16.gmra.mxu0 %v387
      %v897 = vpop.f32.mrf.mxu0
      %v898 = vadd.f32 %v809, %v897
      %v899 = vpop.f32.mrf.mxu0
      %v900 = vadd.f32 %v811, %v899
      %901 = vmatmul.bf16.gmra.mxu0 %v392
      %v902 = vpop.f32.mrf.mxu0
      %v903 = vadd.f32 %v814, %v902
      %v904 = vpop.f32.mrf.mxu0
      %v905 = vadd.f32 %v816, %v904
      %906 = vmatmul.bf16.gmra.mxu0 %v397
      %v907 = vpop.f32.mrf.mxu0
      %v908 = vadd.f32 %v819, %v907
      %v909 = vpop.f32.mrf.mxu0
      %v910 = vadd.f32 %v821, %v909
      %911 = vmatmul.bf16.gmra.mxu0 %v402
      %v912 = vpop.f32.mrf.mxu0
      %v913 = vadd.f32 %v824, %v912
      %v914 = vpop.f32.mrf.mxu0
      %v915 = vadd.f32 %v826, %v914
      %916 = vmatmul.bf16.gmra.mxu0 %v407
      %v917 = vpop.f32.mrf.mxu0
      %v918 = vadd.f32 %v829, %v917
      %v919 = vpop.f32.mrf.mxu0
      %v920 = vadd.f32 %v831, %v919
      %921 = vmatmul.bf16.gmra.mxu0 %v412
      %v922 = vpop.f32.mrf.mxu0
      %v923 = vadd.f32 %v834, %v922
      %v924 = vpop.f32.mrf.mxu0
      %v925 = vadd.f32 %v836, %v924
      %926 = vmatmul.bf16.gmra.mxu0 %v417
      %v927 = vpop.f32.mrf.mxu0
      %v928 = vadd.f32 %v839, %v927
      %v929 = vpop.f32.mrf.mxu0
      %v930 = vadd.f32 %v841, %v929
      %931 = vmatmul.bf16.gmra.mxu0 %v422
      %v932 = vpop.f32.mrf.mxu0
      %v933 = vadd.f32 %v844, %v932
      %v934 = vpop.f32.mrf.mxu0
      %v935 = vadd.f32 %v846, %v934
      %936 = vmatmul.bf16.gmra.mxu0 %v427
      %v937 = vpop.f32.mrf.mxu0
      %v938 = vadd.f32 %v849, %v937
      %v939 = vpop.f32.mrf.mxu0
      %v940 = vadd.f32 %v851, %v939
      %941 = vmatmul.bf16.gmra.mxu0 %v432
      %v942 = vpop.f32.mrf.mxu0
      %v943 = vadd.f32 %v854, %v942
      %v944 = vpop.f32.mrf.mxu0
      %v945 = vadd.f32 %v856, %v944
      %946 = vmatmul.bf16.gmra.mxu0 %v437
      %v947 = vpop.f32.mrf.mxu0
      %v948 = vadd.f32 %v859, %v947
      %v949 = vpop.f32.mrf.mxu0
      %v950 = vadd.f32 %v861, %v949
      %951 = vdwg.mxu0
      %952 = vmatpush.bf16.msra.mxu0 0
      %953 = vmatpush.bf16.msra.mxu0 0
      %954 = vmatpush.bf16.msra.mxu0 0
      %955 = vmatpush.bf16.msra.mxu0 0
      %956 = vmatpush.bf16.msra.mxu0 %v546
      %957 = vmatpush.bf16.msra.mxu0 %v545
      %958 = vmatpush.bf16.msra.mxu0 %v544
      %959 = vmatpush.bf16.msra.mxu0 %v543
      %960 = vmatmul.bf16.gmra.mxu0 %v549
      %v961 = vpop.f32.mrf.mxu0
      %v962 = vadd.f32 %v873, %v961
      %v963 = vpop.f32.mrf.mxu0
      %v964 = vadd.f32 %v875, %v963
      %965 = vmatmul.bf16.gmra.mxu0 %v552
      %v966 = vpop.f32.mrf.mxu0
      %v967 = vadd.f32 %v878, %v966
      %v968 = vpop.f32.mrf.mxu0
      %v969 = vadd.f32 %v880, %v968
      %970 = vmatmul.bf16.gmra.mxu0 %v555
      %v971 = vpop.f32.mrf.mxu0
      %v972 = vadd.f32 %v883, %v971
      %v973 = vpop.f32.mrf.mxu0
      %v974 = vadd.f32 %v885, %v973
      %975 = vmatmul.bf16.gmra.mxu0 %v558
      %v976 = vpop.f32.mrf.mxu0
      %v977 = vadd.f32 %v888, %v976
      %v978 = vpop.f32.mrf.mxu0
      %v979 = vadd.f32 %v890, %v978
      %980 = vmatmul.bf16.gmra.mxu0 %v561
      %v981 = vpop.f32.mrf.mxu0
      %v982 = vadd.f32 %v893, %v981
      %v983 = vpop.f32.mrf.mxu0
      %v984 = vadd.f32 %v895, %v983
      %985 = vmatmul.bf16.gmra.mxu0 %v564
      %v986 = vpop.f32.mrf.mxu0
      %v987 = vadd.f32 %v898, %v986
      %v988 = vpop.f32.mrf.mxu0
      %v989 = vadd.f32 %v900, %v988
      %990 = vmatmul.bf16.gmra.mxu0 %v567
      %v991 = vpop.f32.mrf.mxu0
      %v992 = vadd.f32 %v903, %v991
      %v993 = vpop.f32.mrf.mxu0
      %v994 = vadd.f32 %v905, %v993
      %995 = vmatmul.bf16.gmra.mxu0 %v570
      %v996 = vpop.f32.mrf.mxu0
      %v997 = vadd.f32 %v908, %v996
      %v998 = vpop.f32.mrf.mxu0
      %v999 = vadd.f32 %v910, %v998
      %1000 = vmatmul.bf16.gmra.mxu0 %v573
      %v1001 = vpop.f32.mrf.mxu0
      %v1002 = vadd.f32 %v913, %v1001
      %v1003 = vpop.f32.mrf.mxu0
      %v1004 = vadd.f32 %v915, %v1003
      %1005 = vmatmul.bf16.gmra.mxu0 %v576
      %v1006 = vpop.f32.mrf.mxu0
      %v1007 = vadd.f32 %v918, %v1006
      %v1008 = vpop.f32.mrf.mxu0
      %v1009 = vadd.f32 %v920, %v1008
      %1010 = vmatmul.bf16.gmra.mxu0 %v579
      %v1011 = vpop.f32.mrf.mxu0
      %v1012 = vadd.f32 %v923, %v1011
      %v1013 = vpop.f32.mrf.mxu0
      %v1014 = vadd.f32 %v925, %v1013
      %1015 = vmatmul.bf16.gmra.mxu0 %v582
      %v1016 = vpop.f32.mrf.mxu0
      %v1017 = vadd.f32 %v928, %v1016
      %v1018 = vpop.f32.mrf.mxu0
      %v1019 = vadd.f32 %v930, %v1018
      %1020 = vmatmul.bf16.gmra.mxu0 %v585
      %v1021 = vpop.f32.mrf.mxu0
      %v1022 = vadd.f32 %v933, %v1021
      %v1023 = vpop.f32.mrf.mxu0
      %v1024 = vadd.f32 %v935, %v1023
      %1025 = vmatmul.bf16.gmra.mxu0 %v588
      %v1026 = vpop.f32.mrf.mxu0
      %v1027 = vadd.f32 %v938, %v1026
      %v1028 = vpop.f32.mrf.mxu0
      %v1029 = vadd.f32 %v940, %v1028
      %1030 = vmatmul.bf16.gmra.mxu0 %v591
      %v1031 = vpop.f32.mrf.mxu0
      %v1032 = vadd.f32 %v943, %v1031
      %v1033 = vpop.f32.mrf.mxu0
      %v1034 = vadd.f32 %v945, %v1033
      %1035 = vmatmul.bf16.gmra.mxu0 %v594
      %v1036 = vpop.f32.mrf.mxu0
      %v1037 = vadd.f32 %v948, %v1036
      %v1038 = vpop.f32.mrf.mxu0
      %v1039 = vadd.f32 %v950, %v1038
      %1040 = vdwg.mxu0
      %vm1041 = vcmask 261120
      %v1042 = vsel %vm1041, %v962, 0.0
      %v1043 = vsel %vm1041, %v964, 0.0
      %v1044 = vadd.f32 %v1042, %v1043
      %v1045 = vsel %vm1041, %v967, 0.0
      %v1046 = vadd.f32 %v1044, %v1045
      %v1047 = vsel %vm1041, %v969, 0.0
      %v1048 = vadd.f32 %v1046, %v1047
      %v1049 = vsel %vm1041, %v972, 0.0
      %v1050 = vadd.f32 %v1048, %v1049
      %v1051 = vsel %vm1041, %v974, 0.0
      %v1052 = vadd.f32 %v1050, %v1051
      %v1053 = vsel %vm1041, %v977, 0.0
      %v1054 = vadd.f32 %v1052, %v1053
      %v1055 = vsel %vm1041, %v979, 0.0
      %v1056 = vadd.f32 %v1054, %v1055
      %v1057 = vsel %vm1041, %v982, 0.0
      %v1058 = vadd.f32 %v1056, %v1057
      %v1059 = vsel %vm1041, %v984, 0.0
      %v1060 = vadd.f32 %v1058, %v1059
      %v1061 = vsel %vm1041, %v987, 0.0
      %v1062 = vadd.f32 %v1060, %v1061
      %v1063 = vsel %vm1041, %v989, 0.0
      %v1064 = vadd.f32 %v1062, %v1063
      %v1065 = vsel %vm1041, %v992, 0.0
      %v1066 = vadd.f32 %v1064, %v1065
      %v1067 = vsel %vm1041, %v994, 0.0
      %v1068 = vadd.f32 %v1066, %v1067
      %v1069 = vsel %vm1041, %v997, 0.0
      %v1070 = vadd.f32 %v1068, %v1069
      %v1071 = vsel %vm1041, %v999, 0.0
      %v1072 = vadd.f32 %v1070, %v1071
      %v1073 = vsel %vm1041, %v1002, 0.0
      %v1074 = vadd.f32 %v1072, %v1073
      %v1075 = vsel %vm1041, %v1004, 0.0
      %v1076 = vadd.f32 %v1074, %v1075
      %v1077 = vsel %vm1041, %v1007, 0.0
      %v1078 = vadd.f32 %v1076, %v1077
      %v1079 = vsel %vm1041, %v1009, 0.0
      %v1080 = vadd.f32 %v1078, %v1079
      %v1081 = vsel %vm1041, %v1012, 0.0
      %v1082 = vadd.f32 %v1080, %v1081
      %v1083 = vsel %vm1041, %v1014, 0.0
      %v1084 = vadd.f32 %v1082, %v1083
      %v1085 = vsel %vm1041, %v1017, 0.0
      %v1086 = vadd.f32 %v1084, %v1085
      %v1087 = vsel %vm1041, %v1019, 0.0
      %v1088 = vadd.f32 %v1086, %v1087
      %v1089 = vsel %vm1041, %v1022, 0.0
      %v1090 = vadd.f32 %v1088, %v1089
      %v1091 = vsel %vm1041, %v1024, 0.0
      %v1092 = vadd.f32 %v1090, %v1091
      %v1093 = vsel %vm1041, %v1027, 0.0
      %v1094 = vadd.f32 %v1092, %v1093
      %v1095 = vsel %vm1041, %v1029, 0.0
      %v1096 = vadd.f32 %v1094, %v1095
      %v1097 = vsel %vm1041, %v1032, 0.0
      %v1098 = vadd.f32 %v1096, %v1097
      %v1099 = vsel %vm1041, %v1034, 0.0
      %v1100 = vadd.f32 %v1098, %v1099
      %v1101 = vsel %vm1041, %v1037, 0.0
      %v1102 = vadd.f32 %v1100, %v1101
      %v1103 = vsel %vm1041, %v1039, 0.0
      %v1104 = vadd.f32 %v1102, %v1103
      %v1105 = vrot.slane %v1104, 4
      %v1106 = vadd.f32 %v1104, %v1105
      %v1107 = vrot.slane %v1106, 2
      %v1108 = vadd.f32 %v1106, %v1107
      %v1109 = vrot.slane %v1108, 1
      %v1110 = vadd.f32 %v1108, %v1109
      %v1111 = vrcp.pop 256.0
      %v1112 = vmul.f32 256.0, %v1111
      %v1113 = vsub.f32 1.0, %v1112
      %v1114 = vmul.f32 %v1111, %v1113
      %v1115 = vadd.f32 %v1111, %v1114
      %vm1116 = vweird.f32 %v1111
      %v1117 = vsel %vm1116, %v1111, %v1115
      %v1118 = vmul.f32 %v1110, %v1117
      %v1119 = vmul.f32 %v962, %v962
      %v1120 = vmul.f32 %v964, %v964
      %v1121 = vmul.f32 %v967, %v967
      %v1122 = vmul.f32 %v969, %v969
      %v1123 = vmul.f32 %v972, %v972
      %v1124 = vmul.f32 %v974, %v974
      %v1125 = vmul.f32 %v977, %v977
      %v1126 = vmul.f32 %v979, %v979
      %v1127 = vmul.f32 %v982, %v982
      %v1128 = vmul.f32 %v984, %v984
      %v1129 = vmul.f32 %v987, %v987
      %v1130 = vmul.f32 %v989, %v989
      %v1131 = vmul.f32 %v992, %v992
      %v1132 = vmul.f32 %v994, %v994
      %v1133 = vmul.f32 %v997, %v997
      %v1134 = vmul.f32 %v999, %v999
      %v1135 = vmul.f32 %v1002, %v1002
      %v1136 = vmul.f32 %v1004, %v1004
      %v1137 = vmul.f32 %v1007, %v1007
      %v1138 = vmul.f32 %v1009, %v1009
      %v1139 = vmul.f32 %v1012, %v1012
      %v1140 = vmul.f32 %v1014, %v1014
      %v1141 = vmul.f32 %v1017, %v1017
      %v1142 = vmul.f32 %v1019, %v1019
      %v1143 = vmul.f32 %v1022, %v1022
      %v1144 = vmul.f32 %v1024, %v1024
      %v1145 = vmul.f32 %v1027, %v1027
      %v1146 = vmul.f32 %v1029, %v1029
      %v1147 = vmul.f32 %v1032, %v1032
      %v1148 = vmul.f32 %v1034, %v1034
      %v1149 = vmul.f32 %v1037, %v1037
      %v1150 = vmul.f32 %v1039, %v1039
      %v1151 = vsel %vm1041, %v1119, 0.0
      %v1152 = vsel %vm1041, %v1120, 0.0
      %v1153 = vadd.f32 %v1151, %v1152
      %v1154 = vsel %vm1041, %v1121, 0.0
      %v1155 = vadd.f32 %v1153, %v1154
      %v1156 = vsel %vm1041, %v1122, 0.0
      %v1157 = vadd.f32 %v1155, %v1156
      %v1158 = vsel %vm1041, %v1123, 0.0
      %v1159 = vadd.f32 %v1157, %v1158
      %v1160 = vsel %vm1041, %v1124, 0.0
      %v1161 = vadd.f32 %v1159, %v1160
      %v1162 = vsel %vm1041, %v1125, 0.0
      %v1163 = vadd.f32 %v1161, %v1162
      %v1164 = vsel %vm1041, %v1126, 0.0
      %v1165 = vadd.f32 %v1163, %v1164
      %v1166 = vsel %vm1041, %v1127, 0.0
      %v1167 = vadd.f32 %v1165, %v1166
      %v1168 = vsel %vm1041, %v1128, 0.0
      %v1169 = vadd.f32 %v1167, %v1168
      %v1170 = vsel %vm1041, %v1129, 0.0
      %v1171 = vadd.f32 %v1169, %v1170
      %v1172 = vsel %vm1041, %v1130, 0.0
      %v1173 = vadd.f32 %v1171, %v1172
      %v1174 = vsel %vm1041, %v1131, 0.0
      %v1175 = vadd.f32 %v1173, %v1174
      %v1176 = vsel %vm1041, %v1132, 0.0
      %v1177 = vadd.f32 %v1175, %v1176
      %v1178 = vsel %vm1041, %v1133, 0.0
      %v1179 = vadd.f32 %v1177, %v1178
      %v1180 = vsel %vm1041, %v1134, 0.0
      %v1181 = vadd.f32 %v1179, %v1180
      %v1182 = vsel %vm1041, %v1135, 0.0
      %v1183 = vadd.f32 %v1181, %v1182
      %v1184 = vsel %vm1041, %v1136, 0.0
      %v1185 = vadd.f32 %v1183, %v1184
      %v1186 = vsel %vm1041, %v1137, 0.0
      %v1187 = vadd.f32 %v1185, %v1186
      %v1188 = vsel %vm1041, %v1138, 0.0
      %v1189 = vadd.f32 %v1187, %v1188
      %v1190 = vsel %vm1041, %v1139, 0.0
      %v1191 = vadd.f32 %v1189, %v1190
      %v1192 = vsel %vm1041, %v1140, 0.0
      %v1193 = vadd.f32 %v1191, %v1192
      %v1194 = vsel %vm1041, %v1141, 0.0
      %v1195 = vadd.f32 %v1193, %v1194
      %v1196 = vsel %vm1041, %v1142, 0.0
      %v1197 = vadd.f32 %v1195, %v1196
      %v1198 = vsel %vm1041, %v1143, 0.0
      %v1199 = vadd.f32 %v1197, %v1198
      %v1200 = vsel %vm1041, %v1144, 0.0
      %v1201 = vadd.f32 %v1199, %v1200
      %v1202 = vsel %vm1041, %v1145, 0.0
      %v1203 = vadd.f32 %v1201, %v1202
      %v1204 = vsel %vm1041, %v1146, 0.0
      %v1205 = vadd.f32 %v1203, %v1204
      %v1206 = vsel %vm1041, %v1147, 0.0
      %v1207 = vadd.f32 %v1205, %v1206
      %v1208 = vsel %vm1041, %v1148, 0.0
      %v1209 = vadd.f32 %v1207, %v1208
      %v1210 = vsel %vm1041, %v1149, 0.0
      %v1211 = vadd.f32 %v1209, %v1210
      %v1212 = vsel %vm1041, %v1150, 0.0
      %v1213 = vadd.f32 %v1211, %v1212
      %v1214 = vrot.slane %v1213, 4
      %v1215 = vadd.f32 %v1213, %v1214
      %v1216 = vrot.slane %v1215, 2
      %v1217 = vadd.f32 %v1215, %v1216
      %v1218 = vrot.slane %v1217, 1
      %v1219 = vadd.f32 %v1217, %v1218
      %v1220 = vmul.f32 %v1219, %v1117
      %v1221 = vsub.f32 %v962, %v1118
      %v1222 = vsub.f32 %v964, %v1118
      %v1223 = vsub.f32 %v967, %v1118
      %v1224 = vsub.f32 %v969, %v1118
      %v1225 = vsub.f32 %v972, %v1118
      %v1226 = vsub.f32 %v974, %v1118
      %v1227 = vsub.f32 %v977, %v1118
      %v1228 = vsub.f32 %v979, %v1118
      %v1229 = vsub.f32 %v982, %v1118
      %v1230 = vsub.f32 %v984, %v1118
      %v1231 = vsub.f32 %v987, %v1118
      %v1232 = vsub.f32 %v989, %v1118
      %v1233 = vsub.f32 %v992, %v1118
      %v1234 = vsub.f32 %v994, %v1118
      %v1235 = vsub.f32 %v997, %v1118
      %v1236 = vsub.f32 %v999, %v1118
      %v1237 = vsub.f32 %v1002, %v1118
      %v1238 = vsub.f32 %v1004, %v1118
      %v1239 = vsub.f32 %v1007, %v1118
      %v1240 = vsub.f32 %v1009, %v1118
      %v1241 = vsub.f32 %v1012, %v1118
      %v1242 = vsub.f32 %v1014, %v1118
      %v1243 = vsub.f32 %v1017, %v1118
      %v1244 = vsub.f32 %v1019, %v1118
      %v1245 = vsub.f32 %v1022, %v1118
      %v1246 = vsub.f32 %v1024, %v1118
      %v1247 = vsub.f32 %v1027, %v1118
      %v1248 = vsub.f32 %v1029, %v1118
      %v1249 = vsub.f32 %v1032, %v1118
      %v1250 = vsub.f32 %v1034, %v1118
      %v1251 = vsub.f32 %v1037, %v1118
      %v1252 = vsub.f32 %v1039, %v1118
      %v1253 = vmul.f32 %v1118, %v1118
      %v1254 = vsub.f32 %v1220, %v1253
      %v1255 = vadd.f32 %v1254, 1e-05
      %v1256 = vrsqrt.pop %v1255
      %v1257 = vmul.f32 %v1256, %v1255
      %v1258 = vmul.f32 %v1257, %v1256
      %v1259 = vmul.f32 0.5, %v1258
      %v1260 = vsub.f32 1.5, %v1259
      %v1261 = vmul.f32 %v1256, %v1260
      %vm1262 = vweird.f32 %v1255
      %vm1263 = vweird.f32 %v1256
      %vm1264 = vmor %vm1262, %vm1263
      %v1265 = vsel %vm1264, %v1256, %v1261
      %v1266 = vmul.f32 %v1221, %v1265
      %v1267 = vmul.f32 %v1222, %v1265
      %v1268 = vmul.f32 %v1223, %v1265
      %v1269 = vmul.f32 %v1224, %v1265
      %v1270 = vmul.f32 %v1225, %v1265
      %v1271 = vmul.f32 %v1226, %v1265
      %v1272 = vmul.f32 %v1227, %v1265
      %v1273 = vmul.f32 %v1228, %v1265
      %v1274 = vmul.f32 %v1229, %v1265
      %v1275 = vmul.f32 %v1230, %v1265
      %v1276 = vmul.f32 %v1231, %v1265
      %v1277 = vmul.f32 %v1232, %v1265
      %v1278 = vmul.f32 %v1233, %v1265
      %v1279 = vmul.f32 %v1234, %v1265
      %v1280 = vmul.f32 %v1235, %v1265
      %v1281 = vmul.f32 %v1236, %v1265
      %v1282 = vmul.f32 %v1237, %v1265
      %v1283 = vmul.f32 %v1238, %v1265
      %v1284 = vmul.f32 %v1239, %v1265
      %v1285 = vmul.f32 %v1240, %v1265
      %v1286 = vmul.f32 %v1241, %v1265
      %v1287 = vmul.f32 %v1242, %v1265
      %v1288 = vmul.f32 %v1243, %v1265
      %v1289 = vmul.f32 %v1244, %v1265
      %v1290 = vmul.f32 %v1245, %v1265
      %v1291 = vmul.f32 %v1246, %v1265
      %v1292 = vmul.f32 %v1247, %v1265
      %v1293 = vmul.f32 %v1248, %v1265
      %v1294 = vmul.f32 %v1249, %v1265
      %v1295 = vmul.f32 %v1250, %v1265
      %v1296 = vmul.f32 %v1251, %v1265
      %v1297 = vmul.f32 %v1252, %v1265
      %v1298 = vmax.f32 %v1266, 0.0
      %v1299 = vmax.f32 %v1267, 0.0
      %v1300 = vmax.f32 %v1268, 0.0
      %v1301 = vmax.f32 %v1269, 0.0
      %v1302 = vmax.f32 %v1270, 0.0
      %v1303 = vmax.f32 %v1271, 0.0
      %v1304 = vmax.f32 %v1272, 0.0
      %v1305 = vmax.f32 %v1273, 0.0
      %v1306 = vmax.f32 %v1274, 0.0
      %v1307 = vmax.f32 %v1275, 0.0
      %v1308 = vmax.f32 %v1276, 0.0
      %v1309 = vmax.f32 %v1277, 0.0
      %v1310 = vmax.f32 %v1278, 0.0
      %v1311 = vmax.f32 %v1279, 0.0
      %v1312 = vmax.f32 %v1280, 0.0
      %v1313 = vmax.f32 %v1281, 0.0
      %v1314 = vmax.f32 %v1282, 0.0
      %v1315 = vmax.f32 %v1283, 0.0
      %v1316 = vmax.f32 %v1284, 0.0
      %v1317 = vmax.f32 %v1285, 0.0
      %v1318 = vmax.f32 %v1286, 0.0
      %v1319 = vmax.f32 %v1287, 0.0
      %v1320 = vmax.f32 %v1288, 0.0
      %v1321 = vmax.f32 %v1289, 0.0
      %v1322 = vmax.f32 %v1290, 0.0
      %v1323 = vmax.f32 %v1291, 0.0
      %v1324 = vmax.f32 %v1292, 0.0
      %v1325 = vmax.f32 %v1293, 0.0
      %v1326 = vmax.f32 %v1294, 0.0
      %v1327 = vmax.f32 %v1295, 0.0
      %v1328 = vmax.f32 %v1296, 0.0
      %v1329 = vmax.f32 %v1297, 0.0
      %v1330 = vpack.c.bf16 %v1299, %v1298
      %v1331 = vpack.c.bf16 %v1301, %v1300
      %v1332 = vpack.c.bf16 %v1303, %v1302
      %v1333 = vpack.c.bf16 %v1305, %v1304
      %v1334 = vpack.c.bf16 %v1307, %v1306
      %v1335 = vpack.c.bf16 %v1309, %v1308
      %v1336 = vpack.c.bf16 %v1311, %v1310
      %v1337 = vpack.c.bf16 %v1313, %v1312
      %v1338 = vpack.c.bf16 %v1315, %v1314
      %v1339 = vpack.c.bf16 %v1317, %v1316
      %v1340 = vpack.c.bf16 %v1319, %v1318
      %v1341 = vpack.c.bf16 %v1321, %v1320
      %v1342 = vpack.c.bf16 %v1323, %v1322
      %v1343 = vpack.c.bf16 %v1325, %v1324
      %v1344 = vpack.c.bf16 %v1327, %v1326
      %v1345 = vpack.c.bf16 %v1329, %v1328
      %v1346 = vld [vmem:[%s2] sm:$0xff]
      %v1347 = vld [vmem:[%s2 + $0x8] sm:$0xff]
      %v1348 = vld [vmem:[%s2 + $0x10] sm:$0xff]
      %v1349 = vld [vmem:[%s2 + $0x18] sm:$0xff]
      %v1350 = vpack.c.bf16 %v1347, %v1346
      %v1351 = vpack.c.bf16 %v1349, %v1348
      %v1352 = vld [vmem:[%s3] sm:$0x1]
      %v1354 = vperm.slane %v1352, 0
      %v1357 = vsel %vm1041, %v1330, 0
      %v1360 = vsel %vm1041, %v1331, 0
      %v1363 = vsel %vm1041, %v1332, 0
      %v1366 = vsel %vm1041, %v1333, 0
      %v1369 = vsel %vm1041, %v1334, 0
      %v1372 = vsel %vm1041, %v1335, 0
      %v1375 = vsel %vm1041, %v1336, 0
      %v1378 = vsel %vm1041, %v1337, 0
      %v1381 = vsel %vm1041, %v1338, 0
      %v1384 = vsel %vm1041, %v1339, 0
      %v1387 = vsel %vm1041, %v1340, 0
      %v1390 = vsel %vm1041, %v1341, 0
      %v1393 = vsel %vm1041, %v1342, 0
      %v1396 = vsel %vm1041, %v1343, 0
      %v1399 = vsel %vm1041, %v1344, 0
      %v1402 = vsel %vm1041, %v1345, 0
      %1404 = vmatpush.bf16.msra.mxu0 0
      %1405 = vmatpush.bf16.msra.mxu0 0
      %1406 = vmatpush.bf16.msra.mxu0 0
      %1407 = vmatpush.bf16.msra.mxu0 0
      %1408 = vmatpush.bf16.msra.mxu0 0
      %1409 = vmatpush.bf16.msra.mxu0 0
      %1410 = vmatpush.bf16.msra.mxu0 %v1351
      %1411 = vmatpush.bf16.msra.mxu0 %v1350
      %1412 = vmatmul.bf16.gmra.mxu0 %v1357
      %v1413 = vpop.f32.mrf.mxu0
      %v1414 = vadd.f32 %v1354, %v1413
      %v1415 = vpop.f32.mrf.mxu0
      %v1416 = vadd.f32 %v1354, %v1415
      %1417 = vmatmul.bf16.gmra.mxu0 %v1360
      %v1418 = vpop.f32.mrf.mxu0
      %v1419 = vadd.f32 %v1354, %v1418
      %v1420 = vpop.f32.mrf.mxu0
      %v1421 = vadd.f32 %v1354, %v1420
      %1422 = vmatmul.bf16.gmra.mxu0 %v1363
      %v1423 = vpop.f32.mrf.mxu0
      %v1424 = vadd.f32 %v1354, %v1423
      %v1425 = vpop.f32.mrf.mxu0
      %v1426 = vadd.f32 %v1354, %v1425
      %1427 = vmatmul.bf16.gmra.mxu0 %v1366
      %v1428 = vpop.f32.mrf.mxu0
      %v1429 = vadd.f32 %v1354, %v1428
      %v1430 = vpop.f32.mrf.mxu0
      %v1431 = vadd.f32 %v1354, %v1430
      %1432 = vmatmul.bf16.gmra.mxu0 %v1369
      %v1433 = vpop.f32.mrf.mxu0
      %v1434 = vadd.f32 %v1354, %v1433
      %v1435 = vpop.f32.mrf.mxu0
      %v1436 = vadd.f32 %v1354, %v1435
      %1437 = vmatmul.bf16.gmra.mxu0 %v1372
      %v1438 = vpop.f32.mrf.mxu0
      %v1439 = vadd.f32 %v1354, %v1438
      %v1440 = vpop.f32.mrf.mxu0
      %v1441 = vadd.f32 %v1354, %v1440
      %1442 = vmatmul.bf16.gmra.mxu0 %v1375
      %v1443 = vpop.f32.mrf.mxu0
      %v1444 = vadd.f32 %v1354, %v1443
      %v1445 = vpop.f32.mrf.mxu0
      %v1446 = vadd.f32 %v1354, %v1445
      %1447 = vmatmul.bf16.gmra.mxu0 %v1378
      %v1448 = vpop.f32.mrf.mxu0
      %v1449 = vadd.f32 %v1354, %v1448
      %v1450 = vpop.f32.mrf.mxu0
      %v1451 = vadd.f32 %v1354, %v1450
      %1452 = vmatmul.bf16.gmra.mxu0 %v1381
      %v1453 = vpop.f32.mrf.mxu0
      %v1454 = vadd.f32 %v1354, %v1453
      %v1455 = vpop.f32.mrf.mxu0
      %v1456 = vadd.f32 %v1354, %v1455
      %1457 = vmatmul.bf16.gmra.mxu0 %v1384
      %v1458 = vpop.f32.mrf.mxu0
      %v1459 = vadd.f32 %v1354, %v1458
      %v1460 = vpop.f32.mrf.mxu0
      %v1461 = vadd.f32 %v1354, %v1460
      %1462 = vmatmul.bf16.gmra.mxu0 %v1387
      %v1463 = vpop.f32.mrf.mxu0
      %v1464 = vadd.f32 %v1354, %v1463
      %v1465 = vpop.f32.mrf.mxu0
      %v1466 = vadd.f32 %v1354, %v1465
      %1467 = vmatmul.bf16.gmra.mxu0 %v1390
      %v1468 = vpop.f32.mrf.mxu0
      %v1469 = vadd.f32 %v1354, %v1468
      %v1470 = vpop.f32.mrf.mxu0
      %v1471 = vadd.f32 %v1354, %v1470
      %1472 = vmatmul.bf16.gmra.mxu0 %v1393
      %v1473 = vpop.f32.mrf.mxu0
      %v1474 = vadd.f32 %v1354, %v1473
      %v1475 = vpop.f32.mrf.mxu0
      %v1476 = vadd.f32 %v1354, %v1475
      %1477 = vmatmul.bf16.gmra.mxu0 %v1396
      %v1478 = vpop.f32.mrf.mxu0
      %v1479 = vadd.f32 %v1354, %v1478
      %v1480 = vpop.f32.mrf.mxu0
      %v1481 = vadd.f32 %v1354, %v1480
      %1482 = vmatmul.bf16.gmra.mxu0 %v1399
      %v1483 = vpop.f32.mrf.mxu0
      %v1484 = vadd.f32 %v1354, %v1483
      %v1485 = vpop.f32.mrf.mxu0
      %v1486 = vadd.f32 %v1354, %v1485
      %1487 = vmatmul.bf16.gmra.mxu0 %v1402
      %v1488 = vpop.f32.mrf.mxu0
      %v1489 = vadd.f32 %v1354, %v1488
      %v1490 = vpop.f32.mrf.mxu0
      %v1491 = vadd.f32 %v1354, %v1490
      %1492 = vdwg.mxu0
      %vm1493 = vcmask 31744
      %1494 = vst.msk [vmem:[%s197] sm:$0xff] %vm1493, %v1414
      %1495 = vst.msk [vmem:[%s197 + $0x8] sm:$0xff] %vm1493, %v1416
      %1496 = vst.msk [vmem:[%s197 + $0x10] sm:$0xff] %vm1493, %v1419
      %1497 = vst.msk [vmem:[%s197 + $0x18] sm:$0xff] %vm1493, %v1421
      %1498 = vst.msk [vmem:[%s197 + $0x20] sm:$0xff] %vm1493, %v1424
      %1499 = vst.msk [vmem:[%s197 + $0x28] sm:$0xff] %vm1493, %v1426
      %1500 = vst.msk [vmem:[%s197 + $0x30] sm:$0xff] %vm1493, %v1429
      %1501 = vst.msk [vmem:[%s197 + $0x38] sm:$0xff] %vm1493, %v1431
      %1502 = vst.msk [vmem:[%s197 + $0x40] sm:$0xff] %vm1493, %v1434
      %1503 = vst.msk [vmem:[%s197 + $0x48] sm:$0xff] %vm1493, %v1436
      %1504 = vst.msk [vmem:[%s197 + $0x50] sm:$0xff] %vm1493, %v1439
      %1505 = vst.msk [vmem:[%s197 + $0x58] sm:$0xff] %vm1493, %v1441
      %1506 = vst.msk [vmem:[%s197 + $0x60] sm:$0xff] %vm1493, %v1444
      %1507 = vst.msk [vmem:[%s197 + $0x68] sm:$0xff] %vm1493, %v1446
      %1508 = vst.msk [vmem:[%s197 + $0x70] sm:$0xff] %vm1493, %v1449
      %1509 = vst.msk [vmem:[%s197 + $0x78] sm:$0xff] %vm1493, %v1451
      %1510 = vst.msk [vmem:[%s197 + $0x80] sm:$0xff] %vm1493, %v1454
      %1511 = vst.msk [vmem:[%s197 + $0x88] sm:$0xff] %vm1493, %v1456
      %1512 = vst.msk [vmem:[%s197 + $0x90] sm:$0xff] %vm1493, %v1459
      %1513 = vst.msk [vmem:[%s197 + $0x98] sm:$0xff] %vm1493, %v1461
      %1514 = vst.msk [vmem:[%s197 + $0xa0] sm:$0xff] %vm1493, %v1464
      %1515 = vst.msk [vmem:[%s197 + $0xa8] sm:$0xff] %vm1493, %v1466
      %1516 = vst.msk [vmem:[%s197 + $0xb0] sm:$0xff] %vm1493, %v1469
      %1517 = vst.msk [vmem:[%s197 + $0xb8] sm:$0xff] %vm1493, %v1471
      %1518 = vst.msk [vmem:[%s197 + $0xc0] sm:$0xff] %vm1493, %v1474
      %1519 = vst.msk [vmem:[%s197 + $0xc8] sm:$0xff] %vm1493, %v1476
      %1520 = vst.msk [vmem:[%s197 + $0xd0] sm:$0xff] %vm1493, %v1479
      %1521 = vst.msk [vmem:[%s197 + $0xd8] sm:$0xff] %vm1493, %v1481
      %1522 = vst.msk [vmem:[%s197 + $0xe0] sm:$0xff] %vm1493, %v1484
      %1523 = vst.msk [vmem:[%s197 + $0xe8] sm:$0xff] %vm1493, %v1486
      %1524 = vst.msk [vmem:[%s197 + $0xf0] sm:$0xff] %vm1493, %v1489
      %1525 = vst.msk [vmem:[%s197 + $0xf8] sm:$0xff] %vm1493, %v1491
      %p1526 = scmp.lt.s32.totalorder %s15, 1
      %s1527 = scalar_select %p1526, %s15, 1
      %s1528 = smul.addr %s1527, 32
      %s1529 = smul.addr %s1528, 8
      %s1530 = scalar_lea.vmem %s4, %s1529
      // Predicated region
      $region37: #{_lambda_.15} parent=35 // pred_check
        %p1531 = pneg %p122
      $region38: #{_lambda_.15} parent=35 // pred_check_branch
        %1533 = sbr.rel (%p1531) target = $region40
      $region39: #{_lambda_.15} parent=35 // pred_region
        _
      $region40: #{_lambda_.15} parent=35 // pred_fallthru
        _
    $region36: #{_lambda_.15} parent=5 // pred_fallthru
      _
    %p1534 = scmp.le.s32.totalorder 2, %s10
    // Predicated region
    $region41: #{_lambda_.15} parent=5 // pred_check
      %p1535 = pneg %p1534
    $region42: #{_lambda_.15} parent=5 // pred_check_branch
      %1537 = sbr.rel (%p1535) target = $region44
    $region43: #{_lambda_.15} parent=5 // pred_region
      %s1538 = ssub.s32 %s10, 2
      // Predicated region
      $region45: #{_lambda_.15} parent=43 // pred_check
        %p1539 = pneg %p128
      $region46: #{_lambda_.15} parent=43 // pred_check_branch
        %1541 = sbr.rel (%p1539) target = $region48
      $region47: #{_lambda_.15} parent=43 // pred_region
        %p1542 = scmp.lt.s32.totalorder %s16, 1
        %s1543 = scalar_select %p1542, %s16, 1
        %s1544 = smul.addr %s1543, 32
        %s1545 = smul.addr %s1544, 8
        %s1546 = scalar_lea.vmem %s4, %s1545
      $region48: #{_lambda_.15} parent=43 // pred_fallthru
        _
    $region44: #{_lambda_.15} parent=5 // pred_fallthru
      _
  $region6: #{_lambda_.15} parent=0 // loop_footer
    %s14 = sadd.s32 1, %s10
  $region7: #{_lambda_.15} parent=0 // loop_footer_branch
    %9 = sbr.rel target = $region3
  $region8: #{_lambda_.15} parent=0 // loop_exit
    _

</llo_original>
